<compile_context>
chip_gen: v7x
topology: tpu7x:2x2x1
jax: 0.10.0
libtpu: 0.0.40
codegen_flags: <defaults>
</compile_context>

<pallas_src>
import jax
import jax.numpy as jnp
import numpy as np
from jax import lax
from jax.experimental import pallas as pl
from jax.experimental.pallas import tpu as pltpu


# ----------------------------------------------------------------------------
# Fused whole-network kernel (one grid step = one block of BB samples)
# ----------------------------------------------------------------------------
def _cnn_fused_kernel(x_ref, w1e_ref, w1o_ref, b1_ref,
                      w2e_ref, w2o_ref, b2_ref,
                      wfc_ref, bfc_ref, o_ref, p1pad_ref):
    # x_ref   : (28, BB, 84) bf16   layer-1 LHS: 3 H-shifted input rows per row
    # w1e/w1o : (84, 448)    bf16   layer-1 band weights, even / odd output x
    # b1_ref  : (1, 448)     f32    layer-1 bias tiled over the 14 pooled x
    # w2e/w2o : (3, 448, 448) bf16  layer-2 band weights per ky, even / odd x
    # b2_ref  : (1, 448)     f32    layer-2 bias tiled over the 7 pooled x
    # wfc_ref : (448, 112)   bf16   FC weights, per-y column groups (stride 16)
    # bfc_ref : (1, 10)      f32
    # o_ref   : (BB, 10)     f32
    # p1pad_ref: (16, BB, 448) bf16 VMEM scratch, H-padded layer-2 input
    f32 = jnp.float32
    bf16 = jnp.bfloat16
    BB = x_ref.shape[1]

    # ---------------- layer 1: conv3x3(1->32), one K=84 matmul per parity ----
    lhs1 = x_ref[...].reshape(28 * BB, 84)                        # free view (BB % 8 == 0)
    h1e = jnp.dot(lhs1, w1e_ref[...], preferred_element_type=f32)  # (28*BB, 448)
    h1o = jnp.dot(lhs1, w1o_ref[...], preferred_element_type=f32)
    # fused bias + ReLU + 2x2 W-maxpool (even/odd x columns are the two pool taps)
    mw1 = jnp.maximum(jnp.maximum(h1e, h1o) + b1_ref[...], 0.0)   # (28*BB, 448)
    # 2x2 H-maxpool: max of the two row phases (leading-dim reshape = view)
    t1 = mw1.reshape(14, 2, BB, 448)
    p1 = jnp.maximum(t1[:, 0], t1[:, 1])                          # (14, BB, 448)

    # ---------------- layer-2 input: H-pad into bf16 scratch -----------------
    p1pad_ref[0:1] = jnp.zeros((1, BB, 448), bf16)
    p1pad_ref[15:16] = jnp.zeros((1, BB, 448), bf16)
    p1pad_ref[1:15] = p1.astype(bf16)

    # ---------------- layer 2: conv3x3(32->64), 3 row-matmuls per parity -----
    l0 = p1pad_ref[0:14].reshape(14 * BB, 448)                    # free views
    l1 = p1pad_ref[1:15].reshape(14 * BB, 448)
    l2 = p1pad_ref[2:16].reshape(14 * BB, 448)
    acc_e = jnp.dot(l0, w2e_ref[0], preferred_element_type=f32)   # init from first dot
    acc_e = acc_e + jnp.dot(l1, w2e_ref[1], preferred_element_type=f32)
    acc_e = acc_e + jnp.dot(l2, w2e_ref[2], preferred_element_type=f32)
    acc_o = jnp.dot(l0, w2o_ref[0], preferred_element_type=f32)
    acc_o = acc_o + jnp.dot(l1, w2o_ref[1], preferred_element_type=f32)
    acc_o = acc_o + jnp.dot(l2, w2o_ref[2], preferred_element_type=f32)
    mw2 = jnp.maximum(jnp.maximum(acc_e, acc_o) + b2_ref[...], 0.0)  # (14*BB, 448)
    t2 = mw2.reshape(7, 2, BB, 448)
    p2 = jnp.maximum(t2[:, 0], t2[:, 1])                          # (7, BB, 448)

    # ---------------- fully connected (fused) --------------------------------
    F = jnp.dot(p2.reshape(7 * BB, 448).astype(bf16), wfc_ref[...],
                preferred_element_type=f32)                       # (7*BB, 112)
    F3 = F.reshape(7, BB, 112)
    out = F3[0, :, 0:10] + bfc_ref[...]
    for y in range(1, 7):
        out = out + F3[y, :, 16 * y:16 * y + 10]
    o_ref[...] = out.astype(o_ref.dtype)


# ----------------------------------------------------------------------------
# Wrapper: one pallas_call for the whole forward pass
# ----------------------------------------------------------------------------
def _pick_block(B):
    if B <= 8:
        return 8
    bb = 64
    # keep >= 2 grid steps when the batch allows (v7x has 2 TensorCores)
    while bb > 8 and (B + bb - 1) // bb < 2:
        bb //= 2
    return bb


def _vmem_limit_bytes():
    # ~56 MiB on v7x (64 MiB physical), ~100 MiB on v5e/v6e (128 MiB physical).
    try:
        cap = int(pltpu.get_tpu_info().vmem_capacity_bytes)
    except Exception:
        cap = 64 * 1024 * 1024
    return max(32 * 1024 * 1024, min(cap - 8 * 1024 * 1024, 100 * 1024 * 1024))


def cnn_forward_pallas(x_nchw, kp):
    B = x_nchw.shape[0]
    assert x_nchw.shape[1:] == (1, 28, 28), "CNN expects (B, 1, 28, 28) input"
    x3 = x_nchw.reshape(B, 28, 28)

    # Build the folded layer-1 LHS once in the wrapper (tiny tensor):
    #   lanes [0:28]=row h-1, [28:56]=row h, [56:84]=row h+1 (zero H-padding),
    #   transposed to the (H, batch, lanes) kernel layout, cast to bf16.
    xp = jnp.pad(x3, ((0, 0), (1, 1), (0, 0)))
    xcat = jnp.concatenate([xp[:, 0:28, :], xp[:, 1:29, :], xp[:, 2:30, :]], axis=-1)
    xcat = jnp.transpose(xcat, (1, 0, 2)).astype(jnp.bfloat16)    # (28, B, 84)

    BB = _pick_block(B)
    Bp = ((B + BB - 1) // BB) * BB
    if Bp != B:
        xcat = jnp.pad(xcat, ((0, 0), (0, Bp - B), (0, 0)))

    out = pl.pallas_call(
        _cnn_fused_kernel,
        out_shape=jax.ShapeDtypeStruct((Bp, 10), jnp.float32),
        grid_spec=pltpu.PrefetchScalarGridSpec(
            num_scalar_prefetch=0,
            grid=(Bp // BB,),
            in_specs=[
                pl.BlockSpec((28, BB, 84), lambda n: (0, n, 0)),
                pl.BlockSpec((84, 448), lambda n: (0, 0)),
                pl.BlockSpec((84, 448), lambda n: (0, 0)),
                pl.BlockSpec((1, 448), lambda n: (0, 0)),
                pl.BlockSpec((3, 448, 448), lambda n: (0, 0, 0)),
                pl.BlockSpec((3, 448, 448), lambda n: (0, 0, 0)),
                pl.BlockSpec((1, 448), lambda n: (0, 0)),
                pl.BlockSpec((448, 112), lambda n: (0, 0)),
                pl.BlockSpec((1, 10), lambda n: (0, 0)),
            ],
            out_specs=pl.BlockSpec((BB, 10), lambda n: (n, 0)),
            scratch_shapes=[
                pltpu.VMEM((16, BB, 448), jnp.bfloat16),          # H-padded layer-2 input
            ],
        ),
        compiler_params=pltpu.CompilerParams(
            dimension_semantics=("parallel",),
            vmem_limit_bytes=_vmem_limit_bytes(),
        ),
    )(xcat, kp["w1e"], kp["w1o"], kp["b1p"], kp["w2e"], kp["w2o"],
      kp["b2p"], kp["wfcp"], kp["bfcp"])
    return out[:B]


# ----------------------------------------------------------------------------
# Parameters: canonical (HWIO conv / PyTorch-order FC) + one-time packing
# ----------------------------------------------------------------------------
def init_params(key):
    k1, k2, k3, k4, k5, k6 = jax.random.split(key, 6)
    return {
        "w1": jax.random.normal(k1, (3, 3, 1, 32), jnp.float32) / np.sqrt(9 * 1),
        "b1": jax.random.normal(k2, (32,), jnp.float32) * 0.01,
        "w2": jax.random.normal(k3, (3, 3, 32, 64), jnp.float32) / np.sqrt(9 * 32),
        "b2": jax.random.normal(k4, (64,), jnp.float32) * 0.01,
        # wfc rows are in PyTorch NCHW flatten order: index = c*49 + y*7 + x
        "wfc": jax.random.normal(k5, (7 * 7 * 64, 10), jnp.float32) / np.sqrt(7 * 7 * 64),
        "bfc": jax.random.normal(k6, (10,), jnp.float32) * 0.01,
    }


def prepare_params(p):
    """Pack canonical params into the kernel's matmul-friendly bf16 layouts."""
    w1 = np.asarray(p["w1"], np.float32)    # (3,3,1,32)  HWIO
    b1 = np.asarray(p["b1"], np.float32)
    w2 = np.asarray(p["w2"], np.float32)    # (3,3,32,64) HWIO
    b2 = np.asarray(p["b2"], np.float32)
    wfc = np.asarray(p["wfc"], np.float32)  # (3136, 10), rows = c*49 + y*7 + x
    bfc = np.asarray(p["bfc"], np.float32)

    # layer 1: K = 84 (3 ky-shifted rows x 28 columns), output columns split by
    # output-x parity so the 2x2 W-pool is max(even, odd) on compact 448 lanes.
    w1e = np.zeros((84, 448), np.float32)
    w1o = np.zeros((84, 448), np.float32)
    for ky in range(3):
        for xout in range(28):
            q, odd = divmod(xout, 2)
            dst = w1o if odd else w1e
            for kx in range(3):
                xin = xout + kx - 1
                if 0 <= xin < 28:                       # W-padding folded in
                    dst[ky * 28 + xin, q * 32:(q + 1) * 32] = w1[ky, kx, 0, :]
    b1p = np.tile(b1, 14).reshape(1, 448)

    # layer 2: per-ky band over the 448 compacted pooled lanes (lane = q*32+cin),
    # output columns split by output-x parity (lane = q*64+cout).
    w2e = np.zeros((3, 448, 448), np.float32)
    w2o = np.zeros((3, 448, 448), np.float32)
    for ky in range(3):
        for xout in range(14):
            q, odd = divmod(xout, 2)
            dst = w2o if odd else w2e
            for kx in range(3):
                xin = xout + kx - 1
                if 0 <= xin < 14:
                    dst[ky, xin * 32:(xin + 1) * 32, q * 64:(q + 1) * 64] = w2[ky, kx, :, :]
    b2p = np.tile(b2, 7).reshape(1, 448)

    # FC: rows = compacted pooled layer-2 lanes (q*64 + c), columns grouped per
    # pooled row y at stride 16; PyTorch NCHW flatten order pre-permuted here.
    wfcp = np.zeros((448, 112), np.float32)
    for y in range(7):
        for q in range(7):
            for c in range(64):
                wfcp[q * 64 + c, y * 16:y * 16 + 10] = wfc[c * 49 + y * 7 + q, :]
    bfcp = bfc.reshape(1, 10)

    return {
        "w1e": jnp.asarray(w1e, jnp.bfloat16), "w1o": jnp.asarray(w1o, jnp.bfloat16),
        "b1p": jnp.asarray(b1p, jnp.float32),
        "w2e": jnp.asarray(w2e, jnp.bfloat16), "w2o": jnp.asarray(w2o, jnp.bfloat16),
        "b2p": jnp.asarray(b2p, jnp.float32),
        "wfcp": jnp.asarray(wfcp, jnp.bfloat16), "bfcp": jnp.asarray(bfcp, jnp.float32),
    }


# ----------------------------------------------------------------------------
# Pure-JAX reference (same math, f32, XLA ops) for the correctness check
# ----------------------------------------------------------------------------
def cnn_reference(x_nchw, p):
    def block(x, w, b):
        out = lax.conv_general_dilated(
            x, w, window_strides=(1, 1), padding=((1, 1), (1, 1)),
            dimension_numbers=("NCHW", "HWIO", "NCHW"))
        out = jnp.maximum(out + b.reshape(1, -1, 1, 1), 0.0)
        return lax.reduce_window(out, -jnp.inf, lax.max,
                                 (1, 1, 2, 2), (1, 1, 2, 2), "VALID")
    h = block(x_nchw, p["w1"], p["b1"])
    h = block(h, p["w2"], p["b2"])
    flat = h.reshape(h.shape[0], -1)        # PyTorch (B, C*H*W) flatten order
    return flat @ p["wfc"] + p["bfc"]


if __name__ == "__main__":
    key = jax.random.PRNGKey(0)
    kx, kp_key = jax.random.split(key)
    params = init_params(kp_key)
    kparams = prepare_params(params)
    fwd = jax.jit(cnn_forward_pallas)

    # MNIST-like input implied by fc(7*7*64, 10): (B, 1, 28, 28) NCHW.
    # 1) small batch (BB=8, single grid step)
    x_small = jax.random.normal(kx, (2, 1, 28, 28), jnp.float32)
    out_small = jax.block_until_ready(fwd(x_small, kparams))
    assert out_small.shape == (2, 10)
    ref_small = cnn_reference(x_small, params)
    np.testing.assert_allclose(np.asarray(out_small), np.asarray(ref_small),
                               rtol=3e-2, atol=3e-2)

    # 2) larger batch exercising BB=32, batch padding and a 2-step parallel grid
    x_big = jax.random.normal(jax.random.PRNGKey(1), (48, 1, 28, 28), jnp.float32)
    out_big = jax.block_until_ready(fwd(x_big, kparams))
    assert out_big.shape == (48, 10)
    ref_big = cnn_reference(x_big, params)
    np.testing.assert_allclose(np.asarray(out_big), np.asarray(ref_big),
                               rtol=3e-2, atol=3e-2)

    print("KERNEL_OK")
</pallas_src>

<mosaic_0001>
module attributes {stable_mosaic.version = 11 : i64} {
  func.func @_cnn_fused_kernel(%arg0: i32, %arg1: memref<28x8x84xbf16, #tpu.memory_space<vmem>>, %arg2: memref<84x448xbf16, #tpu.memory_space<vmem>>, %arg3: memref<84x448xbf16, #tpu.memory_space<vmem>>, %arg4: memref<1x448xf32, #tpu.memory_space<vmem>>, %arg5: memref<3x448x448xbf16, #tpu.memory_space<vmem>>, %arg6: memref<3x448x448xbf16, #tpu.memory_space<vmem>>, %arg7: memref<1x448xf32, #tpu.memory_space<vmem>>, %arg8: memref<448x112xbf16, #tpu.memory_space<vmem>>, %arg9: memref<1x10xf32, #tpu.memory_space<vmem>>, %arg10: memref<8x10xf32, #tpu.memory_space<vmem>>, %arg11: memref<16x8x448xbf16, #tpu.memory_space<vmem>>) attributes {dimension_semantics = [#tpu.dimension_semantics<parallel>], iteration_bounds = array<i64: 1>, scalar_prefetch = 0 : i64, scratch_operands = 1 : i64, tpu.core_type = #tpu.core_type<tc>, window_params = [{transform_indices = @transform_0, window_bounds = array<i64: 28, 8, 84>}, {pipeline_mode = #tpu.pipeline_mode<synchronous>, transform_indices = @transform_1, window_bounds = array<i64: 84, 448>}, {pipeline_mode = #tpu.pipeline_mode<synchronous>, transform_indices = @transform_2, window_bounds = array<i64: 84, 448>}, {pipeline_mode = #tpu.pipeline_mode<synchronous>, transform_indices = @transform_3, window_bounds = array<i64: 1, 448>}, {pipeline_mode = #tpu.pipeline_mode<synchronous>, transform_indices = @transform_4, window_bounds = array<i64: 3, 448, 448>}, {pipeline_mode = #tpu.pipeline_mode<synchronous>, transform_indices = @transform_5, window_bounds = array<i64: 3, 448, 448>}, {pipeline_mode = #tpu.pipeline_mode<synchronous>, transform_indices = @transform_6, window_bounds = array<i64: 1, 448>}, {pipeline_mode = #tpu.pipeline_mode<synchronous>, transform_indices = @transform_7, window_bounds = array<i64: 448, 112>}, {pipeline_mode = #tpu.pipeline_mode<synchronous>, transform_indices = @transform_8, window_bounds = array<i64: 1, 10>}, {transform_indices = @transform_9, window_bounds = array<i64: 8, 10>}]} {
    %c0 = arith.constant 0 : index
    %c0_0 = arith.constant 0 : index
    %c0_1 = arith.constant 0 : index
    %0 = vector.load %arg1[%c0, %c0_0, %c0_1] : memref<28x8x84xbf16, #tpu.memory_space<vmem>>, vector<28x8x84xbf16>
    %1 = vector.shape_cast %0 : vector<28x8x84xbf16> to vector<224x84xbf16>
    %c0_2 = arith.constant 0 : index
    %c0_3 = arith.constant 0 : index
    %2 = vector.load %arg2[%c0_2, %c0_3] : memref<84x448xbf16, #tpu.memory_space<vmem>>, vector<84x448xbf16>
    %cst = arith.constant dense<0.000000e+00> : vector<224x448xf32>
    %3 = tpu.matmul %1, %2, %cst {dimension_numbers = #tpu.dot_dimension_numbers<[1], [0], [0], [1], [0, 0, 1, 1], [], []>} : vector<224x84xbf16>, vector<84x448xbf16>, vector<224x448xf32> -> vector<224x448xf32>
    %c0_4 = arith.constant 0 : index
    %c0_5 = arith.constant 0 : index
    %4 = vector.load %arg3[%c0_4, %c0_5] : memref<84x448xbf16, #tpu.memory_space<vmem>>, vector<84x448xbf16>
    %cst_6 = arith.constant dense<0.000000e+00> : vector<224x448xf32>
    %5 = tpu.matmul %1, %4, %cst_6 {dimension_numbers = #tpu.dot_dimension_numbers<[1], [0], [0], [1], [0, 0, 1, 1], [], []>} : vector<224x84xbf16>, vector<84x448xbf16>, vector<224x448xf32> -> vector<224x448xf32>
    %6 = arith.maximumf %3, %5 : vector<224x448xf32>
    %c0_7 = arith.constant 0 : index
    %c0_8 = arith.constant 0 : index
    %7 = vector.load %arg4[%c0_7, %c0_8] : memref<1x448xf32, #tpu.memory_space<vmem>>, vector<1x448xf32>
    %8 = vector.broadcast %7 : vector<1x448xf32> to vector<224x448xf32>
    %9 = arith.addf %6, %8 : vector<224x448xf32>
    %cst_9 = arith.constant 0.000000e+00 : f32
    %10 = vector.broadcast %cst_9 : f32 to vector<224x448xf32>
    %11 = arith.maximumf %9, %10 : vector<224x448xf32>
    %12 = vector.shape_cast %11 : vector<224x448xf32> to vector<14x2x8x448xf32>
    %13 = vector.extract_strided_slice %12 {offsets = [0, 0, 0, 0], sizes = [14, 1, 8, 448], strides = [1, 1, 1, 1]} : vector<14x2x8x448xf32> to vector<14x1x8x448xf32>
    %14 = vector.shape_cast %13 : vector<14x1x8x448xf32> to vector<14x8x448xf32>
    %15 = vector.extract_strided_slice %12 {offsets = [0, 1, 0, 0], sizes = [14, 1, 8, 448], strides = [1, 1, 1, 1]} : vector<14x2x8x448xf32> to vector<14x1x8x448xf32>
    %16 = vector.shape_cast %15 : vector<14x1x8x448xf32> to vector<14x8x448xf32>
    %17 = arith.maximumf %14, %16 : vector<14x8x448xf32>
    %cst_10 = arith.constant 0.000000e+00 : bf16
    %18 = vector.broadcast %cst_10 : bf16 to vector<1x8x448xbf16>
    %c0_11 = arith.constant 0 : index
    %c0_12 = arith.constant 0 : index
    %c0_13 = arith.constant 0 : index
    %19 = vector.load %arg11[%c0_11, %c0_12, %c0_13] : memref<16x8x448xbf16, #tpu.memory_space<vmem>>, vector<1x8x448xbf16>
    tpu.vector_store %arg11[%c0_11, %c0_12, %c0_13], %18 {strides = array<i32>} : memref<16x8x448xbf16, #tpu.memory_space<vmem>>, vector<1x8x448xbf16>,
    %cst_14 = arith.constant 0.000000e+00 : bf16
    %20 = vector.broadcast %cst_14 : bf16 to vector<1x8x448xbf16>
    %c15 = arith.constant 15 : index
    %c0_15 = arith.constant 0 : index
    %c0_16 = arith.constant 0 : index
    %21 = vector.load %arg11[%c15, %c0_15, %c0_16] : memref<16x8x448xbf16, #tpu.memory_space<vmem>>, vector<1x8x448xbf16>
    tpu.vector_store %arg11[%c15, %c0_15, %c0_16], %20 {strides = array<i32>} : memref<16x8x448xbf16, #tpu.memory_space<vmem>>, vector<1x8x448xbf16>,
    %22 = arith.truncf %17 : vector<14x8x448xf32> to vector<14x8x448xbf16>
    %c1 = arith.constant 1 : index
    %c0_17 = arith.constant 0 : index
    %c0_18 = arith.constant 0 : index
    %23 = vector.load %arg11[%c1, %c0_17, %c0_18] : memref<16x8x448xbf16, #tpu.memory_space<vmem>>, vector<14x8x448xbf16>
    tpu.vector_store %arg11[%c1, %c0_17, %c0_18], %22 {strides = array<i32>} : memref<16x8x448xbf16, #tpu.memory_space<vmem>>, vector<14x8x448xbf16>,
    %c0_19 = arith.constant 0 : index
    %c0_20 = arith.constant 0 : index
    %c0_21 = arith.constant 0 : index
    %24 = vector.load %arg11[%c0_19, %c0_20, %c0_21] : memref<16x8x448xbf16, #tpu.memory_space<vmem>>, vector<14x8x448xbf16>
    %25 = vector.shape_cast %24 : vector<14x8x448xbf16> to vector<112x448xbf16>
    %c1_22 = arith.constant 1 : index
    %c0_23 = arith.constant 0 : index
    %c0_24 = arith.constant 0 : index
    %26 = vector.load %arg11[%c1_22, %c0_23, %c0_24] : memref<16x8x448xbf16, #tpu.memory_space<vmem>>, vector<14x8x448xbf16>
    %27 = vector.shape_cast %26 : vector<14x8x448xbf16> to vector<112x448xbf16>
    %c2 = arith.constant 2 : index
    %c0_25 = arith.constant 0 : index
    %c0_26 = arith.constant 0 : index
    %28 = vector.load %arg11[%c2, %c0_25, %c0_26] : memref<16x8x448xbf16, #tpu.memory_space<vmem>>, vector<14x8x448xbf16>
    %29 = vector.shape_cast %28 : vector<14x8x448xbf16> to vector<112x448xbf16>
    %c0_27 = arith.constant 0 : index
    %c0_28 = arith.constant 0 : index
    %c0_29 = arith.constant 0 : index
    %30 = vector.load %arg5[%c0_27, %c0_28, %c0_29] : memref<3x448x448xbf16, #tpu.memory_space<vmem>>, vector<1x448x448xbf16>
    %31 = vector.shape_cast %30 : vector<1x448x448xbf16> to vector<448x448xbf16>
    %cst_30 = arith.constant dense<0.000000e+00> : vector<112x448xf32>
    %32 = tpu.matmul %25, %31, %cst_30 {dimension_numbers = #tpu.dot_dimension_numbers<[1], [0], [0], [1], [0, 0, 1, 1], [], []>} : vector<112x448xbf16>, vector<448x448xbf16>, vector<112x448xf32> -> vector<112x448xf32>
    %c1_31 = arith.constant 1 : index
    %c0_32 = arith.constant 0 : index
    %c0_33 = arith.constant 0 : index
    %33 = vector.load %arg5[%c1_31, %c0_32, %c0_33] : memref<3x448x448xbf16, #tpu.memory_space<vmem>>, vector<1x448x448xbf16>
    %34 = vector.shape_cast %33 : vector<1x448x448xbf16> to vector<448x448xbf16>
    %cst_34 = arith.constant dense<0.000000e+00> : vector<112x448xf32>
    %35 = tpu.matmul %27, %34, %cst_34 {dimension_numbers = #tpu.dot_dimension_numbers<[1], [0], [0], [1], [0, 0, 1, 1], [], []>} : vector<112x448xbf16>, vector<448x448xbf16>, vector<112x448xf32> -> vector<112x448xf32>
    %36 = arith.addf %32, %35 : vector<112x448xf32>
    %c2_35 = arith.constant 2 : index
    %c0_36 = arith.constant 0 : index
    %c0_37 = arith.constant 0 : index
    %37 = vector.load %arg5[%c2_35, %c0_36, %c0_37] : memref<3x448x448xbf16, #tpu.memory_space<vmem>>, vector<1x448x448xbf16>
    %38 = vector.shape_cast %37 : vector<1x448x448xbf16> to vector<448x448xbf16>
    %cst_38 = arith.constant dense<0.000000e+00> : vector<112x448xf32>
    %39 = tpu.matmul %29, %38, %cst_38 {dimension_numbers = #tpu.dot_dimension_numbers<[1], [0], [0], [1], [0, 0, 1, 1], [], []>} : vector<112x448xbf16>, vector<448x448xbf16>, vector<112x448xf32> -> vector<112x448xf32>
    %40 = arith.addf %36, %39 : vector<112x448xf32>
    %c0_39 = arith.constant 0 : index
    %c0_40 = arith.constant 0 : index
    %c0_41 = arith.constant 0 : index
    %41 = vector.load %arg6[%c0_39, %c0_40, %c0_41] : memref<3x448x448xbf16, #tpu.memory_space<vmem>>, vector<1x448x448xbf16>
    %42 = vector.shape_cast %41 : vector<1x448x448xbf16> to vector<448x448xbf16>
    %cst_42 = arith.constant dense<0.000000e+00> : vector<112x448xf32>
    %43 = tpu.matmul %25, %42, %cst_42 {dimension_numbers = #tpu.dot_dimension_numbers<[1], [0], [0], [1], [0, 0, 1, 1], [], []>} : vector<112x448xbf16>, vector<448x448xbf16>, vector<112x448xf32> -> vector<112x448xf32>
    %c1_43 = arith.constant 1 : index
    %c0_44 = arith.constant 0 : index
    %c0_45 = arith.constant 0 : index
    %44 = vector.load %arg6[%c1_43, %c0_44, %c0_45] : memref<3x448x448xbf16, #tpu.memory_space<vmem>>, vector<1x448x448xbf16>
    %45 = vector.shape_cast %44 : vector<1x448x448xbf16> to vector<448x448xbf16>
    %cst_46 = arith.constant dense<0.000000e+00> : vector<112x448xf32>
    %46 = tpu.matmul %27, %45, %cst_46 {dimension_numbers = #tpu.dot_dimension_numbers<[1], [0], [0], [1], [0, 0, 1, 1], [], []>} : vector<112x448xbf16>, vector<448x448xbf16>, vector<112x448xf32> -> vector<112x448xf32>
    %47 = arith.addf %43, %46 : vector<112x448xf32>
    %c2_47 = arith.constant 2 : index
    %c0_48 = arith.constant 0 : index
    %c0_49 = arith.constant 0 : index
    %48 = vector.load %arg6[%c2_47, %c0_48, %c0_49] : memref<3x448x448xbf16, #tpu.memory_space<vmem>>, vector<1x448x448xbf16>
    %49 = vector.shape_cast %48 : vector<1x448x448xbf16> to vector<448x448xbf16>
    %cst_50 = arith.constant dense<0.000000e+00> : vector<112x448xf32>
    %50 = tpu.matmul %29, %49, %cst_50 {dimension_numbers = #tpu.dot_dimension_numbers<[1], [0], [0], [1], [0, 0, 1, 1], [], []>} : vector<112x448xbf16>, vector<448x448xbf16>, vector<112x448xf32> -> vector<112x448xf32>
    %51 = arith.addf %47, %50 : vector<112x448xf32>
    %52 = arith.maximumf %40, %51 : vector<112x448xf32>
    %c0_51 = arith.constant 0 : index
    %c0_52 = arith.constant 0 : index
    %53 = vector.load %arg7[%c0_51, %c0_52] : memref<1x448xf32, #tpu.memory_space<vmem>>, vector<1x448xf32>
    %54 = vector.broadcast %53 : vector<1x448xf32> to vector<112x448xf32>
    %55 = arith.addf %52, %54 : vector<112x448xf32>
    %cst_53 = arith.constant 0.000000e+00 : f32
    %56 = vector.broadcast %cst_53 : f32 to vector<112x448xf32>
    %57 = arith.maximumf %55, %56 : vector<112x448xf32>
    %58 = vector.shape_cast %57 : vector<112x448xf32> to vector<7x2x8x448xf32>
    %59 = vector.extract_strided_slice %58 {offsets = [0, 0, 0, 0], sizes = [7, 1, 8, 448], strides = [1, 1, 1, 1]} : vector<7x2x8x448xf32> to vector<7x1x8x448xf32>
    %60 = vector.shape_cast %59 : vector<7x1x8x448xf32> to vector<7x8x448xf32>
    %61 = vector.extract_strided_slice %58 {offsets = [0, 1, 0, 0], sizes = [7, 1, 8, 448], strides = [1, 1, 1, 1]} : vector<7x2x8x448xf32> to vector<7x1x8x448xf32>
    %62 = vector.shape_cast %61 : vector<7x1x8x448xf32> to vector<7x8x448xf32>
    %63 = arith.maximumf %60, %62 : vector<7x8x448xf32>
    %64 = vector.shape_cast %63 : vector<7x8x448xf32> to vector<56x448xf32>
    %65 = arith.truncf %64 : vector<56x448xf32> to vector<56x448xbf16>
    %c0_54 = arith.constant 0 : index
    %c0_55 = arith.constant 0 : index
    %66 = vector.load %arg8[%c0_54, %c0_55] : memref<448x112xbf16, #tpu.memory_space<vmem>>, vector<448x112xbf16>
    %cst_56 = arith.constant dense<0.000000e+00> : vector<56x112xf32>
    %67 = tpu.matmul %65, %66, %cst_56 {dimension_numbers = #tpu.dot_dimension_numbers<[1], [0], [0], [1], [0, 0, 1, 1], [], []>} : vector<56x448xbf16>, vector<448x112xbf16>, vector<56x112xf32> -> vector<56x112xf32>
    %68 = vector.shape_cast %67 : vector<56x112xf32> to vector<7x8x112xf32>
    %69 = vector.extract_strided_slice %68 {offsets = [0, 0, 0], sizes = [1, 8, 10], strides = [1, 1, 1]} : vector<7x8x112xf32> to vector<1x8x10xf32>
    %70 = vector.shape_cast %69 : vector<1x8x10xf32> to vector<8x10xf32>
    %c0_57 = arith.constant 0 : index
    %c0_58 = arith.constant 0 : index
    %71 = vector.load %arg9[%c0_57, %c0_58] : memref<1x10xf32, #tpu.memory_space<vmem>>, vector<1x10xf32>
    %72 = vector.broadcast %71 : vector<1x10xf32> to vector<8x10xf32>
    %73 = arith.addf %70, %72 : vector<8x10xf32>
    %74 = vector.extract_strided_slice %68 {offsets = [1, 0, 16], sizes = [1, 8, 10], strides = [1, 1, 1]} : vector<7x8x112xf32> to vector<1x8x10xf32>
    %75 = vector.shape_cast %74 : vector<1x8x10xf32> to vector<8x10xf32>
    %76 = arith.addf %73, %75 : vector<8x10xf32>
    %77 = vector.extract_strided_slice %68 {offsets = [2, 0, 32], sizes = [1, 8, 10], strides = [1, 1, 1]} : vector<7x8x112xf32> to vector<1x8x10xf32>
    %78 = vector.shape_cast %77 : vector<1x8x10xf32> to vector<8x10xf32>
    %79 = arith.addf %76, %78 : vector<8x10xf32>
    %80 = vector.extract_strided_slice %68 {offsets = [3, 0, 48], sizes = [1, 8, 10], strides = [1, 1, 1]} : vector<7x8x112xf32> to vector<1x8x10xf32>
    %81 = vector.shape_cast %80 : vector<1x8x10xf32> to vector<8x10xf32>
    %82 = arith.addf %79, %81 : vector<8x10xf32>
    %83 = vector.extract_strided_slice %68 {offsets = [4, 0, 64], sizes = [1, 8, 10], strides = [1, 1, 1]} : vector<7x8x112xf32> to vector<1x8x10xf32>
    %84 = vector.shape_cast %83 : vector<1x8x10xf32> to vector<8x10xf32>
    %85 = arith.addf %82, %84 : vector<8x10xf32>
    %86 = vector.extract_strided_slice %68 {offsets = [5, 0, 80], sizes = [1, 8, 10], strides = [1, 1, 1]} : vector<7x8x112xf32> to vector<1x8x10xf32>
    %87 = vector.shape_cast %86 : vector<1x8x10xf32> to vector<8x10xf32>
    %88 = arith.addf %85, %87 : vector<8x10xf32>
    %89 = vector.extract_strided_slice %68 {offsets = [6, 0, 96], sizes = [1, 8, 10], strides = [1, 1, 1]} : vector<7x8x112xf32> to vector<1x8x10xf32>
    %90 = vector.shape_cast %89 : vector<1x8x10xf32> to vector<8x10xf32>
    %91 = arith.addf %88, %90 : vector<8x10xf32>
    %c0_59 = arith.constant 0 : index
    %c0_60 = arith.constant 0 : index
    %92 = vector.load %arg10[%c0_59, %c0_60] : memref<8x10xf32, #tpu.memory_space<vmem>>, vector<8x10xf32>
    tpu.vector_store %arg10[%c0_59, %c0_60], %91 {strides = array<i32>} : memref<8x10xf32, #tpu.memory_space<vmem>>, vector<8x10xf32>,
    return
  }
  func.func @transform_0(%arg0: i32) -> (i32, i32, i32) {
    %c0_i32 = arith.constant 0 : i32
    %c0_i32_0 = arith.constant 0 : i32
    %c0_i32_1 = arith.constant 0 : i32
    return %c0_i32, %arg0, %c0_i32_0 : i32, i32, i32
  }
  func.func @transform_1(%arg0: i32) -> (i32, i32) {
    %c0_i32 = arith.constant 0 : i32
    %c0_i32_0 = arith.constant 0 : i32
    %c0_i32_1 = arith.constant 0 : i32
    return %c0_i32, %c0_i32_0 : i32, i32
  }
  func.func @transform_2(%arg0: i32) -> (i32, i32) {
    %c0_i32 = arith.constant 0 : i32
    %c0_i32_0 = arith.constant 0 : i32
    %c0_i32_1 = arith.constant 0 : i32
    return %c0_i32, %c0_i32_0 : i32, i32
  }
  func.func @transform_3(%arg0: i32) -> (i32, i32) {
    %c0_i32 = arith.constant 0 : i32
    %c0_i32_0 = arith.constant 0 : i32
    %c0_i32_1 = arith.constant 0 : i32
    return %c0_i32, %c0_i32_0 : i32, i32
  }
  func.func @transform_4(%arg0: i32) -> (i32, i32, i32) {
    %c0_i32 = arith.constant 0 : i32
    %c0_i32_0 = arith.constant 0 : i32
    %c0_i32_1 = arith.constant 0 : i32
    %c0_i32_2 = arith.constant 0 : i32
    return %c0_i32, %c0_i32_0, %c0_i32_1 : i32, i32, i32
  }
  func.func @transform_5(%arg0: i32) -> (i32, i32, i32) {
    %c0_i32 = arith.constant 0 : i32
    %c0_i32_0 = arith.constant 0 : i32
    %c0_i32_1 = arith.constant 0 : i32
    %c0_i32_2 = arith.constant 0 : i32
    return %c0_i32, %c0_i32_0, %c0_i32_1 : i32, i32, i32
  }
  func.func @transform_6(%arg0: i32) -> (i32, i32) {
    %c0_i32 = arith.constant 0 : i32
    %c0_i32_0 = arith.constant 0 : i32
    %c0_i32_1 = arith.constant 0 : i32
    return %c0_i32, %c0_i32_0 : i32, i32
  }
  func.func @transform_7(%arg0: i32) -> (i32, i32) {
    %c0_i32 = arith.constant 0 : i32
    %c0_i32_0 = arith.constant 0 : i32
    %c0_i32_1 = arith.constant 0 : i32
    return %c0_i32, %c0_i32_0 : i32, i32
  }
  func.func @transform_8(%arg0: i32) -> (i32, i32) {
    %c0_i32 = arith.constant 0 : i32
    %c0_i32_0 = arith.constant 0 : i32
    %c0_i32_1 = arith.constant 0 : i32
    return %c0_i32, %c0_i32_0 : i32, i32
  }
  func.func @transform_9(%arg0: i32) -> (i32, i32) {
    %c0_i32 = arith.constant 0 : i32
    %c0_i32_0 = arith.constant 0 : i32
    return %arg0, %c0_i32 : i32, i32
  }
}

</mosaic_0001>

<llo_original>
// kernel: cnn_forward_pallas.1
$region0: #{cnn_forward_pallas.1}
  #allocation0 [shape = 'u32[]', space=smem, size = 0x4, offset = 0x4, fixed_abs, tag = 'smem constant byte address 0x4 - core index']
  #allocation1 [shape = 'u32[144,128]{1,0:T(1,128)}', space=vmem, size = 0x12000, scoped, tag = 'internal scratch']
  #allocation2 [shape = 'bf16[16,8,448]{2,1,0:T(8,128)(2,1)}', space=vmem, size = 0x20000, scoped, tag = 'scratch operand']
  %s0 = inlined_call_operand.vmem [shape: bf16[28,8,84], index: 0, kind: input, shape index: {}]
  %s1 = inlined_call_operand.hbm [shape: bf16[84,448], index: 1, kind: input, shape index: {}]
  %s2 = inlined_call_operand.hbm [shape: bf16[84,448], index: 2, kind: input, shape index: {}]
  %s3 = inlined_call_operand.hbm [shape: f32[1,448], index: 3, kind: input, shape index: {}]
  %s4 = inlined_call_operand.hbm [shape: bf16[3,448,448], index: 4, kind: input, shape index: {}]
  %s5 = inlined_call_operand.hbm [shape: bf16[3,448,448], index: 5, kind: input, shape index: {}]
  %s6 = inlined_call_operand.hbm [shape: f32[1,448], index: 6, kind: input, shape index: {}]
  %s7 = inlined_call_operand.hbm [shape: bf16[448,112], index: 7, kind: input, shape index: {}]
  %s8 = inlined_call_operand.hbm [shape: f32[1,10], index: 8, kind: input, shape index: {}]
  %s9 = inlined_call_operand.vmem [shape: f32[8,10], index: 9, kind: output, shape index: {}]
  %s10 = sld [smem:[#allocation0]]
  $region78: #{cnn_forward_pallas.1} parent=0
    _
  %s12 = ssub.s32 1, %s10
  %s13 = scalar_select 0, %s12, %s10
  $region1: #{cnn_forward_pallas.1} parent=0
    #allocation3 [shape = 'u8[90112]{0}', space=vmem, size = 0x16000, scoped, tag = 'input window, operand 1, single buffered']
    #allocation4 [shape = 's32[1]{0}', space=sflag, size = 0x4, scoped, tag = 'scoped memory for cnn_forward_pallas.1']
    #allocation5 [shape = 'u8[90112]{0}', space=vmem, size = 0x16000, scoped, tag = 'input window, operand 2, single buffered']
    #allocation6 [shape = 's32[1]{0}', space=sflag, size = 0x4, scoped, tag = 'scoped memory for cnn_forward_pallas.1']
    #allocation7 [shape = 'u8[2048]{0}', space=vmem, size = 0x800, scoped, tag = 'input window, operand 3, single buffered']
    #allocation8 [shape = 'u8[1376256]{0}', space=vmem, size = 0x150000, scoped, tag = 'input window, operand 4, single buffered']
    #allocation9 [shape = 's32[1]{0}', space=sflag, size = 0x4, scoped, tag = 'scoped memory for cnn_forward_pallas.1']
    #allocation10 [shape = 'u8[1376256]{0}', space=vmem, size = 0x150000, scoped, tag = 'input window, operand 5, single buffered']
    #allocation11 [shape = 'u8[2048]{0}', space=vmem, size = 0x800, scoped, tag = 'input window, operand 6, single buffered']
    #allocation12 [shape = 's32[1]{0}', space=sflag, size = 0x4, scoped, tag = 'scoped memory for cnn_forward_pallas.1']
    #allocation13 [shape = 'u8[114688]{0}', space=vmem, size = 0x1c000, scoped, tag = 'input window, operand 7, single buffered']
    #allocation14 [shape = 'u8[512]{0}', space=vmem, size = 0x400, scoped, tag = 'input window, operand 8, single buffered']
    #allocation15 [shape = 's32[1]{0}', space=sflag, size = 0x4, scoped, tag = 'scoped memory for cnn_forward_pallas.1']
    %14 = vsyncpa [#allocation4], 0
    %15 = vsyncpa [#allocation6], 0
    %16 = vsyncpa [#allocation9], 0
    %17 = vsyncpa [#allocation12], 0
    %18 = vsyncpa [#allocation15], 0
    // Predicated region
    $region2: #{cnn_forward_pallas.1} parent=1 // pred_check
      _
    $region3: #{cnn_forward_pallas.1} parent=1 // pred_check_branch
      %20 = sbr.rel (0) target = $region5
    $region4: #{cnn_forward_pallas.1} parent=1 // pred_region
      _
    $region5: #{cnn_forward_pallas.1} parent=1 // pred_fallthru
      _
    // Predicated region
    $region6: #{cnn_forward_pallas.1} parent=1 // pred_check
      _
    $region7: #{cnn_forward_pallas.1} parent=1 // pred_check_branch
      %22 = sbr.rel (0) target = $region9
    $region8: #{cnn_forward_pallas.1} parent=1 // pred_region
      %s24 = ssub.s32 2816, 2816
      %25 = vsyncadd [#allocation4], %s24
      %s26 = sshll.u32 [#allocation3], 4
      %s27 = int_to_ptr.vmem [resolvable:$true] %s26
      %32 = dma.hbm_to_vmem [thread:$0]  %s1, 2816, %s27, [#allocation4], 256, 256, 16
    $region9: #{cnn_forward_pallas.1} parent=1 // pred_fallthru
      _
    // Predicated region
    $region10: #{cnn_forward_pallas.1} parent=1 // pred_check
      _
    $region11: #{cnn_forward_pallas.1} parent=1 // pred_check_branch
      %34 = sbr.rel (0) target = $region13
    $region12: #{cnn_forward_pallas.1} parent=1 // pred_region
      %s36 = ssub.s32 2816, 2816
      %37 = vsyncadd [#allocation6], %s36
      %s38 = sshll.u32 [#allocation5], 4
      %s39 = int_to_ptr.vmem [resolvable:$true] %s38
      %44 = dma.hbm_to_vmem [thread:$0]  %s2, 2816, %s39, [#allocation6], 256, 256, 16
    $region13: #{cnn_forward_pallas.1} parent=1 // pred_fallthru
      _
    // Predicated region
    $region14: #{cnn_forward_pallas.1} parent=1 // pred_check
      _
    $region15: #{cnn_forward_pallas.1} parent=1 // pred_check_branch
      %46 = sbr.rel (0) target = $region17
    $region16: #{cnn_forward_pallas.1} parent=1 // pred_region
      %s48 = ssub.s32 64, 64
      %49 = vsyncadd [#allocation6], %s48
      %s51 = sshll.u32 [#allocation7], 4
      %s52 = int_to_ptr.vmem [resolvable:$true] %s51
      %54 = dma.hbm_to_vmem [thread:$0]  %s3, 64, %s52, [#allocation6]
    $region17: #{cnn_forward_pallas.1} parent=1 // pred_fallthru
      _
    // Predicated region
    $region18: #{cnn_forward_pallas.1} parent=1 // pred_check
      _
    $region19: #{cnn_forward_pallas.1} parent=1 // pred_check_branch
      %56 = sbr.rel (0) target = $region21
    $region20: #{cnn_forward_pallas.1} parent=1 // pred_region
      %s58 = ssub.s32 43008, 43008
      %59 = vsyncadd [#allocation9], %s58
      %s60 = sshll.u32 [#allocation8], 4
      %s61 = int_to_ptr.vmem [resolvable:$true] %s60
      %66 = dma.hbm_to_vmem [thread:$0]  %s4, 43008, %s61, [#allocation9], 256, 256, 16
    $region21: #{cnn_forward_pallas.1} parent=1 // pred_fallthru
      _
    // Predicated region
    $region22: #{cnn_forward_pallas.1} parent=1 // pred_check
      _
    $region23: #{cnn_forward_pallas.1} parent=1 // pred_check_branch
      %68 = sbr.rel (0) target = $region25
    $region24: #{cnn_forward_pallas.1} parent=1 // pred_region
      %s70 = ssub.s32 43008, 43008
      %71 = vsyncadd [#allocation9], %s70
      %s72 = sshll.u32 [#allocation10], 4
      %s73 = int_to_ptr.vmem [resolvable:$true] %s72
      %78 = dma.hbm_to_vmem [thread:$0]  %s5, 43008, %s73, [#allocation9], 256, 256, 16
    $region25: #{cnn_forward_pallas.1} parent=1 // pred_fallthru
      _
    // Predicated region
    $region26: #{cnn_forward_pallas.1} parent=1 // pred_check
      _
    $region27: #{cnn_forward_pallas.1} parent=1 // pred_check_branch
      %80 = sbr.rel (0) target = $region29
    $region28: #{cnn_forward_pallas.1} parent=1 // pred_region
      %s82 = ssub.s32 64, 64
      %83 = vsyncadd [#allocation12], %s82
      %s85 = sshll.u32 [#allocation11], 4
      %s86 = int_to_ptr.vmem [resolvable:$true] %s85
      %88 = dma.hbm_to_vmem [thread:$0]  %s6, 64, %s86, [#allocation12]
    $region29: #{cnn_forward_pallas.1} parent=1 // pred_fallthru
      _
    // Predicated region
    $region30: #{cnn_forward_pallas.1} parent=1 // pred_check
      _
    $region31: #{cnn_forward_pallas.1} parent=1 // pred_check_branch
      %90 = sbr.rel (0) target = $region33
    $region32: #{cnn_forward_pallas.1} parent=1 // pred_region
      %s92 = ssub.s32 3584, 3584
      %93 = vsyncadd [#allocation12], %s92
      %s94 = sshll.u32 [#allocation13], 4
      %s95 = int_to_ptr.vmem [resolvable:$true] %s94
      %100 = dma.hbm_to_vmem [thread:$0]  %s7, 3584, %s95, [#allocation12], 64, 64, 4
    $region33: #{cnn_forward_pallas.1} parent=1 // pred_fallthru
      _
    // Predicated region
    $region34: #{cnn_forward_pallas.1} parent=1 // pred_check
      _
    $region35: #{cnn_forward_pallas.1} parent=1 // pred_check_branch
      %102 = sbr.rel (0) target = $region37
    $region36: #{cnn_forward_pallas.1} parent=1 // pred_region
      %s104 = ssub.s32 16, 16
      %105 = vsyncadd [#allocation15], %s104
      %s107 = sshll.u32 [#allocation14], 4
      %s108 = int_to_ptr.vmem [resolvable:$true] %s107
      %110 = dma.hbm_to_vmem [thread:$0]  %s8, 16, %s108, [#allocation15]
    $region37: #{cnn_forward_pallas.1} parent=1 // pred_fallthru
      _
    // Predicated region
    $region38: #{cnn_forward_pallas.1} parent=1 // pred_check
      _
    $region39: #{cnn_forward_pallas.1} parent=1 // pred_check_branch
      %112 = sbr.rel (0) target = $region41
    $region40: #{cnn_forward_pallas.1} parent=1 // pred_region
      %113 = dma.done [#allocation4], 2816
    $region41: #{cnn_forward_pallas.1} parent=1 // pred_fallthru
      _
    // Predicated region
    $region42: #{cnn_forward_pallas.1} parent=1 // pred_check
      _
    $region43: #{cnn_forward_pallas.1} parent=1 // pred_check_branch
      %115 = sbr.rel (0) target = $region45
    $region44: #{cnn_forward_pallas.1} parent=1 // pred_region
      %116 = dma.done [#allocation6], 2816
    $region45: #{cnn_forward_pallas.1} parent=1 // pred_fallthru
      _
    // Predicated region
    $region46: #{cnn_forward_pallas.1} parent=1 // pred_check
      _
    $region47: #{cnn_forward_pallas.1} parent=1 // pred_check_branch
      %118 = sbr.rel (0) target = $region49
    $region48: #{cnn_forward_pallas.1} parent=1 // pred_region
      %119 = dma.done [#allocation6], 64
    $region49: #{cnn_forward_pallas.1} parent=1 // pred_fallthru
      _
    // Predicated region
    $region50: #{cnn_forward_pallas.1} parent=1 // pred_check
      _
    $region51: #{cnn_forward_pallas.1} parent=1 // pred_check_branch
      %121 = sbr.rel (0) target = $region53
    $region52: #{cnn_forward_pallas.1} parent=1 // pred_region
      %122 = dma.done [#allocation9], 43008
    $region53: #{cnn_forward_pallas.1} parent=1 // pred_fallthru
      _
    // Predicated region
    $region54: #{cnn_forward_pallas.1} parent=1 // pred_check
      _
    $region55: #{cnn_forward_pallas.1} parent=1 // pred_check_branch
      %124 = sbr.rel (0) target = $region57
    $region56: #{cnn_forward_pallas.1} parent=1 // pred_region
      %125 = dma.done [#allocation9], 43008
    $region57: #{cnn_forward_pallas.1} parent=1 // pred_fallthru
      _
    // Predicated region
    $region58: #{cnn_forward_pallas.1} parent=1 // pred_check
      _
    $region59: #{cnn_forward_pallas.1} parent=1 // pred_check_branch
      %127 = sbr.rel (0) target = $region61
    $region60: #{cnn_forward_pallas.1} parent=1 // pred_region
      %128 = dma.done [#allocation12], 64
    $region61: #{cnn_forward_pallas.1} parent=1 // pred_fallthru
      _
    // Predicated region
    $region62: #{cnn_forward_pallas.1} parent=1 // pred_check
      _
    $region63: #{cnn_forward_pallas.1} parent=1 // pred_check_branch
      %130 = sbr.rel (0) target = $region65
    $region64: #{cnn_forward_pallas.1} parent=1 // pred_region
      %131 = dma.done [#allocation12], 3584
    $region65: #{cnn_forward_pallas.1} parent=1 // pred_fallthru
      _
    // Predicated region
    $region66: #{cnn_forward_pallas.1} parent=1 // pred_check
      _
    $region67: #{cnn_forward_pallas.1} parent=1 // pred_check_branch
      %133 = sbr.rel (0) target = $region69
    $region68: #{cnn_forward_pallas.1} parent=1 // pred_region
      %134 = dma.done [#allocation15], 16
    $region69: #{cnn_forward_pallas.1} parent=1 // pred_fallthru
      _
    %v136 = vld [vmem:[%s0] sm:$0xf]
    %v137 = vld [vmem:[%s0 + $0x4] sm:$0xf]
    %v138 = vld [vmem:[%s0 + $0x8] sm:$0xf]
    %v139 = vld [vmem:[%s0 + $0xc] sm:$0xf]
    %v140 = vld [vmem:[%s0 + $0x10] sm:$0xf]
    %v141 = vld [vmem:[%s0 + $0x14] sm:$0xf]
    %v142 = vld [vmem:[%s0 + $0x18] sm:$0xf]
    %v143 = vld [vmem:[%s0 + $0x1c] sm:$0xf]
    %v144 = vld [vmem:[%s0 + $0x20] sm:$0xf]
    %v145 = vld [vmem:[%s0 + $0x24] sm:$0xf]
    %v146 = vld [vmem:[%s0 + $0x28] sm:$0xf]
    %v147 = vld [vmem:[%s0 + $0x2c] sm:$0xf]
    %v148 = vld [vmem:[%s0 + $0x30] sm:$0xf]
    %v149 = vld [vmem:[%s0 + $0x34] sm:$0xf]
    %v150 = vld [vmem:[%s0 + $0x38] sm:$0xf]
    %v151 = vld [vmem:[%s0 + $0x3c] sm:$0xf]
    %v152 = vld [vmem:[%s0 + $0x40] sm:$0xf]
    %v153 = vld [vmem:[%s0 + $0x44] sm:$0xf]
    %v154 = vld [vmem:[%s0 + $0x48] sm:$0xf]
    %v155 = vld [vmem:[%s0 + $0x4c] sm:$0xf]
    %v156 = vld [vmem:[%s0 + $0x50] sm:$0xf]
    %v157 = vld [vmem:[%s0 + $0x54] sm:$0xf]
    %v158 = vld [vmem:[%s0 + $0x58] sm:$0xf]
    %v159 = vld [vmem:[%s0 + $0x5c] sm:$0xf]
    %v160 = vld [vmem:[%s0 + $0x60] sm:$0xf]
    %v161 = vld [vmem:[%s0 + $0x64] sm:$0xf]
    %v162 = vld [vmem:[%s0 + $0x68] sm:$0xf]
    %v163 = vld [vmem:[%s0 + $0x6c] sm:$0xf]
    %v164 = vld [vmem:[#allocation3] sm:$0xff]
    %v165 = vld [vmem:[#allocation3 + $0x8] sm:$0xff]
    %v166 = vld [vmem:[#allocation3 + $0x10] sm:$0xff]
    %v167 = vld [vmem:[#allocation3 + $0x18] sm:$0xff]
    %v168 = vld [vmem:[#allocation3 + $0x20] sm:$0xff]
    %v169 = vld [vmem:[#allocation3 + $0x28] sm:$0xff]
    %v170 = vld [vmem:[#allocation3 + $0x30] sm:$0xff]
    %v171 = vld [vmem:[#allocation3 + $0x38] sm:$0xff]
    %v172 = vld [vmem:[#allocation3 + $0x40] sm:$0xff]
    %v173 = vld [vmem:[#allocation3 + $0x48] sm:$0xff]
    %v174 = vld [vmem:[#allocation3 + $0x50] sm:$0xff]
    %v175 = vld [vmem:[#allocation3 + $0x58] sm:$0xff]
    %v176 = vld [vmem:[#allocation3 + $0x60] sm:$0xff]
    %v177 = vld [vmem:[#allocation3 + $0x68] sm:$0xff]
    %v178 = vld [vmem:[#allocation3 + $0x70] sm:$0xff]
    %v179 = vld [vmem:[#allocation3 + $0x78] sm:$0xff]
    %v180 = vld [vmem:[#allocation3 + $0x80] sm:$0xff]
    %v181 = vld [vmem:[#allocation3 + $0x88] sm:$0xff]
    %v182 = vld [vmem:[#allocation3 + $0x90] sm:$0xff]
    %v183 = vld [vmem:[#allocation3 + $0x98] sm:$0xff]
    %v184 = vld [vmem:[#allocation3 + $0xa0] sm:$0x33]
    %v185 = vld [vmem:[#allocation3 + $0xa8] sm:$0x33]
    %v214 = vunpack.c.l.b16 %v136
    %v215 = vunpack.c.l.b16 %v137
    %v216 = vunpack.c.l.b16 %v138
    %v217 = vunpack.c.l.b16 %v139
    %v218 = vunpack.c.l.b16 %v140
    %v219 = vunpack.c.l.b16 %v141
    %v220 = vunpack.c.l.b16 %v142
    %v221 = vunpack.c.l.b16 %v143
    %v222 = vunpack.c.l.b16 %v144
    %v223 = vunpack.c.l.b16 %v145
    %v224 = vunpack.c.l.b16 %v146
    %v225 = vunpack.c.l.b16 %v147
    %v226 = vunpack.c.l.b16 %v148
    %v227 = vunpack.c.l.b16 %v149
    %v228 = vunpack.c.l.b16 %v150
    %v229 = vunpack.c.l.b16 %v151
    %v230 = vunpack.c.l.b16 %v152
    %v231 = vunpack.c.l.b16 %v153
    %v232 = vunpack.c.l.b16 %v154
    %v233 = vunpack.c.l.b16 %v155
    %v234 = vunpack.c.l.b16 %v156
    %v235 = vunpack.c.l.b16 %v157
    %v236 = vunpack.c.l.b16 %v158
    %v237 = vunpack.c.l.b16 %v159
    %v238 = vunpack.c.l.b16 %v160
    %v239 = vunpack.c.l.b16 %v161
    %v240 = vunpack.c.l.b16 %v162
    %v241 = vunpack.c.l.b16 %v163
    %v242 = vpack.c.b16 %v215, %v214
    %v243 = vpack.c.b16 %v217, %v216
    %v244 = vpack.c.b16 %v219, %v218
    %v245 = vpack.c.b16 %v221, %v220
    %v246 = vpack.c.b16 %v223, %v222
    %v247 = vpack.c.b16 %v225, %v224
    %v248 = vpack.c.b16 %v227, %v226
    %v249 = vpack.c.b16 %v229, %v228
    %v250 = vpack.c.b16 %v231, %v230
    %v251 = vpack.c.b16 %v233, %v232
    %v252 = vpack.c.b16 %v235, %v234
    %v253 = vpack.c.b16 %v237, %v236
    %v254 = vpack.c.b16 %v239, %v238
    %v255 = vpack.c.b16 %v241, %v240
    %v278 = vunpack.c.l.b16 %v164
    %v279 = vunpack.c.h.b16 %v164
    %v280 = vunpack.c.l.b16 %v165
    %v281 = vunpack.c.h.b16 %v165
    %v282 = vunpack.c.l.b16 %v166
    %v283 = vunpack.c.h.b16 %v166
    %v284 = vunpack.c.l.b16 %v167
    %v285 = vunpack.c.h.b16 %v167
    %v286 = vunpack.c.l.b16 %v168
    %v287 = vunpack.c.h.b16 %v168
    %v288 = vunpack.c.l.b16 %v169
    %v289 = vunpack.c.h.b16 %v169
    %v290 = vunpack.c.l.b16 %v170
    %v291 = vunpack.c.h.b16 %v170
    %v292 = vunpack.c.l.b16 %v171
    %v293 = vunpack.c.h.b16 %v171
    %v294 = vunpack.c.l.b16 %v172
    %v295 = vunpack.c.h.b16 %v172
    %v296 = vunpack.c.l.b16 %v173
    %v297 = vunpack.c.h.b16 %v173
    %v298 = vunpack.c.l.b16 %v174
    %v299 = vunpack.c.h.b16 %v174
    %v300 = vunpack.c.l.b16 %v175
    %v301 = vunpack.c.h.b16 %v175
    %v302 = vunpack.c.l.b16 %v176
    %v303 = vunpack.c.h.b16 %v176
    %v304 = vunpack.c.l.b16 %v177
    %v305 = vunpack.c.h.b16 %v177
    %v306 = vunpack.c.l.b16 %v178
    %v307 = vunpack.c.h.b16 %v178
    %v308 = vunpack.c.l.b16 %v179
    %v309 = vunpack.c.h.b16 %v179
    %v310 = vunpack.c.l.b16 %v180
    %v311 = vunpack.c.h.b16 %v180
    %v312 = vunpack.c.l.b16 %v181
    %v313 = vunpack.c.h.b16 %v181
    %v314 = vunpack.c.l.b16 %v182
    %v315 = vunpack.c.h.b16 %v182
    %v316 = vunpack.c.l.b16 %v183
    %v317 = vunpack.c.h.b16 %v183
    %v318 = vunpack.c.l.b16 %v184
    %v319 = vunpack.c.h.b16 %v184
    %v320 = vunpack.c.l.b16 %v185
    %v321 = vunpack.c.h.b16 %v185
    %v322 = vpack.c.b16 %v282, %v278
    %v323 = vpack.c.b16 %v283, %v279
    %v324 = vpack.c.b16 %v284, %v280
    %v325 = vpack.c.b16 %v285, %v281
    %v326 = vpack.c.b16 %v290, %v286
    %v327 = vpack.c.b16 %v291, %v287
    %v328 = vpack.c.b16 %v292, %v288
    %v329 = vpack.c.b16 %v293, %v289
    %v330 = vpack.c.b16 %v298, %v294
    %v331 = vpack.c.b16 %v299, %v295
    %v332 = vpack.c.b16 %v300, %v296
    %v333 = vpack.c.b16 %v301, %v297
    %v334 = vpack.c.b16 %v306, %v302
    %v335 = vpack.c.b16 %v307, %v303
    %v336 = vpack.c.b16 %v308, %v304
    %v337 = vpack.c.b16 %v309, %v305
    %v338 = vpack.c.b16 %v314, %v310
    %v339 = vpack.c.b16 %v315, %v311
    %v340 = vpack.c.b16 %v316, %v312
    %v341 = vpack.c.b16 %v317, %v313
    %v342 = vpack.c.b16 %v318, %v318
    %v343 = vpack.c.b16 %v319, %v319
    %v344 = vpack.c.b16 %v320, %v320
    %v345 = vpack.c.b16 %v321, %v321
    %vm366 = vcmask 687104
    %v368 = vsel %vm366, %v242, 0
    %v371 = vsel %vm366, %v243, 0
    %v374 = vsel %vm366, %v244, 0
    %v377 = vsel %vm366, %v245, 0
    %v380 = vsel %vm366, %v246, 0
    %v383 = vsel %vm366, %v247, 0
    %v386 = vsel %vm366, %v248, 0
    %v389 = vsel %vm366, %v249, 0
    %v392 = vsel %vm366, %v250, 0
    %v395 = vsel %vm366, %v251, 0
    %v398 = vsel %vm366, %v252, 0
    %v401 = vsel %vm366, %v253, 0
    %v404 = vsel %vm366, %v254, 0
    %v407 = vsel %vm366, %v255, 0
    %vm409 = vcmask 1041408
    %v411 = vsel %vm409, %v342, 0
    %v414 = vsel %vm409, %v343, 0
    %v417 = vsel %vm409, %v344, 0
    %v420 = vsel %vm409, %v345, 0
    %422 = vmatprep.subr.bf16.mxu0 %v323
    %423 = vmatpush1.bf16.msra.mxu0 %v322
    %424 = vmatprep.subr.bf16.mxu0 %v327
    %425 = vmatpush1.bf16.msra.mxu0 %v326
    %426 = vmatprep.subr.bf16.mxu0 %v331
    %427 = vmatpush1.bf16.msra.mxu0 %v330
    %428 = vmatprep.subr.bf16.mxu0 %v335
    %429 = vmatpush1.bf16.msra.mxu0 %v334
    %430 = vmatprep.subr.bf16.mxu0 %v339
    %431 = vmatpush1.bf16.msra.mxu0 %v338
    %432 = vmatprep.subr.bf16.mxu0 %v414
    %433 = vmatpush1.bf16.msra.mxu0 %v411
    %434 = vmatprep.subr.bf16.mxu0 0
    %435 = vmatpush1.bf16.msra.mxu0 0
    %436 = vmatprep.subr.bf16.mxu0 0
    %437 = vmatpush1.bf16.msra.mxu0 0
    %438 = vmatprep.subr.bf16.mxu0 0
    %439 = vmatpush1.bf16.msra.mxu0 0
    %440 = vmatprep.subr.bf16.mxu0 0
    %441 = vmatpush1.bf16.msra.mxu0 0
    %442 = vmatprep.subr.bf16.mxu0 0
    %443 = vmatpush1.bf16.msra.mxu0 0
    %444 = vmatprep.subr.bf16.mxu0 0
    %445 = vmatpush1.bf16.msra.mxu0 0
    %446 = vmatprep.subr.bf16.mxu0 0
    %447 = vmatpush1.bf16.msra.mxu0 0
    %448 = vmatprep.subr.bf16.mxu0 0
    %449 = vmatpush1.bf16.msra.mxu0 0
    %450 = vmatprep.subr.bf16.mxu0 0
    %451 = vmatpush1.bf16.msra.mxu0 0
    %452 = vmatprep.subr.bf16.mxu0 0
    %453 = vmatpush1.bf16.msra.mxu0 0
    %454 = vmatprep.mubr.bf16.mxu0 0
    %455 = vmatmul.mubr.bf16.gmra.mrb[0].mxu0 %v368
    %v456 = vpop.f32.mrb[0].mxu0
    %v457 = vadd.f32 0.0, %v456
    %v458 = vpop.f32.mrb[0].mxu0
    %v459 = vadd.f32 0.0, %v458
    %v460 = vpop.f32.mrb[0].mxu0
    %v461 = vadd.f32 0.0, %v460
    %v462 = vpop.f32.mrb[0].mxu0
    %v463 = vadd.f32 0.0, %v462
    %464 = vmatprep.mubr.bf16.mxu0 0
    %465 = vmatmul.mubr.bf16.gmra.mrb[0].mxu0 %v371
    %v466 = vpop.f32.mrb[0].mxu0
    %v467 = vadd.f32 0.0, %v466
    %v468 = vpop.f32.mrb[0].mxu0
    %v469 = vadd.f32 0.0, %v468
    %v470 = vpop.f32.mrb[0].mxu0
    %v471 = vadd.f32 0.0, %v470
    %v472 = vpop.f32.mrb[0].mxu0
    %v473 = vadd.f32 0.0, %v472
    %474 = vmatprep.mubr.bf16.mxu0 0
    %475 = vmatmul.mubr.bf16.gmra.mrb[0].mxu0 %v374
    %v476 = vpop.f32.mrb[0].mxu0
    %v477 = vadd.f32 0.0, %v476
    %v478 = vpop.f32.mrb[0].mxu0
    %v479 = vadd.f32 0.0, %v478
    %v480 = vpop.f32.mrb[0].mxu0
    %v481 = vadd.f32 0.0, %v480
    %v482 = vpop.f32.mrb[0].mxu0
    %v483 = vadd.f32 0.0, %v482
    %484 = vmatprep.mubr.bf16.mxu0 0
    %485 = vmatmul.mubr.bf16.gmra.mrb[0].mxu0 %v377
    %v486 = vpop.f32.mrb[0].mxu0
    %v487 = vadd.f32 0.0, %v486
    %v488 = vpop.f32.mrb[0].mxu0
    %v489 = vadd.f32 0.0, %v488
    %v490 = vpop.f32.mrb[0].mxu0
    %v491 = vadd.f32 0.0, %v490
    %v492 = vpop.f32.mrb[0].mxu0
    %v493 = vadd.f32 0.0, %v492
    %494 = vmatprep.mubr.bf16.mxu0 0
    %495 = vmatmul.mubr.bf16.gmra.mrb[0].mxu0 %v380
    %v496 = vpop.f32.mrb[0].mxu0
    %v497 = vadd.f32 0.0, %v496
    %v498 = vpop.f32.mrb[0].mxu0
    %v499 = vadd.f32 0.0, %v498
    %v500 = vpop.f32.mrb[0].mxu0
    %v501 = vadd.f32 0.0, %v500
    %v502 = vpop.f32.mrb[0].mxu0
    %v503 = vadd.f32 0.0, %v502
    %504 = vmatprep.mubr.bf16.mxu0 0
    %505 = vmatmul.mubr.bf16.gmra.mrb[0].mxu0 %v383
    %v506 = vpop.f32.mrb[0].mxu0
    %v507 = vadd.f32 0.0, %v506
    %v508 = vpop.f32.mrb[0].mxu0
    %v509 = vadd.f32 0.0, %v508
    %v510 = vpop.f32.mrb[0].mxu0
    %v511 = vadd.f32 0.0, %v510
    %v512 = vpop.f32.mrb[0].mxu0
    %v513 = vadd.f32 0.0, %v512
    %514 = vmatprep.mubr.bf16.mxu0 0
    %515 = vmatmul.mubr.bf16.gmra.mrb[0].mxu0 %v386
    %v516 = vpop.f32.mrb[0].mxu0
    %v517 = vadd.f32 0.0, %v516
    %v518 = vpop.f32.mrb[0].mxu0
    %v519 = vadd.f32 0.0, %v518
    %v520 = vpop.f32.mrb[0].mxu0
    %v521 = vadd.f32 0.0, %v520
    %v522 = vpop.f32.mrb[0].mxu0
    %v523 = vadd.f32 0.0, %v522
    %524 = vmatprep.mubr.bf16.mxu0 0
    %525 = vmatmul.mubr.bf16.gmra.mrb[0].mxu0 %v389
    %v526 = vpop.f32.mrb[0].mxu0
    %v527 = vadd.f32 0.0, %v526
    %v528 = vpop.f32.mrb[0].mxu0
    %v529 = vadd.f32 0.0, %v528
    %v530 = vpop.f32.mrb[0].mxu0
    %v531 = vadd.f32 0.0, %v530
    %v532 = vpop.f32.mrb[0].mxu0
    %v533 = vadd.f32 0.0, %v532
    %534 = vmatprep.mubr.bf16.mxu0 0
    %535 = vmatmul.mubr.bf16.gmra.mrb[0].mxu0 %v392
    %v536 = vpop.f32.mrb[0].mxu0
    %v537 = vadd.f32 0.0, %v536
    %v538 = vpop.f32.mrb[0].mxu0
    %v539 = vadd.f32 0.0, %v538
    %v540 = vpop.f32.mrb[0].mxu0
    %v541 = vadd.f32 0.0, %v540
    %v542 = vpop.f32.mrb[0].mxu0
    %v543 = vadd.f32 0.0, %v542
    %544 = vmatprep.mubr.bf16.mxu0 0
    %545 = vmatmul.mubr.bf16.gmra.mrb[0].mxu0 %v395
    %v546 = vpop.f32.mrb[0].mxu0
    %v547 = vadd.f32 0.0, %v546
    %v548 = vpop.f32.mrb[0].mxu0
    %v549 = vadd.f32 0.0, %v548
    %v550 = vpop.f32.mrb[0].mxu0
    %v551 = vadd.f32 0.0, %v550
    %v552 = vpop.f32.mrb[0].mxu0
    %v553 = vadd.f32 0.0, %v552
    %554 = vmatprep.mubr.bf16.mxu0 0
    %555 = vmatmul.mubr.bf16.gmra.mrb[0].mxu0 %v398
    %v556 = vpop.f32.mrb[0].mxu0
    %v557 = vadd.f32 0.0, %v556
    %v558 = vpop.f32.mrb[0].mxu0
    %v559 = vadd.f32 0.0, %v558
    %v560 = vpop.f32.mrb[0].mxu0
    %v561 = vadd.f32 0.0, %v560
    %v562 = vpop.f32.mrb[0].mxu0
    %v563 = vadd.f32 0.0, %v562
    %564 = vmatprep.mubr.bf16.mxu0 0
    %565 = vmatmul.mubr.bf16.gmra.mrb[0].mxu0 %v401
    %v566 = vpop.f32.mrb[0].mxu0
    %v567 = vadd.f32 0.0, %v566
    %v568 = vpop.f32.mrb[0].mxu0
    %v569 = vadd.f32 0.0, %v568
    %v570 = vpop.f32.mrb[0].mxu0
    %v571 = vadd.f32 0.0, %v570
    %v572 = vpop.f32.mrb[0].mxu0
    %v573 = vadd.f32 0.0, %v572
    %574 = vmatprep.mubr.bf16.mxu0 0
    %575 = vmatmul.mubr.bf16.gmra.mrb[0].mxu0 %v404
    %v576 = vpop.f32.mrb[0].mxu0
    %v577 = vadd.f32 0.0, %v576
    %v578 = vpop.f32.mrb[0].mxu0
    %v579 = vadd.f32 0.0, %v578
    %v580 = vpop.f32.mrb[0].mxu0
    %v581 = vadd.f32 0.0, %v580
    %v582 = vpop.f32.mrb[0].mxu0
    %v583 = vadd.f32 0.0, %v582
    %584 = vmatprep.mubr.bf16.mxu0 0
    %585 = vmatmul.mubr.bf16.gmra.mrb[0].mxu0 %v407
    %v586 = vpop.f32.mrb[0].mxu0
    %v587 = vadd.f32 0.0, %v586
    %v588 = vpop.f32.mrb[0].mxu0
    %v589 = vadd.f32 0.0, %v588
    %v590 = vpop.f32.mrb[0].mxu0
    %v591 = vadd.f32 0.0, %v590
    %v592 = vpop.f32.mrb[0].mxu0
    %v593 = vadd.f32 0.0, %v592
    %594 = vdwg.mxu0
    %595 = vmatprep.subr.bf16.mxu0 %v325
    %596 = vmatpush1.bf16.msra.mxu0 %v324
    %597 = vmatprep.subr.bf16.mxu0 %v329
    %598 = vmatpush1.bf16.msra.mxu0 %v328
    %599 = vmatprep.subr.bf16.mxu0 %v333
    %600 = vmatpush1.bf16.msra.mxu0 %v332
    %601 = vmatprep.subr.bf16.mxu0 %v337
    %602 = vmatpush1.bf16.msra.mxu0 %v336
    %603 = vmatprep.subr.bf16.mxu0 %v341
    %604 = vmatpush1.bf16.msra.mxu0 %v340
    %605 = vmatprep.subr.bf16.mxu0 %v420
    %606 = vmatpush1.bf16.msra.mxu0 %v417
    %607 = vmatprep.subr.bf16.mxu0 0
    %608 = vmatpush1.bf16.msra.mxu0 0
    %609 = vmatprep.subr.bf16.mxu0 0
    %610 = vmatpush1.bf16.msra.mxu0 0
    %611 = vmatprep.subr.bf16.mxu0 0
    %612 = vmatpush1.bf16.msra.mxu0 0
    %613 = vmatprep.subr.bf16.mxu0 0
    %614 = vmatpush1.bf16.msra.mxu0 0
    %615 = vmatprep.subr.bf16.mxu0 0
    %616 = vmatpush1.bf16.msra.mxu0 0
    %617 = vmatprep.subr.bf16.mxu0 0
    %618 = vmatpush1.bf16.msra.mxu0 0
    %619 = vmatprep.subr.bf16.mxu0 0
    %620 = vmatpush1.bf16.msra.mxu0 0
    %621 = vmatprep.subr.bf16.mxu0 0
    %622 = vmatpush1.bf16.msra.mxu0 0
    %623 = vmatprep.subr.bf16.mxu0 0
    %624 = vmatpush1.bf16.msra.mxu0 0
    %625 = vmatprep.subr.bf16.mxu0 0
    %626 = vmatpush1.bf16.msra.mxu0 0
    %627 = vmatprep.mubr.bf16.mxu0 0
    %628 = vmatmul.mubr.bf16.gmra.mrb[0].mxu0 %v368
    %v629 = vpop.f32.mrb[0].mxu0
    %v630 = vadd.f32 0.0, %v629
    %v631 = vpop.f32.mrb[0].mxu0
    %v632 = vadd.f32 0.0, %v631
    %v633 = vpop.f32.mrb[0].mxu0
    %v634 = vadd.f32 0.0, %v633
    %v635 = vpop.f32.mrb[0].mxu0
    %v636 = vadd.f32 0.0, %v635
    %637 = vmatprep.mubr.bf16.mxu0 0
    %638 = vmatmul.mubr.bf16.gmra.mrb[0].mxu0 %v371
    %v639 = vpop.f32.mrb[0].mxu0
    %v640 = vadd.f32 0.0, %v639
    %v641 = vpop.f32.mrb[0].mxu0
    %v642 = vadd.f32 0.0, %v641
    %v643 = vpop.f32.mrb[0].mxu0
    %v644 = vadd.f32 0.0, %v643
    %v645 = vpop.f32.mrb[0].mxu0
    %v646 = vadd.f32 0.0, %v645
    %647 = vmatprep.mubr.bf16.mxu0 0
    %648 = vmatmul.mubr.bf16.gmra.mrb[0].mxu0 %v374
    %v649 = vpop.f32.mrb[0].mxu0
    %v650 = vadd.f32 0.0, %v649
    %v651 = vpop.f32.mrb[0].mxu0
    %v652 = vadd.f32 0.0, %v651
    %v653 = vpop.f32.mrb[0].mxu0
    %v654 = vadd.f32 0.0, %v653
    %v655 = vpop.f32.mrb[0].mxu0
    %v656 = vadd.f32 0.0, %v655
    %657 = vmatprep.mubr.bf16.mxu0 0
    %658 = vmatmul.mubr.bf16.gmra.mrb[0].mxu0 %v377
    %v659 = vpop.f32.mrb[0].mxu0
    %v660 = vadd.f32 0.0, %v659
    %v661 = vpop.f32.mrb[0].mxu0
    %v662 = vadd.f32 0.0, %v661
    %v663 = vpop.f32.mrb[0].mxu0
    %v664 = vadd.f32 0.0, %v663
    %v665 = vpop.f32.mrb[0].mxu0
    %v666 = vadd.f32 0.0, %v665
    %667 = vmatprep.mubr.bf16.mxu0 0
    %668 = vmatmul.mubr.bf16.gmra.mrb[0].mxu0 %v380
    %v669 = vpop.f32.mrb[0].mxu0
    %v670 = vadd.f32 0.0, %v669
    %v671 = vpop.f32.mrb[0].mxu0
    %v672 = vadd.f32 0.0, %v671
    %v673 = vpop.f32.mrb[0].mxu0
    %v674 = vadd.f32 0.0, %v673
    %v675 = vpop.f32.mrb[0].mxu0
    %v676 = vadd.f32 0.0, %v675
    %677 = vmatprep.mubr.bf16.mxu0 0
    %678 = vmatmul.mubr.bf16.gmra.mrb[0].mxu0 %v383
    %v679 = vpop.f32.mrb[0].mxu0
    %v680 = vadd.f32 0.0, %v679
    %v681 = vpop.f32.mrb[0].mxu0
    %v682 = vadd.f32 0.0, %v681
    %v683 = vpop.f32.mrb[0].mxu0
    %v684 = vadd.f32 0.0, %v683
    %v685 = vpop.f32.mrb[0].mxu0
    %v686 = vadd.f32 0.0, %v685
    %687 = vmatprep.mubr.bf16.mxu0 0
    %688 = vmatmul.mubr.bf16.gmra.mrb[0].mxu0 %v386
    %v689 = vpop.f32.mrb[0].mxu0
    %v690 = vadd.f32 0.0, %v689
    %v691 = vpop.f32.mrb[0].mxu0
    %v692 = vadd.f32 0.0, %v691
    %v693 = vpop.f32.mrb[0].mxu0
    %v694 = vadd.f32 0.0, %v693
    %v695 = vpop.f32.mrb[0].mxu0
    %v696 = vadd.f32 0.0, %v695
    %697 = vmatprep.mubr.bf16.mxu0 0
    %698 = vmatmul.mubr.bf16.gmra.mrb[0].mxu0 %v389
    %v699 = vpop.f32.mrb[0].mxu0
    %v700 = vadd.f32 0.0, %v699
    %v701 = vpop.f32.mrb[0].mxu0
    %v702 = vadd.f32 0.0, %v701
    %v703 = vpop.f32.mrb[0].mxu0
    %v704 = vadd.f32 0.0, %v703
    %v705 = vpop.f32.mrb[0].mxu0
    %v706 = vadd.f32 0.0, %v705
    %707 = vmatprep.mubr.bf16.mxu0 0
    %708 = vmatmul.mubr.bf16.gmra.mrb[0].mxu0 %v392
    %v709 = vpop.f32.mrb[0].mxu0
    %v710 = vadd.f32 0.0, %v709
    %v711 = vpop.f32.mrb[0].mxu0
    %v712 = vadd.f32 0.0, %v711
    %v713 = vpop.f32.mrb[0].mxu0
    %v714 = vadd.f32 0.0, %v713
    %v715 = vpop.f32.mrb[0].mxu0
    %v716 = vadd.f32 0.0, %v715
    %717 = vmatprep.mubr.bf16.mxu0 0
    %718 = vmatmul.mubr.bf16.gmra.mrb[0].mxu0 %v395
    %v719 = vpop.f32.mrb[0].mxu0
    %v720 = vadd.f32 0.0, %v719
    %v721 = vpop.f32.mrb[0].mxu0
    %v722 = vadd.f32 0.0, %v721
    %v723 = vpop.f32.mrb[0].mxu0
    %v724 = vadd.f32 0.0, %v723
    %v725 = vpop.f32.mrb[0].mxu0
    %v726 = vadd.f32 0.0, %v725
    %727 = vmatprep.mubr.bf16.mxu0 0
    %728 = vmatmul.mubr.bf16.gmra.mrb[0].mxu0 %v398
    %v729 = vpop.f32.mrb[0].mxu0
    %v730 = vadd.f32 0.0, %v729
    %v731 = vpop.f32.mrb[0].mxu0
    %v732 = vadd.f32 0.0, %v731
    %v733 = vpop.f32.mrb[0].mxu0
    %v734 = vadd.f32 0.0, %v733
    %v735 = vpop.f32.mrb[0].mxu0
    %v736 = vadd.f32 0.0, %v735
    %737 = vmatprep.mubr.bf16.mxu0 0
    %738 = vmatmul.mubr.bf16.gmra.mrb[0].mxu0 %v401
    %v739 = vpop.f32.mrb[0].mxu0
    %v740 = vadd.f32 0.0, %v739
    %v741 = vpop.f32.mrb[0].mxu0
    %v742 = vadd.f32 0.0, %v741
    %v743 = vpop.f32.mrb[0].mxu0
    %v744 = vadd.f32 0.0, %v743
    %v745 = vpop.f32.mrb[0].mxu0
    %v746 = vadd.f32 0.0, %v745
    %747 = vmatprep.mubr.bf16.mxu0 0
    %748 = vmatmul.mubr.bf16.gmra.mrb[0].mxu0 %v404
    %v749 = vpop.f32.mrb[0].mxu0
    %v750 = vadd.f32 0.0, %v749
    %v751 = vpop.f32.mrb[0].mxu0
    %v752 = vadd.f32 0.0, %v751
    %v753 = vpop.f32.mrb[0].mxu0
    %v754 = vadd.f32 0.0, %v753
    %v755 = vpop.f32.mrb[0].mxu0
    %v756 = vadd.f32 0.0, %v755
    %757 = vmatprep.mubr.bf16.mxu0 0
    %758 = vmatmul.mubr.bf16.gmra.mrb[0].mxu0 %v407
    %v759 = vpop.f32.mrb[0].mxu0
    %v760 = vadd.f32 0.0, %v759
    %v761 = vpop.f32.mrb[0].mxu0
    %v762 = vadd.f32 0.0, %v761
    %v763 = vpop.f32.mrb[0].mxu0
    %v764 = vadd.f32 0.0, %v763
    %v765 = vpop.f32.mrb[0].mxu0
    %v766 = vadd.f32 0.0, %v765
    %767 = vdwg.mxu0
    %v768 = vld [vmem:[#allocation5] sm:$0xff]
    %v769 = vld [vmem:[#allocation5 + $0x8] sm:$0xff]
    %v770 = vld [vmem:[#allocation5 + $0x10] sm:$0xff]
    %v771 = vld [vmem:[#allocation5 + $0x18] sm:$0xff]
    %v772 = vld [vmem:[#allocation5 + $0x20] sm:$0xff]
    %v773 = vld [vmem:[#allocation5 + $0x28] sm:$0xff]
    %v774 = vld [vmem:[#allocation5 + $0x30] sm:$0xff]
    %v775 = vld [vmem:[#allocation5 + $0x38] sm:$0xff]
    %v776 = vld [vmem:[#allocation5 + $0x40] sm:$0xff]
    %v777 = vld [vmem:[#allocation5 + $0x48] sm:$0xff]
    %v778 = vld [vmem:[#allocation5 + $0x50] sm:$0xff]
    %v779 = vld [vmem:[#allocation5 + $0x58] sm:$0xff]
    %v780 = vld [vmem:[#allocation5 + $0x60] sm:$0xff]
    %v781 = vld [vmem:[#allocation5 + $0x68] sm:$0xff]
    %v782 = vld [vmem:[#allocation5 + $0x70] sm:$0xff]
    %v783 = vld [vmem:[#allocation5 + $0x78] sm:$0xff]
    %v784 = vld [vmem:[#allocation5 + $0x80] sm:$0xff]
    %v785 = vld [vmem:[#allocation5 + $0x88] sm:$0xff]
    %v786 = vld [vmem:[#allocation5 + $0x90] sm:$0xff]
    %v787 = vld [vmem:[#allocation5 + $0x98] sm:$0xff]
    %v788 = vld [vmem:[#allocation5 + $0xa0] sm:$0x33]
    %v789 = vld [vmem:[#allocation5 + $0xa8] sm:$0x33]
    %v812 = vunpack.c.l.b16 %v768
    %v813 = vunpack.c.h.b16 %v768
    %v814 = vunpack.c.l.b16 %v769
    %v815 = vunpack.c.h.b16 %v769
    %v816 = vunpack.c.l.b16 %v770
    %v817 = vunpack.c.h.b16 %v770
    %v818 = vunpack.c.l.b16 %v771
    %v819 = vunpack.c.h.b16 %v771
    %v820 = vunpack.c.l.b16 %v772
    %v821 = vunpack.c.h.b16 %v772
    %v822 = vunpack.c.l.b16 %v773
    %v823 = vunpack.c.h.b16 %v773
    %v824 = vunpack.c.l.b16 %v774
    %v825 = vunpack.c.h.b16 %v774
    %v826 = vunpack.c.l.b16 %v775
    %v827 = vunpack.c.h.b16 %v775
    %v828 = vunpack.c.l.b16 %v776
    %v829 = vunpack.c.h.b16 %v776
    %v830 = vunpack.c.l.b16 %v777
    %v831 = vunpack.c.h.b16 %v777
    %v832 = vunpack.c.l.b16 %v778
    %v833 = vunpack.c.h.b16 %v778
    %v834 = vunpack.c.l.b16 %v779
    %v835 = vunpack.c.h.b16 %v779
    %v836 = vunpack.c.l.b16 %v780
    %v837 = vunpack.c.h.b16 %v780
    %v838 = vunpack.c.l.b16 %v781
    %v839 = vunpack.c.h.b16 %v781
    %v840 = vunpack.c.l.b16 %v782
    %v841 = vunpack.c.h.b16 %v782
    %v842 = vunpack.c.l.b16 %v783
    %v843 = vunpack.c.h.b16 %v783
    %v844 = vunpack.c.l.b16 %v784
    %v845 = vunpack.c.h.b16 %v784
    %v846 = vunpack.c.l.b16 %v785
    %v847 = vunpack.c.h.b16 %v785
    %v848 = vunpack.c.l.b16 %v786
    %v849 = vunpack.c.h.b16 %v786
    %v850 = vunpack.c.l.b16 %v787
    %v851 = vunpack.c.h.b16 %v787
    %v852 = vunpack.c.l.b16 %v788
    %v853 = vunpack.c.h.b16 %v788
    %v854 = vunpack.c.l.b16 %v789
    %v855 = vunpack.c.h.b16 %v789
    %v856 = vpack.c.b16 %v816, %v812
    %v857 = vpack.c.b16 %v817, %v813
    %v858 = vpack.c.b16 %v818, %v814
    %v859 = vpack.c.b16 %v819, %v815
    %v860 = vpack.c.b16 %v824, %v820
    %v861 = vpack.c.b16 %v825, %v821
    %v862 = vpack.c.b16 %v826, %v822
    %v863 = vpack.c.b16 %v827, %v823
    %v864 = vpack.c.b16 %v832, %v828
    %v865 = vpack.c.b16 %v833, %v829
    %v866 = vpack.c.b16 %v834, %v830
    %v867 = vpack.c.b16 %v835, %v831
    %v868 = vpack.c.b16 %v840, %v836
    %v869 = vpack.c.b16 %v841, %v837
    %v870 = vpack.c.b16 %v842, %v838
    %v871 = vpack.c.b16 %v843, %v839
    %v872 = vpack.c.b16 %v848, %v844
    %v873 = vpack.c.b16 %v849, %v845
    %v874 = vpack.c.b16 %v850, %v846
    %v875 = vpack.c.b16 %v851, %v847
    %v876 = vpack.c.b16 %v852, %v852
    %v877 = vpack.c.b16 %v853, %v853
    %v878 = vpack.c.b16 %v854, %v854
    %v879 = vpack.c.b16 %v855, %v855
    %v901 = vsel %vm409, %v876, 0
    %v904 = vsel %vm409, %v877, 0
    %v907 = vsel %vm409, %v878, 0
    %v910 = vsel %vm409, %v879, 0
    %912 = vmatprep.subr.bf16.mxu0 %v857
    %913 = vmatpush1.bf16.msra.mxu0 %v856
    %914 = vmatprep.subr.bf16.mxu0 %v861
    %915 = vmatpush1.bf16.msra.mxu0 %v860
    %916 = vmatprep.subr.bf16.mxu0 %v865
    %917 = vmatpush1.bf16.msra.mxu0 %v864
    %918 = vmatprep.subr.bf16.mxu0 %v869
    %919 = vmatpush1.bf16.msra.mxu0 %v868
    %920 = vmatprep.subr.bf16.mxu0 %v873
    %921 = vmatpush1.bf16.msra.mxu0 %v872
    %922 = vmatprep.subr.bf16.mxu0 %v904
    %923 = vmatpush1.bf16.msra.mxu0 %v901
    %924 = vmatprep.subr.bf16.mxu0 0
    %925 = vmatpush1.bf16.msra.mxu0 0
    %926 = vmatprep.subr.bf16.mxu0 0
    %927 = vmatpush1.bf16.msra.mxu0 0
    %928 = vmatprep.subr.bf16.mxu0 0
    %929 = vmatpush1.bf16.msra.mxu0 0
    %930 = vmatprep.subr.bf16.mxu0 0
    %931 = vmatpush1.bf16.msra.mxu0 0
    %932 = vmatprep.subr.bf16.mxu0 0
    %933 = vmatpush1.bf16.msra.mxu0 0
    %934 = vmatprep.subr.bf16.mxu0 0
    %935 = vmatpush1.bf16.msra.mxu0 0
    %936 = vmatprep.subr.bf16.mxu0 0
    %937 = vmatpush1.bf16.msra.mxu0 0
    %938 = vmatprep.subr.bf16.mxu0 0
    %939 = vmatpush1.bf16.msra.mxu0 0
    %940 = vmatprep.subr.bf16.mxu0 0
    %941 = vmatpush1.bf16.msra.mxu0 0
    %942 = vmatprep.subr.bf16.mxu0 0
    %943 = vmatpush1.bf16.msra.mxu0 0
    %944 = vmatprep.mubr.bf16.mxu0 0
    %945 = vmatmul.mubr.bf16.gmra.mrb[0].mxu0 %v368
    %v946 = vpop.f32.mrb[0].mxu0
    %v947 = vadd.f32 0.0, %v946
    %v948 = vpop.f32.mrb[0].mxu0
    %v949 = vadd.f32 0.0, %v948
    %v950 = vpop.f32.mrb[0].mxu0
    %v951 = vadd.f32 0.0, %v950
    %v952 = vpop.f32.mrb[0].mxu0
    %v953 = vadd.f32 0.0, %v952
    %954 = vmatprep.mubr.bf16.mxu0 0
    %955 = vmatmul.mubr.bf16.gmra.mrb[0].mxu0 %v371
    %v956 = vpop.f32.mrb[0].mxu0
    %v957 = vadd.f32 0.0, %v956
    %v958 = vpop.f32.mrb[0].mxu0
    %v959 = vadd.f32 0.0, %v958
    %v960 = vpop.f32.mrb[0].mxu0
    %v961 = vadd.f32 0.0, %v960
    %v962 = vpop.f32.mrb[0].mxu0
    %v963 = vadd.f32 0.0, %v962
    %964 = vmatprep.mubr.bf16.mxu0 0
    %965 = vmatmul.mubr.bf16.gmra.mrb[0].mxu0 %v374
    %v966 = vpop.f32.mrb[0].mxu0
    %v967 = vadd.f32 0.0, %v966
    %v968 = vpop.f32.mrb[0].mxu0
    %v969 = vadd.f32 0.0, %v968
    %v970 = vpop.f32.mrb[0].mxu0
    %v971 = vadd.f32 0.0, %v970
    %v972 = vpop.f32.mrb[0].mxu0
    %v973 = vadd.f32 0.0, %v972
    %974 = vmatprep.mubr.bf16.mxu0 0
    %975 = vmatmul.mubr.bf16.gmra.mrb[0].mxu0 %v377
    %v976 = vpop.f32.mrb[0].mxu0
    %v977 = vadd.f32 0.0, %v976
    %v978 = vpop.f32.mrb[0].mxu0
    %v979 = vadd.f32 0.0, %v978
    %v980 = vpop.f32.mrb[0].mxu0
    %v981 = vadd.f32 0.0, %v980
    %v982 = vpop.f32.mrb[0].mxu0
    %v983 = vadd.f32 0.0, %v982
    %984 = vmatprep.mubr.bf16.mxu0 0
    %985 = vmatmul.mubr.bf16.gmra.mrb[0].mxu0 %v380
    %v986 = vpop.f32.mrb[0].mxu0
    %v987 = vadd.f32 0.0, %v986
    %v988 = vpop.f32.mrb[0].mxu0
    %v989 = vadd.f32 0.0, %v988
    %v990 = vpop.f32.mrb[0].mxu0
    %v991 = vadd.f32 0.0, %v990
    %v992 = vpop.f32.mrb[0].mxu0
    %v993 = vadd.f32 0.0, %v992
    %994 = vmatprep.mubr.bf16.mxu0 0
    %995 = vmatmul.mubr.bf16.gmra.mrb[0].mxu0 %v383
    %v996 = vpop.f32.mrb[0].mxu0
    %v997 = vadd.f32 0.0, %v996
    %v998 = vpop.f32.mrb[0].mxu0
    %v999 = vadd.f32 0.0, %v998
    %v1000 = vpop.f32.mrb[0].mxu0
    %v1001 = vadd.f32 0.0, %v1000
    %v1002 = vpop.f32.mrb[0].mxu0
    %v1003 = vadd.f32 0.0, %v1002
    %1004 = vmatprep.mubr.bf16.mxu0 0
    %1005 = vmatmul.mubr.bf16.gmra.mrb[0].mxu0 %v386
    %v1006 = vpop.f32.mrb[0].mxu0
    %v1007 = vadd.f32 0.0, %v1006
    %v1008 = vpop.f32.mrb[0].mxu0
    %v1009 = vadd.f32 0.0, %v1008
    %v1010 = vpop.f32.mrb[0].mxu0
    %v1011 = vadd.f32 0.0, %v1010
    %v1012 = vpop.f32.mrb[0].mxu0
    %v1013 = vadd.f32 0.0, %v1012
    %1014 = vmatprep.mubr.bf16.mxu0 0
    %1015 = vmatmul.mubr.bf16.gmra.mrb[0].mxu0 %v389
    %v1016 = vpop.f32.mrb[0].mxu0
    %v1017 = vadd.f32 0.0, %v1016
    %v1018 = vpop.f32.mrb[0].mxu0
    %v1019 = vadd.f32 0.0, %v1018
    %v1020 = vpop.f32.mrb[0].mxu0
    %v1021 = vadd.f32 0.0, %v1020
    %v1022 = vpop.f32.mrb[0].mxu0
    %v1023 = vadd.f32 0.0, %v1022
    %1024 = vmatprep.mubr.bf16.mxu0 0
    %1025 = vmatmul.mubr.bf16.gmra.mrb[0].mxu0 %v392
    %v1026 = vpop.f32.mrb[0].mxu0
    %v1027 = vadd.f32 0.0, %v1026
    %v1028 = vpop.f32.mrb[0].mxu0
    %v1029 = vadd.f32 0.0, %v1028
    %v1030 = vpop.f32.mrb[0].mxu0
    %v1031 = vadd.f32 0.0, %v1030
    %v1032 = vpop.f32.mrb[0].mxu0
    %v1033 = vadd.f32 0.0, %v1032
    %1034 = vmatprep.mubr.bf16.mxu0 0
    %1035 = vmatmul.mubr.bf16.gmra.mrb[0].mxu0 %v395
    %v1036 = vpop.f32.mrb[0].mxu0
    %v1037 = vadd.f32 0.0, %v1036
    %v1038 = vpop.f32.mrb[0].mxu0
    %v1039 = vadd.f32 0.0, %v1038
    %v1040 = vpop.f32.mrb[0].mxu0
    %v1041 = vadd.f32 0.0, %v1040
    %v1042 = vpop.f32.mrb[0].mxu0
    %v1043 = vadd.f32 0.0, %v1042
    %1044 = vmatprep.mubr.bf16.mxu0 0
    %1045 = vmatmul.mubr.bf16.gmra.mrb[0].mxu0 %v398
    %v1046 = vpop.f32.mrb[0].mxu0
    %v1047 = vadd.f32 0.0, %v1046
    %v1048 = vpop.f32.mrb[0].mxu0
    %v1049 = vadd.f32 0.0, %v1048
    %v1050 = vpop.f32.mrb[0].mxu0
    %v1051 = vadd.f32 0.0, %v1050
    %v1052 = vpop.f32.mrb[0].mxu0
    %v1053 = vadd.f32 0.0, %v1052
    %1054 = vmatprep.mubr.bf16.mxu0 0
    %1055 = vmatmul.mubr.bf16.gmra.mrb[0].mxu0 %v401
    %v1056 = vpop.f32.mrb[0].mxu0
    %v1057 = vadd.f32 0.0, %v1056
    %v1058 = vpop.f32.mrb[0].mxu0
    %v1059 = vadd.f32 0.0, %v1058
    %v1060 = vpop.f32.mrb[0].mxu0
    %v1061 = vadd.f32 0.0, %v1060
    %v1062 = vpop.f32.mrb[0].mxu0
    %v1063 = vadd.f32 0.0, %v1062
    %1064 = vmatprep.mubr.bf16.mxu0 0
    %1065 = vmatmul.mubr.bf16.gmra.mrb[0].mxu0 %v404
    %v1066 = vpop.f32.mrb[0].mxu0
    %v1067 = vadd.f32 0.0, %v1066
    %v1068 = vpop.f32.mrb[0].mxu0
    %v1069 = vadd.f32 0.0, %v1068
    %v1070 = vpop.f32.mrb[0].mxu0
    %v1071 = vadd.f32 0.0, %v1070
    %v1072 = vpop.f32.mrb[0].mxu0
    %v1073 = vadd.f32 0.0, %v1072
    %1074 = vmatprep.mubr.bf16.mxu0 0
    %1075 = vmatmul.mubr.bf16.gmra.mrb[0].mxu0 %v407
    %v1076 = vpop.f32.mrb[0].mxu0
    %v1077 = vadd.f32 0.0, %v1076
    %v1078 = vpop.f32.mrb[0].mxu0
    %v1079 = vadd.f32 0.0, %v1078
    %v1080 = vpop.f32.mrb[0].mxu0
    %v1081 = vadd.f32 0.0, %v1080
    %v1082 = vpop.f32.mrb[0].mxu0
    %v1083 = vadd.f32 0.0, %v1082
    %1084 = vdwg.mxu0
    %1085 = vmatprep.subr.bf16.mxu0 %v859
    %1086 = vmatpush1.bf16.msra.mxu0 %v858
    %1087 = vmatprep.subr.bf16.mxu0 %v863
    %1088 = vmatpush1.bf16.msra.mxu0 %v862
    %1089 = vmatprep.subr.bf16.mxu0 %v867
    %1090 = vmatpush1.bf16.msra.mxu0 %v866
    %1091 = vmatprep.subr.bf16.mxu0 %v871
    %1092 = vmatpush1.bf16.msra.mxu0 %v870
    %1093 = vmatprep.subr.bf16.mxu0 %v875
    %1094 = vmatpush1.bf16.msra.mxu0 %v874
    %1095 = vmatprep.subr.bf16.mxu0 %v910
    %1096 = vmatpush1.bf16.msra.mxu0 %v907
    %1097 = vmatprep.subr.bf16.mxu0 0
    %1098 = vmatpush1.bf16.msra.mxu0 0
    %1099 = vmatprep.subr.bf16.mxu0 0
    %1100 = vmatpush1.bf16.msra.mxu0 0
    %1101 = vmatprep.subr.bf16.mxu0 0
    %1102 = vmatpush1.bf16.msra.mxu0 0
    %1103 = vmatprep.subr.bf16.mxu0 0
    %1104 = vmatpush1.bf16.msra.mxu0 0
    %1105 = vmatprep.subr.bf16.mxu0 0
    %1106 = vmatpush1.bf16.msra.mxu0 0
    %1107 = vmatprep.subr.bf16.mxu0 0
    %1108 = vmatpush1.bf16.msra.mxu0 0
    %1109 = vmatprep.subr.bf16.mxu0 0
    %1110 = vmatpush1.bf16.msra.mxu0 0
    %1111 = vmatprep.subr.bf16.mxu0 0
    %1112 = vmatpush1.bf16.msra.mxu0 0
    %1113 = vmatprep.subr.bf16.mxu0 0
    %1114 = vmatpush1.bf16.msra.mxu0 0
    %1115 = vmatprep.subr.bf16.mxu0 0
    %1116 = vmatpush1.bf16.msra.mxu0 0
    %1117 = vmatprep.mubr.bf16.mxu0 0
    %1118 = vmatmul.mubr.bf16.gmra.mrb[0].mxu0 %v368
    %v1119 = vpop.f32.mrb[0].mxu0
    %v1120 = vadd.f32 0.0, %v1119
    %v1121 = vpop.f32.mrb[0].mxu0
    %v1122 = vadd.f32 0.0, %v1121
    %v1123 = vpop.f32.mrb[0].mxu0
    %v1124 = vadd.f32 0.0, %v1123
    %v1125 = vpop.f32.mrb[0].mxu0
    %v1126 = vadd.f32 0.0, %v1125
    %1127 = vmatprep.mubr.bf16.mxu0 0
    %1128 = vmatmul.mubr.bf16.gmra.mrb[0].mxu0 %v371
    %v1129 = vpop.f32.mrb[0].mxu0
    %v1130 = vadd.f32 0.0, %v1129
    %v1131 = vpop.f32.mrb[0].mxu0
    %v1132 = vadd.f32 0.0, %v1131
    %v1133 = vpop.f32.mrb[0].mxu0
    %v1134 = vadd.f32 0.0, %v1133
    %v1135 = vpop.f32.mrb[0].mxu0
    %v1136 = vadd.f32 0.0, %v1135
    %1137 = vmatprep.mubr.bf16.mxu0 0
    %1138 = vmatmul.mubr.bf16.gmra.mrb[0].mxu0 %v374
    %v1139 = vpop.f32.mrb[0].mxu0
    %v1140 = vadd.f32 0.0, %v1139
    %v1141 = vpop.f32.mrb[0].mxu0
    %v1142 = vadd.f32 0.0, %v1141
    %v1143 = vpop.f32.mrb[0].mxu0
    %v1144 = vadd.f32 0.0, %v1143
    %v1145 = vpop.f32.mrb[0].mxu0
    %v1146 = vadd.f32 0.0, %v1145
    %1147 = vmatprep.mubr.bf16.mxu0 0
    %1148 = vmatmul.mubr.bf16.gmra.mrb[0].mxu0 %v377
    %v1149 = vpop.f32.mrb[0].mxu0
    %v1150 = vadd.f32 0.0, %v1149
    %v1151 = vpop.f32.mrb[0].mxu0
    %v1152 = vadd.f32 0.0, %v1151
    %v1153 = vpop.f32.mrb[0].mxu0
    %v1154 = vadd.f32 0.0, %v1153
    %v1155 = vpop.f32.mrb[0].mxu0
    %v1156 = vadd.f32 0.0, %v1155
    %1157 = vmatprep.mubr.bf16.mxu0 0
    %1158 = vmatmul.mubr.bf16.gmra.mrb[0].mxu0 %v380
    %v1159 = vpop.f32.mrb[0].mxu0
    %v1160 = vadd.f32 0.0, %v1159
    %v1161 = vpop.f32.mrb[0].mxu0
    %v1162 = vadd.f32 0.0, %v1161
    %v1163 = vpop.f32.mrb[0].mxu0
    %v1164 = vadd.f32 0.0, %v1163
    %v1165 = vpop.f32.mrb[0].mxu0
    %v1166 = vadd.f32 0.0, %v1165
    %1167 = vmatprep.mubr.bf16.mxu0 0
    %1168 = vmatmul.mubr.bf16.gmra.mrb[0].mxu0 %v383
    %v1169 = vpop.f32.mrb[0].mxu0
    %v1170 = vadd.f32 0.0, %v1169
    %v1171 = vpop.f32.mrb[0].mxu0
    %v1172 = vadd.f32 0.0, %v1171
    %v1173 = vpop.f32.mrb[0].mxu0
    %v1174 = vadd.f32 0.0, %v1173
    %v1175 = vpop.f32.mrb[0].mxu0
    %v1176 = vadd.f32 0.0, %v1175
    %1177 = vmatprep.mubr.bf16.mxu0 0
    %1178 = vmatmul.mubr.bf16.gmra.mrb[0].mxu0 %v386
    %v1179 = vpop.f32.mrb[0].mxu0
    %v1180 = vadd.f32 0.0, %v1179
    %v1181 = vpop.f32.mrb[0].mxu0
    %v1182 = vadd.f32 0.0, %v1181
    %v1183 = vpop.f32.mrb[0].mxu0
    %v1184 = vadd.f32 0.0, %v1183
    %v1185 = vpop.f32.mrb[0].mxu0
    %v1186 = vadd.f32 0.0, %v1185
    %1187 = vmatprep.mubr.bf16.mxu0 0
    %1188 = vmatmul.mubr.bf16.gmra.mrb[0].mxu0 %v389
    %v1189 = vpop.f32.mrb[0].mxu0
    %v1190 = vadd.f32 0.0, %v1189
    %v1191 = vpop.f32.mrb[0].mxu0
    %v1192 = vadd.f32 0.0, %v1191
    %v1193 = vpop.f32.mrb[0].mxu0
    %v1194 = vadd.f32 0.0, %v1193
    %v1195 = vpop.f32.mrb[0].mxu0
    %v1196 = vadd.f32 0.0, %v1195
    %1197 = vmatprep.mubr.bf16.mxu0 0
    %1198 = vmatmul.mubr.bf16.gmra.mrb[0].mxu0 %v392
    %v1199 = vpop.f32.mrb[0].mxu0
    %v1200 = vadd.f32 0.0, %v1199
    %v1201 = vpop.f32.mrb[0].mxu0
    %v1202 = vadd.f32 0.0, %v1201
    %v1203 = vpop.f32.mrb[0].mxu0
    %v1204 = vadd.f32 0.0, %v1203
    %v1205 = vpop.f32.mrb[0].mxu0
    %v1206 = vadd.f32 0.0, %v1205
    %1207 = vmatprep.mubr.bf16.mxu0 0
    %1208 = vmatmul.mubr.bf16.gmra.mrb[0].mxu0 %v395
    %v1209 = vpop.f32.mrb[0].mxu0
    %v1210 = vadd.f32 0.0, %v1209
    %v1211 = vpop.f32.mrb[0].mxu0
    %v1212 = vadd.f32 0.0, %v1211
    %v1213 = vpop.f32.mrb[0].mxu0
    %v1214 = vadd.f32 0.0, %v1213
    %v1215 = vpop.f32.mrb[0].mxu0
    %v1216 = vadd.f32 0.0, %v1215
    %1217 = vmatprep.mubr.bf16.mxu0 0
    %1218 = vmatmul.mubr.bf16.gmra.mrb[0].mxu0 %v398
    %v1219 = vpop.f32.mrb[0].mxu0
    %v1220 = vadd.f32 0.0, %v1219
    %v1221 = vpop.f32.mrb[0].mxu0
    %v1222 = vadd.f32 0.0, %v1221
    %v1223 = vpop.f32.mrb[0].mxu0
    %v1224 = vadd.f32 0.0, %v1223
    %v1225 = vpop.f32.mrb[0].mxu0
    %v1226 = vadd.f32 0.0, %v1225
    %1227 = vmatprep.mubr.bf16.mxu0 0
    %1228 = vmatmul.mubr.bf16.gmra.mrb[0].mxu0 %v401
    %v1229 = vpop.f32.mrb[0].mxu0
    %v1230 = vadd.f32 0.0, %v1229
    %v1231 = vpop.f32.mrb[0].mxu0
    %v1232 = vadd.f32 0.0, %v1231
    %v1233 = vpop.f32.mrb[0].mxu0
    %v1234 = vadd.f32 0.0, %v1233
    %v1235 = vpop.f32.mrb[0].mxu0
    %v1236 = vadd.f32 0.0, %v1235
    %1237 = vmatprep.mubr.bf16.mxu0 0
    %1238 = vmatmul.mubr.bf16.gmra.mrb[0].mxu0 %v404
    %v1239 = vpop.f32.mrb[0].mxu0
    %v1240 = vadd.f32 0.0, %v1239
    %v1241 = vpop.f32.mrb[0].mxu0
    %v1242 = vadd.f32 0.0, %v1241
    %v1243 = vpop.f32.mrb[0].mxu0
    %v1244 = vadd.f32 0.0, %v1243
    %v1245 = vpop.f32.mrb[0].mxu0
    %v1246 = vadd.f32 0.0, %v1245
    %1247 = vmatprep.mubr.bf16.mxu0 0
    %1248 = vmatmul.mubr.bf16.gmra.mrb[0].mxu0 %v407
    %v1249 = vpop.f32.mrb[0].mxu0
    %v1250 = vadd.f32 0.0, %v1249
    %v1251 = vpop.f32.mrb[0].mxu0
    %v1252 = vadd.f32 0.0, %v1251
    %v1253 = vpop.f32.mrb[0].mxu0
    %v1254 = vadd.f32 0.0, %v1253
    %v1255 = vpop.f32.mrb[0].mxu0
    %v1256 = vadd.f32 0.0, %v1255
    %1257 = vdwg.mxu0
    %v1258 = vmax.f32 %v457, %v947
    %v1259 = vmax.f32 %v459, %v949
    %v1260 = vmax.f32 %v630, %v1120
    %v1261 = vmax.f32 %v632, %v1122
    %v1262 = vmax.f32 %v461, %v951
    %v1263 = vmax.f32 %v463, %v953
    %v1264 = vmax.f32 %v634, %v1124
    %v1265 = vmax.f32 %v636, %v1126
    %v1266 = vmax.f32 %v467, %v957
    %v1267 = vmax.f32 %v469, %v959
    %v1268 = vmax.f32 %v640, %v1130
    %v1269 = vmax.f32 %v642, %v1132
    %v1270 = vmax.f32 %v471, %v961
    %v1271 = vmax.f32 %v473, %v963
    %v1272 = vmax.f32 %v644, %v1134
    %v1273 = vmax.f32 %v646, %v1136
    %v1274 = vmax.f32 %v477, %v967
    %v1275 = vmax.f32 %v479, %v969
    %v1276 = vmax.f32 %v650, %v1140
    %v1277 = vmax.f32 %v652, %v1142
    %v1278 = vmax.f32 %v481, %v971
    %v1279 = vmax.f32 %v483, %v973
    %v1280 = vmax.f32 %v654, %v1144
    %v1281 = vmax.f32 %v656, %v1146
    %v1282 = vmax.f32 %v487, %v977
    %v1283 = vmax.f32 %v489, %v979
    %v1284 = vmax.f32 %v660, %v1150
    %v1285 = vmax.f32 %v662, %v1152
    %v1286 = vmax.f32 %v491, %v981
    %v1287 = vmax.f32 %v493, %v983
    %v1288 = vmax.f32 %v664, %v1154
    %v1289 = vmax.f32 %v666, %v1156
    %v1290 = vmax.f32 %v497, %v987
    %v1291 = vmax.f32 %v499, %v989
    %v1292 = vmax.f32 %v670, %v1160
    %v1293 = vmax.f32 %v672, %v1162
    %v1294 = vmax.f32 %v501, %v991
    %v1295 = vmax.f32 %v503, %v993
    %v1296 = vmax.f32 %v674, %v1164
    %v1297 = vmax.f32 %v676, %v1166
    %v1298 = vmax.f32 %v507, %v997
    %v1299 = vmax.f32 %v509, %v999
    %v1300 = vmax.f32 %v680, %v1170
    %v1301 = vmax.f32 %v682, %v1172
    %v1302 = vmax.f32 %v511, %v1001
    %v1303 = vmax.f32 %v513, %v1003
    %v1304 = vmax.f32 %v684, %v1174
    %v1305 = vmax.f32 %v686, %v1176
    %v1306 = vmax.f32 %v517, %v1007
    %v1307 = vmax.f32 %v519, %v1009
    %v1308 = vmax.f32 %v690, %v1180
    %v1309 = vmax.f32 %v692, %v1182
    %v1310 = vmax.f32 %v521, %v1011
    %v1311 = vmax.f32 %v523, %v1013
    %v1312 = vmax.f32 %v694, %v1184
    %v1313 = vmax.f32 %v696, %v1186
    %v1314 = vmax.f32 %v527, %v1017
    %v1315 = vmax.f32 %v529, %v1019
    %v1316 = vmax.f32 %v700, %v1190
    %v1317 = vmax.f32 %v702, %v1192
    %v1318 = vmax.f32 %v531, %v1021
    %v1319 = vmax.f32 %v533, %v1023
    %v1320 = vmax.f32 %v704, %v1194
    %v1321 = vmax.f32 %v706, %v1196
    %v1322 = vmax.f32 %v537, %v1027
    %v1323 = vmax.f32 %v539, %v1029
    %v1324 = vmax.f32 %v710, %v1200
    %v1325 = vmax.f32 %v712, %v1202
    %v1326 = vmax.f32 %v541, %v1031
    %v1327 = vmax.f32 %v543, %v1033
    %v1328 = vmax.f32 %v714, %v1204
    %v1329 = vmax.f32 %v716, %v1206
    %v1330 = vmax.f32 %v547, %v1037
    %v1331 = vmax.f32 %v549, %v1039
    %v1332 = vmax.f32 %v720, %v1210
    %v1333 = vmax.f32 %v722, %v1212
    %v1334 = vmax.f32 %v551, %v1041
    %v1335 = vmax.f32 %v553, %v1043
    %v1336 = vmax.f32 %v724, %v1214
    %v1337 = vmax.f32 %v726, %v1216
    %v1338 = vmax.f32 %v557, %v1047
    %v1339 = vmax.f32 %v559, %v1049
    %v1340 = vmax.f32 %v730, %v1220
    %v1341 = vmax.f32 %v732, %v1222
    %v1342 = vmax.f32 %v561, %v1051
    %v1343 = vmax.f32 %v563, %v1053
    %v1344 = vmax.f32 %v734, %v1224
    %v1345 = vmax.f32 %v736, %v1226
    %v1346 = vmax.f32 %v567, %v1057
    %v1347 = vmax.f32 %v569, %v1059
    %v1348 = vmax.f32 %v740, %v1230
    %v1349 = vmax.f32 %v742, %v1232
    %v1350 = vmax.f32 %v571, %v1061
    %v1351 = vmax.f32 %v573, %v1063
    %v1352 = vmax.f32 %v744, %v1234
    %v1353 = vmax.f32 %v746, %v1236
    %v1354 = vmax.f32 %v577, %v1067
    %v1355 = vmax.f32 %v579, %v1069
    %v1356 = vmax.f32 %v750, %v1240
    %v1357 = vmax.f32 %v752, %v1242
    %v1358 = vmax.f32 %v581, %v1071
    %v1359 = vmax.f32 %v583, %v1073
    %v1360 = vmax.f32 %v754, %v1244
    %v1361 = vmax.f32 %v756, %v1246
    %v1362 = vmax.f32 %v587, %v1077
    %v1363 = vmax.f32 %v589, %v1079
    %v1364 = vmax.f32 %v760, %v1250
    %v1365 = vmax.f32 %v762, %v1252
    %v1366 = vmax.f32 %v591, %v1081
    %v1367 = vmax.f32 %v593, %v1083
    %v1368 = vmax.f32 %v764, %v1254
    %v1369 = vmax.f32 %v766, %v1256
    %v1370 = vld [vmem:[#allocation7] sm:$0xf]
    %v1372 = vlaneseq
    %v1373 = vshrl.u32 %v1372, 7
    %v1374 = vsub.s32 0, %v1373
    %v1375 = vrot.slane %v1370, %v1374
    %v1376 = vlaneseq
    %v1377 = vshrl.u32 %v1376, 7
    %v1378 = vsub.s32 1, %v1377
    %v1379 = vrot.slane %v1370, %v1378
    %v1380 = vlaneseq
    %v1381 = vshrl.u32 %v1380, 7
    %v1382 = vsub.s32 2, %v1381
    %v1383 = vrot.slane %v1370, %v1382
    %v1384 = vlaneseq
    %v1385 = vshrl.u32 %v1384, 7
    %v1386 = vsub.s32 3, %v1385
    %v1387 = vrot.slane %v1370, %v1386
    %v1392 = vadd.f32 %v1258, %v1375
    %v1393 = vadd.f32 %v1259, %v1379
    %v1394 = vadd.f32 %v1260, %v1383
    %v1395 = vadd.f32 %v1261, %v1387
    %v1396 = vadd.f32 %v1262, %v1375
    %v1397 = vadd.f32 %v1263, %v1379
    %v1398 = vadd.f32 %v1264, %v1383
    %v1399 = vadd.f32 %v1265, %v1387
    %v1400 = vadd.f32 %v1266, %v1375
    %v1401 = vadd.f32 %v1267, %v1379
    %v1402 = vadd.f32 %v1268, %v1383
    %v1403 = vadd.f32 %v1269, %v1387
    %v1404 = vadd.f32 %v1270, %v1375
    %v1405 = vadd.f32 %v1271, %v1379
    %v1406 = vadd.f32 %v1272, %v1383
    %v1407 = vadd.f32 %v1273, %v1387
    %v1408 = vadd.f32 %v1274, %v1375
    %v1409 = vadd.f32 %v1275, %v1379
    %v1410 = vadd.f32 %v1276, %v1383
    %v1411 = vadd.f32 %v1277, %v1387
    %v1412 = vadd.f32 %v1278, %v1375
    %v1413 = vadd.f32 %v1279, %v1379
    %v1414 = vadd.f32 %v1280, %v1383
    %v1415 = vadd.f32 %v1281, %v1387
    %v1416 = vadd.f32 %v1282, %v1375
    %v1417 = vadd.f32 %v1283, %v1379
    %v1418 = vadd.f32 %v1284, %v1383
    %v1419 = vadd.f32 %v1285, %v1387
    %v1420 = vadd.f32 %v1286, %v1375
    %v1421 = vadd.f32 %v1287, %v1379
    %v1422 = vadd.f32 %v1288, %v1383
    %v1423 = vadd.f32 %v1289, %v1387
    %v1424 = vadd.f32 %v1290, %v1375
    %v1425 = vadd.f32 %v1291, %v1379
    %v1426 = vadd.f32 %v1292, %v1383
    %v1427 = vadd.f32 %v1293, %v1387
    %v1428 = vadd.f32 %v1294, %v1375
    %v1429 = vadd.f32 %v1295, %v1379
    %v1430 = vadd.f32 %v1296, %v1383
    %v1431 = vadd.f32 %v1297, %v1387
    %v1432 = vadd.f32 %v1298, %v1375
    %v1433 = vadd.f32 %v1299, %v1379
    %v1434 = vadd.f32 %v1300, %v1383
    %v1435 = vadd.f32 %v1301, %v1387
    %v1436 = vadd.f32 %v1302, %v1375
    %v1437 = vadd.f32 %v1303, %v1379
    %v1438 = vadd.f32 %v1304, %v1383
    %v1439 = vadd.f32 %v1305, %v1387
    %v1440 = vadd.f32 %v1306, %v1375
    %v1441 = vadd.f32 %v1307, %v1379
    %v1442 = vadd.f32 %v1308, %v1383
    %v1443 = vadd.f32 %v1309, %v1387
    %v1444 = vadd.f32 %v1310, %v1375
    %v1445 = vadd.f32 %v1311, %v1379
    %v1446 = vadd.f32 %v1312, %v1383
    %v1447 = vadd.f32 %v1313, %v1387
    %v1448 = vadd.f32 %v1314, %v1375
    %v1449 = vadd.f32 %v1315, %v1379
    %v1450 = vadd.f32 %v1316, %v1383
    %v1451 = vadd.f32 %v1317, %v1387
    %v1452 = vadd.f32 %v1318, %v1375
    %v1453 = vadd.f32 %v1319, %v1379
    %v1454 = vadd.f32 %v1320, %v1383
    %v1455 = vadd.f32 %v1321, %v1387
    %v1456 = vadd.f32 %v1322, %v1375
    %v1457 = vadd.f32 %v1323, %v1379
    %v1458 = vadd.f32 %v1324, %v1383
    %v1459 = vadd.f32 %v1325, %v1387
    %v1460 = vadd.f32 %v1326, %v1375
    %v1461 = vadd.f32 %v1327, %v1379
    %v1462 = vadd.f32 %v1328, %v1383
    %v1463 = vadd.f32 %v1329, %v1387
    %v1464 = vadd.f32 %v1330, %v1375
    %v1465 = vadd.f32 %v1331, %v1379
    %v1466 = vadd.f32 %v1332, %v1383
    %v1467 = vadd.f32 %v1333, %v1387
    %v1468 = vadd.f32 %v1334, %v1375
    %v1469 = vadd.f32 %v1335, %v1379
    %v1470 = vadd.f32 %v1336, %v1383
    %v1471 = vadd.f32 %v1337, %v1387
    %v1472 = vadd.f32 %v1338, %v1375
    %v1473 = vadd.f32 %v1339, %v1379
    %v1474 = vadd.f32 %v1340, %v1383
    %v1475 = vadd.f32 %v1341, %v1387
    %v1476 = vadd.f32 %v1342, %v1375
    %v1477 = vadd.f32 %v1343, %v1379
    %v1478 = vadd.f32 %v1344, %v1383
    %v1479 = vadd.f32 %v1345, %v1387
    %v1480 = vadd.f32 %v1346, %v1375
    %v1481 = vadd.f32 %v1347, %v1379
    %v1482 = vadd.f32 %v1348, %v1383
    %v1483 = vadd.f32 %v1349, %v1387
    %v1484 = vadd.f32 %v1350, %v1375
    %v1485 = vadd.f32 %v1351, %v1379
    %v1486 = vadd.f32 %v1352, %v1383
    %v1487 = vadd.f32 %v1353, %v1387
    %v1488 = vadd.f32 %v1354, %v1375
    %v1489 = vadd.f32 %v1355, %v1379
    %v1490 = vadd.f32 %v1356, %v1383
    %v1491 = vadd.f32 %v1357, %v1387
    %v1492 = vadd.f32 %v1358, %v1375
    %v1493 = vadd.f32 %v1359, %v1379
    %v1494 = vadd.f32 %v1360, %v1383
    %v1495 = vadd.f32 %v1361, %v1387
    %v1496 = vadd.f32 %v1362, %v1375
    %v1497 = vadd.f32 %v1363, %v1379
    %v1498 = vadd.f32 %v1364, %v1383
    %v1499 = vadd.f32 %v1365, %v1387
    %v1500 = vadd.f32 %v1366, %v1375
    %v1501 = vadd.f32 %v1367, %v1379
    %v1502 = vadd.f32 %v1368, %v1383
    %v1503 = vadd.f32 %v1369, %v1387
    %v1504 = vmax.f32 %v1392, 0.0
    %v1505 = vmax.f32 %v1393, 0.0
    %v1506 = vmax.f32 %v1394, 0.0
    %v1507 = vmax.f32 %v1395, 0.0
    %v1508 = vmax.f32 %v1396, 0.0
    %v1509 = vmax.f32 %v1397, 0.0
    %v1510 = vmax.f32 %v1398, 0.0
    %v1511 = vmax.f32 %v1399, 0.0
    %v1512 = vmax.f32 %v1400, 0.0
    %v1513 = vmax.f32 %v1401, 0.0
    %v1514 = vmax.f32 %v1402, 0.0
    %v1515 = vmax.f32 %v1403, 0.0
    %v1516 = vmax.f32 %v1404, 0.0
    %v1517 = vmax.f32 %v1405, 0.0
    %v1518 = vmax.f32 %v1406, 0.0
    %v1519 = vmax.f32 %v1407, 0.0
    %v1520 = vmax.f32 %v1408, 0.0
    %v1521 = vmax.f32 %v1409, 0.0
    %v1522 = vmax.f32 %v1410, 0.0
    %v1523 = vmax.f32 %v1411, 0.0
    %v1524 = vmax.f32 %v1412, 0.0
    %v1525 = vmax.f32 %v1413, 0.0
    %v1526 = vmax.f32 %v1414, 0.0
    %v1527 = vmax.f32 %v1415, 0.0
    %v1528 = vmax.f32 %v1416, 0.0
    %v1529 = vmax.f32 %v1417, 0.0
    %v1530 = vmax.f32 %v1418, 0.0
    %v1531 = vmax.f32 %v1419, 0.0
    %v1532 = vmax.f32 %v1420, 0.0
    %v1533 = vmax.f32 %v1421, 0.0
    %v1534 = vmax.f32 %v1422, 0.0
    %v1535 = vmax.f32 %v1423, 0.0
    %v1536 = vmax.f32 %v1424, 0.0
    %v1537 = vmax.f32 %v1425, 0.0
    %v1538 = vmax.f32 %v1426, 0.0
    %v1539 = vmax.f32 %v1427, 0.0
    %v1540 = vmax.f32 %v1428, 0.0
    %v1541 = vmax.f32 %v1429, 0.0
    %v1542 = vmax.f32 %v1430, 0.0
    %v1543 = vmax.f32 %v1431, 0.0
    %v1544 = vmax.f32 %v1432, 0.0
    %v1545 = vmax.f32 %v1433, 0.0
    %v1546 = vmax.f32 %v1434, 0.0
    %v1547 = vmax.f32 %v1435, 0.0
    %v1548 = vmax.f32 %v1436, 0.0
    %v1549 = vmax.f32 %v1437, 0.0
    %v1550 = vmax.f32 %v1438, 0.0
    %v1551 = vmax.f32 %v1439, 0.0
    %v1552 = vmax.f32 %v1440, 0.0
    %v1553 = vmax.f32 %v1441, 0.0
    %v1554 = vmax.f32 %v1442, 0.0
    %v1555 = vmax.f32 %v1443, 0.0
    %v1556 = vmax.f32 %v1444, 0.0
    %v1557 = vmax.f32 %v1445, 0.0
    %v1558 = vmax.f32 %v1446, 0.0
    %v1559 = vmax.f32 %v1447, 0.0
    %v1560 = vmax.f32 %v1448, 0.0
    %v1561 = vmax.f32 %v1449, 0.0
    %v1562 = vmax.f32 %v1450, 0.0
    %v1563 = vmax.f32 %v1451, 0.0
    %v1564 = vmax.f32 %v1452, 0.0
    %v1565 = vmax.f32 %v1453, 0.0
    %v1566 = vmax.f32 %v1454, 0.0
    %v1567 = vmax.f32 %v1455, 0.0
    %v1568 = vmax.f32 %v1456, 0.0
    %v1569 = vmax.f32 %v1457, 0.0
    %v1570 = vmax.f32 %v1458, 0.0
    %v1571 = vmax.f32 %v1459, 0.0
    %v1572 = vmax.f32 %v1460, 0.0
    %v1573 = vmax.f32 %v1461, 0.0
    %v1574 = vmax.f32 %v1462, 0.0
    %v1575 = vmax.f32 %v1463, 0.0
    %v1576 = vmax.f32 %v1464, 0.0
    %v1577 = vmax.f32 %v1465, 0.0
    %v1578 = vmax.f32 %v1466, 0.0
    %v1579 = vmax.f32 %v1467, 0.0
    %v1580 = vmax.f32 %v1468, 0.0
    %v1581 = vmax.f32 %v1469, 0.0
    %v1582 = vmax.f32 %v1470, 0.0
    %v1583 = vmax.f32 %v1471, 0.0
    %v1584 = vmax.f32 %v1472, 0.0
    %v1585 = vmax.f32 %v1473, 0.0
    %v1586 = vmax.f32 %v1474, 0.0
    %v1587 = vmax.f32 %v1475, 0.0
    %v1588 = vmax.f32 %v1476, 0.0
    %v1589 = vmax.f32 %v1477, 0.0
    %v1590 = vmax.f32 %v1478, 0.0
    %v1591 = vmax.f32 %v1479, 0.0
    %v1592 = vmax.f32 %v1480, 0.0
    %v1593 = vmax.f32 %v1481, 0.0
    %v1594 = vmax.f32 %v1482, 0.0
    %v1595 = vmax.f32 %v1483, 0.0
    %v1596 = vmax.f32 %v1484, 0.0
    %v1597 = vmax.f32 %v1485, 0.0
    %v1598 = vmax.f32 %v1486, 0.0
    %v1599 = vmax.f32 %v1487, 0.0
    %v1600 = vmax.f32 %v1488, 0.0
    %v1601 = vmax.f32 %v1489, 0.0
    %v1602 = vmax.f32 %v1490, 0.0
    %v1603 = vmax.f32 %v1491, 0.0
    %v1604 = vmax.f32 %v1492, 0.0
    %v1605 = vmax.f32 %v1493, 0.0
    %v1606 = vmax.f32 %v1494, 0.0
    %v1607 = vmax.f32 %v1495, 0.0
    %v1608 = vmax.f32 %v1496, 0.0
    %v1609 = vmax.f32 %v1497, 0.0
    %v1610 = vmax.f32 %v1498, 0.0
    %v1611 = vmax.f32 %v1499, 0.0
    %v1612 = vmax.f32 %v1500, 0.0
    %v1613 = vmax.f32 %v1501, 0.0
    %v1614 = vmax.f32 %v1502, 0.0
    %v1615 = vmax.f32 %v1503, 0.0
    %v1616 = vmax.f32 %v1504, %v1508
    %v1617 = vmax.f32 %v1505, %v1509
    %v1618 = vmax.f32 %v1506, %v1510
    %v1619 = vmax.f32 %v1507, %v1511
    %v1620 = vmax.f32 %v1512, %v1516
    %v1621 = vmax.f32 %v1513, %v1517
    %v1622 = vmax.f32 %v1514, %v1518
    %v1623 = vmax.f32 %v1515, %v1519
    %v1624 = vmax.f32 %v1520, %v1524
    %v1625 = vmax.f32 %v1521, %v1525
    %v1626 = vmax.f32 %v1522, %v1526
    %v1627 = vmax.f32 %v1523, %v1527
    %v1628 = vmax.f32 %v1528, %v1532
    %v1629 = vmax.f32 %v1529, %v1533
    %v1630 = vmax.f32 %v1530, %v1534
    %v1631 = vmax.f32 %v1531, %v1535
    %v1632 = vmax.f32 %v1536, %v1540
    %v1633 = vmax.f32 %v1537, %v1541
    %v1634 = vmax.f32 %v1538, %v1542
    %v1635 = vmax.f32 %v1539, %v1543
    %v1636 = vmax.f32 %v1544, %v1548
    %v1637 = vmax.f32 %v1545, %v1549
    %v1638 = vmax.f32 %v1546, %v1550
    %v1639 = vmax.f32 %v1547, %v1551
    %v1640 = vmax.f32 %v1552, %v1556
    %v1641 = vmax.f32 %v1553, %v1557
    %v1642 = vmax.f32 %v1554, %v1558
    %v1643 = vmax.f32 %v1555, %v1559
    %v1644 = vmax.f32 %v1560, %v1564
    %v1645 = vmax.f32 %v1561, %v1565
    %v1646 = vmax.f32 %v1562, %v1566
    %v1647 = vmax.f32 %v1563, %v1567
    %v1648 = vmax.f32 %v1568, %v1572
    %v1649 = vmax.f32 %v1569, %v1573
    %v1650 = vmax.f32 %v1570, %v1574
    %v1651 = vmax.f32 %v1571, %v1575
    %v1652 = vmax.f32 %v1576, %v1580
    %v1653 = vmax.f32 %v1577, %v1581
    %v1654 = vmax.f32 %v1578, %v1582
    %v1655 = vmax.f32 %v1579, %v1583
    %v1656 = vmax.f32 %v1584, %v1588
    %v1657 = vmax.f32 %v1585, %v1589
    %v1658 = vmax.f32 %v1586, %v1590
    %v1659 = vmax.f32 %v1587, %v1591
    %v1660 = vmax.f32 %v1592, %v1596
    %v1661 = vmax.f32 %v1593, %v1597
    %v1662 = vmax.f32 %v1594, %v1598
    %v1663 = vmax.f32 %v1595, %v1599
    %v1664 = vmax.f32 %v1600, %v1604
    %v1665 = vmax.f32 %v1601, %v1605
    %v1666 = vmax.f32 %v1602, %v1606
    %v1667 = vmax.f32 %v1603, %v1607
    %v1668 = vmax.f32 %v1608, %v1612
    %v1669 = vmax.f32 %v1609, %v1613
    %v1670 = vmax.f32 %v1610, %v1614
    %v1671 = vmax.f32 %v1611, %v1615
    %1672 = vst [vmem:[#allocation2] sm:$0xff] 0
    %vm1673 = vcmask 1043456
    %vm1674 = vcmask 523268
    %vm1675 = vmor %vm1674, %vm1673
    %1676 = vst.msk [vmem:[#allocation2 + $0x8] sm:$0xff] %vm1675, 0
    %s1677 = scalar_lea.vmem [#allocation2], 240
    %1678 = vst [vmem:[%s1677] sm:$0xff] 0
    %1679 = vst.msk [vmem:[%s1677 + $0x8] sm:$0xff] %vm1675, 0
    %v1680 = vpack.c.bf16 %v1616, %v1616
    %v1681 = vpack.c.bf16 %v1617, %v1617
    %v1682 = vpack.c.bf16 %v1618, %v1618
    %v1683 = vpack.c.bf16 %v1619, %v1619
    %v1684 = vpack.c.bf16 %v1620, %v1620
    %v1685 = vpack.c.bf16 %v1621, %v1621
    %v1686 = vpack.c.bf16 %v1622, %v1622
    %v1687 = vpack.c.bf16 %v1623, %v1623
    %v1688 = vpack.c.bf16 %v1624, %v1624
    %v1689 = vpack.c.bf16 %v1625, %v1625
    %v1690 = vpack.c.bf16 %v1626, %v1626
    %v1691 = vpack.c.bf16 %v1627, %v1627
    %v1692 = vpack.c.bf16 %v1628, %v1628
    %v1693 = vpack.c.bf16 %v1629, %v1629
    %v1694 = vpack.c.bf16 %v1630, %v1630
    %v1695 = vpack.c.bf16 %v1631, %v1631
    %v1696 = vpack.c.bf16 %v1632, %v1632
    %v1697 = vpack.c.bf16 %v1633, %v1633
    %v1698 = vpack.c.bf16 %v1634, %v1634
    %v1699 = vpack.c.bf16 %v1635, %v1635
    %v1700 = vpack.c.bf16 %v1636, %v1636
    %v1701 = vpack.c.bf16 %v1637, %v1637
    %v1702 = vpack.c.bf16 %v1638, %v1638
    %v1703 = vpack.c.bf16 %v1639, %v1639
    %v1704 = vpack.c.bf16 %v1640, %v1640
    %v1705 = vpack.c.bf16 %v1641, %v1641
    %v1706 = vpack.c.bf16 %v1642, %v1642
    %v1707 = vpack.c.bf16 %v1643, %v1643
    %v1708 = vpack.c.bf16 %v1644, %v1644
    %v1709 = vpack.c.bf16 %v1645, %v1645
    %v1710 = vpack.c.bf16 %v1646, %v1646
    %v1711 = vpack.c.bf16 %v1647, %v1647
    %v1712 = vpack.c.bf16 %v1648, %v1648
    %v1713 = vpack.c.bf16 %v1649, %v1649
    %v1714 = vpack.c.bf16 %v1650, %v1650
    %v1715 = vpack.c.bf16 %v1651, %v1651
    %v1716 = vpack.c.bf16 %v1652, %v1652
    %v1717 = vpack.c.bf16 %v1653, %v1653
    %v1718 = vpack.c.bf16 %v1654, %v1654
    %v1719 = vpack.c.bf16 %v1655, %v1655
    %v1720 = vpack.c.bf16 %v1656, %v1656
    %v1721 = vpack.c.bf16 %v1657, %v1657
    %v1722 = vpack.c.bf16 %v1658, %v1658
    %v1723 = vpack.c.bf16 %v1659, %v1659
    %v1724 = vpack.c.bf16 %v1660, %v1660
    %v1725 = vpack.c.bf16 %v1661, %v1661
    %v1726 = vpack.c.bf16 %v1662, %v1662
    %v1727 = vpack.c.bf16 %v1663, %v1663
    %v1728 = vpack.c.bf16 %v1664, %v1664
    %v1729 = vpack.c.bf16 %v1665, %v1665
    %v1730 = vpack.c.bf16 %v1666, %v1666
    %v1731 = vpack.c.bf16 %v1667, %v1667
    %v1732 = vpack.c.bf16 %v1668, %v1668
    %v1733 = vpack.c.bf16 %v1669, %v1669
    %v1734 = vpack.c.bf16 %v1670, %v1670
    %v1735 = vpack.c.bf16 %v1671, %v1671
    %v1792 = vunpack.c.l.b16 %v1680
    %v1793 = vunpack.c.l.b16 %v1681
    %v1794 = vunpack.c.l.b16 %v1682
    %v1795 = vunpack.c.l.b16 %v1683
    %v1796 = vunpack.c.l.b16 %v1684
    %v1797 = vunpack.c.l.b16 %v1685
    %v1798 = vunpack.c.l.b16 %v1686
    %v1799 = vunpack.c.l.b16 %v1687
    %v1800 = vunpack.c.l.b16 %v1688
    %v1801 = vunpack.c.l.b16 %v1689
    %v1802 = vunpack.c.l.b16 %v1690
    %v1803 = vunpack.c.l.b16 %v1691
    %v1804 = vunpack.c.l.b16 %v1692
    %v1805 = vunpack.c.l.b16 %v1693
    %v1806 = vunpack.c.l.b16 %v1694
    %v1807 = vunpack.c.l.b16 %v1695
    %v1808 = vunpack.c.l.b16 %v1696
    %v1809 = vunpack.c.l.b16 %v1697
    %v1810 = vunpack.c.l.b16 %v1698
    %v1811 = vunpack.c.l.b16 %v1699
    %v1812 = vunpack.c.l.b16 %v1700
    %v1813 = vunpack.c.l.b16 %v1701
    %v1814 = vunpack.c.l.b16 %v1702
    %v1815 = vunpack.c.l.b16 %v1703
    %v1816 = vunpack.c.l.b16 %v1704
    %v1817 = vunpack.c.l.b16 %v1705
    %v1818 = vunpack.c.l.b16 %v1706
    %v1819 = vunpack.c.l.b16 %v1707
    %v1820 = vunpack.c.l.b16 %v1708
    %v1821 = vunpack.c.l.b16 %v1709
    %v1822 = vunpack.c.l.b16 %v1710
    %v1823 = vunpack.c.l.b16 %v1711
    %v1824 = vunpack.c.l.b16 %v1712
    %v1825 = vunpack.c.l.b16 %v1713
    %v1826 = vunpack.c.l.b16 %v1714
    %v1827 = vunpack.c.l.b16 %v1715
    %v1828 = vunpack.c.l.b16 %v1716
    %v1829 = vunpack.c.l.b16 %v1717
    %v1830 = vunpack.c.l.b16 %v1718
    %v1831 = vunpack.c.l.b16 %v1719
    %v1832 = vunpack.c.l.b16 %v1720
    %v1833 = vunpack.c.l.b16 %v1721
    %v1834 = vunpack.c.l.b16 %v1722
    %v1835 = vunpack.c.l.b16 %v1723
    %v1836 = vunpack.c.l.b16 %v1724
    %v1837 = vunpack.c.l.b16 %v1725
    %v1838 = vunpack.c.l.b16 %v1726
    %v1839 = vunpack.c.l.b16 %v1727
    %v1840 = vunpack.c.l.b16 %v1728
    %v1841 = vunpack.c.l.b16 %v1729
    %v1842 = vunpack.c.l.b16 %v1730
    %v1843 = vunpack.c.l.b16 %v1731
    %v1844 = vunpack.c.l.b16 %v1732
    %v1845 = vunpack.c.l.b16 %v1733
    %v1846 = vunpack.c.l.b16 %v1734
    %v1847 = vunpack.c.l.b16 %v1735
    %v1848 = vpack.c.b16 %v1793, %v1792
    %v1849 = vpack.c.b16 %v1795, %v1794
    %v1850 = vpack.c.b16 %v1797, %v1796
    %v1851 = vpack.c.b16 %v1799, %v1798
    %v1852 = vpack.c.b16 %v1801, %v1800
    %v1853 = vpack.c.b16 %v1803, %v1802
    %v1854 = vpack.c.b16 %v1805, %v1804
    %v1855 = vpack.c.b16 %v1807, %v1806
    %v1856 = vpack.c.b16 %v1809, %v1808
    %v1857 = vpack.c.b16 %v1811, %v1810
    %v1858 = vpack.c.b16 %v1813, %v1812
    %v1859 = vpack.c.b16 %v1815, %v1814
    %v1860 = vpack.c.b16 %v1817, %v1816
    %v1861 = vpack.c.b16 %v1819, %v1818
    %v1862 = vpack.c.b16 %v1821, %v1820
    %v1863 = vpack.c.b16 %v1823, %v1822
    %v1864 = vpack.c.b16 %v1825, %v1824
    %v1865 = vpack.c.b16 %v1827, %v1826
    %v1866 = vpack.c.b16 %v1829, %v1828
    %v1867 = vpack.c.b16 %v1831, %v1830
    %v1868 = vpack.c.b16 %v1833, %v1832
    %v1869 = vpack.c.b16 %v1835, %v1834
    %v1870 = vpack.c.b16 %v1837, %v1836
    %v1871 = vpack.c.b16 %v1839, %v1838
    %v1872 = vpack.c.b16 %v1841, %v1840
    %v1873 = vpack.c.b16 %v1843, %v1842
    %v1874 = vpack.c.b16 %v1845, %v1844
    %v1875 = vpack.c.b16 %v1847, %v1846
    %s1904 = scalar_lea.vmem [#allocation2], 16
    %1905 = vst [vmem:[%s1904] sm:$0xff] %v1848
    %1906 = vst.msk [vmem:[%s1904 + $0x8] sm:$0xff] %vm1675, %v1849
    %1907 = vst [vmem:[%s1904 + $0x10] sm:$0xff] %v1850
    %1908 = vst.msk [vmem:[%s1904 + $0x18] sm:$0xff] %vm1675, %v1851
    %1909 = vst [vmem:[%s1904 + $0x20] sm:$0xff] %v1852
    %1910 = vst.msk [vmem:[%s1904 + $0x28] sm:$0xff] %vm1675, %v1853
    %1911 = vst [vmem:[%s1904 + $0x30] sm:$0xff] %v1854
    %1912 = vst.msk [vmem:[%s1904 + $0x38] sm:$0xff] %vm1675, %v1855
    %1913 = vst [vmem:[%s1904 + $0x40] sm:$0xff] %v1856
    %1914 = vst.msk [vmem:[%s1904 + $0x48] sm:$0xff] %vm1675, %v1857
    %1915 = vst [vmem:[%s1904 + $0x50] sm:$0xff] %v1858
    %1916 = vst.msk [vmem:[%s1904 + $0x58] sm:$0xff] %vm1675, %v1859
    %1917 = vst [vmem:[%s1904 + $0x60] sm:$0xff] %v1860
    %1918 = vst.msk [vmem:[%s1904 + $0x68] sm:$0xff] %vm1675, %v1861
    %1919 = vst [vmem:[%s1904 + $0x70] sm:$0xff] %v1862
    %1920 = vst.msk [vmem:[%s1904 + $0x78] sm:$0xff] %vm1675, %v1863
    %1921 = vst [vmem:[%s1904 + $0x80] sm:$0xff] %v1864
    %1922 = vst.msk [vmem:[%s1904 + $0x88] sm:$0xff] %vm1675, %v1865
    %1923 = vst [vmem:[%s1904 + $0x90] sm:$0xff] %v1866
    %1924 = vst.msk [vmem:[%s1904 + $0x98] sm:$0xff] %vm1675, %v1867
    %1925 = vst [vmem:[%s1904 + $0xa0] sm:$0xff] %v1868
    %1926 = vst.msk [vmem:[%s1904 + $0xa8] sm:$0xff] %vm1675, %v1869
    %1927 = vst [vmem:[%s1904 + $0xb0] sm:$0xff] %v1870
    %1928 = vst.msk [vmem:[%s1904 + $0xb8] sm:$0xff] %vm1675, %v1871
    %1929 = vst [vmem:[%s1904 + $0xc0] sm:$0xff] %v1872
    %1930 = vst.msk [vmem:[%s1904 + $0xc8] sm:$0xff] %vm1675, %v1873
    %1931 = vst [vmem:[%s1904 + $0xd0] sm:$0xff] %v1874
    %1932 = vst.msk [vmem:[%s1904 + $0xd8] sm:$0xff] %vm1675, %v1875
    %v1933 = vld [vmem:[#allocation2] sm:$0xff]
    %v1934 = vld [vmem:[#allocation2 + $0x8] sm:$0xff]
    %v1935 = vld [vmem:[#allocation2 + $0x10] sm:$0xff]
    %v1936 = vld [vmem:[#allocation2 + $0x18] sm:$0xff]
    %v1937 = vld [vmem:[#allocation2 + $0x20] sm:$0xff]
    %v1938 = vld [vmem:[#allocation2 + $0x28] sm:$0xff]
    %v1939 = vld [vmem:[#allocation2 + $0x30] sm:$0xff]
    %v1940 = vld [vmem:[#allocation2 + $0x38] sm:$0xff]
    %v1941 = vld [vmem:[#allocation2 + $0x40] sm:$0xff]
    %v1942 = vld [vmem:[#allocation2 + $0x48] sm:$0xff]
    %v1943 = vld [vmem:[#allocation2 + $0x50] sm:$0xff]
    %v1944 = vld [vmem:[#allocation2 + $0x58] sm:$0xff]
    %v1945 = vld [vmem:[#allocation2 + $0x60] sm:$0xff]
    %v1946 = vld [vmem:[#allocation2 + $0x68] sm:$0xff]
    %v1947 = vld [vmem:[#allocation2 + $0x70] sm:$0xff]
    %v1948 = vld [vmem:[#allocation2 + $0x78] sm:$0xff]
    %v1949 = vld [vmem:[#allocation2 + $0x80] sm:$0xff]
    %v1950 = vld [vmem:[#allocation2 + $0x88] sm:$0xff]
    %v1951 = vld [vmem:[#allocation2 + $0x90] sm:$0xff]
    %v1952 = vld [vmem:[#allocation2 + $0x98] sm:$0xff]
    %v1953 = vld [vmem:[#allocation2 + $0xa0] sm:$0xff]
    %v1954 = vld [vmem:[#allocation2 + $0xa8] sm:$0xff]
    %v1955 = vld [vmem:[#allocation2 + $0xb0] sm:$0xff]
    %v1956 = vld [vmem:[#allocation2 + $0xb8] sm:$0xff]
    %v1957 = vld [vmem:[#allocation2 + $0xc0] sm:$0xff]
    %v1958 = vld [vmem:[#allocation2 + $0xc8] sm:$0xff]
    %v1959 = vld [vmem:[#allocation2 + $0xd0] sm:$0xff]
    %v1960 = vld [vmem:[#allocation2 + $0xd8] sm:$0xff]
    %v1961 = vld [vmem:[%s1904] sm:$0xff]
    %v1962 = vld [vmem:[%s1904 + $0x8] sm:$0xff]
    %v1963 = vld [vmem:[%s1904 + $0x10] sm:$0xff]
    %v1964 = vld [vmem:[%s1904 + $0x18] sm:$0xff]
    %v1965 = vld [vmem:[%s1904 + $0x20] sm:$0xff]
    %v1966 = vld [vmem:[%s1904 + $0x28] sm:$0xff]
    %v1967 = vld [vmem:[%s1904 + $0x30] sm:$0xff]
    %v1968 = vld [vmem:[%s1904 + $0x38] sm:$0xff]
    %v1969 = vld [vmem:[%s1904 + $0x40] sm:$0xff]
    %v1970 = vld [vmem:[%s1904 + $0x48] sm:$0xff]
    %v1971 = vld [vmem:[%s1904 + $0x50] sm:$0xff]
    %v1972 = vld [vmem:[%s1904 + $0x58] sm:$0xff]
    %v1973 = vld [vmem:[%s1904 + $0x60] sm:$0xff]
    %v1974 = vld [vmem:[%s1904 + $0x68] sm:$0xff]
    %v1975 = vld [vmem:[%s1904 + $0x70] sm:$0xff]
    %v1976 = vld [vmem:[%s1904 + $0x78] sm:$0xff]
    %v1977 = vld [vmem:[%s1904 + $0x80] sm:$0xff]
    %v1978 = vld [vmem:[%s1904 + $0x88] sm:$0xff]
    %v1979 = vld [vmem:[%s1904 + $0x90] sm:$0xff]
    %v1980 = vld [vmem:[%s1904 + $0x98] sm:$0xff]
    %v1981 = vld [vmem:[%s1904 + $0xa0] sm:$0xff]
    %v1982 = vld [vmem:[%s1904 + $0xa8] sm:$0xff]
    %v1983 = vld [vmem:[%s1904 + $0xb0] sm:$0xff]
    %v1984 = vld [vmem:[%s1904 + $0xb8] sm:$0xff]
    %v1985 = vld [vmem:[%s1904 + $0xc0] sm:$0xff]
    %v1986 = vld [vmem:[%s1904 + $0xc8] sm:$0xff]
    %v1987 = vld [vmem:[%s1904 + $0xd0] sm:$0xff]
    %v1988 = vld [vmem:[%s1904 + $0xd8] sm:$0xff]
    %s1989 = scalar_lea.vmem [#allocation2], 32
    %v1990 = vld [vmem:[%s1989] sm:$0xff]
    %v1991 = vld [vmem:[%s1989 + $0x8] sm:$0xff]
    %v1992 = vld [vmem:[%s1989 + $0x10] sm:$0xff]
    %v1993 = vld [vmem:[%s1989 + $0x18] sm:$0xff]
    %v1994 = vld [vmem:[%s1989 + $0x20] sm:$0xff]
    %v1995 = vld [vmem:[%s1989 + $0x28] sm:$0xff]
    %v1996 = vld [vmem:[%s1989 + $0x30] sm:$0xff]
    %v1997 = vld [vmem:[%s1989 + $0x38] sm:$0xff]
    %v1998 = vld [vmem:[%s1989 + $0x40] sm:$0xff]
    %v1999 = vld [vmem:[%s1989 + $0x48] sm:$0xff]
    %v2000 = vld [vmem:[%s1989 + $0x50] sm:$0xff]
    %v2001 = vld [vmem:[%s1989 + $0x58] sm:$0xff]
    %v2002 = vld [vmem:[%s1989 + $0x60] sm:$0xff]
    %v2003 = vld [vmem:[%s1989 + $0x68] sm:$0xff]
    %v2004 = vld [vmem:[%s1989 + $0x70] sm:$0xff]
    %v2005 = vld [vmem:[%s1989 + $0x78] sm:$0xff]
    %v2006 = vld [vmem:[%s1989 + $0x80] sm:$0xff]
    %v2007 = vld [vmem:[%s1989 + $0x88] sm:$0xff]
    %v2008 = vld [vmem:[%s1989 + $0x90] sm:$0xff]
    %v2009 = vld [vmem:[%s1989 + $0x98] sm:$0xff]
    %v2010 = vld [vmem:[%s1989 + $0xa0] sm:$0xff]
    %v2011 = vld [vmem:[%s1989 + $0xa8] sm:$0xff]
    %v2012 = vld [vmem:[%s1989 + $0xb0] sm:$0xff]
    %v2013 = vld [vmem:[%s1989 + $0xb8] sm:$0xff]
    %v2014 = vld [vmem:[%s1989 + $0xc0] sm:$0xff]
    %v2015 = vld [vmem:[%s1989 + $0xc8] sm:$0xff]
    %v2016 = vld [vmem:[%s1989 + $0xd0] sm:$0xff]
    %v2017 = vld [vmem:[%s1989 + $0xd8] sm:$0xff]
    %v2018 = vld [vmem:[#allocation8] sm:$0xff]
    %v2019 = vld [vmem:[#allocation8 + $0x8] sm:$0xff]
    %v2020 = vld [vmem:[#allocation8 + $0x10] sm:$0xff]
    %v2021 = vld [vmem:[#allocation8 + $0x18] sm:$0xff]
    %v2022 = vld [vmem:[#allocation8 + $0x20] sm:$0xff]
    %v2023 = vld [vmem:[#allocation8 + $0x28] sm:$0xff]
    %v2024 = vld [vmem:[#allocation8 + $0x30] sm:$0xff]
    %v2025 = vld [vmem:[#allocation8 + $0x38] sm:$0xff]
    %v2026 = vld [vmem:[#allocation8 + $0x40] sm:$0xff]
    %v2027 = vld [vmem:[#allocation8 + $0x48] sm:$0xff]
    %v2028 = vld [vmem:[#allocation8 + $0x50] sm:$0xff]
    %v2029 = vld [vmem:[#allocation8 + $0x58] sm:$0xff]
    %v2030 = vld [vmem:[#allocation8 + $0x60] sm:$0xff]
    %v2031 = vld [vmem:[#allocation8 + $0x68] sm:$0xff]
    %v2032 = vld [vmem:[#allocation8 + $0x70] sm:$0xff]
    %v2033 = vld [vmem:[#allocation8 + $0x78] sm:$0xff]
    %v2034 = vld [vmem:[#allocation8 + $0x80] sm:$0xff]
    %v2035 = vld [vmem:[#allocation8 + $0x88] sm:$0xff]
    %v2036 = vld [vmem:[#allocation8 + $0x90] sm:$0xff]
    %v2037 = vld [vmem:[#allocation8 + $0x98] sm:$0xff]
    %v2038 = vld [vmem:[#allocation8 + $0xa0] sm:$0xff]
    %v2039 = vld [vmem:[#allocation8 + $0xa8] sm:$0xff]
    %v2040 = vld [vmem:[#allocation8 + $0xb0] sm:$0xff]
    %v2041 = vld [vmem:[#allocation8 + $0xb8] sm:$0xff]
    %v2042 = vld [vmem:[#allocation8 + $0xc0] sm:$0xff]
    %v2043 = vld [vmem:[#allocation8 + $0xc8] sm:$0xff]
    %v2044 = vld [vmem:[#allocation8 + $0xd0] sm:$0xff]
    %v2045 = vld [vmem:[#allocation8 + $0xd8] sm:$0xff]
    %v2046 = vld [vmem:[#allocation8 + $0xe0] sm:$0xff]
    %v2047 = vld [vmem:[#allocation8 + $0xe8] sm:$0xff]
    %v2048 = vld [vmem:[#allocation8 + $0xf0] sm:$0xff]
    %v2049 = vld [vmem:[#allocation8 + $0xf8] sm:$0xff]
    %v2050 = vld [vmem:[#allocation8 + $0x100] sm:$0xff]
    %v2051 = vld [vmem:[#allocation8 + $0x108] sm:$0xff]
    %v2052 = vld [vmem:[#allocation8 + $0x110] sm:$0xff]
    %v2053 = vld [vmem:[#allocation8 + $0x118] sm:$0xff]
    %v2054 = vld [vmem:[#allocation8 + $0x120] sm:$0xff]
    %v2055 = vld [vmem:[#allocation8 + $0x128] sm:$0xff]
    %v2056 = vld [vmem:[#allocation8 + $0x130] sm:$0xff]
    %v2057 = vld [vmem:[#allocation8 + $0x138] sm:$0xff]
    %v2058 = vld [vmem:[#allocation8 + $0x140] sm:$0xff]
    %v2059 = vld [vmem:[#allocation8 + $0x148] sm:$0xff]
    %v2060 = vld [vmem:[#allocation8 + $0x150] sm:$0xff]
    %v2061 = vld [vmem:[#allocation8 + $0x158] sm:$0xff]
    %v2062 = vld [vmem:[#allocation8 + $0x160] sm:$0xff]
    %v2063 = vld [vmem:[#allocation8 + $0x168] sm:$0xff]
    %v2064 = vld [vmem:[#allocation8 + $0x170] sm:$0xff]
    %v2065 = vld [vmem:[#allocation8 + $0x178] sm:$0xff]
    %v2066 = vld [vmem:[#allocation8 + $0x180] sm:$0xff]
    %v2067 = vld [vmem:[#allocation8 + $0x188] sm:$0xff]
    %v2068 = vld [vmem:[#allocation8 + $0x190] sm:$0xff]
    %v2069 = vld [vmem:[#allocation8 + $0x198] sm:$0xff]
    %v2070 = vld [vmem:[#allocation8 + $0x1a0] sm:$0xff]
    %v2071 = vld [vmem:[#allocation8 + $0x1a8] sm:$0xff]
    %v2072 = vld [vmem:[#allocation8 + $0x1b0] sm:$0xff]
    %v2073 = vld [vmem:[#allocation8 + $0x1b8] sm:$0xff]
    %v2074 = vld [vmem:[#allocation8 + $0x1c0] sm:$0xff]
    %v2075 = vld [vmem:[#allocation8 + $0x1c8] sm:$0xff]
    %v2076 = vld [vmem:[#allocation8 + $0x1d0] sm:$0xff]
    %v2077 = vld [vmem:[#allocation8 + $0x1d8] sm:$0xff]
    %v2078 = vld [vmem:[#allocation8 + $0x1e0] sm:$0xff]
    %v2079 = vld [vmem:[#allocation8 + $0x1e8] sm:$0xff]
    %v2080 = vld [vmem:[#allocation8 + $0x1f0] sm:$0xff]
    %v2081 = vld [vmem:[#allocation8 + $0x1f8] sm:$0xff]
    %v2082 = vld [vmem:[#allocation8 + $0x200] sm:$0xff]
    %v2083 = vld [vmem:[#allocation8 + $0x208] sm:$0xff]
    %v2084 = vld [vmem:[#allocation8 + $0x210] sm:$0xff]
    %v2085 = vld [vmem:[#allocation8 + $0x218] sm:$0xff]
    %v2086 = vld [vmem:[#allocation8 + $0x220] sm:$0xff]
    %v2087 = vld [vmem:[#allocation8 + $0x228] sm:$0xff]
    %v2088 = vld [vmem:[#allocation8 + $0x230] sm:$0xff]
    %v2089 = vld [vmem:[#allocation8 + $0x238] sm:$0xff]
    %v2090 = vld [vmem:[#allocation8 + $0x240] sm:$0xff]
    %v2091 = vld [vmem:[#allocation8 + $0x248] sm:$0xff]
    %v2092 = vld [vmem:[#allocation8 + $0x250] sm:$0xff]
    %v2093 = vld [vmem:[#allocation8 + $0x258] sm:$0xff]
    %v2094 = vld [vmem:[#allocation8 + $0x260] sm:$0xff]
    %v2095 = vld [vmem:[#allocation8 + $0x268] sm:$0xff]
    %v2096 = vld [vmem:[#allocation8 + $0x270] sm:$0xff]
    %v2097 = vld [vmem:[#allocation8 + $0x278] sm:$0xff]
    %v2098 = vld [vmem:[#allocation8 + $0x280] sm:$0xff]
    %v2099 = vld [vmem:[#allocation8 + $0x288] sm:$0xff]
    %v2100 = vld [vmem:[#allocation8 + $0x290] sm:$0xff]
    %v2101 = vld [vmem:[#allocation8 + $0x298] sm:$0xff]
    %v2102 = vld [vmem:[#allocation8 + $0x2a0] sm:$0xff]
    %v2103 = vld [vmem:[#allocation8 + $0x2a8] sm:$0xff]
    %v2104 = vld [vmem:[#allocation8 + $0x2b0] sm:$0xff]
    %v2105 = vld [vmem:[#allocation8 + $0x2b8] sm:$0xff]
    %v2106 = vld [vmem:[#allocation8 + $0x2c0] sm:$0xff]
    %v2107 = vld [vmem:[#allocation8 + $0x2c8] sm:$0xff]
    %v2108 = vld [vmem:[#allocation8 + $0x2d0] sm:$0xff]
    %v2109 = vld [vmem:[#allocation8 + $0x2d8] sm:$0xff]
    %v2110 = vld [vmem:[#allocation8 + $0x2e0] sm:$0xff]
    %v2111 = vld [vmem:[#allocation8 + $0x2e8] sm:$0xff]
    %v2112 = vld [vmem:[#allocation8 + $0x2f0] sm:$0xff]
    %v2113 = vld [vmem:[#allocation8 + $0x2f8] sm:$0xff]
    %v2114 = vld [vmem:[#allocation8 + $0x300] sm:$0xff]
    %v2115 = vld [vmem:[#allocation8 + $0x308] sm:$0xff]
    %v2116 = vld [vmem:[#allocation8 + $0x310] sm:$0xff]
    %v2117 = vld [vmem:[#allocation8 + $0x318] sm:$0xff]
    %v2118 = vld [vmem:[#allocation8 + $0x320] sm:$0xff]
    %v2119 = vld [vmem:[#allocation8 + $0x328] sm:$0xff]
    %v2120 = vld [vmem:[#allocation8 + $0x330] sm:$0xff]
    %v2121 = vld [vmem:[#allocation8 + $0x338] sm:$0xff]
    %v2122 = vld [vmem:[#allocation8 + $0x340] sm:$0xff]
    %v2123 = vld [vmem:[#allocation8 + $0x348] sm:$0xff]
    %v2124 = vld [vmem:[#allocation8 + $0x350] sm:$0xff]
    %v2125 = vld [vmem:[#allocation8 + $0x358] sm:$0xff]
    %v2126 = vld [vmem:[#allocation8 + $0x360] sm:$0xff]
    %v2127 = vld [vmem:[#allocation8 + $0x368] sm:$0xff]
    %v2128 = vld [vmem:[#allocation8 + $0x370] sm:$0xff]
    %v2129 = vld [vmem:[#allocation8 + $0x378] sm:$0xff]
    %s2130 = scalar_lea.vmem [#allocation8], 896
    %v2131 = vld [vmem:[%s2130] sm:$0xff]
    %v2132 = vld [vmem:[%s2130 + $0x8] sm:$0xff]
    %v2133 = vld [vmem:[%s2130 + $0x10] sm:$0xff]
    %v2134 = vld [vmem:[%s2130 + $0x18] sm:$0xff]
    %v2135 = vld [vmem:[%s2130 + $0x20] sm:$0xff]
    %v2136 = vld [vmem:[%s2130 + $0x28] sm:$0xff]
    %v2137 = vld [vmem:[%s2130 + $0x30] sm:$0xff]
    %v2138 = vld [vmem:[%s2130 + $0x38] sm:$0xff]
    %v2139 = vld [vmem:[%s2130 + $0x40] sm:$0xff]
    %v2140 = vld [vmem:[%s2130 + $0x48] sm:$0xff]
    %v2141 = vld [vmem:[%s2130 + $0x50] sm:$0xff]
    %v2142 = vld [vmem:[%s2130 + $0x58] sm:$0xff]
    %v2143 = vld [vmem:[%s2130 + $0x60] sm:$0xff]
    %v2144 = vld [vmem:[%s2130 + $0x68] sm:$0xff]
    %v2145 = vld [vmem:[%s2130 + $0x70] sm:$0xff]
    %v2146 = vld [vmem:[%s2130 + $0x78] sm:$0xff]
    %v2147 = vld [vmem:[%s2130 + $0x80] sm:$0xff]
    %v2148 = vld [vmem:[%s2130 + $0x88] sm:$0xff]
    %v2149 = vld [vmem:[%s2130 + $0x90] sm:$0xff]
    %v2150 = vld [vmem:[%s2130 + $0x98] sm:$0xff]
    %v2151 = vld [vmem:[%s2130 + $0xa0] sm:$0xff]
    %v2152 = vld [vmem:[%s2130 + $0xa8] sm:$0xff]
    %v2153 = vld [vmem:[%s2130 + $0xb0] sm:$0xff]
    %v2154 = vld [vmem:[%s2130 + $0xb8] sm:$0xff]
    %v2155 = vld [vmem:[%s2130 + $0xc0] sm:$0xff]
    %v2156 = vld [vmem:[%s2130 + $0xc8] sm:$0xff]
    %v2157 = vld [vmem:[%s2130 + $0xd0] sm:$0xff]
    %v2158 = vld [vmem:[%s2130 + $0xd8] sm:$0xff]
    %v2159 = vld [vmem:[%s2130 + $0xe0] sm:$0xff]
    %v2160 = vld [vmem:[%s2130 + $0xe8] sm:$0xff]
    %v2161 = vld [vmem:[%s2130 + $0xf0] sm:$0xff]
    %v2162 = vld [vmem:[%s2130 + $0xf8] sm:$0xff]
    %v2163 = vld [vmem:[%s2130 + $0x100] sm:$0xff]
    %v2164 = vld [vmem:[%s2130 + $0x108] sm:$0xff]
    %v2165 = vld [vmem:[%s2130 + $0x110] sm:$0xff]
    %v2166 = vld [vmem:[%s2130 + $0x118] sm:$0xff]
    %v2167 = vld [vmem:[%s2130 + $0x120] sm:$0xff]
    %v2168 = vld [vmem:[%s2130 + $0x128] sm:$0xff]
    %v2169 = vld [vmem:[%s2130 + $0x130] sm:$0xff]
    %v2170 = vld [vmem:[%s2130 + $0x138] sm:$0xff]
    %v2171 = vld [vmem:[%s2130 + $0x140] sm:$0xff]
    %v2172 = vld [vmem:[%s2130 + $0x148] sm:$0xff]
    %v2173 = vld [vmem:[%s2130 + $0x150] sm:$0xff]
    %v2174 = vld [vmem:[%s2130 + $0x158] sm:$0xff]
    %v2175 = vld [vmem:[%s2130 + $0x160] sm:$0xff]
    %v2176 = vld [vmem:[%s2130 + $0x168] sm:$0xff]
    %v2177 = vld [vmem:[%s2130 + $0x170] sm:$0xff]
    %v2178 = vld [vmem:[%s2130 + $0x178] sm:$0xff]
    %v2179 = vld [vmem:[%s2130 + $0x180] sm:$0xff]
    %v2180 = vld [vmem:[%s2130 + $0x188] sm:$0xff]
    %v2181 = vld [vmem:[%s2130 + $0x190] sm:$0xff]
    %v2182 = vld [vmem:[%s2130 + $0x198] sm:$0xff]
    %v2183 = vld [vmem:[%s2130 + $0x1a0] sm:$0xff]
    %v2184 = vld [vmem:[%s2130 + $0x1a8] sm:$0xff]
    %v2185 = vld [vmem:[%s2130 + $0x1b0] sm:$0xff]
    %v2186 = vld [vmem:[%s2130 + $0x1b8] sm:$0xff]
    %v2187 = vld [vmem:[%s2130 + $0x1c0] sm:$0xff]
    %v2188 = vld [vmem:[%s2130 + $0x1c8] sm:$0xff]
    %v2189 = vld [vmem:[%s2130 + $0x1d0] sm:$0xff]
    %v2190 = vld [vmem:[%s2130 + $0x1d8] sm:$0xff]
    %v2191 = vld [vmem:[%s2130 + $0x1e0] sm:$0xff]
    %v2192 = vld [vmem:[%s2130 + $0x1e8] sm:$0xff]
    %v2193 = vld [vmem:[%s2130 + $0x1f0] sm:$0xff]
    %v2194 = vld [vmem:[%s2130 + $0x1f8] sm:$0xff]
    %v2195 = vld [vmem:[%s2130 + $0x200] sm:$0xff]
    %v2196 = vld [vmem:[%s2130 + $0x208] sm:$0xff]
    %v2197 = vld [vmem:[%s2130 + $0x210] sm:$0xff]
    %v2198 = vld [vmem:[%s2130 + $0x218] sm:$0xff]
    %v2199 = vld [vmem:[%s2130 + $0x220] sm:$0xff]
    %v2200 = vld [vmem:[%s2130 + $0x228] sm:$0xff]
    %v2201 = vld [vmem:[%s2130 + $0x230] sm:$0xff]
    %v2202 = vld [vmem:[%s2130 + $0x238] sm:$0xff]
    %v2203 = vld [vmem:[%s2130 + $0x240] sm:$0xff]
    %v2204 = vld [vmem:[%s2130 + $0x248] sm:$0xff]
    %v2205 = vld [vmem:[%s2130 + $0x250] sm:$0xff]
    %v2206 = vld [vmem:[%s2130 + $0x258] sm:$0xff]
    %v2207 = vld [vmem:[%s2130 + $0x260] sm:$0xff]
    %v2208 = vld [vmem:[%s2130 + $0x268] sm:$0xff]
    %v2209 = vld [vmem:[%s2130 + $0x270] sm:$0xff]
    %v2210 = vld [vmem:[%s2130 + $0x278] sm:$0xff]
    %v2211 = vld [vmem:[%s2130 + $0x280] sm:$0xff]
    %v2212 = vld [vmem:[%s2130 + $0x288] sm:$0xff]
    %v2213 = vld [vmem:[%s2130 + $0x290] sm:$0xff]
    %v2214 = vld [vmem:[%s2130 + $0x298] sm:$0xff]
    %v2215 = vld [vmem:[%s2130 + $0x2a0] sm:$0xff]
    %v2216 = vld [vmem:[%s2130 + $0x2a8] sm:$0xff]
    %v2217 = vld [vmem:[%s2130 + $0x2b0] sm:$0xff]
    %v2218 = vld [vmem:[%s2130 + $0x2b8] sm:$0xff]
    %v2219 = vld [vmem:[%s2130 + $0x2c0] sm:$0xff]
    %v2220 = vld [vmem:[%s2130 + $0x2c8] sm:$0xff]
    %v2221 = vld [vmem:[%s2130 + $0x2d0] sm:$0xff]
    %v2222 = vld [vmem:[%s2130 + $0x2d8] sm:$0xff]
    %v2223 = vld [vmem:[%s2130 + $0x2e0] sm:$0xff]
    %v2224 = vld [vmem:[%s2130 + $0x2e8] sm:$0xff]
    %v2225 = vld [vmem:[%s2130 + $0x2f0] sm:$0xff]
    %v2226 = vld [vmem:[%s2130 + $0x2f8] sm:$0xff]
    %v2227 = vld [vmem:[%s2130 + $0x300] sm:$0xff]
    %v2228 = vld [vmem:[%s2130 + $0x308] sm:$0xff]
    %v2229 = vld [vmem:[%s2130 + $0x310] sm:$0xff]
    %v2230 = vld [vmem:[%s2130 + $0x318] sm:$0xff]
    %v2231 = vld [vmem:[%s2130 + $0x320] sm:$0xff]
    %v2232 = vld [vmem:[%s2130 + $0x328] sm:$0xff]
    %v2233 = vld [vmem:[%s2130 + $0x330] sm:$0xff]
    %v2234 = vld [vmem:[%s2130 + $0x338] sm:$0xff]
    %v2235 = vld [vmem:[%s2130 + $0x340] sm:$0xff]
    %v2236 = vld [vmem:[%s2130 + $0x348] sm:$0xff]
    %v2237 = vld [vmem:[%s2130 + $0x350] sm:$0xff]
    %v2238 = vld [vmem:[%s2130 + $0x358] sm:$0xff]
    %v2239 = vld [vmem:[%s2130 + $0x360] sm:$0xff]
    %v2240 = vld [vmem:[%s2130 + $0x368] sm:$0xff]
    %v2241 = vld [vmem:[%s2130 + $0x370] sm:$0xff]
    %v2242 = vld [vmem:[%s2130 + $0x378] sm:$0xff]
    %v2271 = vunpack.c.l.b16 %v1961
    %v2272 = vunpack.c.h.b16 %v1961
    %v2273 = vunpack.c.l.b16 %v1962
    %v2274 = vunpack.c.h.b16 %v1962
    %v2275 = vunpack.c.l.b16 %v1963
    %v2276 = vunpack.c.h.b16 %v1963
    %v2277 = vunpack.c.l.b16 %v1964
    %v2278 = vunpack.c.h.b16 %v1964
    %v2279 = vunpack.c.l.b16 %v1965
    %v2280 = vunpack.c.h.b16 %v1965
    %v2281 = vunpack.c.l.b16 %v1966
    %v2282 = vunpack.c.h.b16 %v1966
    %v2283 = vunpack.c.l.b16 %v1967
    %v2284 = vunpack.c.h.b16 %v1967
    %v2285 = vunpack.c.l.b16 %v1968
    %v2286 = vunpack.c.h.b16 %v1968
    %v2287 = vunpack.c.l.b16 %v1969
    %v2288 = vunpack.c.h.b16 %v1969
    %v2289 = vunpack.c.l.b16 %v1970
    %v2290 = vunpack.c.h.b16 %v1970
    %v2291 = vunpack.c.l.b16 %v1971
    %v2292 = vunpack.c.h.b16 %v1971
    %v2293 = vunpack.c.l.b16 %v1972
    %v2294 = vunpack.c.h.b16 %v1972
    %v2295 = vunpack.c.l.b16 %v1973
    %v2296 = vunpack.c.h.b16 %v1973
    %v2297 = vunpack.c.l.b16 %v1974
    %v2298 = vunpack.c.h.b16 %v1974
    %v2299 = vunpack.c.l.b16 %v1975
    %v2300 = vunpack.c.h.b16 %v1975
    %v2301 = vunpack.c.l.b16 %v1976
    %v2302 = vunpack.c.h.b16 %v1976
    %v2303 = vunpack.c.l.b16 %v1977
    %v2304 = vunpack.c.h.b16 %v1977
    %v2305 = vunpack.c.l.b16 %v1978
    %v2306 = vunpack.c.h.b16 %v1978
    %v2307 = vunpack.c.l.b16 %v1979
    %v2308 = vunpack.c.h.b16 %v1979
    %v2309 = vunpack.c.l.b16 %v1980
    %v2310 = vunpack.c.h.b16 %v1980
    %v2311 = vunpack.c.l.b16 %v1981
    %v2312 = vunpack.c.h.b16 %v1981
    %v2313 = vunpack.c.l.b16 %v1982
    %v2314 = vunpack.c.h.b16 %v1982
    %v2315 = vunpack.c.l.b16 %v1983
    %v2316 = vunpack.c.h.b16 %v1983
    %v2317 = vunpack.c.l.b16 %v1984
    %v2318 = vunpack.c.h.b16 %v1984
    %v2319 = vunpack.c.l.b16 %v1985
    %v2320 = vunpack.c.h.b16 %v1985
    %v2321 = vunpack.c.l.b16 %v1986
    %v2322 = vunpack.c.h.b16 %v1986
    %v2323 = vunpack.c.l.b16 %v1987
    %v2324 = vunpack.c.h.b16 %v1987
    %v2325 = vunpack.c.l.b16 %v1988
    %v2326 = vunpack.c.h.b16 %v1988
    %v2327 = vpack.c.b16 %v2275, %v2271
    %v2328 = vpack.c.b16 %v2276, %v2272
    %v2329 = vpack.c.b16 %v2277, %v2273
    %v2330 = vpack.c.b16 %v2278, %v2274
    %v2331 = vpack.c.b16 %v2283, %v2279
    %v2332 = vpack.c.b16 %v2284, %v2280
    %v2333 = vpack.c.b16 %v2285, %v2281
    %v2334 = vpack.c.b16 %v2286, %v2282
    %v2335 = vpack.c.b16 %v2291, %v2287
    %v2336 = vpack.c.b16 %v2292, %v2288
    %v2337 = vpack.c.b16 %v2293, %v2289
    %v2338 = vpack.c.b16 %v2294, %v2290
    %v2339 = vpack.c.b16 %v2299, %v2295
    %v2340 = vpack.c.b16 %v2300, %v2296
    %v2341 = vpack.c.b16 %v2301, %v2297
    %v2342 = vpack.c.b16 %v2302, %v2298
    %v2343 = vpack.c.b16 %v2307, %v2303
    %v2344 = vpack.c.b16 %v2308, %v2304
    %v2345 = vpack.c.b16 %v2309, %v2305
    %v2346 = vpack.c.b16 %v2310, %v2306
    %v2347 = vpack.c.b16 %v2315, %v2311
    %v2348 = vpack.c.b16 %v2316, %v2312
    %v2349 = vpack.c.b16 %v2317, %v2313
    %v2350 = vpack.c.b16 %v2318, %v2314
    %v2351 = vpack.c.b16 %v2323, %v2319
    %v2352 = vpack.c.b16 %v2324, %v2320
    %v2353 = vpack.c.b16 %v2325, %v2321
    %v2354 = vpack.c.b16 %v2326, %v2322
    %v2488 = vunpack.c.l.b16 %v2131
    %v2489 = vunpack.c.h.b16 %v2131
    %v2490 = vunpack.c.l.b16 %v2132
    %v2491 = vunpack.c.h.b16 %v2132
    %v2492 = vunpack.c.l.b16 %v2133
    %v2493 = vunpack.c.h.b16 %v2133
    %v2494 = vunpack.c.l.b16 %v2134
    %v2495 = vunpack.c.h.b16 %v2134
    %v2496 = vunpack.c.l.b16 %v2135
    %v2497 = vunpack.c.h.b16 %v2135
    %v2498 = vunpack.c.l.b16 %v2136
    %v2499 = vunpack.c.h.b16 %v2136
    %v2500 = vunpack.c.l.b16 %v2137
    %v2501 = vunpack.c.h.b16 %v2137
    %v2502 = vunpack.c.l.b16 %v2138
    %v2503 = vunpack.c.h.b16 %v2138
    %v2504 = vunpack.c.l.b16 %v2139
    %v2505 = vunpack.c.h.b16 %v2139
    %v2506 = vunpack.c.l.b16 %v2140
    %v2507 = vunpack.c.h.b16 %v2140
    %v2508 = vunpack.c.l.b16 %v2141
    %v2509 = vunpack.c.h.b16 %v2141
    %v2510 = vunpack.c.l.b16 %v2142
    %v2511 = vunpack.c.h.b16 %v2142
    %v2512 = vunpack.c.l.b16 %v2143
    %v2513 = vunpack.c.h.b16 %v2143
    %v2514 = vunpack.c.l.b16 %v2144
    %v2515 = vunpack.c.h.b16 %v2144
    %v2516 = vunpack.c.l.b16 %v2145
    %v2517 = vunpack.c.h.b16 %v2145
    %v2518 = vunpack.c.l.b16 %v2146
    %v2519 = vunpack.c.h.b16 %v2146
    %v2520 = vunpack.c.l.b16 %v2147
    %v2521 = vunpack.c.h.b16 %v2147
    %v2522 = vunpack.c.l.b16 %v2148
    %v2523 = vunpack.c.h.b16 %v2148
    %v2524 = vunpack.c.l.b16 %v2149
    %v2525 = vunpack.c.h.b16 %v2149
    %v2526 = vunpack.c.l.b16 %v2150
    %v2527 = vunpack.c.h.b16 %v2150
    %v2528 = vunpack.c.l.b16 %v2151
    %v2529 = vunpack.c.h.b16 %v2151
    %v2530 = vunpack.c.l.b16 %v2152
    %v2531 = vunpack.c.h.b16 %v2152
    %v2532 = vunpack.c.l.b16 %v2153
    %v2533 = vunpack.c.h.b16 %v2153
    %v2534 = vunpack.c.l.b16 %v2154
    %v2535 = vunpack.c.h.b16 %v2154
    %v2536 = vunpack.c.l.b16 %v2155
    %v2537 = vunpack.c.h.b16 %v2155
    %v2538 = vunpack.c.l.b16 %v2156
    %v2539 = vunpack.c.h.b16 %v2156
    %v2540 = vunpack.c.l.b16 %v2157
    %v2541 = vunpack.c.h.b16 %v2157
    %v2542 = vunpack.c.l.b16 %v2158
    %v2543 = vunpack.c.h.b16 %v2158
    %v2544 = vunpack.c.l.b16 %v2159
    %v2545 = vunpack.c.h.b16 %v2159
    %v2546 = vunpack.c.l.b16 %v2160
    %v2547 = vunpack.c.h.b16 %v2160
    %v2548 = vunpack.c.l.b16 %v2161
    %v2549 = vunpack.c.h.b16 %v2161
    %v2550 = vunpack.c.l.b16 %v2162
    %v2551 = vunpack.c.h.b16 %v2162
    %v2552 = vunpack.c.l.b16 %v2163
    %v2553 = vunpack.c.h.b16 %v2163
    %v2554 = vunpack.c.l.b16 %v2164
    %v2555 = vunpack.c.h.b16 %v2164
    %v2556 = vunpack.c.l.b16 %v2165
    %v2557 = vunpack.c.h.b16 %v2165
    %v2558 = vunpack.c.l.b16 %v2166
    %v2559 = vunpack.c.h.b16 %v2166
    %v2560 = vunpack.c.l.b16 %v2167
    %v2561 = vunpack.c.h.b16 %v2167
    %v2562 = vunpack.c.l.b16 %v2168
    %v2563 = vunpack.c.h.b16 %v2168
    %v2564 = vunpack.c.l.b16 %v2169
    %v2565 = vunpack.c.h.b16 %v2169
    %v2566 = vunpack.c.l.b16 %v2170
    %v2567 = vunpack.c.h.b16 %v2170
    %v2568 = vunpack.c.l.b16 %v2171
    %v2569 = vunpack.c.h.b16 %v2171
    %v2570 = vunpack.c.l.b16 %v2172
    %v2571 = vunpack.c.h.b16 %v2172
    %v2572 = vunpack.c.l.b16 %v2173
    %v2573 = vunpack.c.h.b16 %v2173
    %v2574 = vunpack.c.l.b16 %v2174
    %v2575 = vunpack.c.h.b16 %v2174
    %v2576 = vunpack.c.l.b16 %v2175
    %v2577 = vunpack.c.h.b16 %v2175
    %v2578 = vunpack.c.l.b16 %v2176
    %v2579 = vunpack.c.h.b16 %v2176
    %v2580 = vunpack.c.l.b16 %v2177
    %v2581 = vunpack.c.h.b16 %v2177
    %v2582 = vunpack.c.l.b16 %v2178
    %v2583 = vunpack.c.h.b16 %v2178
    %v2584 = vunpack.c.l.b16 %v2179
    %v2585 = vunpack.c.h.b16 %v2179
    %v2586 = vunpack.c.l.b16 %v2180
    %v2587 = vunpack.c.h.b16 %v2180
    %v2588 = vunpack.c.l.b16 %v2181
    %v2589 = vunpack.c.h.b16 %v2181
    %v2590 = vunpack.c.l.b16 %v2182
    %v2591 = vunpack.c.h.b16 %v2182
    %v2592 = vunpack.c.l.b16 %v2183
    %v2593 = vunpack.c.h.b16 %v2183
    %v2594 = vunpack.c.l.b16 %v2184
    %v2595 = vunpack.c.h.b16 %v2184
    %v2596 = vunpack.c.l.b16 %v2185
    %v2597 = vunpack.c.h.b16 %v2185
    %v2598 = vunpack.c.l.b16 %v2186
    %v2599 = vunpack.c.h.b16 %v2186
    %v2600 = vunpack.c.l.b16 %v2187
    %v2601 = vunpack.c.h.b16 %v2187
    %v2602 = vunpack.c.l.b16 %v2188
    %v2603 = vunpack.c.h.b16 %v2188
    %v2604 = vunpack.c.l.b16 %v2189
    %v2605 = vunpack.c.h.b16 %v2189
    %v2606 = vunpack.c.l.b16 %v2190
    %v2607 = vunpack.c.h.b16 %v2190
    %v2608 = vunpack.c.l.b16 %v2191
    %v2609 = vunpack.c.h.b16 %v2191
    %v2610 = vunpack.c.l.b16 %v2192
    %v2611 = vunpack.c.h.b16 %v2192
    %v2612 = vunpack.c.l.b16 %v2193
    %v2613 = vunpack.c.h.b16 %v2193
    %v2614 = vunpack.c.l.b16 %v2194
    %v2615 = vunpack.c.h.b16 %v2194
    %v2616 = vunpack.c.l.b16 %v2195
    %v2617 = vunpack.c.h.b16 %v2195
    %v2618 = vunpack.c.l.b16 %v2196
    %v2619 = vunpack.c.h.b16 %v2196
    %v2620 = vunpack.c.l.b16 %v2197
    %v2621 = vunpack.c.h.b16 %v2197
    %v2622 = vunpack.c.l.b16 %v2198
    %v2623 = vunpack.c.h.b16 %v2198
    %v2624 = vunpack.c.l.b16 %v2199
    %v2625 = vunpack.c.h.b16 %v2199
    %v2626 = vunpack.c.l.b16 %v2200
    %v2627 = vunpack.c.h.b16 %v2200
    %v2628 = vunpack.c.l.b16 %v2201
    %v2629 = vunpack.c.h.b16 %v2201
    %v2630 = vunpack.c.l.b16 %v2202
    %v2631 = vunpack.c.h.b16 %v2202
    %v2632 = vunpack.c.l.b16 %v2203
    %v2633 = vunpack.c.h.b16 %v2203
    %v2634 = vunpack.c.l.b16 %v2204
    %v2635 = vunpack.c.h.b16 %v2204
    %v2636 = vunpack.c.l.b16 %v2205
    %v2637 = vunpack.c.h.b16 %v2205
    %v2638 = vunpack.c.l.b16 %v2206
    %v2639 = vunpack.c.h.b16 %v2206
    %v2640 = vunpack.c.l.b16 %v2207
    %v2641 = vunpack.c.h.b16 %v2207
    %v2642 = vunpack.c.l.b16 %v2208
    %v2643 = vunpack.c.h.b16 %v2208
    %v2644 = vunpack.c.l.b16 %v2209
    %v2645 = vunpack.c.h.b16 %v2209
    %v2646 = vunpack.c.l.b16 %v2210
    %v2647 = vunpack.c.h.b16 %v2210
    %v2648 = vunpack.c.l.b16 %v2211
    %v2649 = vunpack.c.h.b16 %v2211
    %v2650 = vunpack.c.l.b16 %v2212
    %v2651 = vunpack.c.h.b16 %v2212
    %v2652 = vunpack.c.l.b16 %v2213
    %v2653 = vunpack.c.h.b16 %v2213
    %v2654 = vunpack.c.l.b16 %v2214
    %v2655 = vunpack.c.h.b16 %v2214
    %v2656 = vunpack.c.l.b16 %v2215
    %v2657 = vunpack.c.h.b16 %v2215
    %v2658 = vunpack.c.l.b16 %v2216
    %v2659 = vunpack.c.h.b16 %v2216
    %v2660 = vunpack.c.l.b16 %v2217
    %v2661 = vunpack.c.h.b16 %v2217
    %v2662 = vunpack.c.l.b16 %v2218
    %v2663 = vunpack.c.h.b16 %v2218
    %v2664 = vunpack.c.l.b16 %v2219
    %v2665 = vunpack.c.h.b16 %v2219
    %v2666 = vunpack.c.l.b16 %v2220
    %v2667 = vunpack.c.h.b16 %v2220
    %v2668 = vunpack.c.l.b16 %v2221
    %v2669 = vunpack.c.h.b16 %v2221
    %v2670 = vunpack.c.l.b16 %v2222
    %v2671 = vunpack.c.h.b16 %v2222
    %v2672 = vunpack.c.l.b16 %v2223
    %v2673 = vunpack.c.h.b16 %v2223
    %v2674 = vunpack.c.l.b16 %v2224
    %v2675 = vunpack.c.h.b16 %v2224
    %v2676 = vunpack.c.l.b16 %v2225
    %v2677 = vunpack.c.h.b16 %v2225
    %v2678 = vunpack.c.l.b16 %v2226
    %v2679 = vunpack.c.h.b16 %v2226
    %v2680 = vunpack.c.l.b16 %v2227
    %v2681 = vunpack.c.h.b16 %v2227
    %v2682 = vunpack.c.l.b16 %v2228
    %v2683 = vunpack.c.h.b16 %v2228
    %v2684 = vunpack.c.l.b16 %v2229
    %v2685 = vunpack.c.h.b16 %v2229
    %v2686 = vunpack.c.l.b16 %v2230
    %v2687 = vunpack.c.h.b16 %v2230
    %v2688 = vunpack.c.l.b16 %v2231
    %v2689 = vunpack.c.h.b16 %v2231
    %v2690 = vunpack.c.l.b16 %v2232
    %v2691 = vunpack.c.h.b16 %v2232
    %v2692 = vunpack.c.l.b16 %v2233
    %v2693 = vunpack.c.h.b16 %v2233
    %v2694 = vunpack.c.l.b16 %v2234
    %v2695 = vunpack.c.h.b16 %v2234
    %v2696 = vunpack.c.l.b16 %v2235
    %v2697 = vunpack.c.h.b16 %v2235
    %v2698 = vunpack.c.l.b16 %v2236
    %v2699 = vunpack.c.h.b16 %v2236
    %v2700 = vunpack.c.l.b16 %v2237
    %v2701 = vunpack.c.h.b16 %v2237
    %v2702 = vunpack.c.l.b16 %v2238
    %v2703 = vunpack.c.h.b16 %v2238
    %v2704 = vunpack.c.l.b16 %v2239
    %v2705 = vunpack.c.h.b16 %v2239
    %v2706 = vunpack.c.l.b16 %v2240
    %v2707 = vunpack.c.h.b16 %v2240
    %v2708 = vunpack.c.l.b16 %v2241
    %v2709 = vunpack.c.h.b16 %v2241
    %v2710 = vunpack.c.l.b16 %v2242
    %v2711 = vunpack.c.h.b16 %v2242
    %v2712 = vpack.c.b16 %v2492, %v2488
    %v2713 = vpack.c.b16 %v2493, %v2489
    %v2714 = vpack.c.b16 %v2494, %v2490
    %v2715 = vpack.c.b16 %v2495, %v2491
    %v2716 = vpack.c.b16 %v2500, %v2496
    %v2717 = vpack.c.b16 %v2501, %v2497
    %v2718 = vpack.c.b16 %v2502, %v2498
    %v2719 = vpack.c.b16 %v2503, %v2499
    %v2720 = vpack.c.b16 %v2508, %v2504
    %v2721 = vpack.c.b16 %v2509, %v2505
    %v2722 = vpack.c.b16 %v2510, %v2506
    %v2723 = vpack.c.b16 %v2511, %v2507
    %v2724 = vpack.c.b16 %v2516, %v2512
    %v2725 = vpack.c.b16 %v2517, %v2513
    %v2726 = vpack.c.b16 %v2518, %v2514
    %v2727 = vpack.c.b16 %v2519, %v2515
    %v2728 = vpack.c.b16 %v2524, %v2520
    %v2729 = vpack.c.b16 %v2525, %v2521
    %v2730 = vpack.c.b16 %v2526, %v2522
    %v2731 = vpack.c.b16 %v2527, %v2523
    %v2732 = vpack.c.b16 %v2532, %v2528
    %v2733 = vpack.c.b16 %v2533, %v2529
    %v2734 = vpack.c.b16 %v2534, %v2530
    %v2735 = vpack.c.b16 %v2535, %v2531
    %v2736 = vpack.c.b16 %v2540, %v2536
    %v2737 = vpack.c.b16 %v2541, %v2537
    %v2738 = vpack.c.b16 %v2542, %v2538
    %v2739 = vpack.c.b16 %v2543, %v2539
    %v2740 = vpack.c.b16 %v2548, %v2544
    %v2741 = vpack.c.b16 %v2549, %v2545
    %v2742 = vpack.c.b16 %v2550, %v2546
    %v2743 = vpack.c.b16 %v2551, %v2547
    %v2744 = vpack.c.b16 %v2556, %v2552
    %v2745 = vpack.c.b16 %v2557, %v2553
    %v2746 = vpack.c.b16 %v2558, %v2554
    %v2747 = vpack.c.b16 %v2559, %v2555
    %v2748 = vpack.c.b16 %v2564, %v2560
    %v2749 = vpack.c.b16 %v2565, %v2561
    %v2750 = vpack.c.b16 %v2566, %v2562
    %v2751 = vpack.c.b16 %v2567, %v2563
    %v2752 = vpack.c.b16 %v2572, %v2568
    %v2753 = vpack.c.b16 %v2573, %v2569
    %v2754 = vpack.c.b16 %v2574, %v2570
    %v2755 = vpack.c.b16 %v2575, %v2571
    %v2756 = vpack.c.b16 %v2580, %v2576
    %v2757 = vpack.c.b16 %v2581, %v2577
    %v2758 = vpack.c.b16 %v2582, %v2578
    %v2759 = vpack.c.b16 %v2583, %v2579
    %v2760 = vpack.c.b16 %v2588, %v2584
    %v2761 = vpack.c.b16 %v2589, %v2585
    %v2762 = vpack.c.b16 %v2590, %v2586
    %v2763 = vpack.c.b16 %v2591, %v2587
    %v2764 = vpack.c.b16 %v2596, %v2592
    %v2765 = vpack.c.b16 %v2597, %v2593
    %v2766 = vpack.c.b16 %v2598, %v2594
    %v2767 = vpack.c.b16 %v2599, %v2595
    %v2768 = vpack.c.b16 %v2604, %v2600
    %v2769 = vpack.c.b16 %v2605, %v2601
    %v2770 = vpack.c.b16 %v2606, %v2602
    %v2771 = vpack.c.b16 %v2607, %v2603
    %v2772 = vpack.c.b16 %v2612, %v2608
    %v2773 = vpack.c.b16 %v2613, %v2609
    %v2774 = vpack.c.b16 %v2614, %v2610
    %v2775 = vpack.c.b16 %v2615, %v2611
    %v2776 = vpack.c.b16 %v2620, %v2616
    %v2777 = vpack.c.b16 %v2621, %v2617
    %v2778 = vpack.c.b16 %v2622, %v2618
    %v2779 = vpack.c.b16 %v2623, %v2619
    %v2780 = vpack.c.b16 %v2628, %v2624
    %v2781 = vpack.c.b16 %v2629, %v2625
    %v2782 = vpack.c.b16 %v2630, %v2626
    %v2783 = vpack.c.b16 %v2631, %v2627
    %v2784 = vpack.c.b16 %v2636, %v2632
    %v2785 = vpack.c.b16 %v2637, %v2633
    %v2786 = vpack.c.b16 %v2638, %v2634
    %v2787 = vpack.c.b16 %v2639, %v2635
    %v2788 = vpack.c.b16 %v2644, %v2640
    %v2789 = vpack.c.b16 %v2645, %v2641
    %v2790 = vpack.c.b16 %v2646, %v2642
    %v2791 = vpack.c.b16 %v2647, %v2643
    %v2792 = vpack.c.b16 %v2652, %v2648
    %v2793 = vpack.c.b16 %v2653, %v2649
    %v2794 = vpack.c.b16 %v2654, %v2650
    %v2795 = vpack.c.b16 %v2655, %v2651
    %v2796 = vpack.c.b16 %v2660, %v2656
    %v2797 = vpack.c.b16 %v2661, %v2657
    %v2798 = vpack.c.b16 %v2662, %v2658
    %v2799 = vpack.c.b16 %v2663, %v2659
    %v2800 = vpack.c.b16 %v2668, %v2664
    %v2801 = vpack.c.b16 %v2669, %v2665
    %v2802 = vpack.c.b16 %v2670, %v2666
    %v2803 = vpack.c.b16 %v2671, %v2667
    %v2804 = vpack.c.b16 %v2676, %v2672
    %v2805 = vpack.c.b16 %v2677, %v2673
    %v2806 = vpack.c.b16 %v2678, %v2674
    %v2807 = vpack.c.b16 %v2679, %v2675
    %v2808 = vpack.c.b16 %v2684, %v2680
    %v2809 = vpack.c.b16 %v2685, %v2681
    %v2810 = vpack.c.b16 %v2686, %v2682
    %v2811 = vpack.c.b16 %v2687, %v2683
    %v2812 = vpack.c.b16 %v2692, %v2688
    %v2813 = vpack.c.b16 %v2693, %v2689
    %v2814 = vpack.c.b16 %v2694, %v2690
    %v2815 = vpack.c.b16 %v2695, %v2691
    %v2816 = vpack.c.b16 %v2700, %v2696
    %v2817 = vpack.c.b16 %v2701, %v2697
    %v2818 = vpack.c.b16 %v2702, %v2698
    %v2819 = vpack.c.b16 %v2703, %v2699
    %v2820 = vpack.c.b16 %v2708, %v2704
    %v2821 = vpack.c.b16 %v2709, %v2705
    %v2822 = vpack.c.b16 %v2710, %v2706
    %v2823 = vpack.c.b16 %v2711, %v2707
    %vm2936 = vcmask 523264
    %v2938 = vsel %vm2936, %v2330, 0
    %v2941 = vsel %vm2936, %v2334, 0
    %v2944 = vsel %vm2936, %v2338, 0
    %v2947 = vsel %vm2936, %v2342, 0
    %v2950 = vsel %vm2936, %v2346, 0
    %v2953 = vsel %vm2936, %v2350, 0
    %v2956 = vsel %vm2936, %v2354, 0
    %2958 = vmatprep.subr.bf16.mxu0 %v2713
    %2959 = vmatpush1.bf16.msra.mxu0 %v2712
    %2960 = vmatprep.subr.bf16.mxu0 %v2717
    %2961 = vmatpush1.bf16.msra.mxu0 %v2716
    %2962 = vmatprep.subr.bf16.mxu0 %v2721
    %2963 = vmatpush1.bf16.msra.mxu0 %v2720
    %2964 = vmatprep.subr.bf16.mxu0 %v2725
    %2965 = vmatpush1.bf16.msra.mxu0 %v2724
    %2966 = vmatprep.subr.bf16.mxu0 %v2729
    %2967 = vmatpush1.bf16.msra.mxu0 %v2728
    %2968 = vmatprep.subr.bf16.mxu0 %v2733
    %2969 = vmatpush1.bf16.msra.mxu0 %v2732
    %2970 = vmatprep.subr.bf16.mxu0 %v2737
    %2971 = vmatpush1.bf16.msra.mxu0 %v2736
    %2972 = vmatprep.subr.bf16.mxu0 %v2741
    %2973 = vmatpush1.bf16.msra.mxu0 %v2740
    %2974 = vmatprep.subr.bf16.mxu0 %v2745
    %2975 = vmatpush1.bf16.msra.mxu0 %v2744
    %2976 = vmatprep.subr.bf16.mxu0 %v2749
    %2977 = vmatpush1.bf16.msra.mxu0 %v2748
    %2978 = vmatprep.subr.bf16.mxu0 %v2753
    %2979 = vmatpush1.bf16.msra.mxu0 %v2752
    %2980 = vmatprep.subr.bf16.mxu0 %v2757
    %2981 = vmatpush1.bf16.msra.mxu0 %v2756
    %2982 = vmatprep.subr.bf16.mxu0 %v2761
    %2983 = vmatpush1.bf16.msra.mxu0 %v2760
    %2984 = vmatprep.subr.bf16.mxu0 %v2765
    %2985 = vmatpush1.bf16.msra.mxu0 %v2764
    %2986 = vmatprep.subr.bf16.mxu0 %v2769
    %2987 = vmatpush1.bf16.msra.mxu0 %v2768
    %2988 = vmatprep.subr.bf16.mxu0 %v2773
    %2989 = vmatpush1.bf16.msra.mxu0 %v2772
    %2990 = vmatprep.mubr.bf16.mxu0 %v2328
    %2991 = vmatmul.mubr.bf16.gmra.mrb[0].mxu0 %v2327
    %v2992 = vpop.f32.mrb[0].mxu0
    %v2993 = vadd.f32 0.0, %v2992
    %v2994 = vpop.f32.mrb[0].mxu0
    %v2995 = vadd.f32 0.0, %v2994
    %v2996 = vpop.f32.mrb[0].mxu0
    %v2997 = vadd.f32 0.0, %v2996
    %v2998 = vpop.f32.mrb[0].mxu0
    %v2999 = vadd.f32 0.0, %v2998
    %3000 = vmatprep.mubr.bf16.mxu0 %v2332
    %3001 = vmatmul.mubr.bf16.gmra.mrb[0].mxu0 %v2331
    %v3002 = vpop.f32.mrb[0].mxu0
    %v3003 = vadd.f32 0.0, %v3002
    %v3004 = vpop.f32.mrb[0].mxu0
    %v3005 = vadd.f32 0.0, %v3004
    %v3006 = vpop.f32.mrb[0].mxu0
    %v3007 = vadd.f32 0.0, %v3006
    %v3008 = vpop.f32.mrb[0].mxu0
    %v3009 = vadd.f32 0.0, %v3008
    %3010 = vmatprep.mubr.bf16.mxu0 %v2336
    %3011 = vmatmul.mubr.bf16.gmra.mrb[0].mxu0 %v2335
    %v3012 = vpop.f32.mrb[0].mxu0
    %v3013 = vadd.f32 0.0, %v3012
    %v3014 = vpop.f32.mrb[0].mxu0
    %v3015 = vadd.f32 0.0, %v3014
    %v3016 = vpop.f32.mrb[0].mxu0
    %v3017 = vadd.f32 0.0, %v3016
    %v3018 = vpop.f32.mrb[0].mxu0
    %v3019 = vadd.f32 0.0, %v3018
    %3020 = vmatprep.mubr.bf16.mxu0 %v2340
    %3021 = vmatmul.mubr.bf16.gmra.mrb[0].mxu0 %v2339
    %v3022 = vpop.f32.mrb[0].mxu0
    %v3023 = vadd.f32 0.0, %v3022
    %v3024 = vpop.f32.mrb[0].mxu0
    %v3025 = vadd.f32 0.0, %v3024
    %v3026 = vpop.f32.mrb[0].mxu0
    %v3027 = vadd.f32 0.0, %v3026
    %v3028 = vpop.f32.mrb[0].mxu0
    %v3029 = vadd.f32 0.0, %v3028
    %3030 = vmatprep.mubr.bf16.mxu0 %v2344
    %3031 = vmatmul.mubr.bf16.gmra.mrb[0].mxu0 %v2343
    %v3032 = vpop.f32.mrb[0].mxu0
    %v3033 = vadd.f32 0.0, %v3032
    %v3034 = vpop.f32.mrb[0].mxu0
    %v3035 = vadd.f32 0.0, %v3034
    %v3036 = vpop.f32.mrb[0].mxu0
    %v3037 = vadd.f32 0.0, %v3036
    %v3038 = vpop.f32.mrb[0].mxu0
    %v3039 = vadd.f32 0.0, %v3038
    %3040 = vmatprep.mubr.bf16.mxu0 %v2348
    %3041 = vmatmul.mubr.bf16.gmra.mrb[0].mxu0 %v2347
    %v3042 = vpop.f32.mrb[0].mxu0
    %v3043 = vadd.f32 0.0, %v3042
    %v3044 = vpop.f32.mrb[0].mxu0
    %v3045 = vadd.f32 0.0, %v3044
    %v3046 = vpop.f32.mrb[0].mxu0
    %v3047 = vadd.f32 0.0, %v3046
    %v3048 = vpop.f32.mrb[0].mxu0
    %v3049 = vadd.f32 0.0, %v3048
    %3050 = vmatprep.mubr.bf16.mxu0 %v2352
    %3051 = vmatmul.mubr.bf16.gmra.mrb[0].mxu0 %v2351
    %v3052 = vpop.f32.mrb[0].mxu0
    %v3053 = vadd.f32 0.0, %v3052
    %v3054 = vpop.f32.mrb[0].mxu0
    %v3055 = vadd.f32 0.0, %v3054
    %v3056 = vpop.f32.mrb[0].mxu0
    %v3057 = vadd.f32 0.0, %v3056
    %v3058 = vpop.f32.mrb[0].mxu0
    %v3059 = vadd.f32 0.0, %v3058
    %3060 = vdwg.mxu0
    %3061 = vmatprep.subr.bf16.mxu0 %v2777
    %3062 = vmatpush1.bf16.msra.mxu0 %v2776
    %3063 = vmatprep.subr.bf16.mxu0 %v2781
    %3064 = vmatpush1.bf16.msra.mxu0 %v2780
    %3065 = vmatprep.subr.bf16.mxu0 %v2785
    %3066 = vmatpush1.bf16.msra.mxu0 %v2784
    %3067 = vmatprep.subr.bf16.mxu0 %v2789
    %3068 = vmatpush1.bf16.msra.mxu0 %v2788
    %3069 = vmatprep.subr.bf16.mxu0 %v2793
    %3070 = vmatpush1.bf16.msra.mxu0 %v2792
    %3071 = vmatprep.subr.bf16.mxu0 %v2797
    %3072 = vmatpush1.bf16.msra.mxu0 %v2796
    %3073 = vmatprep.subr.bf16.mxu0 %v2801
    %3074 = vmatpush1.bf16.msra.mxu0 %v2800
    %3075 = vmatprep.subr.bf16.mxu0 %v2805
    %3076 = vmatpush1.bf16.msra.mxu0 %v2804
    %3077 = vmatprep.subr.bf16.mxu0 %v2809
    %3078 = vmatpush1.bf16.msra.mxu0 %v2808
    %3079 = vmatprep.subr.bf16.mxu0 %v2813
    %3080 = vmatpush1.bf16.msra.mxu0 %v2812
    %3081 = vmatprep.subr.bf16.mxu0 %v2817
    %3082 = vmatpush1.bf16.msra.mxu0 %v2816
    %3083 = vmatprep.subr.bf16.mxu0 %v2821
    %3084 = vmatpush1.bf16.msra.mxu0 %v2820
    %3085 = vmatprep.subr.bf16.mxu0 0
    %3086 = vmatpush1.bf16.msra.mxu0 0
    %3087 = vmatprep.subr.bf16.mxu0 0
    %3088 = vmatpush1.bf16.msra.mxu0 0
    %3089 = vmatprep.subr.bf16.mxu0 0
    %3090 = vmatpush1.bf16.msra.mxu0 0
    %3091 = vmatprep.subr.bf16.mxu0 0
    %3092 = vmatpush1.bf16.msra.mxu0 0
    %3093 = vmatprep.mubr.bf16.mxu0 %v2938
    %3094 = vmatmul.mubr.bf16.gmra.mrb[0].mxu0 %v2329
    %v3095 = vpop.f32.mrb[0].mxu0
    %v3096 = vadd.f32 %v2993, %v3095
    %v3097 = vpop.f32.mrb[0].mxu0
    %v3098 = vadd.f32 %v2995, %v3097
    %v3099 = vpop.f32.mrb[0].mxu0
    %v3100 = vadd.f32 %v2997, %v3099
    %v3101 = vpop.f32.mrb[0].mxu0
    %v3102 = vadd.f32 %v2999, %v3101
    %3103 = vmatprep.mubr.bf16.mxu0 %v2941
    %3104 = vmatmul.mubr.bf16.gmra.mrb[0].mxu0 %v2333
    %v3105 = vpop.f32.mrb[0].mxu0
    %v3106 = vadd.f32 %v3003, %v3105
    %v3107 = vpop.f32.mrb[0].mxu0
    %v3108 = vadd.f32 %v3005, %v3107
    %v3109 = vpop.f32.mrb[0].mxu0
    %v3110 = vadd.f32 %v3007, %v3109
    %v3111 = vpop.f32.mrb[0].mxu0
    %v3112 = vadd.f32 %v3009, %v3111
    %3113 = vmatprep.mubr.bf16.mxu0 %v2944
    %3114 = vmatmul.mubr.bf16.gmra.mrb[0].mxu0 %v2337
    %v3115 = vpop.f32.mrb[0].mxu0
    %v3116 = vadd.f32 %v3013, %v3115
    %v3117 = vpop.f32.mrb[0].mxu0
    %v3118 = vadd.f32 %v3015, %v3117
    %v3119 = vpop.f32.mrb[0].mxu0
    %v3120 = vadd.f32 %v3017, %v3119
    %v3121 = vpop.f32.mrb[0].mxu0
    %v3122 = vadd.f32 %v3019, %v3121
    %3123 = vmatprep.mubr.bf16.mxu0 %v2947
    %3124 = vmatmul.mubr.bf16.gmra.mrb[0].mxu0 %v2341
    %v3125 = vpop.f32.mrb[0].mxu0
    %v3126 = vadd.f32 %v3023, %v3125
    %v3127 = vpop.f32.mrb[0].mxu0
    %v3128 = vadd.f32 %v3025, %v3127
    %v3129 = vpop.f32.mrb[0].mxu0
    %v3130 = vadd.f32 %v3027, %v3129
    %v3131 = vpop.f32.mrb[0].mxu0
    %v3132 = vadd.f32 %v3029, %v3131
    %3133 = vmatprep.mubr.bf16.mxu0 %v2950
    %3134 = vmatmul.mubr.bf16.gmra.mrb[0].mxu0 %v2345
    %v3135 = vpop.f32.mrb[0].mxu0
    %v3136 = vadd.f32 %v3033, %v3135
    %v3137 = vpop.f32.mrb[0].mxu0
    %v3138 = vadd.f32 %v3035, %v3137
    %v3139 = vpop.f32.mrb[0].mxu0
    %v3140 = vadd.f32 %v3037, %v3139
    %v3141 = vpop.f32.mrb[0].mxu0
    %v3142 = vadd.f32 %v3039, %v3141
    %3143 = vmatprep.mubr.bf16.mxu0 %v2953
    %3144 = vmatmul.mubr.bf16.gmra.mrb[0].mxu0 %v2349
    %v3145 = vpop.f32.mrb[0].mxu0
    %v3146 = vadd.f32 %v3043, %v3145
    %v3147 = vpop.f32.mrb[0].mxu0
    %v3148 = vadd.f32 %v3045, %v3147
    %v3149 = vpop.f32.mrb[0].mxu0
    %v3150 = vadd.f32 %v3047, %v3149
    %v3151 = vpop.f32.mrb[0].mxu0
    %v3152 = vadd.f32 %v3049, %v3151
    %3153 = vmatprep.mubr.bf16.mxu0 %v2956
    %3154 = vmatmul.mubr.bf16.gmra.mrb[0].mxu0 %v2353
    %v3155 = vpop.f32.mrb[0].mxu0
    %v3156 = vadd.f32 %v3053, %v3155
    %v3157 = vpop.f32.mrb[0].mxu0
    %v3158 = vadd.f32 %v3055, %v3157
    %v3159 = vpop.f32.mrb[0].mxu0
    %v3160 = vadd.f32 %v3057, %v3159
    %v3161 = vpop.f32.mrb[0].mxu0
    %v3162 = vadd.f32 %v3059, %v3161
    %3163 = vdwg.mxu0
    %3164 = vmatprep.subr.bf16.mxu0 %v2715
    %3165 = vmatpush1.bf16.msra.mxu0 %v2714
    %3166 = vmatprep.subr.bf16.mxu0 %v2719
    %3167 = vmatpush1.bf16.msra.mxu0 %v2718
    %3168 = vmatprep.subr.bf16.mxu0 %v2723
    %3169 = vmatpush1.bf16.msra.mxu0 %v2722
    %3170 = vmatprep.subr.bf16.mxu0 %v2727
    %3171 = vmatpush1.bf16.msra.mxu0 %v2726
    %3172 = vmatprep.subr.bf16.mxu0 %v2731
    %3173 = vmatpush1.bf16.msra.mxu0 %v2730
    %3174 = vmatprep.subr.bf16.mxu0 %v2735
    %3175 = vmatpush1.bf16.msra.mxu0 %v2734
    %3176 = vmatprep.subr.bf16.mxu0 %v2739
    %3177 = vmatpush1.bf16.msra.mxu0 %v2738
    %3178 = vmatprep.subr.bf16.mxu0 %v2743
    %3179 = vmatpush1.bf16.msra.mxu0 %v2742
    %3180 = vmatprep.subr.bf16.mxu0 %v2747
    %3181 = vmatpush1.bf16.msra.mxu0 %v2746
    %3182 = vmatprep.subr.bf16.mxu0 %v2751
    %3183 = vmatpush1.bf16.msra.mxu0 %v2750
    %3184 = vmatprep.subr.bf16.mxu0 %v2755
    %3185 = vmatpush1.bf16.msra.mxu0 %v2754
    %3186 = vmatprep.subr.bf16.mxu0 %v2759
    %3187 = vmatpush1.bf16.msra.mxu0 %v2758
    %3188 = vmatprep.subr.bf16.mxu0 %v2763
    %3189 = vmatpush1.bf16.msra.mxu0 %v2762
    %3190 = vmatprep.subr.bf16.mxu0 %v2767
    %3191 = vmatpush1.bf16.msra.mxu0 %v2766
    %3192 = vmatprep.subr.bf16.mxu0 %v2771
    %3193 = vmatpush1.bf16.msra.mxu0 %v2770
    %3194 = vmatprep.subr.bf16.mxu0 %v2775
    %3195 = vmatpush1.bf16.msra.mxu0 %v2774
    %3196 = vmatprep.mubr.bf16.mxu0 %v2328
    %3197 = vmatmul.mubr.bf16.gmra.mrb[0].mxu0 %v2327
    %v3198 = vpop.f32.mrb[0].mxu0
    %v3199 = vadd.f32 0.0, %v3198
    %v3200 = vpop.f32.mrb[0].mxu0
    %v3201 = vadd.f32 0.0, %v3200
    %v3202 = vpop.f32.mrb[0].mxu0
    %v3203 = vadd.f32 0.0, %v3202
    %v3204 = vpop.f32.mrb[0].mxu0
    %v3205 = vadd.f32 0.0, %v3204
    %3206 = vmatprep.mubr.bf16.mxu0 %v2332
    %3207 = vmatmul.mubr.bf16.gmra.mrb[0].mxu0 %v2331
    %v3208 = vpop.f32.mrb[0].mxu0
    %v3209 = vadd.f32 0.0, %v3208
    %v3210 = vpop.f32.mrb[0].mxu0
    %v3211 = vadd.f32 0.0, %v3210
    %v3212 = vpop.f32.mrb[0].mxu0
    %v3213 = vadd.f32 0.0, %v3212
    %v3214 = vpop.f32.mrb[0].mxu0
    %v3215 = vadd.f32 0.0, %v3214
    %3216 = vmatprep.mubr.bf16.mxu0 %v2336
    %3217 = vmatmul.mubr.bf16.gmra.mrb[0].mxu0 %v2335
    %v3218 = vpop.f32.mrb[0].mxu0
    %v3219 = vadd.f32 0.0, %v3218
    %v3220 = vpop.f32.mrb[0].mxu0
    %v3221 = vadd.f32 0.0, %v3220
    %v3222 = vpop.f32.mrb[0].mxu0
    %v3223 = vadd.f32 0.0, %v3222
    %v3224 = vpop.f32.mrb[0].mxu0
    %v3225 = vadd.f32 0.0, %v3224
    %3226 = vmatprep.mubr.bf16.mxu0 %v2340
    %3227 = vmatmul.mubr.bf16.gmra.mrb[0].mxu0 %v2339
    %v3228 = vpop.f32.mrb[0].mxu0
    %v3229 = vadd.f32 0.0, %v3228
    %v3230 = vpop.f32.mrb[0].mxu0
    %v3231 = vadd.f32 0.0, %v3230
    %v3232 = vpop.f32.mrb[0].mxu0
    %v3233 = vadd.f32 0.0, %v3232
    %v3234 = vpop.f32.mrb[0].mxu0
    %v3235 = vadd.f32 0.0, %v3234
    %3236 = vmatprep.mubr.bf16.mxu0 %v2344
    %3237 = vmatmul.mubr.bf16.gmra.mrb[0].mxu0 %v2343
    %v3238 = vpop.f32.mrb[0].mxu0
    %v3239 = vadd.f32 0.0, %v3238
    %v3240 = vpop.f32.mrb[0].mxu0
    %v3241 = vadd.f32 0.0, %v3240
    %v3242 = vpop.f32.mrb[0].mxu0
    %v3243 = vadd.f32 0.0, %v3242
    %v3244 = vpop.f32.mrb[0].mxu0
    %v3245 = vadd.f32 0.0, %v3244
    %3246 = vmatprep.mubr.bf16.mxu0 %v2348
    %3247 = vmatmul.mubr.bf16.gmra.mrb[0].mxu0 %v2347
    %v3248 = vpop.f32.mrb[0].mxu0
    %v3249 = vadd.f32 0.0, %v3248
    %v3250 = vpop.f32.mrb[0].mxu0
    %v3251 = vadd.f32 0.0, %v3250
    %v3252 = vpop.f32.mrb[0].mxu0
    %v3253 = vadd.f32 0.0, %v3252
    %v3254 = vpop.f32.mrb[0].mxu0
    %v3255 = vadd.f32 0.0, %v3254
    %3256 = vmatprep.mubr.bf16.mxu0 %v2352
    %3257 = vmatmul.mubr.bf16.gmra.mrb[0].mxu0 %v2351
    %v3258 = vpop.f32.mrb[0].mxu0
    %v3259 = vadd.f32 0.0, %v3258
    %v3260 = vpop.f32.mrb[0].mxu0
    %v3261 = vadd.f32 0.0, %v3260
    %v3262 = vpop.f32.mrb[0].mxu0
    %v3263 = vadd.f32 0.0, %v3262
    %v3264 = vpop.f32.mrb[0].mxu0
    %v3265 = vadd.f32 0.0, %v3264
    %3266 = vdwg.mxu0
    %3267 = vmatprep.subr.bf16.mxu0 %v2779
    %3268 = vmatpush1.bf16.msra.mxu0 %v2778
    %3269 = vmatprep.subr.bf16.mxu0 %v2783
    %3270 = vmatpush1.bf16.msra.mxu0 %v2782
    %3271 = vmatprep.subr.bf16.mxu0 %v2787
    %3272 = vmatpush1.bf16.msra.mxu0 %v2786
    %3273 = vmatprep.subr.bf16.mxu0 %v2791
    %3274 = vmatpush1.bf16.msra.mxu0 %v2790
    %3275 = vmatprep.subr.bf16.mxu0 %v2795
    %3276 = vmatpush1.bf16.msra.mxu0 %v2794
    %3277 = vmatprep.subr.bf16.mxu0 %v2799
    %3278 = vmatpush1.bf16.msra.mxu0 %v2798
    %3279 = vmatprep.subr.bf16.mxu0 %v2803
    %3280 = vmatpush1.bf16.msra.mxu0 %v2802
    %3281 = vmatprep.subr.bf16.mxu0 %v2807
    %3282 = vmatpush1.bf16.msra.mxu0 %v2806
    %3283 = vmatprep.subr.bf16.mxu0 %v2811
    %3284 = vmatpush1.bf16.msra.mxu0 %v2810
    %3285 = vmatprep.subr.bf16.mxu0 %v2815
    %3286 = vmatpush1.bf16.msra.mxu0 %v2814
    %3287 = vmatprep.subr.bf16.mxu0 %v2819
    %3288 = vmatpush1.bf16.msra.mxu0 %v2818
    %3289 = vmatprep.subr.bf16.mxu0 %v2823
    %3290 = vmatpush1.bf16.msra.mxu0 %v2822
    %3291 = vmatprep.subr.bf16.mxu0 0
    %3292 = vmatpush1.bf16.msra.mxu0 0
    %3293 = vmatprep.subr.bf16.mxu0 0
    %3294 = vmatpush1.bf16.msra.mxu0 0
    %3295 = vmatprep.subr.bf16.mxu0 0
    %3296 = vmatpush1.bf16.msra.mxu0 0
    %3297 = vmatprep.subr.bf16.mxu0 0
    %3298 = vmatpush1.bf16.msra.mxu0 0
    %3299 = vmatprep.mubr.bf16.mxu0 %v2938
    %3300 = vmatmul.mubr.bf16.gmra.mrb[0].mxu0 %v2329
    %v3301 = vpop.f32.mrb[0].mxu0
    %v3302 = vadd.f32 %v3199, %v3301
    %v3303 = vpop.f32.mrb[0].mxu0
    %v3304 = vadd.f32 %v3201, %v3303
    %v3305 = vpop.f32.mrb[0].mxu0
    %v3306 = vadd.f32 %v3203, %v3305
    %v3307 = vpop.f32.mrb[0].mxu0
    %v3308 = vadd.f32 %v3205, %v3307
    %3309 = vmatprep.mubr.bf16.mxu0 %v2941
    %3310 = vmatmul.mubr.bf16.gmra.mrb[0].mxu0 %v2333
    %v3311 = vpop.f32.mrb[0].mxu0
    %v3312 = vadd.f32 %v3209, %v3311
    %v3313 = vpop.f32.mrb[0].mxu0
    %v3314 = vadd.f32 %v3211, %v3313
    %v3315 = vpop.f32.mrb[0].mxu0
    %v3316 = vadd.f32 %v3213, %v3315
    %v3317 = vpop.f32.mrb[0].mxu0
    %v3318 = vadd.f32 %v3215, %v3317
    %3319 = vmatprep.mubr.bf16.mxu0 %v2944
    %3320 = vmatmul.mubr.bf16.gmra.mrb[0].mxu0 %v2337
    %v3321 = vpop.f32.mrb[0].mxu0
    %v3322 = vadd.f32 %v3219, %v3321
    %v3323 = vpop.f32.mrb[0].mxu0
    %v3324 = vadd.f32 %v3221, %v3323
    %v3325 = vpop.f32.mrb[0].mxu0
    %v3326 = vadd.f32 %v3223, %v3325
    %v3327 = vpop.f32.mrb[0].mxu0
    %v3328 = vadd.f32 %v3225, %v3327
    %3329 = vmatprep.mubr.bf16.mxu0 %v2947
    %3330 = vmatmul.mubr.bf16.gmra.mrb[0].mxu0 %v2341
    %v3331 = vpop.f32.mrb[0].mxu0
    %v3332 = vadd.f32 %v3229, %v3331
    %v3333 = vpop.f32.mrb[0].mxu0
    %v3334 = vadd.f32 %v3231, %v3333
    %v3335 = vpop.f32.mrb[0].mxu0
    %v3336 = vadd.f32 %v3233, %v3335
    %v3337 = vpop.f32.mrb[0].mxu0
    %v3338 = vadd.f32 %v3235, %v3337
    %3339 = vmatprep.mubr.bf16.mxu0 %v2950
    %3340 = vmatmul.mubr.bf16.gmra.mrb[0].mxu0 %v2345
    %v3341 = vpop.f32.mrb[0].mxu0
    %v3342 = vadd.f32 %v3239, %v3341
    %v3343 = vpop.f32.mrb[0].mxu0
    %v3344 = vadd.f32 %v3241, %v3343
    %v3345 = vpop.f32.mrb[0].mxu0
    %v3346 = vadd.f32 %v3243, %v3345
    %v3347 = vpop.f32.mrb[0].mxu0
    %v3348 = vadd.f32 %v3245, %v3347
    %3349 = vmatprep.mubr.bf16.mxu0 %v2953
    %3350 = vmatmul.mubr.bf16.gmra.mrb[0].mxu0 %v2349
    %v3351 = vpop.f32.mrb[0].mxu0
    %v3352 = vadd.f32 %v3249, %v3351
    %v3353 = vpop.f32.mrb[0].mxu0
    %v3354 = vadd.f32 %v3251, %v3353
    %v3355 = vpop.f32.mrb[0].mxu0
    %v3356 = vadd.f32 %v3253, %v3355
    %v3357 = vpop.f32.mrb[0].mxu0
    %v3358 = vadd.f32 %v3255, %v3357
    %3359 = vmatprep.mubr.bf16.mxu0 %v2956
    %3360 = vmatmul.mubr.bf16.gmra.mrb[0].mxu0 %v2353
    %v3361 = vpop.f32.mrb[0].mxu0
    %v3362 = vadd.f32 %v3259, %v3361
    %v3363 = vpop.f32.mrb[0].mxu0
    %v3364 = vadd.f32 %v3261, %v3363
    %v3365 = vpop.f32.mrb[0].mxu0
    %v3366 = vadd.f32 %v3263, %v3365
    %v3367 = vpop.f32.mrb[0].mxu0
    %v3368 = vadd.f32 %v3265, %v3367
    %3369 = vdwg.mxu0
    %v3398 = vunpack.c.l.b16 %v1933
    %v3399 = vunpack.c.h.b16 %v1933
    %v3400 = vunpack.c.l.b16 %v1934
    %v3401 = vunpack.c.h.b16 %v1934
    %v3402 = vunpack.c.l.b16 %v1935
    %v3403 = vunpack.c.h.b16 %v1935
    %v3404 = vunpack.c.l.b16 %v1936
    %v3405 = vunpack.c.h.b16 %v1936
    %v3406 = vunpack.c.l.b16 %v1937
    %v3407 = vunpack.c.h.b16 %v1937
    %v3408 = vunpack.c.l.b16 %v1938
    %v3409 = vunpack.c.h.b16 %v1938
    %v3410 = vunpack.c.l.b16 %v1939
    %v3411 = vunpack.c.h.b16 %v1939
    %v3412 = vunpack.c.l.b16 %v1940
    %v3413 = vunpack.c.h.b16 %v1940
    %v3414 = vunpack.c.l.b16 %v1941
    %v3415 = vunpack.c.h.b16 %v1941
    %v3416 = vunpack.c.l.b16 %v1942
    %v3417 = vunpack.c.h.b16 %v1942
    %v3418 = vunpack.c.l.b16 %v1943
    %v3419 = vunpack.c.h.b16 %v1943
    %v3420 = vunpack.c.l.b16 %v1944
    %v3421 = vunpack.c.h.b16 %v1944
    %v3422 = vunpack.c.l.b16 %v1945
    %v3423 = vunpack.c.h.b16 %v1945
    %v3424 = vunpack.c.l.b16 %v1946
    %v3425 = vunpack.c.h.b16 %v1946
    %v3426 = vunpack.c.l.b16 %v1947
    %v3427 = vunpack.c.h.b16 %v1947
    %v3428 = vunpack.c.l.b16 %v1948
    %v3429 = vunpack.c.h.b16 %v1948
    %v3430 = vunpack.c.l.b16 %v1949
    %v3431 = vunpack.c.h.b16 %v1949
    %v3432 = vunpack.c.l.b16 %v1950
    %v3433 = vunpack.c.h.b16 %v1950
    %v3434 = vunpack.c.l.b16 %v1951
    %v3435 = vunpack.c.h.b16 %v1951
    %v3436 = vunpack.c.l.b16 %v1952
    %v3437 = vunpack.c.h.b16 %v1952
    %v3438 = vunpack.c.l.b16 %v1953
    %v3439 = vunpack.c.h.b16 %v1953
    %v3440 = vunpack.c.l.b16 %v1954
    %v3441 = vunpack.c.h.b16 %v1954
    %v3442 = vunpack.c.l.b16 %v1955
    %v3443 = vunpack.c.h.b16 %v1955
    %v3444 = vunpack.c.l.b16 %v1956
    %v3445 = vunpack.c.h.b16 %v1956
    %v3446 = vunpack.c.l.b16 %v1957
    %v3447 = vunpack.c.h.b16 %v1957
    %v3448 = vunpack.c.l.b16 %v1958
    %v3449 = vunpack.c.h.b16 %v1958
    %v3450 = vunpack.c.l.b16 %v1959
    %v3451 = vunpack.c.h.b16 %v1959
    %v3452 = vunpack.c.l.b16 %v1960
    %v3453 = vunpack.c.h.b16 %v1960
    %v3454 = vpack.c.b16 %v3402, %v3398
    %v3455 = vpack.c.b16 %v3403, %v3399
    %v3456 = vpack.c.b16 %v3404, %v3400
    %v3457 = vpack.c.b16 %v3405, %v3401
    %v3458 = vpack.c.b16 %v3410, %v3406
    %v3459 = vpack.c.b16 %v3411, %v3407
    %v3460 = vpack.c.b16 %v3412, %v3408
    %v3461 = vpack.c.b16 %v3413, %v3409
    %v3462 = vpack.c.b16 %v3418, %v3414
    %v3463 = vpack.c.b16 %v3419, %v3415
    %v3464 = vpack.c.b16 %v3420, %v3416
    %v3465 = vpack.c.b16 %v3421, %v3417
    %v3466 = vpack.c.b16 %v3426, %v3422
    %v3467 = vpack.c.b16 %v3427, %v3423
    %v3468 = vpack.c.b16 %v3428, %v3424
    %v3469 = vpack.c.b16 %v3429, %v3425
    %v3470 = vpack.c.b16 %v3434, %v3430
    %v3471 = vpack.c.b16 %v3435, %v3431
    %v3472 = vpack.c.b16 %v3436, %v3432
    %v3473 = vpack.c.b16 %v3437, %v3433
    %v3474 = vpack.c.b16 %v3442, %v3438
    %v3475 = vpack.c.b16 %v3443, %v3439
    %v3476 = vpack.c.b16 %v3444, %v3440
    %v3477 = vpack.c.b16 %v3445, %v3441
    %v3478 = vpack.c.b16 %v3450, %v3446
    %v3479 = vpack.c.b16 %v3451, %v3447
    %v3480 = vpack.c.b16 %v3452, %v3448
    %v3481 = vpack.c.b16 %v3453, %v3449
    %v3615 = vunpack.c.l.b16 %v2018
    %v3616 = vunpack.c.h.b16 %v2018
    %v3617 = vunpack.c.l.b16 %v2019
    %v3618 = vunpack.c.h.b16 %v2019
    %v3619 = vunpack.c.l.b16 %v2020
    %v3620 = vunpack.c.h.b16 %v2020
    %v3621 = vunpack.c.l.b16 %v2021
    %v3622 = vunpack.c.h.b16 %v2021
    %v3623 = vunpack.c.l.b16 %v2022
    %v3624 = vunpack.c.h.b16 %v2022
    %v3625 = vunpack.c.l.b16 %v2023
    %v3626 = vunpack.c.h.b16 %v2023
    %v3627 = vunpack.c.l.b16 %v2024
    %v3628 = vunpack.c.h.b16 %v2024
    %v3629 = vunpack.c.l.b16 %v2025
    %v3630 = vunpack.c.h.b16 %v2025
    %v3631 = vunpack.c.l.b16 %v2026
    %v3632 = vunpack.c.h.b16 %v2026
    %v3633 = vunpack.c.l.b16 %v2027
    %v3634 = vunpack.c.h.b16 %v2027
    %v3635 = vunpack.c.l.b16 %v2028
    %v3636 = vunpack.c.h.b16 %v2028
    %v3637 = vunpack.c.l.b16 %v2029
    %v3638 = vunpack.c.h.b16 %v2029
    %v3639 = vunpack.c.l.b16 %v2030
    %v3640 = vunpack.c.h.b16 %v2030
    %v3641 = vunpack.c.l.b16 %v2031
    %v3642 = vunpack.c.h.b16 %v2031
    %v3643 = vunpack.c.l.b16 %v2032
    %v3644 = vunpack.c.h.b16 %v2032
    %v3645 = vunpack.c.l.b16 %v2033
    %v3646 = vunpack.c.h.b16 %v2033
    %v3647 = vunpack.c.l.b16 %v2034
    %v3648 = vunpack.c.h.b16 %v2034
    %v3649 = vunpack.c.l.b16 %v2035
    %v3650 = vunpack.c.h.b16 %v2035
    %v3651 = vunpack.c.l.b16 %v2036
    %v3652 = vunpack.c.h.b16 %v2036
    %v3653 = vunpack.c.l.b16 %v2037
    %v3654 = vunpack.c.h.b16 %v2037
    %v3655 = vunpack.c.l.b16 %v2038
    %v3656 = vunpack.c.h.b16 %v2038
    %v3657 = vunpack.c.l.b16 %v2039
    %v3658 = vunpack.c.h.b16 %v2039
    %v3659 = vunpack.c.l.b16 %v2040
    %v3660 = vunpack.c.h.b16 %v2040
    %v3661 = vunpack.c.l.b16 %v2041
    %v3662 = vunpack.c.h.b16 %v2041
    %v3663 = vunpack.c.l.b16 %v2042
    %v3664 = vunpack.c.h.b16 %v2042
    %v3665 = vunpack.c.l.b16 %v2043
    %v3666 = vunpack.c.h.b16 %v2043
    %v3667 = vunpack.c.l.b16 %v2044
    %v3668 = vunpack.c.h.b16 %v2044
    %v3669 = vunpack.c.l.b16 %v2045
    %v3670 = vunpack.c.h.b16 %v2045
    %v3671 = vunpack.c.l.b16 %v2046
    %v3672 = vunpack.c.h.b16 %v2046
    %v3673 = vunpack.c.l.b16 %v2047
    %v3674 = vunpack.c.h.b16 %v2047
    %v3675 = vunpack.c.l.b16 %v2048
    %v3676 = vunpack.c.h.b16 %v2048
    %v3677 = vunpack.c.l.b16 %v2049
    %v3678 = vunpack.c.h.b16 %v2049
    %v3679 = vunpack.c.l.b16 %v2050
    %v3680 = vunpack.c.h.b16 %v2050
    %v3681 = vunpack.c.l.b16 %v2051
    %v3682 = vunpack.c.h.b16 %v2051
    %v3683 = vunpack.c.l.b16 %v2052
    %v3684 = vunpack.c.h.b16 %v2052
    %v3685 = vunpack.c.l.b16 %v2053
    %v3686 = vunpack.c.h.b16 %v2053
    %v3687 = vunpack.c.l.b16 %v2054
    %v3688 = vunpack.c.h.b16 %v2054
    %v3689 = vunpack.c.l.b16 %v2055
    %v3690 = vunpack.c.h.b16 %v2055
    %v3691 = vunpack.c.l.b16 %v2056
    %v3692 = vunpack.c.h.b16 %v2056
    %v3693 = vunpack.c.l.b16 %v2057
    %v3694 = vunpack.c.h.b16 %v2057
    %v3695 = vunpack.c.l.b16 %v2058
    %v3696 = vunpack.c.h.b16 %v2058
    %v3697 = vunpack.c.l.b16 %v2059
    %v3698 = vunpack.c.h.b16 %v2059
    %v3699 = vunpack.c.l.b16 %v2060
    %v3700 = vunpack.c.h.b16 %v2060
    %v3701 = vunpack.c.l.b16 %v2061
    %v3702 = vunpack.c.h.b16 %v2061
    %v3703 = vunpack.c.l.b16 %v2062
    %v3704 = vunpack.c.h.b16 %v2062
    %v3705 = vunpack.c.l.b16 %v2063
    %v3706 = vunpack.c.h.b16 %v2063
    %v3707 = vunpack.c.l.b16 %v2064
    %v3708 = vunpack.c.h.b16 %v2064
    %v3709 = vunpack.c.l.b16 %v2065
    %v3710 = vunpack.c.h.b16 %v2065
    %v3711 = vunpack.c.l.b16 %v2066
    %v3712 = vunpack.c.h.b16 %v2066
    %v3713 = vunpack.c.l.b16 %v2067
    %v3714 = vunpack.c.h.b16 %v2067
    %v3715 = vunpack.c.l.b16 %v2068
    %v3716 = vunpack.c.h.b16 %v2068
    %v3717 = vunpack.c.l.b16 %v2069
    %v3718 = vunpack.c.h.b16 %v2069
    %v3719 = vunpack.c.l.b16 %v2070
    %v3720 = vunpack.c.h.b16 %v2070
    %v3721 = vunpack.c.l.b16 %v2071
    %v3722 = vunpack.c.h.b16 %v2071
    %v3723 = vunpack.c.l.b16 %v2072
    %v3724 = vunpack.c.h.b16 %v2072
    %v3725 = vunpack.c.l.b16 %v2073
    %v3726 = vunpack.c.h.b16 %v2073
    %v3727 = vunpack.c.l.b16 %v2074
    %v3728 = vunpack.c.h.b16 %v2074
    %v3729 = vunpack.c.l.b16 %v2075
    %v3730 = vunpack.c.h.b16 %v2075
    %v3731 = vunpack.c.l.b16 %v2076
    %v3732 = vunpack.c.h.b16 %v2076
    %v3733 = vunpack.c.l.b16 %v2077
    %v3734 = vunpack.c.h.b16 %v2077
    %v3735 = vunpack.c.l.b16 %v2078
    %v3736 = vunpack.c.h.b16 %v2078
    %v3737 = vunpack.c.l.b16 %v2079
    %v3738 = vunpack.c.h.b16 %v2079
    %v3739 = vunpack.c.l.b16 %v2080
    %v3740 = vunpack.c.h.b16 %v2080
    %v3741 = vunpack.c.l.b16 %v2081
    %v3742 = vunpack.c.h.b16 %v2081
    %v3743 = vunpack.c.l.b16 %v2082
    %v3744 = vunpack.c.h.b16 %v2082
    %v3745 = vunpack.c.l.b16 %v2083
    %v3746 = vunpack.c.h.b16 %v2083
    %v3747 = vunpack.c.l.b16 %v2084
    %v3748 = vunpack.c.h.b16 %v2084
    %v3749 = vunpack.c.l.b16 %v2085
    %v3750 = vunpack.c.h.b16 %v2085
    %v3751 = vunpack.c.l.b16 %v2086
    %v3752 = vunpack.c.h.b16 %v2086
    %v3753 = vunpack.c.l.b16 %v2087
    %v3754 = vunpack.c.h.b16 %v2087
    %v3755 = vunpack.c.l.b16 %v2088
    %v3756 = vunpack.c.h.b16 %v2088
    %v3757 = vunpack.c.l.b16 %v2089
    %v3758 = vunpack.c.h.b16 %v2089
    %v3759 = vunpack.c.l.b16 %v2090
    %v3760 = vunpack.c.h.b16 %v2090
    %v3761 = vunpack.c.l.b16 %v2091
    %v3762 = vunpack.c.h.b16 %v2091
    %v3763 = vunpack.c.l.b16 %v2092
    %v3764 = vunpack.c.h.b16 %v2092
    %v3765 = vunpack.c.l.b16 %v2093
    %v3766 = vunpack.c.h.b16 %v2093
    %v3767 = vunpack.c.l.b16 %v2094
    %v3768 = vunpack.c.h.b16 %v2094
    %v3769 = vunpack.c.l.b16 %v2095
    %v3770 = vunpack.c.h.b16 %v2095
    %v3771 = vunpack.c.l.b16 %v2096
    %v3772 = vunpack.c.h.b16 %v2096
    %v3773 = vunpack.c.l.b16 %v2097
    %v3774 = vunpack.c.h.b16 %v2097
    %v3775 = vunpack.c.l.b16 %v2098
    %v3776 = vunpack.c.h.b16 %v2098
    %v3777 = vunpack.c.l.b16 %v2099
    %v3778 = vunpack.c.h.b16 %v2099
    %v3779 = vunpack.c.l.b16 %v2100
    %v3780 = vunpack.c.h.b16 %v2100
    %v3781 = vunpack.c.l.b16 %v2101
    %v3782 = vunpack.c.h.b16 %v2101
    %v3783 = vunpack.c.l.b16 %v2102
    %v3784 = vunpack.c.h.b16 %v2102
    %v3785 = vunpack.c.l.b16 %v2103
    %v3786 = vunpack.c.h.b16 %v2103
    %v3787 = vunpack.c.l.b16 %v2104
    %v3788 = vunpack.c.h.b16 %v2104
    %v3789 = vunpack.c.l.b16 %v2105
    %v3790 = vunpack.c.h.b16 %v2105
    %v3791 = vunpack.c.l.b16 %v2106
    %v3792 = vunpack.c.h.b16 %v2106
    %v3793 = vunpack.c.l.b16 %v2107
    %v3794 = vunpack.c.h.b16 %v2107
    %v3795 = vunpack.c.l.b16 %v2108
    %v3796 = vunpack.c.h.b16 %v2108
    %v3797 = vunpack.c.l.b16 %v2109
    %v3798 = vunpack.c.h.b16 %v2109
    %v3799 = vunpack.c.l.b16 %v2110
    %v3800 = vunpack.c.h.b16 %v2110
    %v3801 = vunpack.c.l.b16 %v2111
    %v3802 = vunpack.c.h.b16 %v2111
    %v3803 = vunpack.c.l.b16 %v2112
    %v3804 = vunpack.c.h.b16 %v2112
    %v3805 = vunpack.c.l.b16 %v2113
    %v3806 = vunpack.c.h.b16 %v2113
    %v3807 = vunpack.c.l.b16 %v2114
    %v3808 = vunpack.c.h.b16 %v2114
    %v3809 = vunpack.c.l.b16 %v2115
    %v3810 = vunpack.c.h.b16 %v2115
    %v3811 = vunpack.c.l.b16 %v2116
    %v3812 = vunpack.c.h.b16 %v2116
    %v3813 = vunpack.c.l.b16 %v2117
    %v3814 = vunpack.c.h.b16 %v2117
    %v3815 = vunpack.c.l.b16 %v2118
    %v3816 = vunpack.c.h.b16 %v2118
    %v3817 = vunpack.c.l.b16 %v2119
    %v3818 = vunpack.c.h.b16 %v2119
    %v3819 = vunpack.c.l.b16 %v2120
    %v3820 = vunpack.c.h.b16 %v2120
    %v3821 = vunpack.c.l.b16 %v2121
    %v3822 = vunpack.c.h.b16 %v2121
    %v3823 = vunpack.c.l.b16 %v2122
    %v3824 = vunpack.c.h.b16 %v2122
    %v3825 = vunpack.c.l.b16 %v2123
    %v3826 = vunpack.c.h.b16 %v2123
    %v3827 = vunpack.c.l.b16 %v2124
    %v3828 = vunpack.c.h.b16 %v2124
    %v3829 = vunpack.c.l.b16 %v2125
    %v3830 = vunpack.c.h.b16 %v2125
    %v3831 = vunpack.c.l.b16 %v2126
    %v3832 = vunpack.c.h.b16 %v2126
    %v3833 = vunpack.c.l.b16 %v2127
    %v3834 = vunpack.c.h.b16 %v2127
    %v3835 = vunpack.c.l.b16 %v2128
    %v3836 = vunpack.c.h.b16 %v2128
    %v3837 = vunpack.c.l.b16 %v2129
    %v3838 = vunpack.c.h.b16 %v2129
    %v3839 = vpack.c.b16 %v3619, %v3615
    %v3840 = vpack.c.b16 %v3620, %v3616
    %v3841 = vpack.c.b16 %v3621, %v3617
    %v3842 = vpack.c.b16 %v3622, %v3618
    %v3843 = vpack.c.b16 %v3627, %v3623
    %v3844 = vpack.c.b16 %v3628, %v3624
    %v3845 = vpack.c.b16 %v3629, %v3625
    %v3846 = vpack.c.b16 %v3630, %v3626
    %v3847 = vpack.c.b16 %v3635, %v3631
    %v3848 = vpack.c.b16 %v3636, %v3632
    %v3849 = vpack.c.b16 %v3637, %v3633
    %v3850 = vpack.c.b16 %v3638, %v3634
    %v3851 = vpack.c.b16 %v3643, %v3639
    %v3852 = vpack.c.b16 %v3644, %v3640
    %v3853 = vpack.c.b16 %v3645, %v3641
    %v3854 = vpack.c.b16 %v3646, %v3642
    %v3855 = vpack.c.b16 %v3651, %v3647
    %v3856 = vpack.c.b16 %v3652, %v3648
    %v3857 = vpack.c.b16 %v3653, %v3649
    %v3858 = vpack.c.b16 %v3654, %v3650
    %v3859 = vpack.c.b16 %v3659, %v3655
    %v3860 = vpack.c.b16 %v3660, %v3656
    %v3861 = vpack.c.b16 %v3661, %v3657
    %v3862 = vpack.c.b16 %v3662, %v3658
    %v3863 = vpack.c.b16 %v3667, %v3663
    %v3864 = vpack.c.b16 %v3668, %v3664
    %v3865 = vpack.c.b16 %v3669, %v3665
    %v3866 = vpack.c.b16 %v3670, %v3666
    %v3867 = vpack.c.b16 %v3675, %v3671
    %v3868 = vpack.c.b16 %v3676, %v3672
    %v3869 = vpack.c.b16 %v3677, %v3673
    %v3870 = vpack.c.b16 %v3678, %v3674
    %v3871 = vpack.c.b16 %v3683, %v3679
    %v3872 = vpack.c.b16 %v3684, %v3680
    %v3873 = vpack.c.b16 %v3685, %v3681
    %v3874 = vpack.c.b16 %v3686, %v3682
    %v3875 = vpack.c.b16 %v3691, %v3687
    %v3876 = vpack.c.b16 %v3692, %v3688
    %v3877 = vpack.c.b16 %v3693, %v3689
    %v3878 = vpack.c.b16 %v3694, %v3690
    %v3879 = vpack.c.b16 %v3699, %v3695
    %v3880 = vpack.c.b16 %v3700, %v3696
    %v3881 = vpack.c.b16 %v3701, %v3697
    %v3882 = vpack.c.b16 %v3702, %v3698
    %v3883 = vpack.c.b16 %v3707, %v3703
    %v3884 = vpack.c.b16 %v3708, %v3704
    %v3885 = vpack.c.b16 %v3709, %v3705
    %v3886 = vpack.c.b16 %v3710, %v3706
    %v3887 = vpack.c.b16 %v3715, %v3711
    %v3888 = vpack.c.b16 %v3716, %v3712
    %v3889 = vpack.c.b16 %v3717, %v3713
    %v3890 = vpack.c.b16 %v3718, %v3714
    %v3891 = vpack.c.b16 %v3723, %v3719
    %v3892 = vpack.c.b16 %v3724, %v3720
    %v3893 = vpack.c.b16 %v3725, %v3721
    %v3894 = vpack.c.b16 %v3726, %v3722
    %v3895 = vpack.c.b16 %v3731, %v3727
    %v3896 = vpack.c.b16 %v3732, %v3728
    %v3897 = vpack.c.b16 %v3733, %v3729
    %v3898 = vpack.c.b16 %v3734, %v3730
    %v3899 = vpack.c.b16 %v3739, %v3735
    %v3900 = vpack.c.b16 %v3740, %v3736
    %v3901 = vpack.c.b16 %v3741, %v3737
    %v3902 = vpack.c.b16 %v3742, %v3738
    %v3903 = vpack.c.b16 %v3747, %v3743
    %v3904 = vpack.c.b16 %v3748, %v3744
    %v3905 = vpack.c.b16 %v3749, %v3745
    %v3906 = vpack.c.b16 %v3750, %v3746
    %v3907 = vpack.c.b16 %v3755, %v3751
    %v3908 = vpack.c.b16 %v3756, %v3752
    %v3909 = vpack.c.b16 %v3757, %v3753
    %v3910 = vpack.c.b16 %v3758, %v3754
    %v3911 = vpack.c.b16 %v3763, %v3759
    %v3912 = vpack.c.b16 %v3764, %v3760
    %v3913 = vpack.c.b16 %v3765, %v3761
    %v3914 = vpack.c.b16 %v3766, %v3762
    %v3915 = vpack.c.b16 %v3771, %v3767
    %v3916 = vpack.c.b16 %v3772, %v3768
    %v3917 = vpack.c.b16 %v3773, %v3769
    %v3918 = vpack.c.b16 %v3774, %v3770
    %v3919 = vpack.c.b16 %v3779, %v3775
    %v3920 = vpack.c.b16 %v3780, %v3776
    %v3921 = vpack.c.b16 %v3781, %v3777
    %v3922 = vpack.c.b16 %v3782, %v3778
    %v3923 = vpack.c.b16 %v3787, %v3783
    %v3924 = vpack.c.b16 %v3788, %v3784
    %v3925 = vpack.c.b16 %v3789, %v3785
    %v3926 = vpack.c.b16 %v3790, %v3786
    %v3927 = vpack.c.b16 %v3795, %v3791
    %v3928 = vpack.c.b16 %v3796, %v3792
    %v3929 = vpack.c.b16 %v3797, %v3793
    %v3930 = vpack.c.b16 %v3798, %v3794
    %v3931 = vpack.c.b16 %v3803, %v3799
    %v3932 = vpack.c.b16 %v3804, %v3800
    %v3933 = vpack.c.b16 %v3805, %v3801
    %v3934 = vpack.c.b16 %v3806, %v3802
    %v3935 = vpack.c.b16 %v3811, %v3807
    %v3936 = vpack.c.b16 %v3812, %v3808
    %v3937 = vpack.c.b16 %v3813, %v3809
    %v3938 = vpack.c.b16 %v3814, %v3810
    %v3939 = vpack.c.b16 %v3819, %v3815
    %v3940 = vpack.c.b16 %v3820, %v3816
    %v3941 = vpack.c.b16 %v3821, %v3817
    %v3942 = vpack.c.b16 %v3822, %v3818
    %v3943 = vpack.c.b16 %v3827, %v3823
    %v3944 = vpack.c.b16 %v3828, %v3824
    %v3945 = vpack.c.b16 %v3829, %v3825
    %v3946 = vpack.c.b16 %v3830, %v3826
    %v3947 = vpack.c.b16 %v3835, %v3831
    %v3948 = vpack.c.b16 %v3836, %v3832
    %v3949 = vpack.c.b16 %v3837, %v3833
    %v3950 = vpack.c.b16 %v3838, %v3834
    %v4064 = vsel %vm2936, %v3457, 0
    %v4067 = vsel %vm2936, %v3461, 0
    %v4070 = vsel %vm2936, %v3465, 0
    %v4073 = vsel %vm2936, %v3469, 0
    %v4076 = vsel %vm2936, %v3473, 0
    %v4079 = vsel %vm2936, %v3477, 0
    %v4082 = vsel %vm2936, %v3481, 0
    %4084 = vmatprep.subr.bf16.mxu0 %v3840
    %4085 = vmatpush1.bf16.msra.mxu0 %v3839
    %4086 = vmatprep.subr.bf16.mxu0 %v3844
    %4087 = vmatpush1.bf16.msra.mxu0 %v3843
    %4088 = vmatprep.subr.bf16.mxu0 %v3848
    %4089 = vmatpush1.bf16.msra.mxu0 %v3847
    %4090 = vmatprep.subr.bf16.mxu0 %v3852
    %4091 = vmatpush1.bf16.msra.mxu0 %v3851
    %4092 = vmatprep.subr.bf16.mxu0 %v3856
    %4093 = vmatpush1.bf16.msra.mxu0 %v3855
    %4094 = vmatprep.subr.bf16.mxu0 %v3860
    %4095 = vmatpush1.bf16.msra.mxu0 %v3859
    %4096 = vmatprep.subr.bf16.mxu0 %v3864
    %4097 = vmatpush1.bf16.msra.mxu0 %v3863
    %4098 = vmatprep.subr.bf16.mxu0 %v3868
    %4099 = vmatpush1.bf16.msra.mxu0 %v3867
    %4100 = vmatprep.subr.bf16.mxu0 %v3872
    %4101 = vmatpush1.bf16.msra.mxu0 %v3871
    %4102 = vmatprep.subr.bf16.mxu0 %v3876
    %4103 = vmatpush1.bf16.msra.mxu0 %v3875
    %4104 = vmatprep.subr.bf16.mxu0 %v3880
    %4105 = vmatpush1.bf16.msra.mxu0 %v3879
    %4106 = vmatprep.subr.bf16.mxu0 %v3884
    %4107 = vmatpush1.bf16.msra.mxu0 %v3883
    %4108 = vmatprep.subr.bf16.mxu0 %v3888
    %4109 = vmatpush1.bf16.msra.mxu0 %v3887
    %4110 = vmatprep.subr.bf16.mxu0 %v3892
    %4111 = vmatpush1.bf16.msra.mxu0 %v3891
    %4112 = vmatprep.subr.bf16.mxu0 %v3896
    %4113 = vmatpush1.bf16.msra.mxu0 %v3895
    %4114 = vmatprep.subr.bf16.mxu0 %v3900
    %4115 = vmatpush1.bf16.msra.mxu0 %v3899
    %4116 = vmatprep.mubr.bf16.mxu0 %v3455
    %4117 = vmatmul.mubr.bf16.gmra.mrb[0].mxu0 %v3454
    %v4118 = vpop.f32.mrb[0].mxu0
    %v4119 = vadd.f32 %v3096, %v4118
    %v4120 = vpop.f32.mrb[0].mxu0
    %v4121 = vadd.f32 %v3098, %v4120
    %v4122 = vpop.f32.mrb[0].mxu0
    %v4123 = vadd.f32 %v3100, %v4122
    %v4124 = vpop.f32.mrb[0].mxu0
    %v4125 = vadd.f32 %v3102, %v4124
    %4126 = vmatprep.mubr.bf16.mxu0 %v3459
    %4127 = vmatmul.mubr.bf16.gmra.mrb[0].mxu0 %v3458
    %v4128 = vpop.f32.mrb[0].mxu0
    %v4129 = vadd.f32 %v3106, %v4128
    %v4130 = vpop.f32.mrb[0].mxu0
    %v4131 = vadd.f32 %v3108, %v4130
    %v4132 = vpop.f32.mrb[0].mxu0
    %v4133 = vadd.f32 %v3110, %v4132
    %v4134 = vpop.f32.mrb[0].mxu0
    %v4135 = vadd.f32 %v3112, %v4134
    %4136 = vmatprep.mubr.bf16.mxu0 %v3463
    %4137 = vmatmul.mubr.bf16.gmra.mrb[0].mxu0 %v3462
    %v4138 = vpop.f32.mrb[0].mxu0
    %v4139 = vadd.f32 %v3116, %v4138
    %v4140 = vpop.f32.mrb[0].mxu0
    %v4141 = vadd.f32 %v3118, %v4140
    %v4142 = vpop.f32.mrb[0].mxu0
    %v4143 = vadd.f32 %v3120, %v4142
    %v4144 = vpop.f32.mrb[0].mxu0
    %v4145 = vadd.f32 %v3122, %v4144
    %4146 = vmatprep.mubr.bf16.mxu0 %v3467
    %4147 = vmatmul.mubr.bf16.gmra.mrb[0].mxu0 %v3466
    %v4148 = vpop.f32.mrb[0].mxu0
    %v4149 = vadd.f32 %v3126, %v4148
    %v4150 = vpop.f32.mrb[0].mxu0
    %v4151 = vadd.f32 %v3128, %v4150
    %v4152 = vpop.f32.mrb[0].mxu0
    %v4153 = vadd.f32 %v3130, %v4152
    %v4154 = vpop.f32.mrb[0].mxu0
    %v4155 = vadd.f32 %v3132, %v4154
    %4156 = vmatprep.mubr.bf16.mxu0 %v3471
    %4157 = vmatmul.mubr.bf16.gmra.mrb[0].mxu0 %v3470
    %v4158 = vpop.f32.mrb[0].mxu0
    %v4159 = vadd.f32 %v3136, %v4158
    %v4160 = vpop.f32.mrb[0].mxu0
    %v4161 = vadd.f32 %v3138, %v4160
    %v4162 = vpop.f32.mrb[0].mxu0
    %v4163 = vadd.f32 %v3140, %v4162
    %v4164 = vpop.f32.mrb[0].mxu0
    %v4165 = vadd.f32 %v3142, %v4164
    %4166 = vmatprep.mubr.bf16.mxu0 %v3475
    %4167 = vmatmul.mubr.bf16.gmra.mrb[0].mxu0 %v3474
    %v4168 = vpop.f32.mrb[0].mxu0
    %v4169 = vadd.f32 %v3146, %v4168
    %v4170 = vpop.f32.mrb[0].mxu0
    %v4171 = vadd.f32 %v3148, %v4170
    %v4172 = vpop.f32.mrb[0].mxu0
    %v4173 = vadd.f32 %v3150, %v4172
    %v4174 = vpop.f32.mrb[0].mxu0
    %v4175 = vadd.f32 %v3152, %v4174
    %4176 = vmatprep.mubr.bf16.mxu0 %v3479
    %4177 = vmatmul.mubr.bf16.gmra.mrb[0].mxu0 %v3478
    %v4178 = vpop.f32.mrb[0].mxu0
    %v4179 = vadd.f32 %v3156, %v4178
    %v4180 = vpop.f32.mrb[0].mxu0
    %v4181 = vadd.f32 %v3158, %v4180
    %v4182 = vpop.f32.mrb[0].mxu0
    %v4183 = vadd.f32 %v3160, %v4182
    %v4184 = vpop.f32.mrb[0].mxu0
    %v4185 = vadd.f32 %v3162, %v4184
    %4186 = vdwg.mxu0
    %4187 = vmatprep.subr.bf16.mxu0 %v3904
    %4188 = vmatpush1.bf16.msra.mxu0 %v3903
    %4189 = vmatprep.subr.bf16.mxu0 %v3908
    %4190 = vmatpush1.bf16.msra.mxu0 %v3907
    %4191 = vmatprep.subr.bf16.mxu0 %v3912
    %4192 = vmatpush1.bf16.msra.mxu0 %v3911
    %4193 = vmatprep.subr.bf16.mxu0 %v3916
    %4194 = vmatpush1.bf16.msra.mxu0 %v3915
    %4195 = vmatprep.subr.bf16.mxu0 %v3920
    %4196 = vmatpush1.bf16.msra.mxu0 %v3919
    %4197 = vmatprep.subr.bf16.mxu0 %v3924
    %4198 = vmatpush1.bf16.msra.mxu0 %v3923
    %4199 = vmatprep.subr.bf16.mxu0 %v3928
    %4200 = vmatpush1.bf16.msra.mxu0 %v3927
    %4201 = vmatprep.subr.bf16.mxu0 %v3932
    %4202 = vmatpush1.bf16.msra.mxu0 %v3931
    %4203 = vmatprep.subr.bf16.mxu0 %v3936
    %4204 = vmatpush1.bf16.msra.mxu0 %v3935
    %4205 = vmatprep.subr.bf16.mxu0 %v3940
    %4206 = vmatpush1.bf16.msra.mxu0 %v3939
    %4207 = vmatprep.subr.bf16.mxu0 %v3944
    %4208 = vmatpush1.bf16.msra.mxu0 %v3943
    %4209 = vmatprep.subr.bf16.mxu0 %v3948
    %4210 = vmatpush1.bf16.msra.mxu0 %v3947
    %4211 = vmatprep.subr.bf16.mxu0 0
    %4212 = vmatpush1.bf16.msra.mxu0 0
    %4213 = vmatprep.subr.bf16.mxu0 0
    %4214 = vmatpush1.bf16.msra.mxu0 0
    %4215 = vmatprep.subr.bf16.mxu0 0
    %4216 = vmatpush1.bf16.msra.mxu0 0
    %4217 = vmatprep.subr.bf16.mxu0 0
    %4218 = vmatpush1.bf16.msra.mxu0 0
    %4219 = vmatprep.mubr.bf16.mxu0 %v4064
    %4220 = vmatmul.mubr.bf16.gmra.mrb[0].mxu0 %v3456
    %v4221 = vpop.f32.mrb[0].mxu0
    %v4222 = vadd.f32 %v4119, %v4221
    %v4223 = vpop.f32.mrb[0].mxu0
    %v4224 = vadd.f32 %v4121, %v4223
    %v4225 = vpop.f32.mrb[0].mxu0
    %v4226 = vadd.f32 %v4123, %v4225
    %v4227 = vpop.f32.mrb[0].mxu0
    %v4228 = vadd.f32 %v4125, %v4227
    %4229 = vmatprep.mubr.bf16.mxu0 %v4067
    %4230 = vmatmul.mubr.bf16.gmra.mrb[0].mxu0 %v3460
    %v4231 = vpop.f32.mrb[0].mxu0
    %v4232 = vadd.f32 %v4129, %v4231
    %v4233 = vpop.f32.mrb[0].mxu0
    %v4234 = vadd.f32 %v4131, %v4233
    %v4235 = vpop.f32.mrb[0].mxu0
    %v4236 = vadd.f32 %v4133, %v4235
    %v4237 = vpop.f32.mrb[0].mxu0
    %v4238 = vadd.f32 %v4135, %v4237
    %4239 = vmatprep.mubr.bf16.mxu0 %v4070
    %4240 = vmatmul.mubr.bf16.gmra.mrb[0].mxu0 %v3464
    %v4241 = vpop.f32.mrb[0].mxu0
    %v4242 = vadd.f32 %v4139, %v4241
    %v4243 = vpop.f32.mrb[0].mxu0
    %v4244 = vadd.f32 %v4141, %v4243
    %v4245 = vpop.f32.mrb[0].mxu0
    %v4246 = vadd.f32 %v4143, %v4245
    %v4247 = vpop.f32.mrb[0].mxu0
    %v4248 = vadd.f32 %v4145, %v4247
    %4249 = vmatprep.mubr.bf16.mxu0 %v4073
    %4250 = vmatmul.mubr.bf16.gmra.mrb[0].mxu0 %v3468
    %v4251 = vpop.f32.mrb[0].mxu0
    %v4252 = vadd.f32 %v4149, %v4251
    %v4253 = vpop.f32.mrb[0].mxu0
    %v4254 = vadd.f32 %v4151, %v4253
    %v4255 = vpop.f32.mrb[0].mxu0
    %v4256 = vadd.f32 %v4153, %v4255
    %v4257 = vpop.f32.mrb[0].mxu0
    %v4258 = vadd.f32 %v4155, %v4257
    %4259 = vmatprep.mubr.bf16.mxu0 %v4076
    %4260 = vmatmul.mubr.bf16.gmra.mrb[0].mxu0 %v3472
    %v4261 = vpop.f32.mrb[0].mxu0
    %v4262 = vadd.f32 %v4159, %v4261
    %v4263 = vpop.f32.mrb[0].mxu0
    %v4264 = vadd.f32 %v4161, %v4263
    %v4265 = vpop.f32.mrb[0].mxu0
    %v4266 = vadd.f32 %v4163, %v4265
    %v4267 = vpop.f32.mrb[0].mxu0
    %v4268 = vadd.f32 %v4165, %v4267
    %4269 = vmatprep.mubr.bf16.mxu0 %v4079
    %4270 = vmatmul.mubr.bf16.gmra.mrb[0].mxu0 %v3476
    %v4271 = vpop.f32.mrb[0].mxu0
    %v4272 = vadd.f32 %v4169, %v4271
    %v4273 = vpop.f32.mrb[0].mxu0
    %v4274 = vadd.f32 %v4171, %v4273
    %v4275 = vpop.f32.mrb[0].mxu0
    %v4276 = vadd.f32 %v4173, %v4275
    %v4277 = vpop.f32.mrb[0].mxu0
    %v4278 = vadd.f32 %v4175, %v4277
    %4279 = vmatprep.mubr.bf16.mxu0 %v4082
    %4280 = vmatmul.mubr.bf16.gmra.mrb[0].mxu0 %v3480
    %v4281 = vpop.f32.mrb[0].mxu0
    %v4282 = vadd.f32 %v4179, %v4281
    %v4283 = vpop.f32.mrb[0].mxu0
    %v4284 = vadd.f32 %v4181, %v4283
    %v4285 = vpop.f32.mrb[0].mxu0
    %v4286 = vadd.f32 %v4183, %v4285
    %v4287 = vpop.f32.mrb[0].mxu0
    %v4288 = vadd.f32 %v4185, %v4287
    %4289 = vdwg.mxu0
    %4290 = vmatprep.subr.bf16.mxu0 %v3842
    %4291 = vmatpush1.bf16.msra.mxu0 %v3841
    %4292 = vmatprep.subr.bf16.mxu0 %v3846
    %4293 = vmatpush1.bf16.msra.mxu0 %v3845
    %4294 = vmatprep.subr.bf16.mxu0 %v3850
    %4295 = vmatpush1.bf16.msra.mxu0 %v3849
    %4296 = vmatprep.subr.bf16.mxu0 %v3854
    %4297 = vmatpush1.bf16.msra.mxu0 %v3853
    %4298 = vmatprep.subr.bf16.mxu0 %v3858
    %4299 = vmatpush1.bf16.msra.mxu0 %v3857
    %4300 = vmatprep.subr.bf16.mxu0 %v3862
    %4301 = vmatpush1.bf16.msra.mxu0 %v3861
    %4302 = vmatprep.subr.bf16.mxu0 %v3866
    %4303 = vmatpush1.bf16.msra.mxu0 %v3865
    %4304 = vmatprep.subr.bf16.mxu0 %v3870
    %4305 = vmatpush1.bf16.msra.mxu0 %v3869
    %4306 = vmatprep.subr.bf16.mxu0 %v3874
    %4307 = vmatpush1.bf16.msra.mxu0 %v3873
    %4308 = vmatprep.subr.bf16.mxu0 %v3878
    %4309 = vmatpush1.bf16.msra.mxu0 %v3877
    %4310 = vmatprep.subr.bf16.mxu0 %v3882
    %4311 = vmatpush1.bf16.msra.mxu0 %v3881
    %4312 = vmatprep.subr.bf16.mxu0 %v3886
    %4313 = vmatpush1.bf16.msra.mxu0 %v3885
    %4314 = vmatprep.subr.bf16.mxu0 %v3890
    %4315 = vmatpush1.bf16.msra.mxu0 %v3889
    %4316 = vmatprep.subr.bf16.mxu0 %v3894
    %4317 = vmatpush1.bf16.msra.mxu0 %v3893
    %4318 = vmatprep.subr.bf16.mxu0 %v3898
    %4319 = vmatpush1.bf16.msra.mxu0 %v3897
    %4320 = vmatprep.subr.bf16.mxu0 %v3902
    %4321 = vmatpush1.bf16.msra.mxu0 %v3901
    %4322 = vmatprep.mubr.bf16.mxu0 %v3455
    %4323 = vmatmul.mubr.bf16.gmra.mrb[0].mxu0 %v3454
    %v4324 = vpop.f32.mrb[0].mxu0
    %v4325 = vadd.f32 %v3302, %v4324
    %v4326 = vpop.f32.mrb[0].mxu0
    %v4327 = vadd.f32 %v3304, %v4326
    %v4328 = vpop.f32.mrb[0].mxu0
    %v4329 = vadd.f32 %v3306, %v4328
    %v4330 = vpop.f32.mrb[0].mxu0
    %v4331 = vadd.f32 %v3308, %v4330
    %4332 = vmatprep.mubr.bf16.mxu0 %v3459
    %4333 = vmatmul.mubr.bf16.gmra.mrb[0].mxu0 %v3458
    %v4334 = vpop.f32.mrb[0].mxu0
    %v4335 = vadd.f32 %v3312, %v4334
    %v4336 = vpop.f32.mrb[0].mxu0
    %v4337 = vadd.f32 %v3314, %v4336
    %v4338 = vpop.f32.mrb[0].mxu0
    %v4339 = vadd.f32 %v3316, %v4338
    %v4340 = vpop.f32.mrb[0].mxu0
    %v4341 = vadd.f32 %v3318, %v4340
    %4342 = vmatprep.mubr.bf16.mxu0 %v3463
    %4343 = vmatmul.mubr.bf16.gmra.mrb[0].mxu0 %v3462
    %v4344 = vpop.f32.mrb[0].mxu0
    %v4345 = vadd.f32 %v3322, %v4344
    %v4346 = vpop.f32.mrb[0].mxu0
    %v4347 = vadd.f32 %v3324, %v4346
    %v4348 = vpop.f32.mrb[0].mxu0
    %v4349 = vadd.f32 %v3326, %v4348
    %v4350 = vpop.f32.mrb[0].mxu0
    %v4351 = vadd.f32 %v3328, %v4350
    %4352 = vmatprep.mubr.bf16.mxu0 %v3467
    %4353 = vmatmul.mubr.bf16.gmra.mrb[0].mxu0 %v3466
    %v4354 = vpop.f32.mrb[0].mxu0
    %v4355 = vadd.f32 %v3332, %v4354
    %v4356 = vpop.f32.mrb[0].mxu0
    %v4357 = vadd.f32 %v3334, %v4356
    %v4358 = vpop.f32.mrb[0].mxu0
    %v4359 = vadd.f32 %v3336, %v4358
    %v4360 = vpop.f32.mrb[0].mxu0
    %v4361 = vadd.f32 %v3338, %v4360
    %4362 = vmatprep.mubr.bf16.mxu0 %v3471
    %4363 = vmatmul.mubr.bf16.gmra.mrb[0].mxu0 %v3470
    %v4364 = vpop.f32.mrb[0].mxu0
    %v4365 = vadd.f32 %v3342, %v4364
    %v4366 = vpop.f32.mrb[0].mxu0
    %v4367 = vadd.f32 %v3344, %v4366
    %v4368 = vpop.f32.mrb[0].mxu0
    %v4369 = vadd.f32 %v3346, %v4368
    %v4370 = vpop.f32.mrb[0].mxu0
    %v4371 = vadd.f32 %v3348, %v4370
    %4372 = vmatprep.mubr.bf16.mxu0 %v3475
    %4373 = vmatmul.mubr.bf16.gmra.mrb[0].mxu0 %v3474
    %v4374 = vpop.f32.mrb[0].mxu0
    %v4375 = vadd.f32 %v3352, %v4374
    %v4376 = vpop.f32.mrb[0].mxu0
    %v4377 = vadd.f32 %v3354, %v4376
    %v4378 = vpop.f32.mrb[0].mxu0
    %v4379 = vadd.f32 %v3356, %v4378
    %v4380 = vpop.f32.mrb[0].mxu0
    %v4381 = vadd.f32 %v3358, %v4380
    %4382 = vmatprep.mubr.bf16.mxu0 %v3479
    %4383 = vmatmul.mubr.bf16.gmra.mrb[0].mxu0 %v3478
    %v4384 = vpop.f32.mrb[0].mxu0
    %v4385 = vadd.f32 %v3362, %v4384
    %v4386 = vpop.f32.mrb[0].mxu0
    %v4387 = vadd.f32 %v3364, %v4386
    %v4388 = vpop.f32.mrb[0].mxu0
    %v4389 = vadd.f32 %v3366, %v4388
    %v4390 = vpop.f32.mrb[0].mxu0
    %v4391 = vadd.f32 %v3368, %v4390
    %4392 = vdwg.mxu0
    %4393 = vmatprep.subr.bf16.mxu0 %v3906
    %4394 = vmatpush1.bf16.msra.mxu0 %v3905
    %4395 = vmatprep.subr.bf16.mxu0 %v3910
    %4396 = vmatpush1.bf16.msra.mxu0 %v3909
    %4397 = vmatprep.subr.bf16.mxu0 %v3914
    %4398 = vmatpush1.bf16.msra.mxu0 %v3913
    %4399 = vmatprep.subr.bf16.mxu0 %v3918
    %4400 = vmatpush1.bf16.msra.mxu0 %v3917
    %4401 = vmatprep.subr.bf16.mxu0 %v3922
    %4402 = vmatpush1.bf16.msra.mxu0 %v3921
    %4403 = vmatprep.subr.bf16.mxu0 %v3926
    %4404 = vmatpush1.bf16.msra.mxu0 %v3925
    %4405 = vmatprep.subr.bf16.mxu0 %v3930
    %4406 = vmatpush1.bf16.msra.mxu0 %v3929
    %4407 = vmatprep.subr.bf16.mxu0 %v3934
    %4408 = vmatpush1.bf16.msra.mxu0 %v3933
    %4409 = vmatprep.subr.bf16.mxu0 %v3938
    %4410 = vmatpush1.bf16.msra.mxu0 %v3937
    %4411 = vmatprep.subr.bf16.mxu0 %v3942
    %4412 = vmatpush1.bf16.msra.mxu0 %v3941
    %4413 = vmatprep.subr.bf16.mxu0 %v3946
    %4414 = vmatpush1.bf16.msra.mxu0 %v3945
    %4415 = vmatprep.subr.bf16.mxu0 %v3950
    %4416 = vmatpush1.bf16.msra.mxu0 %v3949
    %4417 = vmatprep.subr.bf16.mxu0 0
    %4418 = vmatpush1.bf16.msra.mxu0 0
    %4419 = vmatprep.subr.bf16.mxu0 0
    %4420 = vmatpush1.bf16.msra.mxu0 0
    %4421 = vmatprep.subr.bf16.mxu0 0
    %4422 = vmatpush1.bf16.msra.mxu0 0
    %4423 = vmatprep.subr.bf16.mxu0 0
    %4424 = vmatpush1.bf16.msra.mxu0 0
    %4425 = vmatprep.mubr.bf16.mxu0 %v4064
    %4426 = vmatmul.mubr.bf16.gmra.mrb[0].mxu0 %v3456
    %v4427 = vpop.f32.mrb[0].mxu0
    %v4428 = vadd.f32 %v4325, %v4427
    %v4429 = vpop.f32.mrb[0].mxu0
    %v4430 = vadd.f32 %v4327, %v4429
    %v4431 = vpop.f32.mrb[0].mxu0
    %v4432 = vadd.f32 %v4329, %v4431
    %v4433 = vpop.f32.mrb[0].mxu0
    %v4434 = vadd.f32 %v4331, %v4433
    %4435 = vmatprep.mubr.bf16.mxu0 %v4067
    %4436 = vmatmul.mubr.bf16.gmra.mrb[0].mxu0 %v3460
    %v4437 = vpop.f32.mrb[0].mxu0
    %v4438 = vadd.f32 %v4335, %v4437
    %v4439 = vpop.f32.mrb[0].mxu0
    %v4440 = vadd.f32 %v4337, %v4439
    %v4441 = vpop.f32.mrb[0].mxu0
    %v4442 = vadd.f32 %v4339, %v4441
    %v4443 = vpop.f32.mrb[0].mxu0
    %v4444 = vadd.f32 %v4341, %v4443
    %4445 = vmatprep.mubr.bf16.mxu0 %v4070
    %4446 = vmatmul.mubr.bf16.gmra.mrb[0].mxu0 %v3464
    %v4447 = vpop.f32.mrb[0].mxu0
    %v4448 = vadd.f32 %v4345, %v4447
    %v4449 = vpop.f32.mrb[0].mxu0
    %v4450 = vadd.f32 %v4347, %v4449
    %v4451 = vpop.f32.mrb[0].mxu0
    %v4452 = vadd.f32 %v4349, %v4451
    %v4453 = vpop.f32.mrb[0].mxu0
    %v4454 = vadd.f32 %v4351, %v4453
    %4455 = vmatprep.mubr.bf16.mxu0 %v4073
    %4456 = vmatmul.mubr.bf16.gmra.mrb[0].mxu0 %v3468
    %v4457 = vpop.f32.mrb[0].mxu0
    %v4458 = vadd.f32 %v4355, %v4457
    %v4459 = vpop.f32.mrb[0].mxu0
    %v4460 = vadd.f32 %v4357, %v4459
    %v4461 = vpop.f32.mrb[0].mxu0
    %v4462 = vadd.f32 %v4359, %v4461
    %v4463 = vpop.f32.mrb[0].mxu0
    %v4464 = vadd.f32 %v4361, %v4463
    %4465 = vmatprep.mubr.bf16.mxu0 %v4076
    %4466 = vmatmul.mubr.bf16.gmra.mrb[0].mxu0 %v3472
    %v4467 = vpop.f32.mrb[0].mxu0
    %v4468 = vadd.f32 %v4365, %v4467
    %v4469 = vpop.f32.mrb[0].mxu0
    %v4470 = vadd.f32 %v4367, %v4469
    %v4471 = vpop.f32.mrb[0].mxu0
    %v4472 = vadd.f32 %v4369, %v4471
    %v4473 = vpop.f32.mrb[0].mxu0
    %v4474 = vadd.f32 %v4371, %v4473
    %4475 = vmatprep.mubr.bf16.mxu0 %v4079
    %4476 = vmatmul.mubr.bf16.gmra.mrb[0].mxu0 %v3476
    %v4477 = vpop.f32.mrb[0].mxu0
    %v4478 = vadd.f32 %v4375, %v4477
    %v4479 = vpop.f32.mrb[0].mxu0
    %v4480 = vadd.f32 %v4377, %v4479
    %v4481 = vpop.f32.mrb[0].mxu0
    %v4482 = vadd.f32 %v4379, %v4481
    %v4483 = vpop.f32.mrb[0].mxu0
    %v4484 = vadd.f32 %v4381, %v4483
    %4485 = vmatprep.mubr.bf16.mxu0 %v4082
    %4486 = vmatmul.mubr.bf16.gmra.mrb[0].mxu0 %v3480
    %v4487 = vpop.f32.mrb[0].mxu0
    %v4488 = vadd.f32 %v4385, %v4487
    %v4489 = vpop.f32.mrb[0].mxu0
    %v4490 = vadd.f32 %v4387, %v4489
    %v4491 = vpop.f32.mrb[0].mxu0
    %v4492 = vadd.f32 %v4389, %v4491
    %v4493 = vpop.f32.mrb[0].mxu0
    %v4494 = vadd.f32 %v4391, %v4493
    %4495 = vdwg.mxu0
    %s4496 = scalar_lea.vmem [#allocation8], 1792
    %v4497 = vld [vmem:[%s4496] sm:$0xff]
    %v4498 = vld [vmem:[%s4496 + $0x8] sm:$0xff]
    %v4499 = vld [vmem:[%s4496 + $0x10] sm:$0xff]
    %v4500 = vld [vmem:[%s4496 + $0x18] sm:$0xff]
    %v4501 = vld [vmem:[%s4496 + $0x20] sm:$0xff]
    %v4502 = vld [vmem:[%s4496 + $0x28] sm:$0xff]
    %v4503 = vld [vmem:[%s4496 + $0x30] sm:$0xff]
    %v4504 = vld [vmem:[%s4496 + $0x38] sm:$0xff]
    %v4505 = vld [vmem:[%s4496 + $0x40] sm:$0xff]
    %v4506 = vld [vmem:[%s4496 + $0x48] sm:$0xff]
    %v4507 = vld [vmem:[%s4496 + $0x50] sm:$0xff]
    %v4508 = vld [vmem:[%s4496 + $0x58] sm:$0xff]
    %v4509 = vld [vmem:[%s4496 + $0x60] sm:$0xff]
    %v4510 = vld [vmem:[%s4496 + $0x68] sm:$0xff]
    %v4511 = vld [vmem:[%s4496 + $0x70] sm:$0xff]
    %v4512 = vld [vmem:[%s4496 + $0x78] sm:$0xff]
    %v4513 = vld [vmem:[%s4496 + $0x80] sm:$0xff]
    %v4514 = vld [vmem:[%s4496 + $0x88] sm:$0xff]
    %v4515 = vld [vmem:[%s4496 + $0x90] sm:$0xff]
    %v4516 = vld [vmem:[%s4496 + $0x98] sm:$0xff]
    %v4517 = vld [vmem:[%s4496 + $0xa0] sm:$0xff]
    %v4518 = vld [vmem:[%s4496 + $0xa8] sm:$0xff]
    %v4519 = vld [vmem:[%s4496 + $0xb0] sm:$0xff]
    %v4520 = vld [vmem:[%s4496 + $0xb8] sm:$0xff]
    %v4521 = vld [vmem:[%s4496 + $0xc0] sm:$0xff]
    %v4522 = vld [vmem:[%s4496 + $0xc8] sm:$0xff]
    %v4523 = vld [vmem:[%s4496 + $0xd0] sm:$0xff]
    %v4524 = vld [vmem:[%s4496 + $0xd8] sm:$0xff]
    %v4525 = vld [vmem:[%s4496 + $0xe0] sm:$0xff]
    %v4526 = vld [vmem:[%s4496 + $0xe8] sm:$0xff]
    %v4527 = vld [vmem:[%s4496 + $0xf0] sm:$0xff]
    %v4528 = vld [vmem:[%s4496 + $0xf8] sm:$0xff]
    %v4529 = vld [vmem:[%s4496 + $0x100] sm:$0xff]
    %v4530 = vld [vmem:[%s4496 + $0x108] sm:$0xff]
    %v4531 = vld [vmem:[%s4496 + $0x110] sm:$0xff]
    %v4532 = vld [vmem:[%s4496 + $0x118] sm:$0xff]
    %v4533 = vld [vmem:[%s4496 + $0x120] sm:$0xff]
    %v4534 = vld [vmem:[%s4496 + $0x128] sm:$0xff]
    %v4535 = vld [vmem:[%s4496 + $0x130] sm:$0xff]
    %v4536 = vld [vmem:[%s4496 + $0x138] sm:$0xff]
    %v4537 = vld [vmem:[%s4496 + $0x140] sm:$0xff]
    %v4538 = vld [vmem:[%s4496 + $0x148] sm:$0xff]
    %v4539 = vld [vmem:[%s4496 + $0x150] sm:$0xff]
    %v4540 = vld [vmem:[%s4496 + $0x158] sm:$0xff]
    %v4541 = vld [vmem:[%s4496 + $0x160] sm:$0xff]
    %v4542 = vld [vmem:[%s4496 + $0x168] sm:$0xff]
    %v4543 = vld [vmem:[%s4496 + $0x170] sm:$0xff]
    %v4544 = vld [vmem:[%s4496 + $0x178] sm:$0xff]
    %v4545 = vld [vmem:[%s4496 + $0x180] sm:$0xff]
    %v4546 = vld [vmem:[%s4496 + $0x188] sm:$0xff]
    %v4547 = vld [vmem:[%s4496 + $0x190] sm:$0xff]
    %v4548 = vld [vmem:[%s4496 + $0x198] sm:$0xff]
    %v4549 = vld [vmem:[%s4496 + $0x1a0] sm:$0xff]
    %v4550 = vld [vmem:[%s4496 + $0x1a8] sm:$0xff]
    %v4551 = vld [vmem:[%s4496 + $0x1b0] sm:$0xff]
    %v4552 = vld [vmem:[%s4496 + $0x1b8] sm:$0xff]
    %v4553 = vld [vmem:[%s4496 + $0x1c0] sm:$0xff]
    %v4554 = vld [vmem:[%s4496 + $0x1c8] sm:$0xff]
    %v4555 = vld [vmem:[%s4496 + $0x1d0] sm:$0xff]
    %v4556 = vld [vmem:[%s4496 + $0x1d8] sm:$0xff]
    %v4557 = vld [vmem:[%s4496 + $0x1e0] sm:$0xff]
    %v4558 = vld [vmem:[%s4496 + $0x1e8] sm:$0xff]
    %v4559 = vld [vmem:[%s4496 + $0x1f0] sm:$0xff]
    %v4560 = vld [vmem:[%s4496 + $0x1f8] sm:$0xff]
    %v4561 = vld [vmem:[%s4496 + $0x200] sm:$0xff]
    %v4562 = vld [vmem:[%s4496 + $0x208] sm:$0xff]
    %v4563 = vld [vmem:[%s4496 + $0x210] sm:$0xff]
    %v4564 = vld [vmem:[%s4496 + $0x218] sm:$0xff]
    %v4565 = vld [vmem:[%s4496 + $0x220] sm:$0xff]
    %v4566 = vld [vmem:[%s4496 + $0x228] sm:$0xff]
    %v4567 = vld [vmem:[%s4496 + $0x230] sm:$0xff]
    %v4568 = vld [vmem:[%s4496 + $0x238] sm:$0xff]
    %v4569 = vld [vmem:[%s4496 + $0x240] sm:$0xff]
    %v4570 = vld [vmem:[%s4496 + $0x248] sm:$0xff]
    %v4571 = vld [vmem:[%s4496 + $0x250] sm:$0xff]
    %v4572 = vld [vmem:[%s4496 + $0x258] sm:$0xff]
    %v4573 = vld [vmem:[%s4496 + $0x260] sm:$0xff]
    %v4574 = vld [vmem:[%s4496 + $0x268] sm:$0xff]
    %v4575 = vld [vmem:[%s4496 + $0x270] sm:$0xff]
    %v4576 = vld [vmem:[%s4496 + $0x278] sm:$0xff]
    %v4577 = vld [vmem:[%s4496 + $0x280] sm:$0xff]
    %v4578 = vld [vmem:[%s4496 + $0x288] sm:$0xff]
    %v4579 = vld [vmem:[%s4496 + $0x290] sm:$0xff]
    %v4580 = vld [vmem:[%s4496 + $0x298] sm:$0xff]
    %v4581 = vld [vmem:[%s4496 + $0x2a0] sm:$0xff]
    %v4582 = vld [vmem:[%s4496 + $0x2a8] sm:$0xff]
    %v4583 = vld [vmem:[%s4496 + $0x2b0] sm:$0xff]
    %v4584 = vld [vmem:[%s4496 + $0x2b8] sm:$0xff]
    %v4585 = vld [vmem:[%s4496 + $0x2c0] sm:$0xff]
    %v4586 = vld [vmem:[%s4496 + $0x2c8] sm:$0xff]
    %v4587 = vld [vmem:[%s4496 + $0x2d0] sm:$0xff]
    %v4588 = vld [vmem:[%s4496 + $0x2d8] sm:$0xff]
    %v4589 = vld [vmem:[%s4496 + $0x2e0] sm:$0xff]
    %v4590 = vld [vmem:[%s4496 + $0x2e8] sm:$0xff]
    %v4591 = vld [vmem:[%s4496 + $0x2f0] sm:$0xff]
    %v4592 = vld [vmem:[%s4496 + $0x2f8] sm:$0xff]
    %v4593 = vld [vmem:[%s4496 + $0x300] sm:$0xff]
    %v4594 = vld [vmem:[%s4496 + $0x308] sm:$0xff]
    %v4595 = vld [vmem:[%s4496 + $0x310] sm:$0xff]
    %v4596 = vld [vmem:[%s4496 + $0x318] sm:$0xff]
    %v4597 = vld [vmem:[%s4496 + $0x320] sm:$0xff]
    %v4598 = vld [vmem:[%s4496 + $0x328] sm:$0xff]
    %v4599 = vld [vmem:[%s4496 + $0x330] sm:$0xff]
    %v4600 = vld [vmem:[%s4496 + $0x338] sm:$0xff]
    %v4601 = vld [vmem:[%s4496 + $0x340] sm:$0xff]
    %v4602 = vld [vmem:[%s4496 + $0x348] sm:$0xff]
    %v4603 = vld [vmem:[%s4496 + $0x350] sm:$0xff]
    %v4604 = vld [vmem:[%s4496 + $0x358] sm:$0xff]
    %v4605 = vld [vmem:[%s4496 + $0x360] sm:$0xff]
    %v4606 = vld [vmem:[%s4496 + $0x368] sm:$0xff]
    %v4607 = vld [vmem:[%s4496 + $0x370] sm:$0xff]
    %v4608 = vld [vmem:[%s4496 + $0x378] sm:$0xff]
    %v4637 = vunpack.c.l.b16 %v1990
    %v4638 = vunpack.c.h.b16 %v1990
    %v4639 = vunpack.c.l.b16 %v1991
    %v4640 = vunpack.c.h.b16 %v1991
    %v4641 = vunpack.c.l.b16 %v1992
    %v4642 = vunpack.c.h.b16 %v1992
    %v4643 = vunpack.c.l.b16 %v1993
    %v4644 = vunpack.c.h.b16 %v1993
    %v4645 = vunpack.c.l.b16 %v1994
    %v4646 = vunpack.c.h.b16 %v1994
    %v4647 = vunpack.c.l.b16 %v1995
    %v4648 = vunpack.c.h.b16 %v1995
    %v4649 = vunpack.c.l.b16 %v1996
    %v4650 = vunpack.c.h.b16 %v1996
    %v4651 = vunpack.c.l.b16 %v1997
    %v4652 = vunpack.c.h.b16 %v1997
    %v4653 = vunpack.c.l.b16 %v1998
    %v4654 = vunpack.c.h.b16 %v1998
    %v4655 = vunpack.c.l.b16 %v1999
    %v4656 = vunpack.c.h.b16 %v1999
    %v4657 = vunpack.c.l.b16 %v2000
    %v4658 = vunpack.c.h.b16 %v2000
    %v4659 = vunpack.c.l.b16 %v2001
    %v4660 = vunpack.c.h.b16 %v2001
    %v4661 = vunpack.c.l.b16 %v2002
    %v4662 = vunpack.c.h.b16 %v2002
    %v4663 = vunpack.c.l.b16 %v2003
    %v4664 = vunpack.c.h.b16 %v2003
    %v4665 = vunpack.c.l.b16 %v2004
    %v4666 = vunpack.c.h.b16 %v2004
    %v4667 = vunpack.c.l.b16 %v2005
    %v4668 = vunpack.c.h.b16 %v2005
    %v4669 = vunpack.c.l.b16 %v2006
    %v4670 = vunpack.c.h.b16 %v2006
    %v4671 = vunpack.c.l.b16 %v2007
    %v4672 = vunpack.c.h.b16 %v2007
    %v4673 = vunpack.c.l.b16 %v2008
    %v4674 = vunpack.c.h.b16 %v2008
    %v4675 = vunpack.c.l.b16 %v2009
    %v4676 = vunpack.c.h.b16 %v2009
    %v4677 = vunpack.c.l.b16 %v2010
    %v4678 = vunpack.c.h.b16 %v2010
    %v4679 = vunpack.c.l.b16 %v2011
    %v4680 = vunpack.c.h.b16 %v2011
    %v4681 = vunpack.c.l.b16 %v2012
    %v4682 = vunpack.c.h.b16 %v2012
    %v4683 = vunpack.c.l.b16 %v2013
    %v4684 = vunpack.c.h.b16 %v2013
    %v4685 = vunpack.c.l.b16 %v2014
    %v4686 = vunpack.c.h.b16 %v2014
    %v4687 = vunpack.c.l.b16 %v2015
    %v4688 = vunpack.c.h.b16 %v2015
    %v4689 = vunpack.c.l.b16 %v2016
    %v4690 = vunpack.c.h.b16 %v2016
    %v4691 = vunpack.c.l.b16 %v2017
    %v4692 = vunpack.c.h.b16 %v2017
    %v4693 = vpack.c.b16 %v4641, %v4637
    %v4694 = vpack.c.b16 %v4642, %v4638
    %v4695 = vpack.c.b16 %v4643, %v4639
    %v4696 = vpack.c.b16 %v4644, %v4640
    %v4697 = vpack.c.b16 %v4649, %v4645
    %v4698 = vpack.c.b16 %v4650, %v4646
    %v4699 = vpack.c.b16 %v4651, %v4647
    %v4700 = vpack.c.b16 %v4652, %v4648
    %v4701 = vpack.c.b16 %v4657, %v4653
    %v4702 = vpack.c.b16 %v4658, %v4654
    %v4703 = vpack.c.b16 %v4659, %v4655
    %v4704 = vpack.c.b16 %v4660, %v4656
    %v4705 = vpack.c.b16 %v4665, %v4661
    %v4706 = vpack.c.b16 %v4666, %v4662
    %v4707 = vpack.c.b16 %v4667, %v4663
    %v4708 = vpack.c.b16 %v4668, %v4664
    %v4709 = vpack.c.b16 %v4673, %v4669
    %v4710 = vpack.c.b16 %v4674, %v4670
    %v4711 = vpack.c.b16 %v4675, %v4671
    %v4712 = vpack.c.b16 %v4676, %v4672
    %v4713 = vpack.c.b16 %v4681, %v4677
    %v4714 = vpack.c.b16 %v4682, %v4678
    %v4715 = vpack.c.b16 %v4683, %v4679
    %v4716 = vpack.c.b16 %v4684, %v4680
    %v4717 = vpack.c.b16 %v4689, %v4685
    %v4718 = vpack.c.b16 %v4690, %v4686
    %v4719 = vpack.c.b16 %v4691, %v4687
    %v4720 = vpack.c.b16 %v4692, %v4688
    %v4854 = vunpack.c.l.b16 %v4497
    %v4855 = vunpack.c.h.b16 %v4497
    %v4856 = vunpack.c.l.b16 %v4498
    %v4857 = vunpack.c.h.b16 %v4498
    %v4858 = vunpack.c.l.b16 %v4499
    %v4859 = vunpack.c.h.b16 %v4499
    %v4860 = vunpack.c.l.b16 %v4500
    %v4861 = vunpack.c.h.b16 %v4500
    %v4862 = vunpack.c.l.b16 %v4501
    %v4863 = vunpack.c.h.b16 %v4501
    %v4864 = vunpack.c.l.b16 %v4502
    %v4865 = vunpack.c.h.b16 %v4502
    %v4866 = vunpack.c.l.b16 %v4503
    %v4867 = vunpack.c.h.b16 %v4503
    %v4868 = vunpack.c.l.b16 %v4504
    %v4869 = vunpack.c.h.b16 %v4504
    %v4870 = vunpack.c.l.b16 %v4505
    %v4871 = vunpack.c.h.b16 %v4505
    %v4872 = vunpack.c.l.b16 %v4506
    %v4873 = vunpack.c.h.b16 %v4506
    %v4874 = vunpack.c.l.b16 %v4507
    %v4875 = vunpack.c.h.b16 %v4507
    %v4876 = vunpack.c.l.b16 %v4508
    %v4877 = vunpack.c.h.b16 %v4508
    %v4878 = vunpack.c.l.b16 %v4509
    %v4879 = vunpack.c.h.b16 %v4509
    %v4880 = vunpack.c.l.b16 %v4510
    %v4881 = vunpack.c.h.b16 %v4510
    %v4882 = vunpack.c.l.b16 %v4511
    %v4883 = vunpack.c.h.b16 %v4511
    %v4884 = vunpack.c.l.b16 %v4512
    %v4885 = vunpack.c.h.b16 %v4512
    %v4886 = vunpack.c.l.b16 %v4513
    %v4887 = vunpack.c.h.b16 %v4513
    %v4888 = vunpack.c.l.b16 %v4514
    %v4889 = vunpack.c.h.b16 %v4514
    %v4890 = vunpack.c.l.b16 %v4515
    %v4891 = vunpack.c.h.b16 %v4515
    %v4892 = vunpack.c.l.b16 %v4516
    %v4893 = vunpack.c.h.b16 %v4516
    %v4894 = vunpack.c.l.b16 %v4517
    %v4895 = vunpack.c.h.b16 %v4517
    %v4896 = vunpack.c.l.b16 %v4518
    %v4897 = vunpack.c.h.b16 %v4518
    %v4898 = vunpack.c.l.b16 %v4519
    %v4899 = vunpack.c.h.b16 %v4519
    %v4900 = vunpack.c.l.b16 %v4520
    %v4901 = vunpack.c.h.b16 %v4520
    %v4902 = vunpack.c.l.b16 %v4521
    %v4903 = vunpack.c.h.b16 %v4521
    %v4904 = vunpack.c.l.b16 %v4522
    %v4905 = vunpack.c.h.b16 %v4522
    %v4906 = vunpack.c.l.b16 %v4523
    %v4907 = vunpack.c.h.b16 %v4523
    %v4908 = vunpack.c.l.b16 %v4524
    %v4909 = vunpack.c.h.b16 %v4524
    %v4910 = vunpack.c.l.b16 %v4525
    %v4911 = vunpack.c.h.b16 %v4525
    %v4912 = vunpack.c.l.b16 %v4526
    %v4913 = vunpack.c.h.b16 %v4526
    %v4914 = vunpack.c.l.b16 %v4527
    %v4915 = vunpack.c.h.b16 %v4527
    %v4916 = vunpack.c.l.b16 %v4528
    %v4917 = vunpack.c.h.b16 %v4528
    %v4918 = vunpack.c.l.b16 %v4529
    %v4919 = vunpack.c.h.b16 %v4529
    %v4920 = vunpack.c.l.b16 %v4530
    %v4921 = vunpack.c.h.b16 %v4530
    %v4922 = vunpack.c.l.b16 %v4531
    %v4923 = vunpack.c.h.b16 %v4531
    %v4924 = vunpack.c.l.b16 %v4532
    %v4925 = vunpack.c.h.b16 %v4532
    %v4926 = vunpack.c.l.b16 %v4533
    %v4927 = vunpack.c.h.b16 %v4533
    %v4928 = vunpack.c.l.b16 %v4534
    %v4929 = vunpack.c.h.b16 %v4534
    %v4930 = vunpack.c.l.b16 %v4535
    %v4931 = vunpack.c.h.b16 %v4535
    %v4932 = vunpack.c.l.b16 %v4536
    %v4933 = vunpack.c.h.b16 %v4536
    %v4934 = vunpack.c.l.b16 %v4537
    %v4935 = vunpack.c.h.b16 %v4537
    %v4936 = vunpack.c.l.b16 %v4538
    %v4937 = vunpack.c.h.b16 %v4538
    %v4938 = vunpack.c.l.b16 %v4539
    %v4939 = vunpack.c.h.b16 %v4539
    %v4940 = vunpack.c.l.b16 %v4540
    %v4941 = vunpack.c.h.b16 %v4540
    %v4942 = vunpack.c.l.b16 %v4541
    %v4943 = vunpack.c.h.b16 %v4541
    %v4944 = vunpack.c.l.b16 %v4542
    %v4945 = vunpack.c.h.b16 %v4542
    %v4946 = vunpack.c.l.b16 %v4543
    %v4947 = vunpack.c.h.b16 %v4543
    %v4948 = vunpack.c.l.b16 %v4544
    %v4949 = vunpack.c.h.b16 %v4544
    %v4950 = vunpack.c.l.b16 %v4545
    %v4951 = vunpack.c.h.b16 %v4545
    %v4952 = vunpack.c.l.b16 %v4546
    %v4953 = vunpack.c.h.b16 %v4546
    %v4954 = vunpack.c.l.b16 %v4547
    %v4955 = vunpack.c.h.b16 %v4547
    %v4956 = vunpack.c.l.b16 %v4548
    %v4957 = vunpack.c.h.b16 %v4548
    %v4958 = vunpack.c.l.b16 %v4549
    %v4959 = vunpack.c.h.b16 %v4549
    %v4960 = vunpack.c.l.b16 %v4550
    %v4961 = vunpack.c.h.b16 %v4550
    %v4962 = vunpack.c.l.b16 %v4551
    %v4963 = vunpack.c.h.b16 %v4551
    %v4964 = vunpack.c.l.b16 %v4552
    %v4965 = vunpack.c.h.b16 %v4552
    %v4966 = vunpack.c.l.b16 %v4553
    %v4967 = vunpack.c.h.b16 %v4553
    %v4968 = vunpack.c.l.b16 %v4554
    %v4969 = vunpack.c.h.b16 %v4554
    %v4970 = vunpack.c.l.b16 %v4555
    %v4971 = vunpack.c.h.b16 %v4555
    %v4972 = vunpack.c.l.b16 %v4556
    %v4973 = vunpack.c.h.b16 %v4556
    %v4974 = vunpack.c.l.b16 %v4557
    %v4975 = vunpack.c.h.b16 %v4557
    %v4976 = vunpack.c.l.b16 %v4558
    %v4977 = vunpack.c.h.b16 %v4558
    %v4978 = vunpack.c.l.b16 %v4559
    %v4979 = vunpack.c.h.b16 %v4559
    %v4980 = vunpack.c.l.b16 %v4560
    %v4981 = vunpack.c.h.b16 %v4560
    %v4982 = vunpack.c.l.b16 %v4561
    %v4983 = vunpack.c.h.b16 %v4561
    %v4984 = vunpack.c.l.b16 %v4562
    %v4985 = vunpack.c.h.b16 %v4562
    %v4986 = vunpack.c.l.b16 %v4563
    %v4987 = vunpack.c.h.b16 %v4563
    %v4988 = vunpack.c.l.b16 %v4564
    %v4989 = vunpack.c.h.b16 %v4564
    %v4990 = vunpack.c.l.b16 %v4565
    %v4991 = vunpack.c.h.b16 %v4565
    %v4992 = vunpack.c.l.b16 %v4566
    %v4993 = vunpack.c.h.b16 %v4566
    %v4994 = vunpack.c.l.b16 %v4567
    %v4995 = vunpack.c.h.b16 %v4567
    %v4996 = vunpack.c.l.b16 %v4568
    %v4997 = vunpack.c.h.b16 %v4568
    %v4998 = vunpack.c.l.b16 %v4569
    %v4999 = vunpack.c.h.b16 %v4569
    %v5000 = vunpack.c.l.b16 %v4570
    %v5001 = vunpack.c.h.b16 %v4570
    %v5002 = vunpack.c.l.b16 %v4571
    %v5003 = vunpack.c.h.b16 %v4571
    %v5004 = vunpack.c.l.b16 %v4572
    %v5005 = vunpack.c.h.b16 %v4572
    %v5006 = vunpack.c.l.b16 %v4573
    %v5007 = vunpack.c.h.b16 %v4573
    %v5008 = vunpack.c.l.b16 %v4574
    %v5009 = vunpack.c.h.b16 %v4574
    %v5010 = vunpack.c.l.b16 %v4575
    %v5011 = vunpack.c.h.b16 %v4575
    %v5012 = vunpack.c.l.b16 %v4576
    %v5013 = vunpack.c.h.b16 %v4576
    %v5014 = vunpack.c.l.b16 %v4577
    %v5015 = vunpack.c.h.b16 %v4577
    %v5016 = vunpack.c.l.b16 %v4578
    %v5017 = vunpack.c.h.b16 %v4578
    %v5018 = vunpack.c.l.b16 %v4579
    %v5019 = vunpack.c.h.b16 %v4579
    %v5020 = vunpack.c.l.b16 %v4580
    %v5021 = vunpack.c.h.b16 %v4580
    %v5022 = vunpack.c.l.b16 %v4581
    %v5023 = vunpack.c.h.b16 %v4581
    %v5024 = vunpack.c.l.b16 %v4582
    %v5025 = vunpack.c.h.b16 %v4582
    %v5026 = vunpack.c.l.b16 %v4583
    %v5027 = vunpack.c.h.b16 %v4583
    %v5028 = vunpack.c.l.b16 %v4584
    %v5029 = vunpack.c.h.b16 %v4584
    %v5030 = vunpack.c.l.b16 %v4585
    %v5031 = vunpack.c.h.b16 %v4585
    %v5032 = vunpack.c.l.b16 %v4586
    %v5033 = vunpack.c.h.b16 %v4586
    %v5034 = vunpack.c.l.b16 %v4587
    %v5035 = vunpack.c.h.b16 %v4587
    %v5036 = vunpack.c.l.b16 %v4588
    %v5037 = vunpack.c.h.b16 %v4588
    %v5038 = vunpack.c.l.b16 %v4589
    %v5039 = vunpack.c.h.b16 %v4589
    %v5040 = vunpack.c.l.b16 %v4590
    %v5041 = vunpack.c.h.b16 %v4590
    %v5042 = vunpack.c.l.b16 %v4591
    %v5043 = vunpack.c.h.b16 %v4591
    %v5044 = vunpack.c.l.b16 %v4592
    %v5045 = vunpack.c.h.b16 %v4592
    %v5046 = vunpack.c.l.b16 %v4593
    %v5047 = vunpack.c.h.b16 %v4593
    %v5048 = vunpack.c.l.b16 %v4594
    %v5049 = vunpack.c.h.b16 %v4594
    %v5050 = vunpack.c.l.b16 %v4595
    %v5051 = vunpack.c.h.b16 %v4595
    %v5052 = vunpack.c.l.b16 %v4596
    %v5053 = vunpack.c.h.b16 %v4596
    %v5054 = vunpack.c.l.b16 %v4597
    %v5055 = vunpack.c.h.b16 %v4597
    %v5056 = vunpack.c.l.b16 %v4598
    %v5057 = vunpack.c.h.b16 %v4598
    %v5058 = vunpack.c.l.b16 %v4599
    %v5059 = vunpack.c.h.b16 %v4599
    %v5060 = vunpack.c.l.b16 %v4600
    %v5061 = vunpack.c.h.b16 %v4600
    %v5062 = vunpack.c.l.b16 %v4601
    %v5063 = vunpack.c.h.b16 %v4601
    %v5064 = vunpack.c.l.b16 %v4602
    %v5065 = vunpack.c.h.b16 %v4602
    %v5066 = vunpack.c.l.b16 %v4603
    %v5067 = vunpack.c.h.b16 %v4603
    %v5068 = vunpack.c.l.b16 %v4604
    %v5069 = vunpack.c.h.b16 %v4604
    %v5070 = vunpack.c.l.b16 %v4605
    %v5071 = vunpack.c.h.b16 %v4605
    %v5072 = vunpack.c.l.b16 %v4606
    %v5073 = vunpack.c.h.b16 %v4606
    %v5074 = vunpack.c.l.b16 %v4607
    %v5075 = vunpack.c.h.b16 %v4607
    %v5076 = vunpack.c.l.b16 %v4608
    %v5077 = vunpack.c.h.b16 %v4608
    %v5078 = vpack.c.b16 %v4858, %v4854
    %v5079 = vpack.c.b16 %v4859, %v4855
    %v5080 = vpack.c.b16 %v4860, %v4856
    %v5081 = vpack.c.b16 %v4861, %v4857
    %v5082 = vpack.c.b16 %v4866, %v4862
    %v5083 = vpack.c.b16 %v4867, %v4863
    %v5084 = vpack.c.b16 %v4868, %v4864
    %v5085 = vpack.c.b16 %v4869, %v4865
    %v5086 = vpack.c.b16 %v4874, %v4870
    %v5087 = vpack.c.b16 %v4875, %v4871
    %v5088 = vpack.c.b16 %v4876, %v4872
    %v5089 = vpack.c.b16 %v4877, %v4873
    %v5090 = vpack.c.b16 %v4882, %v4878
    %v5091 = vpack.c.b16 %v4883, %v4879
    %v5092 = vpack.c.b16 %v4884, %v4880
    %v5093 = vpack.c.b16 %v4885, %v4881
    %v5094 = vpack.c.b16 %v4890, %v4886
    %v5095 = vpack.c.b16 %v4891, %v4887
    %v5096 = vpack.c.b16 %v4892, %v4888
    %v5097 = vpack.c.b16 %v4893, %v4889
    %v5098 = vpack.c.b16 %v4898, %v4894
    %v5099 = vpack.c.b16 %v4899, %v4895
    %v5100 = vpack.c.b16 %v4900, %v4896
    %v5101 = vpack.c.b16 %v4901, %v4897
    %v5102 = vpack.c.b16 %v4906, %v4902
    %v5103 = vpack.c.b16 %v4907, %v4903
    %v5104 = vpack.c.b16 %v4908, %v4904
    %v5105 = vpack.c.b16 %v4909, %v4905
    %v5106 = vpack.c.b16 %v4914, %v4910
    %v5107 = vpack.c.b16 %v4915, %v4911
    %v5108 = vpack.c.b16 %v4916, %v4912
    %v5109 = vpack.c.b16 %v4917, %v4913
    %v5110 = vpack.c.b16 %v4922, %v4918
    %v5111 = vpack.c.b16 %v4923, %v4919
    %v5112 = vpack.c.b16 %v4924, %v4920
    %v5113 = vpack.c.b16 %v4925, %v4921
    %v5114 = vpack.c.b16 %v4930, %v4926
    %v5115 = vpack.c.b16 %v4931, %v4927
    %v5116 = vpack.c.b16 %v4932, %v4928
    %v5117 = vpack.c.b16 %v4933, %v4929
    %v5118 = vpack.c.b16 %v4938, %v4934
    %v5119 = vpack.c.b16 %v4939, %v4935
    %v5120 = vpack.c.b16 %v4940, %v4936
    %v5121 = vpack.c.b16 %v4941, %v4937
    %v5122 = vpack.c.b16 %v4946, %v4942
    %v5123 = vpack.c.b16 %v4947, %v4943
    %v5124 = vpack.c.b16 %v4948, %v4944
    %v5125 = vpack.c.b16 %v4949, %v4945
    %v5126 = vpack.c.b16 %v4954, %v4950
    %v5127 = vpack.c.b16 %v4955, %v4951
    %v5128 = vpack.c.b16 %v4956, %v4952
    %v5129 = vpack.c.b16 %v4957, %v4953
    %v5130 = vpack.c.b16 %v4962, %v4958
    %v5131 = vpack.c.b16 %v4963, %v4959
    %v5132 = vpack.c.b16 %v4964, %v4960
    %v5133 = vpack.c.b16 %v4965, %v4961
    %v5134 = vpack.c.b16 %v4970, %v4966
    %v5135 = vpack.c.b16 %v4971, %v4967
    %v5136 = vpack.c.b16 %v4972, %v4968
    %v5137 = vpack.c.b16 %v4973, %v4969
    %v5138 = vpack.c.b16 %v4978, %v4974
    %v5139 = vpack.c.b16 %v4979, %v4975
    %v5140 = vpack.c.b16 %v4980, %v4976
    %v5141 = vpack.c.b16 %v4981, %v4977
    %v5142 = vpack.c.b16 %v4986, %v4982
    %v5143 = vpack.c.b16 %v4987, %v4983
    %v5144 = vpack.c.b16 %v4988, %v4984
    %v5145 = vpack.c.b16 %v4989, %v4985
    %v5146 = vpack.c.b16 %v4994, %v4990
    %v5147 = vpack.c.b16 %v4995, %v4991
    %v5148 = vpack.c.b16 %v4996, %v4992
    %v5149 = vpack.c.b16 %v4997, %v4993
    %v5150 = vpack.c.b16 %v5002, %v4998
    %v5151 = vpack.c.b16 %v5003, %v4999
    %v5152 = vpack.c.b16 %v5004, %v5000
    %v5153 = vpack.c.b16 %v5005, %v5001
    %v5154 = vpack.c.b16 %v5010, %v5006
    %v5155 = vpack.c.b16 %v5011, %v5007
    %v5156 = vpack.c.b16 %v5012, %v5008
    %v5157 = vpack.c.b16 %v5013, %v5009
    %v5158 = vpack.c.b16 %v5018, %v5014
    %v5159 = vpack.c.b16 %v5019, %v5015
    %v5160 = vpack.c.b16 %v5020, %v5016
    %v5161 = vpack.c.b16 %v5021, %v5017
    %v5162 = vpack.c.b16 %v5026, %v5022
    %v5163 = vpack.c.b16 %v5027, %v5023
    %v5164 = vpack.c.b16 %v5028, %v5024
    %v5165 = vpack.c.b16 %v5029, %v5025
    %v5166 = vpack.c.b16 %v5034, %v5030
    %v5167 = vpack.c.b16 %v5035, %v5031
    %v5168 = vpack.c.b16 %v5036, %v5032
    %v5169 = vpack.c.b16 %v5037, %v5033
    %v5170 = vpack.c.b16 %v5042, %v5038
    %v5171 = vpack.c.b16 %v5043, %v5039
    %v5172 = vpack.c.b16 %v5044, %v5040
    %v5173 = vpack.c.b16 %v5045, %v5041
    %v5174 = vpack.c.b16 %v5050, %v5046
    %v5175 = vpack.c.b16 %v5051, %v5047
    %v5176 = vpack.c.b16 %v5052, %v5048
    %v5177 = vpack.c.b16 %v5053, %v5049
    %v5178 = vpack.c.b16 %v5058, %v5054
    %v5179 = vpack.c.b16 %v5059, %v5055
    %v5180 = vpack.c.b16 %v5060, %v5056
    %v5181 = vpack.c.b16 %v5061, %v5057
    %v5182 = vpack.c.b16 %v5066, %v5062
    %v5183 = vpack.c.b16 %v5067, %v5063
    %v5184 = vpack.c.b16 %v5068, %v5064
    %v5185 = vpack.c.b16 %v5069, %v5065
    %v5186 = vpack.c.b16 %v5074, %v5070
    %v5187 = vpack.c.b16 %v5075, %v5071
    %v5188 = vpack.c.b16 %v5076, %v5072
    %v5189 = vpack.c.b16 %v5077, %v5073
    %v5303 = vsel %vm2936, %v4696, 0
    %v5306 = vsel %vm2936, %v4700, 0
    %v5309 = vsel %vm2936, %v4704, 0
    %v5312 = vsel %vm2936, %v4708, 0
    %v5315 = vsel %vm2936, %v4712, 0
    %v5318 = vsel %vm2936, %v4716, 0
    %v5321 = vsel %vm2936, %v4720, 0
    %5323 = vmatprep.subr.bf16.mxu0 %v5079
    %5324 = vmatpush1.bf16.msra.mxu0 %v5078
    %5325 = vmatprep.subr.bf16.mxu0 %v5083
    %5326 = vmatpush1.bf16.msra.mxu0 %v5082
    %5327 = vmatprep.subr.bf16.mxu0 %v5087
    %5328 = vmatpush1.bf16.msra.mxu0 %v5086
    %5329 = vmatprep.subr.bf16.mxu0 %v5091
    %5330 = vmatpush1.bf16.msra.mxu0 %v5090
    %5331 = vmatprep.subr.bf16.mxu0 %v5095
    %5332 = vmatpush1.bf16.msra.mxu0 %v5094
    %5333 = vmatprep.subr.bf16.mxu0 %v5099
    %5334 = vmatpush1.bf16.msra.mxu0 %v5098
    %5335 = vmatprep.subr.bf16.mxu0 %v5103
    %5336 = vmatpush1.bf16.msra.mxu0 %v5102
    %5337 = vmatprep.subr.bf16.mxu0 %v5107
    %5338 = vmatpush1.bf16.msra.mxu0 %v5106
    %5339 = vmatprep.subr.bf16.mxu0 %v5111
    %5340 = vmatpush1.bf16.msra.mxu0 %v5110
    %5341 = vmatprep.subr.bf16.mxu0 %v5115
    %5342 = vmatpush1.bf16.msra.mxu0 %v5114
    %5343 = vmatprep.subr.bf16.mxu0 %v5119
    %5344 = vmatpush1.bf16.msra.mxu0 %v5118
    %5345 = vmatprep.subr.bf16.mxu0 %v5123
    %5346 = vmatpush1.bf16.msra.mxu0 %v5122
    %5347 = vmatprep.subr.bf16.mxu0 %v5127
    %5348 = vmatpush1.bf16.msra.mxu0 %v5126
    %5349 = vmatprep.subr.bf16.mxu0 %v5131
    %5350 = vmatpush1.bf16.msra.mxu0 %v5130
    %5351 = vmatprep.subr.bf16.mxu0 %v5135
    %5352 = vmatpush1.bf16.msra.mxu0 %v5134
    %5353 = vmatprep.subr.bf16.mxu0 %v5139
    %5354 = vmatpush1.bf16.msra.mxu0 %v5138
    %5355 = vmatprep.mubr.bf16.mxu0 %v4694
    %5356 = vmatmul.mubr.bf16.gmra.mrb[0].mxu0 %v4693
    %v5357 = vpop.f32.mrb[0].mxu0
    %v5358 = vadd.f32 0.0, %v5357
    %v5359 = vpop.f32.mrb[0].mxu0
    %v5360 = vadd.f32 0.0, %v5359
    %v5361 = vpop.f32.mrb[0].mxu0
    %v5362 = vadd.f32 0.0, %v5361
    %v5363 = vpop.f32.mrb[0].mxu0
    %v5364 = vadd.f32 0.0, %v5363
    %5365 = vmatprep.mubr.bf16.mxu0 %v4698
    %5366 = vmatmul.mubr.bf16.gmra.mrb[0].mxu0 %v4697
    %v5367 = vpop.f32.mrb[0].mxu0
    %v5368 = vadd.f32 0.0, %v5367
    %v5369 = vpop.f32.mrb[0].mxu0
    %v5370 = vadd.f32 0.0, %v5369
    %v5371 = vpop.f32.mrb[0].mxu0
    %v5372 = vadd.f32 0.0, %v5371
    %v5373 = vpop.f32.mrb[0].mxu0
    %v5374 = vadd.f32 0.0, %v5373
    %5375 = vmatprep.mubr.bf16.mxu0 %v4702
    %5376 = vmatmul.mubr.bf16.gmra.mrb[0].mxu0 %v4701
    %v5377 = vpop.f32.mrb[0].mxu0
    %v5378 = vadd.f32 0.0, %v5377
    %v5379 = vpop.f32.mrb[0].mxu0
    %v5380 = vadd.f32 0.0, %v5379
    %v5381 = vpop.f32.mrb[0].mxu0
    %v5382 = vadd.f32 0.0, %v5381
    %v5383 = vpop.f32.mrb[0].mxu0
    %v5384 = vadd.f32 0.0, %v5383
    %5385 = vmatprep.mubr.bf16.mxu0 %v4706
    %5386 = vmatmul.mubr.bf16.gmra.mrb[0].mxu0 %v4705
    %v5387 = vpop.f32.mrb[0].mxu0
    %v5388 = vadd.f32 0.0, %v5387
    %v5389 = vpop.f32.mrb[0].mxu0
    %v5390 = vadd.f32 0.0, %v5389
    %v5391 = vpop.f32.mrb[0].mxu0
    %v5392 = vadd.f32 0.0, %v5391
    %v5393 = vpop.f32.mrb[0].mxu0
    %v5394 = vadd.f32 0.0, %v5393
    %5395 = vmatprep.mubr.bf16.mxu0 %v4710
    %5396 = vmatmul.mubr.bf16.gmra.mrb[0].mxu0 %v4709
    %v5397 = vpop.f32.mrb[0].mxu0
    %v5398 = vadd.f32 0.0, %v5397
    %v5399 = vpop.f32.mrb[0].mxu0
    %v5400 = vadd.f32 0.0, %v5399
    %v5401 = vpop.f32.mrb[0].mxu0
    %v5402 = vadd.f32 0.0, %v5401
    %v5403 = vpop.f32.mrb[0].mxu0
    %v5404 = vadd.f32 0.0, %v5403
    %5405 = vmatprep.mubr.bf16.mxu0 %v4714
    %5406 = vmatmul.mubr.bf16.gmra.mrb[0].mxu0 %v4713
    %v5407 = vpop.f32.mrb[0].mxu0
    %v5408 = vadd.f32 0.0, %v5407
    %v5409 = vpop.f32.mrb[0].mxu0
    %v5410 = vadd.f32 0.0, %v5409
    %v5411 = vpop.f32.mrb[0].mxu0
    %v5412 = vadd.f32 0.0, %v5411
    %v5413 = vpop.f32.mrb[0].mxu0
    %v5414 = vadd.f32 0.0, %v5413
    %5415 = vmatprep.mubr.bf16.mxu0 %v4718
    %5416 = vmatmul.mubr.bf16.gmra.mrb[0].mxu0 %v4717
    %v5417 = vpop.f32.mrb[0].mxu0
    %v5418 = vadd.f32 0.0, %v5417
    %v5419 = vpop.f32.mrb[0].mxu0
    %v5420 = vadd.f32 0.0, %v5419
    %v5421 = vpop.f32.mrb[0].mxu0
    %v5422 = vadd.f32 0.0, %v5421
    %v5423 = vpop.f32.mrb[0].mxu0
    %v5424 = vadd.f32 0.0, %v5423
    %5425 = vdwg.mxu0
    %5426 = vmatprep.subr.bf16.mxu0 %v5143
    %5427 = vmatpush1.bf16.msra.mxu0 %v5142
    %5428 = vmatprep.subr.bf16.mxu0 %v5147
    %5429 = vmatpush1.bf16.msra.mxu0 %v5146
    %5430 = vmatprep.subr.bf16.mxu0 %v5151
    %5431 = vmatpush1.bf16.msra.mxu0 %v5150
    %5432 = vmatprep.subr.bf16.mxu0 %v5155
    %5433 = vmatpush1.bf16.msra.mxu0 %v5154
    %5434 = vmatprep.subr.bf16.mxu0 %v5159
    %5435 = vmatpush1.bf16.msra.mxu0 %v5158
    %5436 = vmatprep.subr.bf16.mxu0 %v5163
    %5437 = vmatpush1.bf16.msra.mxu0 %v5162
    %5438 = vmatprep.subr.bf16.mxu0 %v5167
    %5439 = vmatpush1.bf16.msra.mxu0 %v5166
    %5440 = vmatprep.subr.bf16.mxu0 %v5171
    %5441 = vmatpush1.bf16.msra.mxu0 %v5170
    %5442 = vmatprep.subr.bf16.mxu0 %v5175
    %5443 = vmatpush1.bf16.msra.mxu0 %v5174
    %5444 = vmatprep.subr.bf16.mxu0 %v5179
    %5445 = vmatpush1.bf16.msra.mxu0 %v5178
    %5446 = vmatprep.subr.bf16.mxu0 %v5183
    %5447 = vmatpush1.bf16.msra.mxu0 %v5182
    %5448 = vmatprep.subr.bf16.mxu0 %v5187
    %5449 = vmatpush1.bf16.msra.mxu0 %v5186
    %5450 = vmatprep.subr.bf16.mxu0 0
    %5451 = vmatpush1.bf16.msra.mxu0 0
    %5452 = vmatprep.subr.bf16.mxu0 0
    %5453 = vmatpush1.bf16.msra.mxu0 0
    %5454 = vmatprep.subr.bf16.mxu0 0
    %5455 = vmatpush1.bf16.msra.mxu0 0
    %5456 = vmatprep.subr.bf16.mxu0 0
    %5457 = vmatpush1.bf16.msra.mxu0 0
    %5458 = vmatprep.mubr.bf16.mxu0 %v5303
    %5459 = vmatmul.mubr.bf16.gmra.mrb[0].mxu0 %v4695
    %v5460 = vpop.f32.mrb[0].mxu0
    %v5461 = vadd.f32 %v5358, %v5460
    %v5462 = vpop.f32.mrb[0].mxu0
    %v5463 = vadd.f32 %v5360, %v5462
    %v5464 = vpop.f32.mrb[0].mxu0
    %v5465 = vadd.f32 %v5362, %v5464
    %v5466 = vpop.f32.mrb[0].mxu0
    %v5467 = vadd.f32 %v5364, %v5466
    %5468 = vmatprep.mubr.bf16.mxu0 %v5306
    %5469 = vmatmul.mubr.bf16.gmra.mrb[0].mxu0 %v4699
    %v5470 = vpop.f32.mrb[0].mxu0
    %v5471 = vadd.f32 %v5368, %v5470
    %v5472 = vpop.f32.mrb[0].mxu0
    %v5473 = vadd.f32 %v5370, %v5472
    %v5474 = vpop.f32.mrb[0].mxu0
    %v5475 = vadd.f32 %v5372, %v5474
    %v5476 = vpop.f32.mrb[0].mxu0
    %v5477 = vadd.f32 %v5374, %v5476
    %5478 = vmatprep.mubr.bf16.mxu0 %v5309
    %5479 = vmatmul.mubr.bf16.gmra.mrb[0].mxu0 %v4703
    %v5480 = vpop.f32.mrb[0].mxu0
    %v5481 = vadd.f32 %v5378, %v5480
    %v5482 = vpop.f32.mrb[0].mxu0
    %v5483 = vadd.f32 %v5380, %v5482
    %v5484 = vpop.f32.mrb[0].mxu0
    %v5485 = vadd.f32 %v5382, %v5484
    %v5486 = vpop.f32.mrb[0].mxu0
    %v5487 = vadd.f32 %v5384, %v5486
    %5488 = vmatprep.mubr.bf16.mxu0 %v5312
    %5489 = vmatmul.mubr.bf16.gmra.mrb[0].mxu0 %v4707
    %v5490 = vpop.f32.mrb[0].mxu0
    %v5491 = vadd.f32 %v5388, %v5490
    %v5492 = vpop.f32.mrb[0].mxu0
    %v5493 = vadd.f32 %v5390, %v5492
    %v5494 = vpop.f32.mrb[0].mxu0
    %v5495 = vadd.f32 %v5392, %v5494
    %v5496 = vpop.f32.mrb[0].mxu0
    %v5497 = vadd.f32 %v5394, %v5496
    %5498 = vmatprep.mubr.bf16.mxu0 %v5315
    %5499 = vmatmul.mubr.bf16.gmra.mrb[0].mxu0 %v4711
    %v5500 = vpop.f32.mrb[0].mxu0
    %v5501 = vadd.f32 %v5398, %v5500
    %v5502 = vpop.f32.mrb[0].mxu0
    %v5503 = vadd.f32 %v5400, %v5502
    %v5504 = vpop.f32.mrb[0].mxu0
    %v5505 = vadd.f32 %v5402, %v5504
    %v5506 = vpop.f32.mrb[0].mxu0
    %v5507 = vadd.f32 %v5404, %v5506
    %5508 = vmatprep.mubr.bf16.mxu0 %v5318
    %5509 = vmatmul.mubr.bf16.gmra.mrb[0].mxu0 %v4715
    %v5510 = vpop.f32.mrb[0].mxu0
    %v5511 = vadd.f32 %v5408, %v5510
    %v5512 = vpop.f32.mrb[0].mxu0
    %v5513 = vadd.f32 %v5410, %v5512
    %v5514 = vpop.f32.mrb[0].mxu0
    %v5515 = vadd.f32 %v5412, %v5514
    %v5516 = vpop.f32.mrb[0].mxu0
    %v5517 = vadd.f32 %v5414, %v5516
    %5518 = vmatprep.mubr.bf16.mxu0 %v5321
    %5519 = vmatmul.mubr.bf16.gmra.mrb[0].mxu0 %v4719
    %v5520 = vpop.f32.mrb[0].mxu0
    %v5521 = vadd.f32 %v5418, %v5520
    %v5522 = vpop.f32.mrb[0].mxu0
    %v5523 = vadd.f32 %v5420, %v5522
    %v5524 = vpop.f32.mrb[0].mxu0
    %v5525 = vadd.f32 %v5422, %v5524
    %v5526 = vpop.f32.mrb[0].mxu0
    %v5527 = vadd.f32 %v5424, %v5526
    %5528 = vdwg.mxu0
    %5529 = vmatprep.subr.bf16.mxu0 %v5081
    %5530 = vmatpush1.bf16.msra.mxu0 %v5080
    %5531 = vmatprep.subr.bf16.mxu0 %v5085
    %5532 = vmatpush1.bf16.msra.mxu0 %v5084
    %5533 = vmatprep.subr.bf16.mxu0 %v5089
    %5534 = vmatpush1.bf16.msra.mxu0 %v5088
    %5535 = vmatprep.subr.bf16.mxu0 %v5093
    %5536 = vmatpush1.bf16.msra.mxu0 %v5092
    %5537 = vmatprep.subr.bf16.mxu0 %v5097
    %5538 = vmatpush1.bf16.msra.mxu0 %v5096
    %5539 = vmatprep.subr.bf16.mxu0 %v5101
    %5540 = vmatpush1.bf16.msra.mxu0 %v5100
    %5541 = vmatprep.subr.bf16.mxu0 %v5105
    %5542 = vmatpush1.bf16.msra.mxu0 %v5104
    %5543 = vmatprep.subr.bf16.mxu0 %v5109
    %5544 = vmatpush1.bf16.msra.mxu0 %v5108
    %5545 = vmatprep.subr.bf16.mxu0 %v5113
    %5546 = vmatpush1.bf16.msra.mxu0 %v5112
    %5547 = vmatprep.subr.bf16.mxu0 %v5117
    %5548 = vmatpush1.bf16.msra.mxu0 %v5116
    %5549 = vmatprep.subr.bf16.mxu0 %v5121
    %5550 = vmatpush1.bf16.msra.mxu0 %v5120
    %5551 = vmatprep.subr.bf16.mxu0 %v5125
    %5552 = vmatpush1.bf16.msra.mxu0 %v5124
    %5553 = vmatprep.subr.bf16.mxu0 %v5129
    %5554 = vmatpush1.bf16.msra.mxu0 %v5128
    %5555 = vmatprep.subr.bf16.mxu0 %v5133
    %5556 = vmatpush1.bf16.msra.mxu0 %v5132
    %5557 = vmatprep.subr.bf16.mxu0 %v5137
    %5558 = vmatpush1.bf16.msra.mxu0 %v5136
    %5559 = vmatprep.subr.bf16.mxu0 %v5141
    %5560 = vmatpush1.bf16.msra.mxu0 %v5140
    %5561 = vmatprep.mubr.bf16.mxu0 %v4694
    %5562 = vmatmul.mubr.bf16.gmra.mrb[0].mxu0 %v4693
    %v5563 = vpop.f32.mrb[0].mxu0
    %v5564 = vadd.f32 0.0, %v5563
    %v5565 = vpop.f32.mrb[0].mxu0
    %v5566 = vadd.f32 0.0, %v5565
    %v5567 = vpop.f32.mrb[0].mxu0
    %v5568 = vadd.f32 0.0, %v5567
    %v5569 = vpop.f32.mrb[0].mxu0
    %v5570 = vadd.f32 0.0, %v5569
    %5571 = vmatprep.mubr.bf16.mxu0 %v4698
    %5572 = vmatmul.mubr.bf16.gmra.mrb[0].mxu0 %v4697
    %v5573 = vpop.f32.mrb[0].mxu0
    %v5574 = vadd.f32 0.0, %v5573
    %v5575 = vpop.f32.mrb[0].mxu0
    %v5576 = vadd.f32 0.0, %v5575
    %v5577 = vpop.f32.mrb[0].mxu0
    %v5578 = vadd.f32 0.0, %v5577
    %v5579 = vpop.f32.mrb[0].mxu0
    %v5580 = vadd.f32 0.0, %v5579
    %5581 = vmatprep.mubr.bf16.mxu0 %v4702
    %5582 = vmatmul.mubr.bf16.gmra.mrb[0].mxu0 %v4701
    %v5583 = vpop.f32.mrb[0].mxu0
    %v5584 = vadd.f32 0.0, %v5583
    %v5585 = vpop.f32.mrb[0].mxu0
    %v5586 = vadd.f32 0.0, %v5585
    %v5587 = vpop.f32.mrb[0].mxu0
    %v5588 = vadd.f32 0.0, %v5587
    %v5589 = vpop.f32.mrb[0].mxu0
    %v5590 = vadd.f32 0.0, %v5589
    %5591 = vmatprep.mubr.bf16.mxu0 %v4706
    %5592 = vmatmul.mubr.bf16.gmra.mrb[0].mxu0 %v4705
    %v5593 = vpop.f32.mrb[0].mxu0
    %v5594 = vadd.f32 0.0, %v5593
    %v5595 = vpop.f32.mrb[0].mxu0
    %v5596 = vadd.f32 0.0, %v5595
    %v5597 = vpop.f32.mrb[0].mxu0
    %v5598 = vadd.f32 0.0, %v5597
    %v5599 = vpop.f32.mrb[0].mxu0
    %v5600 = vadd.f32 0.0, %v5599
    %5601 = vmatprep.mubr.bf16.mxu0 %v4710
    %5602 = vmatmul.mubr.bf16.gmra.mrb[0].mxu0 %v4709
    %v5603 = vpop.f32.mrb[0].mxu0
    %v5604 = vadd.f32 0.0, %v5603
    %v5605 = vpop.f32.mrb[0].mxu0
    %v5606 = vadd.f32 0.0, %v5605
    %v5607 = vpop.f32.mrb[0].mxu0
    %v5608 = vadd.f32 0.0, %v5607
    %v5609 = vpop.f32.mrb[0].mxu0
    %v5610 = vadd.f32 0.0, %v5609
    %5611 = vmatprep.mubr.bf16.mxu0 %v4714
    %5612 = vmatmul.mubr.bf16.gmra.mrb[0].mxu0 %v4713
    %v5613 = vpop.f32.mrb[0].mxu0
    %v5614 = vadd.f32 0.0, %v5613
    %v5615 = vpop.f32.mrb[0].mxu0
    %v5616 = vadd.f32 0.0, %v5615
    %v5617 = vpop.f32.mrb[0].mxu0
    %v5618 = vadd.f32 0.0, %v5617
    %v5619 = vpop.f32.mrb[0].mxu0
    %v5620 = vadd.f32 0.0, %v5619
    %5621 = vmatprep.mubr.bf16.mxu0 %v4718
    %5622 = vmatmul.mubr.bf16.gmra.mrb[0].mxu0 %v4717
    %v5623 = vpop.f32.mrb[0].mxu0
    %v5624 = vadd.f32 0.0, %v5623
    %v5625 = vpop.f32.mrb[0].mxu0
    %v5626 = vadd.f32 0.0, %v5625
    %v5627 = vpop.f32.mrb[0].mxu0
    %v5628 = vadd.f32 0.0, %v5627
    %v5629 = vpop.f32.mrb[0].mxu0
    %v5630 = vadd.f32 0.0, %v5629
    %5631 = vdwg.mxu0
    %5632 = vmatprep.subr.bf16.mxu0 %v5145
    %5633 = vmatpush1.bf16.msra.mxu0 %v5144
    %5634 = vmatprep.subr.bf16.mxu0 %v5149
    %5635 = vmatpush1.bf16.msra.mxu0 %v5148
    %5636 = vmatprep.subr.bf16.mxu0 %v5153
    %5637 = vmatpush1.bf16.msra.mxu0 %v5152
    %5638 = vmatprep.subr.bf16.mxu0 %v5157
    %5639 = vmatpush1.bf16.msra.mxu0 %v5156
    %5640 = vmatprep.subr.bf16.mxu0 %v5161
    %5641 = vmatpush1.bf16.msra.mxu0 %v5160
    %5642 = vmatprep.subr.bf16.mxu0 %v5165
    %5643 = vmatpush1.bf16.msra.mxu0 %v5164
    %5644 = vmatprep.subr.bf16.mxu0 %v5169
    %5645 = vmatpush1.bf16.msra.mxu0 %v5168
    %5646 = vmatprep.subr.bf16.mxu0 %v5173
    %5647 = vmatpush1.bf16.msra.mxu0 %v5172
    %5648 = vmatprep.subr.bf16.mxu0 %v5177
    %5649 = vmatpush1.bf16.msra.mxu0 %v5176
    %5650 = vmatprep.subr.bf16.mxu0 %v5181
    %5651 = vmatpush1.bf16.msra.mxu0 %v5180
    %5652 = vmatprep.subr.bf16.mxu0 %v5185
    %5653 = vmatpush1.bf16.msra.mxu0 %v5184
    %5654 = vmatprep.subr.bf16.mxu0 %v5189
    %5655 = vmatpush1.bf16.msra.mxu0 %v5188
    %5656 = vmatprep.subr.bf16.mxu0 0
    %5657 = vmatpush1.bf16.msra.mxu0 0
    %5658 = vmatprep.subr.bf16.mxu0 0
    %5659 = vmatpush1.bf16.msra.mxu0 0
    %5660 = vmatprep.subr.bf16.mxu0 0
    %5661 = vmatpush1.bf16.msra.mxu0 0
    %5662 = vmatprep.subr.bf16.mxu0 0
    %5663 = vmatpush1.bf16.msra.mxu0 0
    %5664 = vmatprep.mubr.bf16.mxu0 %v5303
    %5665 = vmatmul.mubr.bf16.gmra.mrb[0].mxu0 %v4695
    %v5666 = vpop.f32.mrb[0].mxu0
    %v5667 = vadd.f32 %v5564, %v5666
    %v5668 = vpop.f32.mrb[0].mxu0
    %v5669 = vadd.f32 %v5566, %v5668
    %v5670 = vpop.f32.mrb[0].mxu0
    %v5671 = vadd.f32 %v5568, %v5670
    %v5672 = vpop.f32.mrb[0].mxu0
    %v5673 = vadd.f32 %v5570, %v5672
    %5674 = vmatprep.mubr.bf16.mxu0 %v5306
    %5675 = vmatmul.mubr.bf16.gmra.mrb[0].mxu0 %v4699
    %v5676 = vpop.f32.mrb[0].mxu0
    %v5677 = vadd.f32 %v5574, %v5676
    %v5678 = vpop.f32.mrb[0].mxu0
    %v5679 = vadd.f32 %v5576, %v5678
    %v5680 = vpop.f32.mrb[0].mxu0
    %v5681 = vadd.f32 %v5578, %v5680
    %v5682 = vpop.f32.mrb[0].mxu0
    %v5683 = vadd.f32 %v5580, %v5682
    %5684 = vmatprep.mubr.bf16.mxu0 %v5309
    %5685 = vmatmul.mubr.bf16.gmra.mrb[0].mxu0 %v4703
    %v5686 = vpop.f32.mrb[0].mxu0
    %v5687 = vadd.f32 %v5584, %v5686
    %v5688 = vpop.f32.mrb[0].mxu0
    %v5689 = vadd.f32 %v5586, %v5688
    %v5690 = vpop.f32.mrb[0].mxu0
    %v5691 = vadd.f32 %v5588, %v5690
    %v5692 = vpop.f32.mrb[0].mxu0
    %v5693 = vadd.f32 %v5590, %v5692
    %5694 = vmatprep.mubr.bf16.mxu0 %v5312
    %5695 = vmatmul.mubr.bf16.gmra.mrb[0].mxu0 %v4707
    %v5696 = vpop.f32.mrb[0].mxu0
    %v5697 = vadd.f32 %v5594, %v5696
    %v5698 = vpop.f32.mrb[0].mxu0
    %v5699 = vadd.f32 %v5596, %v5698
    %v5700 = vpop.f32.mrb[0].mxu0
    %v5701 = vadd.f32 %v5598, %v5700
    %v5702 = vpop.f32.mrb[0].mxu0
    %v5703 = vadd.f32 %v5600, %v5702
    %5704 = vmatprep.mubr.bf16.mxu0 %v5315
    %5705 = vmatmul.mubr.bf16.gmra.mrb[0].mxu0 %v4711
    %v5706 = vpop.f32.mrb[0].mxu0
    %v5707 = vadd.f32 %v5604, %v5706
    %v5708 = vpop.f32.mrb[0].mxu0
    %v5709 = vadd.f32 %v5606, %v5708
    %v5710 = vpop.f32.mrb[0].mxu0
    %v5711 = vadd.f32 %v5608, %v5710
    %v5712 = vpop.f32.mrb[0].mxu0
    %v5713 = vadd.f32 %v5610, %v5712
    %5714 = vmatprep.mubr.bf16.mxu0 %v5318
    %5715 = vmatmul.mubr.bf16.gmra.mrb[0].mxu0 %v4715
    %v5716 = vpop.f32.mrb[0].mxu0
    %v5717 = vadd.f32 %v5614, %v5716
    %v5718 = vpop.f32.mrb[0].mxu0
    %v5719 = vadd.f32 %v5616, %v5718
    %v5720 = vpop.f32.mrb[0].mxu0
    %v5721 = vadd.f32 %v5618, %v5720
    %v5722 = vpop.f32.mrb[0].mxu0
    %v5723 = vadd.f32 %v5620, %v5722
    %5724 = vmatprep.mubr.bf16.mxu0 %v5321
    %5725 = vmatmul.mubr.bf16.gmra.mrb[0].mxu0 %v4719
    %v5726 = vpop.f32.mrb[0].mxu0
    %v5727 = vadd.f32 %v5624, %v5726
    %v5728 = vpop.f32.mrb[0].mxu0
    %v5729 = vadd.f32 %v5626, %v5728
    %v5730 = vpop.f32.mrb[0].mxu0
    %v5731 = vadd.f32 %v5628, %v5730
    %v5732 = vpop.f32.mrb[0].mxu0
    %v5733 = vadd.f32 %v5630, %v5732
    %5734 = vdwg.mxu0
    %v5735 = vadd.f32 %v4222, %v5461
    %v5736 = vadd.f32 %v4224, %v5463
    %v5737 = vadd.f32 %v4428, %v5667
    %v5738 = vadd.f32 %v4430, %v5669
    %v5739 = vadd.f32 %v4226, %v5465
    %v5740 = vadd.f32 %v4228, %v5467
    %v5741 = vadd.f32 %v4432, %v5671
    %v5742 = vadd.f32 %v4434, %v5673
    %v5743 = vadd.f32 %v4232, %v5471
    %v5744 = vadd.f32 %v4234, %v5473
    %v5745 = vadd.f32 %v4438, %v5677
    %v5746 = vadd.f32 %v4440, %v5679
    %v5747 = vadd.f32 %v4236, %v5475
    %v5748 = vadd.f32 %v4238, %v5477
    %v5749 = vadd.f32 %v4442, %v5681
    %v5750 = vadd.f32 %v4444, %v5683
    %v5751 = vadd.f32 %v4242, %v5481
    %v5752 = vadd.f32 %v4244, %v5483
    %v5753 = vadd.f32 %v4448, %v5687
    %v5754 = vadd.f32 %v4450, %v5689
    %v5755 = vadd.f32 %v4246, %v5485
    %v5756 = vadd.f32 %v4248, %v5487
    %v5757 = vadd.f32 %v4452, %v5691
    %v5758 = vadd.f32 %v4454, %v5693
    %v5759 = vadd.f32 %v4252, %v5491
    %v5760 = vadd.f32 %v4254, %v5493
    %v5761 = vadd.f32 %v4458, %v5697
    %v5762 = vadd.f32 %v4460, %v5699
    %v5763 = vadd.f32 %v4256, %v5495
    %v5764 = vadd.f32 %v4258, %v5497
    %v5765 = vadd.f32 %v4462, %v5701
    %v5766 = vadd.f32 %v4464, %v5703
    %v5767 = vadd.f32 %v4262, %v5501
    %v5768 = vadd.f32 %v4264, %v5503
    %v5769 = vadd.f32 %v4468, %v5707
    %v5770 = vadd.f32 %v4470, %v5709
    %v5771 = vadd.f32 %v4266, %v5505
    %v5772 = vadd.f32 %v4268, %v5507
    %v5773 = vadd.f32 %v4472, %v5711
    %v5774 = vadd.f32 %v4474, %v5713
    %v5775 = vadd.f32 %v4272, %v5511
    %v5776 = vadd.f32 %v4274, %v5513
    %v5777 = vadd.f32 %v4478, %v5717
    %v5778 = vadd.f32 %v4480, %v5719
    %v5779 = vadd.f32 %v4276, %v5515
    %v5780 = vadd.f32 %v4278, %v5517
    %v5781 = vadd.f32 %v4482, %v5721
    %v5782 = vadd.f32 %v4484, %v5723
    %v5783 = vadd.f32 %v4282, %v5521
    %v5784 = vadd.f32 %v4284, %v5523
    %v5785 = vadd.f32 %v4488, %v5727
    %v5786 = vadd.f32 %v4490, %v5729
    %v5787 = vadd.f32 %v4286, %v5525
    %v5788 = vadd.f32 %v4288, %v5527
    %v5789 = vadd.f32 %v4492, %v5731
    %v5790 = vadd.f32 %v4494, %v5733
    %v5791 = vld [vmem:[#allocation10] sm:$0xff]
    %v5792 = vld [vmem:[#allocation10 + $0x8] sm:$0xff]
    %v5793 = vld [vmem:[#allocation10 + $0x10] sm:$0xff]
    %v5794 = vld [vmem:[#allocation10 + $0x18] sm:$0xff]
    %v5795 = vld [vmem:[#allocation10 + $0x20] sm:$0xff]
    %v5796 = vld [vmem:[#allocation10 + $0x28] sm:$0xff]
    %v5797 = vld [vmem:[#allocation10 + $0x30] sm:$0xff]
    %v5798 = vld [vmem:[#allocation10 + $0x38] sm:$0xff]
    %v5799 = vld [vmem:[#allocation10 + $0x40] sm:$0xff]
    %v5800 = vld [vmem:[#allocation10 + $0x48] sm:$0xff]
    %v5801 = vld [vmem:[#allocation10 + $0x50] sm:$0xff]
    %v5802 = vld [vmem:[#allocation10 + $0x58] sm:$0xff]
    %v5803 = vld [vmem:[#allocation10 + $0x60] sm:$0xff]
    %v5804 = vld [vmem:[#allocation10 + $0x68] sm:$0xff]
    %v5805 = vld [vmem:[#allocation10 + $0x70] sm:$0xff]
    %v5806 = vld [vmem:[#allocation10 + $0x78] sm:$0xff]
    %v5807 = vld [vmem:[#allocation10 + $0x80] sm:$0xff]
    %v5808 = vld [vmem:[#allocation10 + $0x88] sm:$0xff]
    %v5809 = vld [vmem:[#allocation10 + $0x90] sm:$0xff]
    %v5810 = vld [vmem:[#allocation10 + $0x98] sm:$0xff]
    %v5811 = vld [vmem:[#allocation10 + $0xa0] sm:$0xff]
    %v5812 = vld [vmem:[#allocation10 + $0xa8] sm:$0xff]
    %v5813 = vld [vmem:[#allocation10 + $0xb0] sm:$0xff]
    %v5814 = vld [vmem:[#allocation10 + $0xb8] sm:$0xff]
    %v5815 = vld [vmem:[#allocation10 + $0xc0] sm:$0xff]
    %v5816 = vld [vmem:[#allocation10 + $0xc8] sm:$0xff]
    %v5817 = vld [vmem:[#allocation10 + $0xd0] sm:$0xff]
    %v5818 = vld [vmem:[#allocation10 + $0xd8] sm:$0xff]
    %v5819 = vld [vmem:[#allocation10 + $0xe0] sm:$0xff]
    %v5820 = vld [vmem:[#allocation10 + $0xe8] sm:$0xff]
    %v5821 = vld [vmem:[#allocation10 + $0xf0] sm:$0xff]
    %v5822 = vld [vmem:[#allocation10 + $0xf8] sm:$0xff]
    %v5823 = vld [vmem:[#allocation10 + $0x100] sm:$0xff]
    %v5824 = vld [vmem:[#allocation10 + $0x108] sm:$0xff]
    %v5825 = vld [vmem:[#allocation10 + $0x110] sm:$0xff]
    %v5826 = vld [vmem:[#allocation10 + $0x118] sm:$0xff]
    %v5827 = vld [vmem:[#allocation10 + $0x120] sm:$0xff]
    %v5828 = vld [vmem:[#allocation10 + $0x128] sm:$0xff]
    %v5829 = vld [vmem:[#allocation10 + $0x130] sm:$0xff]
    %v5830 = vld [vmem:[#allocation10 + $0x138] sm:$0xff]
    %v5831 = vld [vmem:[#allocation10 + $0x140] sm:$0xff]
    %v5832 = vld [vmem:[#allocation10 + $0x148] sm:$0xff]
    %v5833 = vld [vmem:[#allocation10 + $0x150] sm:$0xff]
    %v5834 = vld [vmem:[#allocation10 + $0x158] sm:$0xff]
    %v5835 = vld [vmem:[#allocation10 + $0x160] sm:$0xff]
    %v5836 = vld [vmem:[#allocation10 + $0x168] sm:$0xff]
    %v5837 = vld [vmem:[#allocation10 + $0x170] sm:$0xff]
    %v5838 = vld [vmem:[#allocation10 + $0x178] sm:$0xff]
    %v5839 = vld [vmem:[#allocation10 + $0x180] sm:$0xff]
    %v5840 = vld [vmem:[#allocation10 + $0x188] sm:$0xff]
    %v5841 = vld [vmem:[#allocation10 + $0x190] sm:$0xff]
    %v5842 = vld [vmem:[#allocation10 + $0x198] sm:$0xff]
    %v5843 = vld [vmem:[#allocation10 + $0x1a0] sm:$0xff]
    %v5844 = vld [vmem:[#allocation10 + $0x1a8] sm:$0xff]
    %v5845 = vld [vmem:[#allocation10 + $0x1b0] sm:$0xff]
    %v5846 = vld [vmem:[#allocation10 + $0x1b8] sm:$0xff]
    %v5847 = vld [vmem:[#allocation10 + $0x1c0] sm:$0xff]
    %v5848 = vld [vmem:[#allocation10 + $0x1c8] sm:$0xff]
    %v5849 = vld [vmem:[#allocation10 + $0x1d0] sm:$0xff]
    %v5850 = vld [vmem:[#allocation10 + $0x1d8] sm:$0xff]
    %v5851 = vld [vmem:[#allocation10 + $0x1e0] sm:$0xff]
    %v5852 = vld [vmem:[#allocation10 + $0x1e8] sm:$0xff]
    %v5853 = vld [vmem:[#allocation10 + $0x1f0] sm:$0xff]
    %v5854 = vld [vmem:[#allocation10 + $0x1f8] sm:$0xff]
    %v5855 = vld [vmem:[#allocation10 + $0x200] sm:$0xff]
    %v5856 = vld [vmem:[#allocation10 + $0x208] sm:$0xff]
    %v5857 = vld [vmem:[#allocation10 + $0x210] sm:$0xff]
    %v5858 = vld [vmem:[#allocation10 + $0x218] sm:$0xff]
    %v5859 = vld [vmem:[#allocation10 + $0x220] sm:$0xff]
    %v5860 = vld [vmem:[#allocation10 + $0x228] sm:$0xff]
    %v5861 = vld [vmem:[#allocation10 + $0x230] sm:$0xff]
    %v5862 = vld [vmem:[#allocation10 + $0x238] sm:$0xff]
    %v5863 = vld [vmem:[#allocation10 + $0x240] sm:$0xff]
    %v5864 = vld [vmem:[#allocation10 + $0x248] sm:$0xff]
    %v5865 = vld [vmem:[#allocation10 + $0x250] sm:$0xff]
    %v5866 = vld [vmem:[#allocation10 + $0x258] sm:$0xff]
    %v5867 = vld [vmem:[#allocation10 + $0x260] sm:$0xff]
    %v5868 = vld [vmem:[#allocation10 + $0x268] sm:$0xff]
    %v5869 = vld [vmem:[#allocation10 + $0x270] sm:$0xff]
    %v5870 = vld [vmem:[#allocation10 + $0x278] sm:$0xff]
    %v5871 = vld [vmem:[#allocation10 + $0x280] sm:$0xff]
    %v5872 = vld [vmem:[#allocation10 + $0x288] sm:$0xff]
    %v5873 = vld [vmem:[#allocation10 + $0x290] sm:$0xff]
    %v5874 = vld [vmem:[#allocation10 + $0x298] sm:$0xff]
    %v5875 = vld [vmem:[#allocation10 + $0x2a0] sm:$0xff]
    %v5876 = vld [vmem:[#allocation10 + $0x2a8] sm:$0xff]
    %v5877 = vld [vmem:[#allocation10 + $0x2b0] sm:$0xff]
    %v5878 = vld [vmem:[#allocation10 + $0x2b8] sm:$0xff]
    %v5879 = vld [vmem:[#allocation10 + $0x2c0] sm:$0xff]
    %v5880 = vld [vmem:[#allocation10 + $0x2c8] sm:$0xff]
    %v5881 = vld [vmem:[#allocation10 + $0x2d0] sm:$0xff]
    %v5882 = vld [vmem:[#allocation10 + $0x2d8] sm:$0xff]
    %v5883 = vld [vmem:[#allocation10 + $0x2e0] sm:$0xff]
    %v5884 = vld [vmem:[#allocation10 + $0x2e8] sm:$0xff]
    %v5885 = vld [vmem:[#allocation10 + $0x2f0] sm:$0xff]
    %v5886 = vld [vmem:[#allocation10 + $0x2f8] sm:$0xff]
    %v5887 = vld [vmem:[#allocation10 + $0x300] sm:$0xff]
    %v5888 = vld [vmem:[#allocation10 + $0x308] sm:$0xff]
    %v5889 = vld [vmem:[#allocation10 + $0x310] sm:$0xff]
    %v5890 = vld [vmem:[#allocation10 + $0x318] sm:$0xff]
    %v5891 = vld [vmem:[#allocation10 + $0x320] sm:$0xff]
    %v5892 = vld [vmem:[#allocation10 + $0x328] sm:$0xff]
    %v5893 = vld [vmem:[#allocation10 + $0x330] sm:$0xff]
    %v5894 = vld [vmem:[#allocation10 + $0x338] sm:$0xff]
    %v5895 = vld [vmem:[#allocation10 + $0x340] sm:$0xff]
    %v5896 = vld [vmem:[#allocation10 + $0x348] sm:$0xff]
    %v5897 = vld [vmem:[#allocation10 + $0x350] sm:$0xff]
    %v5898 = vld [vmem:[#allocation10 + $0x358] sm:$0xff]
    %v5899 = vld [vmem:[#allocation10 + $0x360] sm:$0xff]
    %v5900 = vld [vmem:[#allocation10 + $0x368] sm:$0xff]
    %v5901 = vld [vmem:[#allocation10 + $0x370] sm:$0xff]
    %v5902 = vld [vmem:[#allocation10 + $0x378] sm:$0xff]
    %s5903 = scalar_lea.vmem [#allocation10], 896
    %v5904 = vld [vmem:[%s5903] sm:$0xff]
    %v5905 = vld [vmem:[%s5903 + $0x8] sm:$0xff]
    %v5906 = vld [vmem:[%s5903 + $0x10] sm:$0xff]
    %v5907 = vld [vmem:[%s5903 + $0x18] sm:$0xff]
    %v5908 = vld [vmem:[%s5903 + $0x20] sm:$0xff]
    %v5909 = vld [vmem:[%s5903 + $0x28] sm:$0xff]
    %v5910 = vld [vmem:[%s5903 + $0x30] sm:$0xff]
    %v5911 = vld [vmem:[%s5903 + $0x38] sm:$0xff]
    %v5912 = vld [vmem:[%s5903 + $0x40] sm:$0xff]
    %v5913 = vld [vmem:[%s5903 + $0x48] sm:$0xff]
    %v5914 = vld [vmem:[%s5903 + $0x50] sm:$0xff]
    %v5915 = vld [vmem:[%s5903 + $0x58] sm:$0xff]
    %v5916 = vld [vmem:[%s5903 + $0x60] sm:$0xff]
    %v5917 = vld [vmem:[%s5903 + $0x68] sm:$0xff]
    %v5918 = vld [vmem:[%s5903 + $0x70] sm:$0xff]
    %v5919 = vld [vmem:[%s5903 + $0x78] sm:$0xff]
    %v5920 = vld [vmem:[%s5903 + $0x80] sm:$0xff]
    %v5921 = vld [vmem:[%s5903 + $0x88] sm:$0xff]
    %v5922 = vld [vmem:[%s5903 + $0x90] sm:$0xff]
    %v5923 = vld [vmem:[%s5903 + $0x98] sm:$0xff]
    %v5924 = vld [vmem:[%s5903 + $0xa0] sm:$0xff]
    %v5925 = vld [vmem:[%s5903 + $0xa8] sm:$0xff]
    %v5926 = vld [vmem:[%s5903 + $0xb0] sm:$0xff]
    %v5927 = vld [vmem:[%s5903 + $0xb8] sm:$0xff]
    %v5928 = vld [vmem:[%s5903 + $0xc0] sm:$0xff]
    %v5929 = vld [vmem:[%s5903 + $0xc8] sm:$0xff]
    %v5930 = vld [vmem:[%s5903 + $0xd0] sm:$0xff]
    %v5931 = vld [vmem:[%s5903 + $0xd8] sm:$0xff]
    %v5932 = vld [vmem:[%s5903 + $0xe0] sm:$0xff]
    %v5933 = vld [vmem:[%s5903 + $0xe8] sm:$0xff]
    %v5934 = vld [vmem:[%s5903 + $0xf0] sm:$0xff]
    %v5935 = vld [vmem:[%s5903 + $0xf8] sm:$0xff]
    %v5936 = vld [vmem:[%s5903 + $0x100] sm:$0xff]
    %v5937 = vld [vmem:[%s5903 + $0x108] sm:$0xff]
    %v5938 = vld [vmem:[%s5903 + $0x110] sm:$0xff]
    %v5939 = vld [vmem:[%s5903 + $0x118] sm:$0xff]
    %v5940 = vld [vmem:[%s5903 + $0x120] sm:$0xff]
    %v5941 = vld [vmem:[%s5903 + $0x128] sm:$0xff]
    %v5942 = vld [vmem:[%s5903 + $0x130] sm:$0xff]
    %v5943 = vld [vmem:[%s5903 + $0x138] sm:$0xff]
    %v5944 = vld [vmem:[%s5903 + $0x140] sm:$0xff]
    %v5945 = vld [vmem:[%s5903 + $0x148] sm:$0xff]
    %v5946 = vld [vmem:[%s5903 + $0x150] sm:$0xff]
    %v5947 = vld [vmem:[%s5903 + $0x158] sm:$0xff]
    %v5948 = vld [vmem:[%s5903 + $0x160] sm:$0xff]
    %v5949 = vld [vmem:[%s5903 + $0x168] sm:$0xff]
    %v5950 = vld [vmem:[%s5903 + $0x170] sm:$0xff]
    %v5951 = vld [vmem:[%s5903 + $0x178] sm:$0xff]
    %v5952 = vld [vmem:[%s5903 + $0x180] sm:$0xff]
    %v5953 = vld [vmem:[%s5903 + $0x188] sm:$0xff]
    %v5954 = vld [vmem:[%s5903 + $0x190] sm:$0xff]
    %v5955 = vld [vmem:[%s5903 + $0x198] sm:$0xff]
    %v5956 = vld [vmem:[%s5903 + $0x1a0] sm:$0xff]
    %v5957 = vld [vmem:[%s5903 + $0x1a8] sm:$0xff]
    %v5958 = vld [vmem:[%s5903 + $0x1b0] sm:$0xff]
    %v5959 = vld [vmem:[%s5903 + $0x1b8] sm:$0xff]
    %v5960 = vld [vmem:[%s5903 + $0x1c0] sm:$0xff]
    %v5961 = vld [vmem:[%s5903 + $0x1c8] sm:$0xff]
    %v5962 = vld [vmem:[%s5903 + $0x1d0] sm:$0xff]
    %v5963 = vld [vmem:[%s5903 + $0x1d8] sm:$0xff]
    %v5964 = vld [vmem:[%s5903 + $0x1e0] sm:$0xff]
    %v5965 = vld [vmem:[%s5903 + $0x1e8] sm:$0xff]
    %v5966 = vld [vmem:[%s5903 + $0x1f0] sm:$0xff]
    %v5967 = vld [vmem:[%s5903 + $0x1f8] sm:$0xff]
    %v5968 = vld [vmem:[%s5903 + $0x200] sm:$0xff]
    %v5969 = vld [vmem:[%s5903 + $0x208] sm:$0xff]
    %v5970 = vld [vmem:[%s5903 + $0x210] sm:$0xff]
    %v5971 = vld [vmem:[%s5903 + $0x218] sm:$0xff]
    %v5972 = vld [vmem:[%s5903 + $0x220] sm:$0xff]
    %v5973 = vld [vmem:[%s5903 + $0x228] sm:$0xff]
    %v5974 = vld [vmem:[%s5903 + $0x230] sm:$0xff]
    %v5975 = vld [vmem:[%s5903 + $0x238] sm:$0xff]
    %v5976 = vld [vmem:[%s5903 + $0x240] sm:$0xff]
    %v5977 = vld [vmem:[%s5903 + $0x248] sm:$0xff]
    %v5978 = vld [vmem:[%s5903 + $0x250] sm:$0xff]
    %v5979 = vld [vmem:[%s5903 + $0x258] sm:$0xff]
    %v5980 = vld [vmem:[%s5903 + $0x260] sm:$0xff]
    %v5981 = vld [vmem:[%s5903 + $0x268] sm:$0xff]
    %v5982 = vld [vmem:[%s5903 + $0x270] sm:$0xff]
    %v5983 = vld [vmem:[%s5903 + $0x278] sm:$0xff]
    %v5984 = vld [vmem:[%s5903 + $0x280] sm:$0xff]
    %v5985 = vld [vmem:[%s5903 + $0x288] sm:$0xff]
    %v5986 = vld [vmem:[%s5903 + $0x290] sm:$0xff]
    %v5987 = vld [vmem:[%s5903 + $0x298] sm:$0xff]
    %v5988 = vld [vmem:[%s5903 + $0x2a0] sm:$0xff]
    %v5989 = vld [vmem:[%s5903 + $0x2a8] sm:$0xff]
    %v5990 = vld [vmem:[%s5903 + $0x2b0] sm:$0xff]
    %v5991 = vld [vmem:[%s5903 + $0x2b8] sm:$0xff]
    %v5992 = vld [vmem:[%s5903 + $0x2c0] sm:$0xff]
    %v5993 = vld [vmem:[%s5903 + $0x2c8] sm:$0xff]
    %v5994 = vld [vmem:[%s5903 + $0x2d0] sm:$0xff]
    %v5995 = vld [vmem:[%s5903 + $0x2d8] sm:$0xff]
    %v5996 = vld [vmem:[%s5903 + $0x2e0] sm:$0xff]
    %v5997 = vld [vmem:[%s5903 + $0x2e8] sm:$0xff]
    %v5998 = vld [vmem:[%s5903 + $0x2f0] sm:$0xff]
    %v5999 = vld [vmem:[%s5903 + $0x2f8] sm:$0xff]
    %v6000 = vld [vmem:[%s5903 + $0x300] sm:$0xff]
    %v6001 = vld [vmem:[%s5903 + $0x308] sm:$0xff]
    %v6002 = vld [vmem:[%s5903 + $0x310] sm:$0xff]
    %v6003 = vld [vmem:[%s5903 + $0x318] sm:$0xff]
    %v6004 = vld [vmem:[%s5903 + $0x320] sm:$0xff]
    %v6005 = vld [vmem:[%s5903 + $0x328] sm:$0xff]
    %v6006 = vld [vmem:[%s5903 + $0x330] sm:$0xff]
    %v6007 = vld [vmem:[%s5903 + $0x338] sm:$0xff]
    %v6008 = vld [vmem:[%s5903 + $0x340] sm:$0xff]
    %v6009 = vld [vmem:[%s5903 + $0x348] sm:$0xff]
    %v6010 = vld [vmem:[%s5903 + $0x350] sm:$0xff]
    %v6011 = vld [vmem:[%s5903 + $0x358] sm:$0xff]
    %v6012 = vld [vmem:[%s5903 + $0x360] sm:$0xff]
    %v6013 = vld [vmem:[%s5903 + $0x368] sm:$0xff]
    %v6014 = vld [vmem:[%s5903 + $0x370] sm:$0xff]
    %v6015 = vld [vmem:[%s5903 + $0x378] sm:$0xff]
    %v6128 = vunpack.c.l.b16 %v5904
    %v6129 = vunpack.c.h.b16 %v5904
    %v6130 = vunpack.c.l.b16 %v5905
    %v6131 = vunpack.c.h.b16 %v5905
    %v6132 = vunpack.c.l.b16 %v5906
    %v6133 = vunpack.c.h.b16 %v5906
    %v6134 = vunpack.c.l.b16 %v5907
    %v6135 = vunpack.c.h.b16 %v5907
    %v6136 = vunpack.c.l.b16 %v5908
    %v6137 = vunpack.c.h.b16 %v5908
    %v6138 = vunpack.c.l.b16 %v5909
    %v6139 = vunpack.c.h.b16 %v5909
    %v6140 = vunpack.c.l.b16 %v5910
    %v6141 = vunpack.c.h.b16 %v5910
    %v6142 = vunpack.c.l.b16 %v5911
    %v6143 = vunpack.c.h.b16 %v5911
    %v6144 = vunpack.c.l.b16 %v5912
    %v6145 = vunpack.c.h.b16 %v5912
    %v6146 = vunpack.c.l.b16 %v5913
    %v6147 = vunpack.c.h.b16 %v5913
    %v6148 = vunpack.c.l.b16 %v5914
    %v6149 = vunpack.c.h.b16 %v5914
    %v6150 = vunpack.c.l.b16 %v5915
    %v6151 = vunpack.c.h.b16 %v5915
    %v6152 = vunpack.c.l.b16 %v5916
    %v6153 = vunpack.c.h.b16 %v5916
    %v6154 = vunpack.c.l.b16 %v5917
    %v6155 = vunpack.c.h.b16 %v5917
    %v6156 = vunpack.c.l.b16 %v5918
    %v6157 = vunpack.c.h.b16 %v5918
    %v6158 = vunpack.c.l.b16 %v5919
    %v6159 = vunpack.c.h.b16 %v5919
    %v6160 = vunpack.c.l.b16 %v5920
    %v6161 = vunpack.c.h.b16 %v5920
    %v6162 = vunpack.c.l.b16 %v5921
    %v6163 = vunpack.c.h.b16 %v5921
    %v6164 = vunpack.c.l.b16 %v5922
    %v6165 = vunpack.c.h.b16 %v5922
    %v6166 = vunpack.c.l.b16 %v5923
    %v6167 = vunpack.c.h.b16 %v5923
    %v6168 = vunpack.c.l.b16 %v5924
    %v6169 = vunpack.c.h.b16 %v5924
    %v6170 = vunpack.c.l.b16 %v5925
    %v6171 = vunpack.c.h.b16 %v5925
    %v6172 = vunpack.c.l.b16 %v5926
    %v6173 = vunpack.c.h.b16 %v5926
    %v6174 = vunpack.c.l.b16 %v5927
    %v6175 = vunpack.c.h.b16 %v5927
    %v6176 = vunpack.c.l.b16 %v5928
    %v6177 = vunpack.c.h.b16 %v5928
    %v6178 = vunpack.c.l.b16 %v5929
    %v6179 = vunpack.c.h.b16 %v5929
    %v6180 = vunpack.c.l.b16 %v5930
    %v6181 = vunpack.c.h.b16 %v5930
    %v6182 = vunpack.c.l.b16 %v5931
    %v6183 = vunpack.c.h.b16 %v5931
    %v6184 = vunpack.c.l.b16 %v5932
    %v6185 = vunpack.c.h.b16 %v5932
    %v6186 = vunpack.c.l.b16 %v5933
    %v6187 = vunpack.c.h.b16 %v5933
    %v6188 = vunpack.c.l.b16 %v5934
    %v6189 = vunpack.c.h.b16 %v5934
    %v6190 = vunpack.c.l.b16 %v5935
    %v6191 = vunpack.c.h.b16 %v5935
    %v6192 = vunpack.c.l.b16 %v5936
    %v6193 = vunpack.c.h.b16 %v5936
    %v6194 = vunpack.c.l.b16 %v5937
    %v6195 = vunpack.c.h.b16 %v5937
    %v6196 = vunpack.c.l.b16 %v5938
    %v6197 = vunpack.c.h.b16 %v5938
    %v6198 = vunpack.c.l.b16 %v5939
    %v6199 = vunpack.c.h.b16 %v5939
    %v6200 = vunpack.c.l.b16 %v5940
    %v6201 = vunpack.c.h.b16 %v5940
    %v6202 = vunpack.c.l.b16 %v5941
    %v6203 = vunpack.c.h.b16 %v5941
    %v6204 = vunpack.c.l.b16 %v5942
    %v6205 = vunpack.c.h.b16 %v5942
    %v6206 = vunpack.c.l.b16 %v5943
    %v6207 = vunpack.c.h.b16 %v5943
    %v6208 = vunpack.c.l.b16 %v5944
    %v6209 = vunpack.c.h.b16 %v5944
    %v6210 = vunpack.c.l.b16 %v5945
    %v6211 = vunpack.c.h.b16 %v5945
    %v6212 = vunpack.c.l.b16 %v5946
    %v6213 = vunpack.c.h.b16 %v5946
    %v6214 = vunpack.c.l.b16 %v5947
    %v6215 = vunpack.c.h.b16 %v5947
    %v6216 = vunpack.c.l.b16 %v5948
    %v6217 = vunpack.c.h.b16 %v5948
    %v6218 = vunpack.c.l.b16 %v5949
    %v6219 = vunpack.c.h.b16 %v5949
    %v6220 = vunpack.c.l.b16 %v5950
    %v6221 = vunpack.c.h.b16 %v5950
    %v6222 = vunpack.c.l.b16 %v5951
    %v6223 = vunpack.c.h.b16 %v5951
    %v6224 = vunpack.c.l.b16 %v5952
    %v6225 = vunpack.c.h.b16 %v5952
    %v6226 = vunpack.c.l.b16 %v5953
    %v6227 = vunpack.c.h.b16 %v5953
    %v6228 = vunpack.c.l.b16 %v5954
    %v6229 = vunpack.c.h.b16 %v5954
    %v6230 = vunpack.c.l.b16 %v5955
    %v6231 = vunpack.c.h.b16 %v5955
    %v6232 = vunpack.c.l.b16 %v5956
    %v6233 = vunpack.c.h.b16 %v5956
    %v6234 = vunpack.c.l.b16 %v5957
    %v6235 = vunpack.c.h.b16 %v5957
    %v6236 = vunpack.c.l.b16 %v5958
    %v6237 = vunpack.c.h.b16 %v5958
    %v6238 = vunpack.c.l.b16 %v5959
    %v6239 = vunpack.c.h.b16 %v5959
    %v6240 = vunpack.c.l.b16 %v5960
    %v6241 = vunpack.c.h.b16 %v5960
    %v6242 = vunpack.c.l.b16 %v5961
    %v6243 = vunpack.c.h.b16 %v5961
    %v6244 = vunpack.c.l.b16 %v5962
    %v6245 = vunpack.c.h.b16 %v5962
    %v6246 = vunpack.c.l.b16 %v5963
    %v6247 = vunpack.c.h.b16 %v5963
    %v6248 = vunpack.c.l.b16 %v5964
    %v6249 = vunpack.c.h.b16 %v5964
    %v6250 = vunpack.c.l.b16 %v5965
    %v6251 = vunpack.c.h.b16 %v5965
    %v6252 = vunpack.c.l.b16 %v5966
    %v6253 = vunpack.c.h.b16 %v5966
    %v6254 = vunpack.c.l.b16 %v5967
    %v6255 = vunpack.c.h.b16 %v5967
    %v6256 = vunpack.c.l.b16 %v5968
    %v6257 = vunpack.c.h.b16 %v5968
    %v6258 = vunpack.c.l.b16 %v5969
    %v6259 = vunpack.c.h.b16 %v5969
    %v6260 = vunpack.c.l.b16 %v5970
    %v6261 = vunpack.c.h.b16 %v5970
    %v6262 = vunpack.c.l.b16 %v5971
    %v6263 = vunpack.c.h.b16 %v5971
    %v6264 = vunpack.c.l.b16 %v5972
    %v6265 = vunpack.c.h.b16 %v5972
    %v6266 = vunpack.c.l.b16 %v5973
    %v6267 = vunpack.c.h.b16 %v5973
    %v6268 = vunpack.c.l.b16 %v5974
    %v6269 = vunpack.c.h.b16 %v5974
    %v6270 = vunpack.c.l.b16 %v5975
    %v6271 = vunpack.c.h.b16 %v5975
    %v6272 = vunpack.c.l.b16 %v5976
    %v6273 = vunpack.c.h.b16 %v5976
    %v6274 = vunpack.c.l.b16 %v5977
    %v6275 = vunpack.c.h.b16 %v5977
    %v6276 = vunpack.c.l.b16 %v5978
    %v6277 = vunpack.c.h.b16 %v5978
    %v6278 = vunpack.c.l.b16 %v5979
    %v6279 = vunpack.c.h.b16 %v5979
    %v6280 = vunpack.c.l.b16 %v5980
    %v6281 = vunpack.c.h.b16 %v5980
    %v6282 = vunpack.c.l.b16 %v5981
    %v6283 = vunpack.c.h.b16 %v5981
    %v6284 = vunpack.c.l.b16 %v5982
    %v6285 = vunpack.c.h.b16 %v5982
    %v6286 = vunpack.c.l.b16 %v5983
    %v6287 = vunpack.c.h.b16 %v5983
    %v6288 = vunpack.c.l.b16 %v5984
    %v6289 = vunpack.c.h.b16 %v5984
    %v6290 = vunpack.c.l.b16 %v5985
    %v6291 = vunpack.c.h.b16 %v5985
    %v6292 = vunpack.c.l.b16 %v5986
    %v6293 = vunpack.c.h.b16 %v5986
    %v6294 = vunpack.c.l.b16 %v5987
    %v6295 = vunpack.c.h.b16 %v5987
    %v6296 = vunpack.c.l.b16 %v5988
    %v6297 = vunpack.c.h.b16 %v5988
    %v6298 = vunpack.c.l.b16 %v5989
    %v6299 = vunpack.c.h.b16 %v5989
    %v6300 = vunpack.c.l.b16 %v5990
    %v6301 = vunpack.c.h.b16 %v5990
    %v6302 = vunpack.c.l.b16 %v5991
    %v6303 = vunpack.c.h.b16 %v5991
    %v6304 = vunpack.c.l.b16 %v5992
    %v6305 = vunpack.c.h.b16 %v5992
    %v6306 = vunpack.c.l.b16 %v5993
    %v6307 = vunpack.c.h.b16 %v5993
    %v6308 = vunpack.c.l.b16 %v5994
    %v6309 = vunpack.c.h.b16 %v5994
    %v6310 = vunpack.c.l.b16 %v5995
    %v6311 = vunpack.c.h.b16 %v5995
    %v6312 = vunpack.c.l.b16 %v5996
    %v6313 = vunpack.c.h.b16 %v5996
    %v6314 = vunpack.c.l.b16 %v5997
    %v6315 = vunpack.c.h.b16 %v5997
    %v6316 = vunpack.c.l.b16 %v5998
    %v6317 = vunpack.c.h.b16 %v5998
    %v6318 = vunpack.c.l.b16 %v5999
    %v6319 = vunpack.c.h.b16 %v5999
    %v6320 = vunpack.c.l.b16 %v6000
    %v6321 = vunpack.c.h.b16 %v6000
    %v6322 = vunpack.c.l.b16 %v6001
    %v6323 = vunpack.c.h.b16 %v6001
    %v6324 = vunpack.c.l.b16 %v6002
    %v6325 = vunpack.c.h.b16 %v6002
    %v6326 = vunpack.c.l.b16 %v6003
    %v6327 = vunpack.c.h.b16 %v6003
    %v6328 = vunpack.c.l.b16 %v6004
    %v6329 = vunpack.c.h.b16 %v6004
    %v6330 = vunpack.c.l.b16 %v6005
    %v6331 = vunpack.c.h.b16 %v6005
    %v6332 = vunpack.c.l.b16 %v6006
    %v6333 = vunpack.c.h.b16 %v6006
    %v6334 = vunpack.c.l.b16 %v6007
    %v6335 = vunpack.c.h.b16 %v6007
    %v6336 = vunpack.c.l.b16 %v6008
    %v6337 = vunpack.c.h.b16 %v6008
    %v6338 = vunpack.c.l.b16 %v6009
    %v6339 = vunpack.c.h.b16 %v6009
    %v6340 = vunpack.c.l.b16 %v6010
    %v6341 = vunpack.c.h.b16 %v6010
    %v6342 = vunpack.c.l.b16 %v6011
    %v6343 = vunpack.c.h.b16 %v6011
    %v6344 = vunpack.c.l.b16 %v6012
    %v6345 = vunpack.c.h.b16 %v6012
    %v6346 = vunpack.c.l.b16 %v6013
    %v6347 = vunpack.c.h.b16 %v6013
    %v6348 = vunpack.c.l.b16 %v6014
    %v6349 = vunpack.c.h.b16 %v6014
    %v6350 = vunpack.c.l.b16 %v6015
    %v6351 = vunpack.c.h.b16 %v6015
    %v6352 = vpack.c.b16 %v6132, %v6128
    %v6353 = vpack.c.b16 %v6133, %v6129
    %v6354 = vpack.c.b16 %v6134, %v6130
    %v6355 = vpack.c.b16 %v6135, %v6131
    %v6356 = vpack.c.b16 %v6140, %v6136
    %v6357 = vpack.c.b16 %v6141, %v6137
    %v6358 = vpack.c.b16 %v6142, %v6138
    %v6359 = vpack.c.b16 %v6143, %v6139
    %v6360 = vpack.c.b16 %v6148, %v6144
    %v6361 = vpack.c.b16 %v6149, %v6145
    %v6362 = vpack.c.b16 %v6150, %v6146
    %v6363 = vpack.c.b16 %v6151, %v6147
    %v6364 = vpack.c.b16 %v6156, %v6152
    %v6365 = vpack.c.b16 %v6157, %v6153
    %v6366 = vpack.c.b16 %v6158, %v6154
    %v6367 = vpack.c.b16 %v6159, %v6155
    %v6368 = vpack.c.b16 %v6164, %v6160
    %v6369 = vpack.c.b16 %v6165, %v6161
    %v6370 = vpack.c.b16 %v6166, %v6162
    %v6371 = vpack.c.b16 %v6167, %v6163
    %v6372 = vpack.c.b16 %v6172, %v6168
    %v6373 = vpack.c.b16 %v6173, %v6169
    %v6374 = vpack.c.b16 %v6174, %v6170
    %v6375 = vpack.c.b16 %v6175, %v6171
    %v6376 = vpack.c.b16 %v6180, %v6176
    %v6377 = vpack.c.b16 %v6181, %v6177
    %v6378 = vpack.c.b16 %v6182, %v6178
    %v6379 = vpack.c.b16 %v6183, %v6179
    %v6380 = vpack.c.b16 %v6188, %v6184
    %v6381 = vpack.c.b16 %v6189, %v6185
    %v6382 = vpack.c.b16 %v6190, %v6186
    %v6383 = vpack.c.b16 %v6191, %v6187
    %v6384 = vpack.c.b16 %v6196, %v6192
    %v6385 = vpack.c.b16 %v6197, %v6193
    %v6386 = vpack.c.b16 %v6198, %v6194
    %v6387 = vpack.c.b16 %v6199, %v6195
    %v6388 = vpack.c.b16 %v6204, %v6200
    %v6389 = vpack.c.b16 %v6205, %v6201
    %v6390 = vpack.c.b16 %v6206, %v6202
    %v6391 = vpack.c.b16 %v6207, %v6203
    %v6392 = vpack.c.b16 %v6212, %v6208
    %v6393 = vpack.c.b16 %v6213, %v6209
    %v6394 = vpack.c.b16 %v6214, %v6210
    %v6395 = vpack.c.b16 %v6215, %v6211
    %v6396 = vpack.c.b16 %v6220, %v6216
    %v6397 = vpack.c.b16 %v6221, %v6217
    %v6398 = vpack.c.b16 %v6222, %v6218
    %v6399 = vpack.c.b16 %v6223, %v6219
    %v6400 = vpack.c.b16 %v6228, %v6224
    %v6401 = vpack.c.b16 %v6229, %v6225
    %v6402 = vpack.c.b16 %v6230, %v6226
    %v6403 = vpack.c.b16 %v6231, %v6227
    %v6404 = vpack.c.b16 %v6236, %v6232
    %v6405 = vpack.c.b16 %v6237, %v6233
    %v6406 = vpack.c.b16 %v6238, %v6234
    %v6407 = vpack.c.b16 %v6239, %v6235
    %v6408 = vpack.c.b16 %v6244, %v6240
    %v6409 = vpack.c.b16 %v6245, %v6241
    %v6410 = vpack.c.b16 %v6246, %v6242
    %v6411 = vpack.c.b16 %v6247, %v6243
    %v6412 = vpack.c.b16 %v6252, %v6248
    %v6413 = vpack.c.b16 %v6253, %v6249
    %v6414 = vpack.c.b16 %v6254, %v6250
    %v6415 = vpack.c.b16 %v6255, %v6251
    %v6416 = vpack.c.b16 %v6260, %v6256
    %v6417 = vpack.c.b16 %v6261, %v6257
    %v6418 = vpack.c.b16 %v6262, %v6258
    %v6419 = vpack.c.b16 %v6263, %v6259
    %v6420 = vpack.c.b16 %v6268, %v6264
    %v6421 = vpack.c.b16 %v6269, %v6265
    %v6422 = vpack.c.b16 %v6270, %v6266
    %v6423 = vpack.c.b16 %v6271, %v6267
    %v6424 = vpack.c.b16 %v6276, %v6272
    %v6425 = vpack.c.b16 %v6277, %v6273
    %v6426 = vpack.c.b16 %v6278, %v6274
    %v6427 = vpack.c.b16 %v6279, %v6275
    %v6428 = vpack.c.b16 %v6284, %v6280
    %v6429 = vpack.c.b16 %v6285, %v6281
    %v6430 = vpack.c.b16 %v6286, %v6282
    %v6431 = vpack.c.b16 %v6287, %v6283
    %v6432 = vpack.c.b16 %v6292, %v6288
    %v6433 = vpack.c.b16 %v6293, %v6289
    %v6434 = vpack.c.b16 %v6294, %v6290
    %v6435 = vpack.c.b16 %v6295, %v6291
    %v6436 = vpack.c.b16 %v6300, %v6296
    %v6437 = vpack.c.b16 %v6301, %v6297
    %v6438 = vpack.c.b16 %v6302, %v6298
    %v6439 = vpack.c.b16 %v6303, %v6299
    %v6440 = vpack.c.b16 %v6308, %v6304
    %v6441 = vpack.c.b16 %v6309, %v6305
    %v6442 = vpack.c.b16 %v6310, %v6306
    %v6443 = vpack.c.b16 %v6311, %v6307
    %v6444 = vpack.c.b16 %v6316, %v6312
    %v6445 = vpack.c.b16 %v6317, %v6313
    %v6446 = vpack.c.b16 %v6318, %v6314
    %v6447 = vpack.c.b16 %v6319, %v6315
    %v6448 = vpack.c.b16 %v6324, %v6320
    %v6449 = vpack.c.b16 %v6325, %v6321
    %v6450 = vpack.c.b16 %v6326, %v6322
    %v6451 = vpack.c.b16 %v6327, %v6323
    %v6452 = vpack.c.b16 %v6332, %v6328
    %v6453 = vpack.c.b16 %v6333, %v6329
    %v6454 = vpack.c.b16 %v6334, %v6330
    %v6455 = vpack.c.b16 %v6335, %v6331
    %v6456 = vpack.c.b16 %v6340, %v6336
    %v6457 = vpack.c.b16 %v6341, %v6337
    %v6458 = vpack.c.b16 %v6342, %v6338
    %v6459 = vpack.c.b16 %v6343, %v6339
    %v6460 = vpack.c.b16 %v6348, %v6344
    %v6461 = vpack.c.b16 %v6349, %v6345
    %v6462 = vpack.c.b16 %v6350, %v6346
    %v6463 = vpack.c.b16 %v6351, %v6347
    %6576 = vmatprep.subr.bf16.mxu0 %v6353
    %6577 = vmatpush1.bf16.msra.mxu0 %v6352
    %6578 = vmatprep.subr.bf16.mxu0 %v6357
    %6579 = vmatpush1.bf16.msra.mxu0 %v6356
    %6580 = vmatprep.subr.bf16.mxu0 %v6361
    %6581 = vmatpush1.bf16.msra.mxu0 %v6360
    %6582 = vmatprep.subr.bf16.mxu0 %v6365
    %6583 = vmatpush1.bf16.msra.mxu0 %v6364
    %6584 = vmatprep.subr.bf16.mxu0 %v6369
    %6585 = vmatpush1.bf16.msra.mxu0 %v6368
    %6586 = vmatprep.subr.bf16.mxu0 %v6373
    %6587 = vmatpush1.bf16.msra.mxu0 %v6372
    %6588 = vmatprep.subr.bf16.mxu0 %v6377
    %6589 = vmatpush1.bf16.msra.mxu0 %v6376
    %6590 = vmatprep.subr.bf16.mxu0 %v6381
    %6591 = vmatpush1.bf16.msra.mxu0 %v6380
    %6592 = vmatprep.subr.bf16.mxu0 %v6385
    %6593 = vmatpush1.bf16.msra.mxu0 %v6384
    %6594 = vmatprep.subr.bf16.mxu0 %v6389
    %6595 = vmatpush1.bf16.msra.mxu0 %v6388
    %6596 = vmatprep.subr.bf16.mxu0 %v6393
    %6597 = vmatpush1.bf16.msra.mxu0 %v6392
    %6598 = vmatprep.subr.bf16.mxu0 %v6397
    %6599 = vmatpush1.bf16.msra.mxu0 %v6396
    %6600 = vmatprep.subr.bf16.mxu0 %v6401
    %6601 = vmatpush1.bf16.msra.mxu0 %v6400
    %6602 = vmatprep.subr.bf16.mxu0 %v6405
    %6603 = vmatpush1.bf16.msra.mxu0 %v6404
    %6604 = vmatprep.subr.bf16.mxu0 %v6409
    %6605 = vmatpush1.bf16.msra.mxu0 %v6408
    %6606 = vmatprep.subr.bf16.mxu0 %v6413
    %6607 = vmatpush1.bf16.msra.mxu0 %v6412
    %6608 = vmatprep.mubr.bf16.mxu0 %v2328
    %6609 = vmatmul.mubr.bf16.gmra.mrb[0].mxu0 %v2327
    %v6610 = vpop.f32.mrb[0].mxu0
    %v6611 = vadd.f32 0.0, %v6610
    %v6612 = vpop.f32.mrb[0].mxu0
    %v6613 = vadd.f32 0.0, %v6612
    %v6614 = vpop.f32.mrb[0].mxu0
    %v6615 = vadd.f32 0.0, %v6614
    %v6616 = vpop.f32.mrb[0].mxu0
    %v6617 = vadd.f32 0.0, %v6616
    %6618 = vmatprep.mubr.bf16.mxu0 %v2332
    %6619 = vmatmul.mubr.bf16.gmra.mrb[0].mxu0 %v2331
    %v6620 = vpop.f32.mrb[0].mxu0
    %v6621 = vadd.f32 0.0, %v6620
    %v6622 = vpop.f32.mrb[0].mxu0
    %v6623 = vadd.f32 0.0, %v6622
    %v6624 = vpop.f32.mrb[0].mxu0
    %v6625 = vadd.f32 0.0, %v6624
    %v6626 = vpop.f32.mrb[0].mxu0
    %v6627 = vadd.f32 0.0, %v6626
    %6628 = vmatprep.mubr.bf16.mxu0 %v2336
    %6629 = vmatmul.mubr.bf16.gmra.mrb[0].mxu0 %v2335
    %v6630 = vpop.f32.mrb[0].mxu0
    %v6631 = vadd.f32 0.0, %v6630
    %v6632 = vpop.f32.mrb[0].mxu0
    %v6633 = vadd.f32 0.0, %v6632
    %v6634 = vpop.f32.mrb[0].mxu0
    %v6635 = vadd.f32 0.0, %v6634
    %v6636 = vpop.f32.mrb[0].mxu0
    %v6637 = vadd.f32 0.0, %v6636
    %6638 = vmatprep.mubr.bf16.mxu0 %v2340
    %6639 = vmatmul.mubr.bf16.gmra.mrb[0].mxu0 %v2339
    %v6640 = vpop.f32.mrb[0].mxu0
    %v6641 = vadd.f32 0.0, %v6640
    %v6642 = vpop.f32.mrb[0].mxu0
    %v6643 = vadd.f32 0.0, %v6642
    %v6644 = vpop.f32.mrb[0].mxu0
    %v6645 = vadd.f32 0.0, %v6644
    %v6646 = vpop.f32.mrb[0].mxu0
    %v6647 = vadd.f32 0.0, %v6646
    %6648 = vmatprep.mubr.bf16.mxu0 %v2344
    %6649 = vmatmul.mubr.bf16.gmra.mrb[0].mxu0 %v2343
    %v6650 = vpop.f32.mrb[0].mxu0
    %v6651 = vadd.f32 0.0, %v6650
    %v6652 = vpop.f32.mrb[0].mxu0
    %v6653 = vadd.f32 0.0, %v6652
    %v6654 = vpop.f32.mrb[0].mxu0
    %v6655 = vadd.f32 0.0, %v6654
    %v6656 = vpop.f32.mrb[0].mxu0
    %v6657 = vadd.f32 0.0, %v6656
    %6658 = vmatprep.mubr.bf16.mxu0 %v2348
    %6659 = vmatmul.mubr.bf16.gmra.mrb[0].mxu0 %v2347
    %v6660 = vpop.f32.mrb[0].mxu0
    %v6661 = vadd.f32 0.0, %v6660
    %v6662 = vpop.f32.mrb[0].mxu0
    %v6663 = vadd.f32 0.0, %v6662
    %v6664 = vpop.f32.mrb[0].mxu0
    %v6665 = vadd.f32 0.0, %v6664
    %v6666 = vpop.f32.mrb[0].mxu0
    %v6667 = vadd.f32 0.0, %v6666
    %6668 = vmatprep.mubr.bf16.mxu0 %v2352
    %6669 = vmatmul.mubr.bf16.gmra.mrb[0].mxu0 %v2351
    %v6670 = vpop.f32.mrb[0].mxu0
    %v6671 = vadd.f32 0.0, %v6670
    %v6672 = vpop.f32.mrb[0].mxu0
    %v6673 = vadd.f32 0.0, %v6672
    %v6674 = vpop.f32.mrb[0].mxu0
    %v6675 = vadd.f32 0.0, %v6674
    %v6676 = vpop.f32.mrb[0].mxu0
    %v6677 = vadd.f32 0.0, %v6676
    %6678 = vdwg.mxu0
    %6679 = vmatprep.subr.bf16.mxu0 %v6417
    %6680 = vmatpush1.bf16.msra.mxu0 %v6416
    %6681 = vmatprep.subr.bf16.mxu0 %v6421
    %6682 = vmatpush1.bf16.msra.mxu0 %v6420
    %6683 = vmatprep.subr.bf16.mxu0 %v6425
    %6684 = vmatpush1.bf16.msra.mxu0 %v6424
    %6685 = vmatprep.subr.bf16.mxu0 %v6429
    %6686 = vmatpush1.bf16.msra.mxu0 %v6428
    %6687 = vmatprep.subr.bf16.mxu0 %v6433
    %6688 = vmatpush1.bf16.msra.mxu0 %v6432
    %6689 = vmatprep.subr.bf16.mxu0 %v6437
    %6690 = vmatpush1.bf16.msra.mxu0 %v6436
    %6691 = vmatprep.subr.bf16.mxu0 %v6441
    %6692 = vmatpush1.bf16.msra.mxu0 %v6440
    %6693 = vmatprep.subr.bf16.mxu0 %v6445
    %6694 = vmatpush1.bf16.msra.mxu0 %v6444
    %6695 = vmatprep.subr.bf16.mxu0 %v6449
    %6696 = vmatpush1.bf16.msra.mxu0 %v6448
    %6697 = vmatprep.subr.bf16.mxu0 %v6453
    %6698 = vmatpush1.bf16.msra.mxu0 %v6452
    %6699 = vmatprep.subr.bf16.mxu0 %v6457
    %6700 = vmatpush1.bf16.msra.mxu0 %v6456
    %6701 = vmatprep.subr.bf16.mxu0 %v6461
    %6702 = vmatpush1.bf16.msra.mxu0 %v6460
    %6703 = vmatprep.subr.bf16.mxu0 0
    %6704 = vmatpush1.bf16.msra.mxu0 0
    %6705 = vmatprep.subr.bf16.mxu0 0
    %6706 = vmatpush1.bf16.msra.mxu0 0
    %6707 = vmatprep.subr.bf16.mxu0 0
    %6708 = vmatpush1.bf16.msra.mxu0 0
    %6709 = vmatprep.subr.bf16.mxu0 0
    %6710 = vmatpush1.bf16.msra.mxu0 0
    %6711 = vmatprep.mubr.bf16.mxu0 %v2938
    %6712 = vmatmul.mubr.bf16.gmra.mrb[0].mxu0 %v2329
    %v6713 = vpop.f32.mrb[0].mxu0
    %v6714 = vadd.f32 %v6611, %v6713
    %v6715 = vpop.f32.mrb[0].mxu0
    %v6716 = vadd.f32 %v6613, %v6715
    %v6717 = vpop.f32.mrb[0].mxu0
    %v6718 = vadd.f32 %v6615, %v6717
    %v6719 = vpop.f32.mrb[0].mxu0
    %v6720 = vadd.f32 %v6617, %v6719
    %6721 = vmatprep.mubr.bf16.mxu0 %v2941
    %6722 = vmatmul.mubr.bf16.gmra.mrb[0].mxu0 %v2333
    %v6723 = vpop.f32.mrb[0].mxu0
    %v6724 = vadd.f32 %v6621, %v6723
    %v6725 = vpop.f32.mrb[0].mxu0
    %v6726 = vadd.f32 %v6623, %v6725
    %v6727 = vpop.f32.mrb[0].mxu0
    %v6728 = vadd.f32 %v6625, %v6727
    %v6729 = vpop.f32.mrb[0].mxu0
    %v6730 = vadd.f32 %v6627, %v6729
    %6731 = vmatprep.mubr.bf16.mxu0 %v2944
    %6732 = vmatmul.mubr.bf16.gmra.mrb[0].mxu0 %v2337
    %v6733 = vpop.f32.mrb[0].mxu0
    %v6734 = vadd.f32 %v6631, %v6733
    %v6735 = vpop.f32.mrb[0].mxu0
    %v6736 = vadd.f32 %v6633, %v6735
    %v6737 = vpop.f32.mrb[0].mxu0
    %v6738 = vadd.f32 %v6635, %v6737
    %v6739 = vpop.f32.mrb[0].mxu0
    %v6740 = vadd.f32 %v6637, %v6739
    %6741 = vmatprep.mubr.bf16.mxu0 %v2947
    %6742 = vmatmul.mubr.bf16.gmra.mrb[0].mxu0 %v2341
    %v6743 = vpop.f32.mrb[0].mxu0
    %v6744 = vadd.f32 %v6641, %v6743
    %v6745 = vpop.f32.mrb[0].mxu0
    %v6746 = vadd.f32 %v6643, %v6745
    %v6747 = vpop.f32.mrb[0].mxu0
    %v6748 = vadd.f32 %v6645, %v6747
    %v6749 = vpop.f32.mrb[0].mxu0
    %v6750 = vadd.f32 %v6647, %v6749
    %6751 = vmatprep.mubr.bf16.mxu0 %v2950
    %6752 = vmatmul.mubr.bf16.gmra.mrb[0].mxu0 %v2345
    %v6753 = vpop.f32.mrb[0].mxu0
    %v6754 = vadd.f32 %v6651, %v6753
    %v6755 = vpop.f32.mrb[0].mxu0
    %v6756 = vadd.f32 %v6653, %v6755
    %v6757 = vpop.f32.mrb[0].mxu0
    %v6758 = vadd.f32 %v6655, %v6757
    %v6759 = vpop.f32.mrb[0].mxu0
    %v6760 = vadd.f32 %v6657, %v6759
    %6761 = vmatprep.mubr.bf16.mxu0 %v2953
    %6762 = vmatmul.mubr.bf16.gmra.mrb[0].mxu0 %v2349
    %v6763 = vpop.f32.mrb[0].mxu0
    %v6764 = vadd.f32 %v6661, %v6763
    %v6765 = vpop.f32.mrb[0].mxu0
    %v6766 = vadd.f32 %v6663, %v6765
    %v6767 = vpop.f32.mrb[0].mxu0
    %v6768 = vadd.f32 %v6665, %v6767
    %v6769 = vpop.f32.mrb[0].mxu0
    %v6770 = vadd.f32 %v6667, %v6769
    %6771 = vmatprep.mubr.bf16.mxu0 %v2956
    %6772 = vmatmul.mubr.bf16.gmra.mrb[0].mxu0 %v2353
    %v6773 = vpop.f32.mrb[0].mxu0
    %v6774 = vadd.f32 %v6671, %v6773
    %v6775 = vpop.f32.mrb[0].mxu0
    %v6776 = vadd.f32 %v6673, %v6775
    %v6777 = vpop.f32.mrb[0].mxu0
    %v6778 = vadd.f32 %v6675, %v6777
    %v6779 = vpop.f32.mrb[0].mxu0
    %v6780 = vadd.f32 %v6677, %v6779
    %6781 = vdwg.mxu0
    %6782 = vmatprep.subr.bf16.mxu0 %v6355
    %6783 = vmatpush1.bf16.msra.mxu0 %v6354
    %6784 = vmatprep.subr.bf16.mxu0 %v6359
    %6785 = vmatpush1.bf16.msra.mxu0 %v6358
    %6786 = vmatprep.subr.bf16.mxu0 %v6363
    %6787 = vmatpush1.bf16.msra.mxu0 %v6362
    %6788 = vmatprep.subr.bf16.mxu0 %v6367
    %6789 = vmatpush1.bf16.msra.mxu0 %v6366
    %6790 = vmatprep.subr.bf16.mxu0 %v6371
    %6791 = vmatpush1.bf16.msra.mxu0 %v6370
    %6792 = vmatprep.subr.bf16.mxu0 %v6375
    %6793 = vmatpush1.bf16.msra.mxu0 %v6374
    %6794 = vmatprep.subr.bf16.mxu0 %v6379
    %6795 = vmatpush1.bf16.msra.mxu0 %v6378
    %6796 = vmatprep.subr.bf16.mxu0 %v6383
    %6797 = vmatpush1.bf16.msra.mxu0 %v6382
    %6798 = vmatprep.subr.bf16.mxu0 %v6387
    %6799 = vmatpush1.bf16.msra.mxu0 %v6386
    %6800 = vmatprep.subr.bf16.mxu0 %v6391
    %6801 = vmatpush1.bf16.msra.mxu0 %v6390
    %6802 = vmatprep.subr.bf16.mxu0 %v6395
    %6803 = vmatpush1.bf16.msra.mxu0 %v6394
    %6804 = vmatprep.subr.bf16.mxu0 %v6399
    %6805 = vmatpush1.bf16.msra.mxu0 %v6398
    %6806 = vmatprep.subr.bf16.mxu0 %v6403
    %6807 = vmatpush1.bf16.msra.mxu0 %v6402
    %6808 = vmatprep.subr.bf16.mxu0 %v6407
    %6809 = vmatpush1.bf16.msra.mxu0 %v6406
    %6810 = vmatprep.subr.bf16.mxu0 %v6411
    %6811 = vmatpush1.bf16.msra.mxu0 %v6410
    %6812 = vmatprep.subr.bf16.mxu0 %v6415
    %6813 = vmatpush1.bf16.msra.mxu0 %v6414
    %6814 = vmatprep.mubr.bf16.mxu0 %v2328
    %6815 = vmatmul.mubr.bf16.gmra.mrb[0].mxu0 %v2327
    %v6816 = vpop.f32.mrb[0].mxu0
    %v6817 = vadd.f32 0.0, %v6816
    %v6818 = vpop.f32.mrb[0].mxu0
    %v6819 = vadd.f32 0.0, %v6818
    %v6820 = vpop.f32.mrb[0].mxu0
    %v6821 = vadd.f32 0.0, %v6820
    %v6822 = vpop.f32.mrb[0].mxu0
    %v6823 = vadd.f32 0.0, %v6822
    %6824 = vmatprep.mubr.bf16.mxu0 %v2332
    %6825 = vmatmul.mubr.bf16.gmra.mrb[0].mxu0 %v2331
    %v6826 = vpop.f32.mrb[0].mxu0
    %v6827 = vadd.f32 0.0, %v6826
    %v6828 = vpop.f32.mrb[0].mxu0
    %v6829 = vadd.f32 0.0, %v6828
    %v6830 = vpop.f32.mrb[0].mxu0
    %v6831 = vadd.f32 0.0, %v6830
    %v6832 = vpop.f32.mrb[0].mxu0
    %v6833 = vadd.f32 0.0, %v6832
    %6834 = vmatprep.mubr.bf16.mxu0 %v2336
    %6835 = vmatmul.mubr.bf16.gmra.mrb[0].mxu0 %v2335
    %v6836 = vpop.f32.mrb[0].mxu0
    %v6837 = vadd.f32 0.0, %v6836
    %v6838 = vpop.f32.mrb[0].mxu0
    %v6839 = vadd.f32 0.0, %v6838
    %v6840 = vpop.f32.mrb[0].mxu0
    %v6841 = vadd.f32 0.0, %v6840
    %v6842 = vpop.f32.mrb[0].mxu0
    %v6843 = vadd.f32 0.0, %v6842
    %6844 = vmatprep.mubr.bf16.mxu0 %v2340
    %6845 = vmatmul.mubr.bf16.gmra.mrb[0].mxu0 %v2339
    %v6846 = vpop.f32.mrb[0].mxu0
    %v6847 = vadd.f32 0.0, %v6846
    %v6848 = vpop.f32.mrb[0].mxu0
    %v6849 = vadd.f32 0.0, %v6848
    %v6850 = vpop.f32.mrb[0].mxu0
    %v6851 = vadd.f32 0.0, %v6850
    %v6852 = vpop.f32.mrb[0].mxu0
    %v6853 = vadd.f32 0.0, %v6852
    %6854 = vmatprep.mubr.bf16.mxu0 %v2344
    %6855 = vmatmul.mubr.bf16.gmra.mrb[0].mxu0 %v2343
    %v6856 = vpop.f32.mrb[0].mxu0
    %v6857 = vadd.f32 0.0, %v6856
    %v6858 = vpop.f32.mrb[0].mxu0
    %v6859 = vadd.f32 0.0, %v6858
    %v6860 = vpop.f32.mrb[0].mxu0
    %v6861 = vadd.f32 0.0, %v6860
    %v6862 = vpop.f32.mrb[0].mxu0
    %v6863 = vadd.f32 0.0, %v6862
    %6864 = vmatprep.mubr.bf16.mxu0 %v2348
    %6865 = vmatmul.mubr.bf16.gmra.mrb[0].mxu0 %v2347
    %v6866 = vpop.f32.mrb[0].mxu0
    %v6867 = vadd.f32 0.0, %v6866
    %v6868 = vpop.f32.mrb[0].mxu0
    %v6869 = vadd.f32 0.0, %v6868
    %v6870 = vpop.f32.mrb[0].mxu0
    %v6871 = vadd.f32 0.0, %v6870
    %v6872 = vpop.f32.mrb[0].mxu0
    %v6873 = vadd.f32 0.0, %v6872
    %6874 = vmatprep.mubr.bf16.mxu0 %v2352
    %6875 = vmatmul.mubr.bf16.gmra.mrb[0].mxu0 %v2351
    %v6876 = vpop.f32.mrb[0].mxu0
    %v6877 = vadd.f32 0.0, %v6876
    %v6878 = vpop.f32.mrb[0].mxu0
    %v6879 = vadd.f32 0.0, %v6878
    %v6880 = vpop.f32.mrb[0].mxu0
    %v6881 = vadd.f32 0.0, %v6880
    %v6882 = vpop.f32.mrb[0].mxu0
    %v6883 = vadd.f32 0.0, %v6882
    %6884 = vdwg.mxu0
    %6885 = vmatprep.subr.bf16.mxu0 %v6419
    %6886 = vmatpush1.bf16.msra.mxu0 %v6418
    %6887 = vmatprep.subr.bf16.mxu0 %v6423
    %6888 = vmatpush1.bf16.msra.mxu0 %v6422
    %6889 = vmatprep.subr.bf16.mxu0 %v6427
    %6890 = vmatpush1.bf16.msra.mxu0 %v6426
    %6891 = vmatprep.subr.bf16.mxu0 %v6431
    %6892 = vmatpush1.bf16.msra.mxu0 %v6430
    %6893 = vmatprep.subr.bf16.mxu0 %v6435
    %6894 = vmatpush1.bf16.msra.mxu0 %v6434
    %6895 = vmatprep.subr.bf16.mxu0 %v6439
    %6896 = vmatpush1.bf16.msra.mxu0 %v6438
    %6897 = vmatprep.subr.bf16.mxu0 %v6443
    %6898 = vmatpush1.bf16.msra.mxu0 %v6442
    %6899 = vmatprep.subr.bf16.mxu0 %v6447
    %6900 = vmatpush1.bf16.msra.mxu0 %v6446
    %6901 = vmatprep.subr.bf16.mxu0 %v6451
    %6902 = vmatpush1.bf16.msra.mxu0 %v6450
    %6903 = vmatprep.subr.bf16.mxu0 %v6455
    %6904 = vmatpush1.bf16.msra.mxu0 %v6454
    %6905 = vmatprep.subr.bf16.mxu0 %v6459
    %6906 = vmatpush1.bf16.msra.mxu0 %v6458
    %6907 = vmatprep.subr.bf16.mxu0 %v6463
    %6908 = vmatpush1.bf16.msra.mxu0 %v6462
    %6909 = vmatprep.subr.bf16.mxu0 0
    %6910 = vmatpush1.bf16.msra.mxu0 0
    %6911 = vmatprep.subr.bf16.mxu0 0
    %6912 = vmatpush1.bf16.msra.mxu0 0
    %6913 = vmatprep.subr.bf16.mxu0 0
    %6914 = vmatpush1.bf16.msra.mxu0 0
    %6915 = vmatprep.subr.bf16.mxu0 0
    %6916 = vmatpush1.bf16.msra.mxu0 0
    %6917 = vmatprep.mubr.bf16.mxu0 %v2938
    %6918 = vmatmul.mubr.bf16.gmra.mrb[0].mxu0 %v2329
    %v6919 = vpop.f32.mrb[0].mxu0
    %v6920 = vadd.f32 %v6817, %v6919
    %v6921 = vpop.f32.mrb[0].mxu0
    %v6922 = vadd.f32 %v6819, %v6921
    %v6923 = vpop.f32.mrb[0].mxu0
    %v6924 = vadd.f32 %v6821, %v6923
    %v6925 = vpop.f32.mrb[0].mxu0
    %v6926 = vadd.f32 %v6823, %v6925
    %6927 = vmatprep.mubr.bf16.mxu0 %v2941
    %6928 = vmatmul.mubr.bf16.gmra.mrb[0].mxu0 %v2333
    %v6929 = vpop.f32.mrb[0].mxu0
    %v6930 = vadd.f32 %v6827, %v6929
    %v6931 = vpop.f32.mrb[0].mxu0
    %v6932 = vadd.f32 %v6829, %v6931
    %v6933 = vpop.f32.mrb[0].mxu0
    %v6934 = vadd.f32 %v6831, %v6933
    %v6935 = vpop.f32.mrb[0].mxu0
    %v6936 = vadd.f32 %v6833, %v6935
    %6937 = vmatprep.mubr.bf16.mxu0 %v2944
    %6938 = vmatmul.mubr.bf16.gmra.mrb[0].mxu0 %v2337
    %v6939 = vpop.f32.mrb[0].mxu0
    %v6940 = vadd.f32 %v6837, %v6939
    %v6941 = vpop.f32.mrb[0].mxu0
    %v6942 = vadd.f32 %v6839, %v6941
    %v6943 = vpop.f32.mrb[0].mxu0
    %v6944 = vadd.f32 %v6841, %v6943
    %v6945 = vpop.f32.mrb[0].mxu0
    %v6946 = vadd.f32 %v6843, %v6945
    %6947 = vmatprep.mubr.bf16.mxu0 %v2947
    %6948 = vmatmul.mubr.bf16.gmra.mrb[0].mxu0 %v2341
    %v6949 = vpop.f32.mrb[0].mxu0
    %v6950 = vadd.f32 %v6847, %v6949
    %v6951 = vpop.f32.mrb[0].mxu0
    %v6952 = vadd.f32 %v6849, %v6951
    %v6953 = vpop.f32.mrb[0].mxu0
    %v6954 = vadd.f32 %v6851, %v6953
    %v6955 = vpop.f32.mrb[0].mxu0
    %v6956 = vadd.f32 %v6853, %v6955
    %6957 = vmatprep.mubr.bf16.mxu0 %v2950
    %6958 = vmatmul.mubr.bf16.gmra.mrb[0].mxu0 %v2345
    %v6959 = vpop.f32.mrb[0].mxu0
    %v6960 = vadd.f32 %v6857, %v6959
    %v6961 = vpop.f32.mrb[0].mxu0
    %v6962 = vadd.f32 %v6859, %v6961
    %v6963 = vpop.f32.mrb[0].mxu0
    %v6964 = vadd.f32 %v6861, %v6963
    %v6965 = vpop.f32.mrb[0].mxu0
    %v6966 = vadd.f32 %v6863, %v6965
    %6967 = vmatprep.mubr.bf16.mxu0 %v2953
    %6968 = vmatmul.mubr.bf16.gmra.mrb[0].mxu0 %v2349
    %v6969 = vpop.f32.mrb[0].mxu0
    %v6970 = vadd.f32 %v6867, %v6969
    %v6971 = vpop.f32.mrb[0].mxu0
    %v6972 = vadd.f32 %v6869, %v6971
    %v6973 = vpop.f32.mrb[0].mxu0
    %v6974 = vadd.f32 %v6871, %v6973
    %v6975 = vpop.f32.mrb[0].mxu0
    %v6976 = vadd.f32 %v6873, %v6975
    %6977 = vmatprep.mubr.bf16.mxu0 %v2956
    %6978 = vmatmul.mubr.bf16.gmra.mrb[0].mxu0 %v2353
    %v6979 = vpop.f32.mrb[0].mxu0
    %v6980 = vadd.f32 %v6877, %v6979
    %v6981 = vpop.f32.mrb[0].mxu0
    %v6982 = vadd.f32 %v6879, %v6981
    %v6983 = vpop.f32.mrb[0].mxu0
    %v6984 = vadd.f32 %v6881, %v6983
    %v6985 = vpop.f32.mrb[0].mxu0
    %v6986 = vadd.f32 %v6883, %v6985
    %6987 = vdwg.mxu0
    %v7100 = vunpack.c.l.b16 %v5791
    %v7101 = vunpack.c.h.b16 %v5791
    %v7102 = vunpack.c.l.b16 %v5792
    %v7103 = vunpack.c.h.b16 %v5792
    %v7104 = vunpack.c.l.b16 %v5793
    %v7105 = vunpack.c.h.b16 %v5793
    %v7106 = vunpack.c.l.b16 %v5794
    %v7107 = vunpack.c.h.b16 %v5794
    %v7108 = vunpack.c.l.b16 %v5795
    %v7109 = vunpack.c.h.b16 %v5795
    %v7110 = vunpack.c.l.b16 %v5796
    %v7111 = vunpack.c.h.b16 %v5796
    %v7112 = vunpack.c.l.b16 %v5797
    %v7113 = vunpack.c.h.b16 %v5797
    %v7114 = vunpack.c.l.b16 %v5798
    %v7115 = vunpack.c.h.b16 %v5798
    %v7116 = vunpack.c.l.b16 %v5799
    %v7117 = vunpack.c.h.b16 %v5799
    %v7118 = vunpack.c.l.b16 %v5800
    %v7119 = vunpack.c.h.b16 %v5800
    %v7120 = vunpack.c.l.b16 %v5801
    %v7121 = vunpack.c.h.b16 %v5801
    %v7122 = vunpack.c.l.b16 %v5802
    %v7123 = vunpack.c.h.b16 %v5802
    %v7124 = vunpack.c.l.b16 %v5803
    %v7125 = vunpack.c.h.b16 %v5803
    %v7126 = vunpack.c.l.b16 %v5804
    %v7127 = vunpack.c.h.b16 %v5804
    %v7128 = vunpack.c.l.b16 %v5805
    %v7129 = vunpack.c.h.b16 %v5805
    %v7130 = vunpack.c.l.b16 %v5806
    %v7131 = vunpack.c.h.b16 %v5806
    %v7132 = vunpack.c.l.b16 %v5807
    %v7133 = vunpack.c.h.b16 %v5807
    %v7134 = vunpack.c.l.b16 %v5808
    %v7135 = vunpack.c.h.b16 %v5808
    %v7136 = vunpack.c.l.b16 %v5809
    %v7137 = vunpack.c.h.b16 %v5809
    %v7138 = vunpack.c.l.b16 %v5810
    %v7139 = vunpack.c.h.b16 %v5810
    %v7140 = vunpack.c.l.b16 %v5811
    %v7141 = vunpack.c.h.b16 %v5811
    %v7142 = vunpack.c.l.b16 %v5812
    %v7143 = vunpack.c.h.b16 %v5812
    %v7144 = vunpack.c.l.b16 %v5813
    %v7145 = vunpack.c.h.b16 %v5813
    %v7146 = vunpack.c.l.b16 %v5814
    %v7147 = vunpack.c.h.b16 %v5814
    %v7148 = vunpack.c.l.b16 %v5815
    %v7149 = vunpack.c.h.b16 %v5815
    %v7150 = vunpack.c.l.b16 %v5816
    %v7151 = vunpack.c.h.b16 %v5816
    %v7152 = vunpack.c.l.b16 %v5817
    %v7153 = vunpack.c.h.b16 %v5817
    %v7154 = vunpack.c.l.b16 %v5818
    %v7155 = vunpack.c.h.b16 %v5818
    %v7156 = vunpack.c.l.b16 %v5819
    %v7157 = vunpack.c.h.b16 %v5819
    %v7158 = vunpack.c.l.b16 %v5820
    %v7159 = vunpack.c.h.b16 %v5820
    %v7160 = vunpack.c.l.b16 %v5821
    %v7161 = vunpack.c.h.b16 %v5821
    %v7162 = vunpack.c.l.b16 %v5822
    %v7163 = vunpack.c.h.b16 %v5822
    %v7164 = vunpack.c.l.b16 %v5823
    %v7165 = vunpack.c.h.b16 %v5823
    %v7166 = vunpack.c.l.b16 %v5824
    %v7167 = vunpack.c.h.b16 %v5824
    %v7168 = vunpack.c.l.b16 %v5825
    %v7169 = vunpack.c.h.b16 %v5825
    %v7170 = vunpack.c.l.b16 %v5826
    %v7171 = vunpack.c.h.b16 %v5826
    %v7172 = vunpack.c.l.b16 %v5827
    %v7173 = vunpack.c.h.b16 %v5827
    %v7174 = vunpack.c.l.b16 %v5828
    %v7175 = vunpack.c.h.b16 %v5828
    %v7176 = vunpack.c.l.b16 %v5829
    %v7177 = vunpack.c.h.b16 %v5829
    %v7178 = vunpack.c.l.b16 %v5830
    %v7179 = vunpack.c.h.b16 %v5830
    %v7180 = vunpack.c.l.b16 %v5831
    %v7181 = vunpack.c.h.b16 %v5831
    %v7182 = vunpack.c.l.b16 %v5832
    %v7183 = vunpack.c.h.b16 %v5832
    %v7184 = vunpack.c.l.b16 %v5833
    %v7185 = vunpack.c.h.b16 %v5833
    %v7186 = vunpack.c.l.b16 %v5834
    %v7187 = vunpack.c.h.b16 %v5834
    %v7188 = vunpack.c.l.b16 %v5835
    %v7189 = vunpack.c.h.b16 %v5835
    %v7190 = vunpack.c.l.b16 %v5836
    %v7191 = vunpack.c.h.b16 %v5836
    %v7192 = vunpack.c.l.b16 %v5837
    %v7193 = vunpack.c.h.b16 %v5837
    %v7194 = vunpack.c.l.b16 %v5838
    %v7195 = vunpack.c.h.b16 %v5838
    %v7196 = vunpack.c.l.b16 %v5839
    %v7197 = vunpack.c.h.b16 %v5839
    %v7198 = vunpack.c.l.b16 %v5840
    %v7199 = vunpack.c.h.b16 %v5840
    %v7200 = vunpack.c.l.b16 %v5841
    %v7201 = vunpack.c.h.b16 %v5841
    %v7202 = vunpack.c.l.b16 %v5842
    %v7203 = vunpack.c.h.b16 %v5842
    %v7204 = vunpack.c.l.b16 %v5843
    %v7205 = vunpack.c.h.b16 %v5843
    %v7206 = vunpack.c.l.b16 %v5844
    %v7207 = vunpack.c.h.b16 %v5844
    %v7208 = vunpack.c.l.b16 %v5845
    %v7209 = vunpack.c.h.b16 %v5845
    %v7210 = vunpack.c.l.b16 %v5846
    %v7211 = vunpack.c.h.b16 %v5846
    %v7212 = vunpack.c.l.b16 %v5847
    %v7213 = vunpack.c.h.b16 %v5847
    %v7214 = vunpack.c.l.b16 %v5848
    %v7215 = vunpack.c.h.b16 %v5848
    %v7216 = vunpack.c.l.b16 %v5849
    %v7217 = vunpack.c.h.b16 %v5849
    %v7218 = vunpack.c.l.b16 %v5850
    %v7219 = vunpack.c.h.b16 %v5850
    %v7220 = vunpack.c.l.b16 %v5851
    %v7221 = vunpack.c.h.b16 %v5851
    %v7222 = vunpack.c.l.b16 %v5852
    %v7223 = vunpack.c.h.b16 %v5852
    %v7224 = vunpack.c.l.b16 %v5853
    %v7225 = vunpack.c.h.b16 %v5853
    %v7226 = vunpack.c.l.b16 %v5854
    %v7227 = vunpack.c.h.b16 %v5854
    %v7228 = vunpack.c.l.b16 %v5855
    %v7229 = vunpack.c.h.b16 %v5855
    %v7230 = vunpack.c.l.b16 %v5856
    %v7231 = vunpack.c.h.b16 %v5856
    %v7232 = vunpack.c.l.b16 %v5857
    %v7233 = vunpack.c.h.b16 %v5857
    %v7234 = vunpack.c.l.b16 %v5858
    %v7235 = vunpack.c.h.b16 %v5858
    %v7236 = vunpack.c.l.b16 %v5859
    %v7237 = vunpack.c.h.b16 %v5859
    %v7238 = vunpack.c.l.b16 %v5860
    %v7239 = vunpack.c.h.b16 %v5860
    %v7240 = vunpack.c.l.b16 %v5861
    %v7241 = vunpack.c.h.b16 %v5861
    %v7242 = vunpack.c.l.b16 %v5862
    %v7243 = vunpack.c.h.b16 %v5862
    %v7244 = vunpack.c.l.b16 %v5863
    %v7245 = vunpack.c.h.b16 %v5863
    %v7246 = vunpack.c.l.b16 %v5864
    %v7247 = vunpack.c.h.b16 %v5864
    %v7248 = vunpack.c.l.b16 %v5865
    %v7249 = vunpack.c.h.b16 %v5865
    %v7250 = vunpack.c.l.b16 %v5866
    %v7251 = vunpack.c.h.b16 %v5866
    %v7252 = vunpack.c.l.b16 %v5867
    %v7253 = vunpack.c.h.b16 %v5867
    %v7254 = vunpack.c.l.b16 %v5868
    %v7255 = vunpack.c.h.b16 %v5868
    %v7256 = vunpack.c.l.b16 %v5869
    %v7257 = vunpack.c.h.b16 %v5869
    %v7258 = vunpack.c.l.b16 %v5870
    %v7259 = vunpack.c.h.b16 %v5870
    %v7260 = vunpack.c.l.b16 %v5871
    %v7261 = vunpack.c.h.b16 %v5871
    %v7262 = vunpack.c.l.b16 %v5872
    %v7263 = vunpack.c.h.b16 %v5872
    %v7264 = vunpack.c.l.b16 %v5873
    %v7265 = vunpack.c.h.b16 %v5873
    %v7266 = vunpack.c.l.b16 %v5874
    %v7267 = vunpack.c.h.b16 %v5874
    %v7268 = vunpack.c.l.b16 %v5875
    %v7269 = vunpack.c.h.b16 %v5875
    %v7270 = vunpack.c.l.b16 %v5876
    %v7271 = vunpack.c.h.b16 %v5876
    %v7272 = vunpack.c.l.b16 %v5877
    %v7273 = vunpack.c.h.b16 %v5877
    %v7274 = vunpack.c.l.b16 %v5878
    %v7275 = vunpack.c.h.b16 %v5878
    %v7276 = vunpack.c.l.b16 %v5879
    %v7277 = vunpack.c.h.b16 %v5879
    %v7278 = vunpack.c.l.b16 %v5880
    %v7279 = vunpack.c.h.b16 %v5880
    %v7280 = vunpack.c.l.b16 %v5881
    %v7281 = vunpack.c.h.b16 %v5881
    %v7282 = vunpack.c.l.b16 %v5882
    %v7283 = vunpack.c.h.b16 %v5882
    %v7284 = vunpack.c.l.b16 %v5883
    %v7285 = vunpack.c.h.b16 %v5883
    %v7286 = vunpack.c.l.b16 %v5884
    %v7287 = vunpack.c.h.b16 %v5884
    %v7288 = vunpack.c.l.b16 %v5885
    %v7289 = vunpack.c.h.b16 %v5885
    %v7290 = vunpack.c.l.b16 %v5886
    %v7291 = vunpack.c.h.b16 %v5886
    %v7292 = vunpack.c.l.b16 %v5887
    %v7293 = vunpack.c.h.b16 %v5887
    %v7294 = vunpack.c.l.b16 %v5888
    %v7295 = vunpack.c.h.b16 %v5888
    %v7296 = vunpack.c.l.b16 %v5889
    %v7297 = vunpack.c.h.b16 %v5889
    %v7298 = vunpack.c.l.b16 %v5890
    %v7299 = vunpack.c.h.b16 %v5890
    %v7300 = vunpack.c.l.b16 %v5891
    %v7301 = vunpack.c.h.b16 %v5891
    %v7302 = vunpack.c.l.b16 %v5892
    %v7303 = vunpack.c.h.b16 %v5892
    %v7304 = vunpack.c.l.b16 %v5893
    %v7305 = vunpack.c.h.b16 %v5893
    %v7306 = vunpack.c.l.b16 %v5894
    %v7307 = vunpack.c.h.b16 %v5894
    %v7308 = vunpack.c.l.b16 %v5895
    %v7309 = vunpack.c.h.b16 %v5895
    %v7310 = vunpack.c.l.b16 %v5896
    %v7311 = vunpack.c.h.b16 %v5896
    %v7312 = vunpack.c.l.b16 %v5897
    %v7313 = vunpack.c.h.b16 %v5897
    %v7314 = vunpack.c.l.b16 %v5898
    %v7315 = vunpack.c.h.b16 %v5898
    %v7316 = vunpack.c.l.b16 %v5899
    %v7317 = vunpack.c.h.b16 %v5899
    %v7318 = vunpack.c.l.b16 %v5900
    %v7319 = vunpack.c.h.b16 %v5900
    %v7320 = vunpack.c.l.b16 %v5901
    %v7321 = vunpack.c.h.b16 %v5901
    %v7322 = vunpack.c.l.b16 %v5902
    %v7323 = vunpack.c.h.b16 %v5902
    %v7324 = vpack.c.b16 %v7104, %v7100
    %v7325 = vpack.c.b16 %v7105, %v7101
    %v7326 = vpack.c.b16 %v7106, %v7102
    %v7327 = vpack.c.b16 %v7107, %v7103
    %v7328 = vpack.c.b16 %v7112, %v7108
    %v7329 = vpack.c.b16 %v7113, %v7109
    %v7330 = vpack.c.b16 %v7114, %v7110
    %v7331 = vpack.c.b16 %v7115, %v7111
    %v7332 = vpack.c.b16 %v7120, %v7116
    %v7333 = vpack.c.b16 %v7121, %v7117
    %v7334 = vpack.c.b16 %v7122, %v7118
    %v7335 = vpack.c.b16 %v7123, %v7119
    %v7336 = vpack.c.b16 %v7128, %v7124
    %v7337 = vpack.c.b16 %v7129, %v7125
    %v7338 = vpack.c.b16 %v7130, %v7126
    %v7339 = vpack.c.b16 %v7131, %v7127
    %v7340 = vpack.c.b16 %v7136, %v7132
    %v7341 = vpack.c.b16 %v7137, %v7133
    %v7342 = vpack.c.b16 %v7138, %v7134
    %v7343 = vpack.c.b16 %v7139, %v7135
    %v7344 = vpack.c.b16 %v7144, %v7140
    %v7345 = vpack.c.b16 %v7145, %v7141
    %v7346 = vpack.c.b16 %v7146, %v7142
    %v7347 = vpack.c.b16 %v7147, %v7143
    %v7348 = vpack.c.b16 %v7152, %v7148
    %v7349 = vpack.c.b16 %v7153, %v7149
    %v7350 = vpack.c.b16 %v7154, %v7150
    %v7351 = vpack.c.b16 %v7155, %v7151
    %v7352 = vpack.c.b16 %v7160, %v7156
    %v7353 = vpack.c.b16 %v7161, %v7157
    %v7354 = vpack.c.b16 %v7162, %v7158
    %v7355 = vpack.c.b16 %v7163, %v7159
    %v7356 = vpack.c.b16 %v7168, %v7164
    %v7357 = vpack.c.b16 %v7169, %v7165
    %v7358 = vpack.c.b16 %v7170, %v7166
    %v7359 = vpack.c.b16 %v7171, %v7167
    %v7360 = vpack.c.b16 %v7176, %v7172
    %v7361 = vpack.c.b16 %v7177, %v7173
    %v7362 = vpack.c.b16 %v7178, %v7174
    %v7363 = vpack.c.b16 %v7179, %v7175
    %v7364 = vpack.c.b16 %v7184, %v7180
    %v7365 = vpack.c.b16 %v7185, %v7181
    %v7366 = vpack.c.b16 %v7186, %v7182
    %v7367 = vpack.c.b16 %v7187, %v7183
    %v7368 = vpack.c.b16 %v7192, %v7188
    %v7369 = vpack.c.b16 %v7193, %v7189
    %v7370 = vpack.c.b16 %v7194, %v7190
    %v7371 = vpack.c.b16 %v7195, %v7191
    %v7372 = vpack.c.b16 %v7200, %v7196
    %v7373 = vpack.c.b16 %v7201, %v7197
    %v7374 = vpack.c.b16 %v7202, %v7198
    %v7375 = vpack.c.b16 %v7203, %v7199
    %v7376 = vpack.c.b16 %v7208, %v7204
    %v7377 = vpack.c.b16 %v7209, %v7205
    %v7378 = vpack.c.b16 %v7210, %v7206
    %v7379 = vpack.c.b16 %v7211, %v7207
    %v7380 = vpack.c.b16 %v7216, %v7212
    %v7381 = vpack.c.b16 %v7217, %v7213
    %v7382 = vpack.c.b16 %v7218, %v7214
    %v7383 = vpack.c.b16 %v7219, %v7215
    %v7384 = vpack.c.b16 %v7224, %v7220
    %v7385 = vpack.c.b16 %v7225, %v7221
    %v7386 = vpack.c.b16 %v7226, %v7222
    %v7387 = vpack.c.b16 %v7227, %v7223
    %v7388 = vpack.c.b16 %v7232, %v7228
    %v7389 = vpack.c.b16 %v7233, %v7229
    %v7390 = vpack.c.b16 %v7234, %v7230
    %v7391 = vpack.c.b16 %v7235, %v7231
    %v7392 = vpack.c.b16 %v7240, %v7236
    %v7393 = vpack.c.b16 %v7241, %v7237
    %v7394 = vpack.c.b16 %v7242, %v7238
    %v7395 = vpack.c.b16 %v7243, %v7239
    %v7396 = vpack.c.b16 %v7248, %v7244
    %v7397 = vpack.c.b16 %v7249, %v7245
    %v7398 = vpack.c.b16 %v7250, %v7246
    %v7399 = vpack.c.b16 %v7251, %v7247
    %v7400 = vpack.c.b16 %v7256, %v7252
    %v7401 = vpack.c.b16 %v7257, %v7253
    %v7402 = vpack.c.b16 %v7258, %v7254
    %v7403 = vpack.c.b16 %v7259, %v7255
    %v7404 = vpack.c.b16 %v7264, %v7260
    %v7405 = vpack.c.b16 %v7265, %v7261
    %v7406 = vpack.c.b16 %v7266, %v7262
    %v7407 = vpack.c.b16 %v7267, %v7263
    %v7408 = vpack.c.b16 %v7272, %v7268
    %v7409 = vpack.c.b16 %v7273, %v7269
    %v7410 = vpack.c.b16 %v7274, %v7270
    %v7411 = vpack.c.b16 %v7275, %v7271
    %v7412 = vpack.c.b16 %v7280, %v7276
    %v7413 = vpack.c.b16 %v7281, %v7277
    %v7414 = vpack.c.b16 %v7282, %v7278
    %v7415 = vpack.c.b16 %v7283, %v7279
    %v7416 = vpack.c.b16 %v7288, %v7284
    %v7417 = vpack.c.b16 %v7289, %v7285
    %v7418 = vpack.c.b16 %v7290, %v7286
    %v7419 = vpack.c.b16 %v7291, %v7287
    %v7420 = vpack.c.b16 %v7296, %v7292
    %v7421 = vpack.c.b16 %v7297, %v7293
    %v7422 = vpack.c.b16 %v7298, %v7294
    %v7423 = vpack.c.b16 %v7299, %v7295
    %v7424 = vpack.c.b16 %v7304, %v7300
    %v7425 = vpack.c.b16 %v7305, %v7301
    %v7426 = vpack.c.b16 %v7306, %v7302
    %v7427 = vpack.c.b16 %v7307, %v7303
    %v7428 = vpack.c.b16 %v7312, %v7308
    %v7429 = vpack.c.b16 %v7313, %v7309
    %v7430 = vpack.c.b16 %v7314, %v7310
    %v7431 = vpack.c.b16 %v7315, %v7311
    %v7432 = vpack.c.b16 %v7320, %v7316
    %v7433 = vpack.c.b16 %v7321, %v7317
    %v7434 = vpack.c.b16 %v7322, %v7318
    %v7435 = vpack.c.b16 %v7323, %v7319
    %7548 = vmatprep.subr.bf16.mxu0 %v7325
    %7549 = vmatpush1.bf16.msra.mxu0 %v7324
    %7550 = vmatprep.subr.bf16.mxu0 %v7329
    %7551 = vmatpush1.bf16.msra.mxu0 %v7328
    %7552 = vmatprep.subr.bf16.mxu0 %v7333
    %7553 = vmatpush1.bf16.msra.mxu0 %v7332
    %7554 = vmatprep.subr.bf16.mxu0 %v7337
    %7555 = vmatpush1.bf16.msra.mxu0 %v7336
    %7556 = vmatprep.subr.bf16.mxu0 %v7341
    %7557 = vmatpush1.bf16.msra.mxu0 %v7340
    %7558 = vmatprep.subr.bf16.mxu0 %v7345
    %7559 = vmatpush1.bf16.msra.mxu0 %v7344
    %7560 = vmatprep.subr.bf16.mxu0 %v7349
    %7561 = vmatpush1.bf16.msra.mxu0 %v7348
    %7562 = vmatprep.subr.bf16.mxu0 %v7353
    %7563 = vmatpush1.bf16.msra.mxu0 %v7352
    %7564 = vmatprep.subr.bf16.mxu0 %v7357
    %7565 = vmatpush1.bf16.msra.mxu0 %v7356
    %7566 = vmatprep.subr.bf16.mxu0 %v7361
    %7567 = vmatpush1.bf16.msra.mxu0 %v7360
    %7568 = vmatprep.subr.bf16.mxu0 %v7365
    %7569 = vmatpush1.bf16.msra.mxu0 %v7364
    %7570 = vmatprep.subr.bf16.mxu0 %v7369
    %7571 = vmatpush1.bf16.msra.mxu0 %v7368
    %7572 = vmatprep.subr.bf16.mxu0 %v7373
    %7573 = vmatpush1.bf16.msra.mxu0 %v7372
    %7574 = vmatprep.subr.bf16.mxu0 %v7377
    %7575 = vmatpush1.bf16.msra.mxu0 %v7376
    %7576 = vmatprep.subr.bf16.mxu0 %v7381
    %7577 = vmatpush1.bf16.msra.mxu0 %v7380
    %7578 = vmatprep.subr.bf16.mxu0 %v7385
    %7579 = vmatpush1.bf16.msra.mxu0 %v7384
    %7580 = vmatprep.mubr.bf16.mxu0 %v3455
    %7581 = vmatmul.mubr.bf16.gmra.mrb[0].mxu0 %v3454
    %v7582 = vpop.f32.mrb[0].mxu0
    %v7583 = vadd.f32 %v6714, %v7582
    %v7584 = vpop.f32.mrb[0].mxu0
    %v7585 = vadd.f32 %v6716, %v7584
    %v7586 = vpop.f32.mrb[0].mxu0
    %v7587 = vadd.f32 %v6718, %v7586
    %v7588 = vpop.f32.mrb[0].mxu0
    %v7589 = vadd.f32 %v6720, %v7588
    %7590 = vmatprep.mubr.bf16.mxu0 %v3459
    %7591 = vmatmul.mubr.bf16.gmra.mrb[0].mxu0 %v3458
    %v7592 = vpop.f32.mrb[0].mxu0
    %v7593 = vadd.f32 %v6724, %v7592
    %v7594 = vpop.f32.mrb[0].mxu0
    %v7595 = vadd.f32 %v6726, %v7594
    %v7596 = vpop.f32.mrb[0].mxu0
    %v7597 = vadd.f32 %v6728, %v7596
    %v7598 = vpop.f32.mrb[0].mxu0
    %v7599 = vadd.f32 %v6730, %v7598
    %7600 = vmatprep.mubr.bf16.mxu0 %v3463
    %7601 = vmatmul.mubr.bf16.gmra.mrb[0].mxu0 %v3462
    %v7602 = vpop.f32.mrb[0].mxu0
    %v7603 = vadd.f32 %v6734, %v7602
    %v7604 = vpop.f32.mrb[0].mxu0
    %v7605 = vadd.f32 %v6736, %v7604
    %v7606 = vpop.f32.mrb[0].mxu0
    %v7607 = vadd.f32 %v6738, %v7606
    %v7608 = vpop.f32.mrb[0].mxu0
    %v7609 = vadd.f32 %v6740, %v7608
    %7610 = vmatprep.mubr.bf16.mxu0 %v3467
    %7611 = vmatmul.mubr.bf16.gmra.mrb[0].mxu0 %v3466
    %v7612 = vpop.f32.mrb[0].mxu0
    %v7613 = vadd.f32 %v6744, %v7612
    %v7614 = vpop.f32.mrb[0].mxu0
    %v7615 = vadd.f32 %v6746, %v7614
    %v7616 = vpop.f32.mrb[0].mxu0
    %v7617 = vadd.f32 %v6748, %v7616
    %v7618 = vpop.f32.mrb[0].mxu0
    %v7619 = vadd.f32 %v6750, %v7618
    %7620 = vmatprep.mubr.bf16.mxu0 %v3471
    %7621 = vmatmul.mubr.bf16.gmra.mrb[0].mxu0 %v3470
    %v7622 = vpop.f32.mrb[0].mxu0
    %v7623 = vadd.f32 %v6754, %v7622
    %v7624 = vpop.f32.mrb[0].mxu0
    %v7625 = vadd.f32 %v6756, %v7624
    %v7626 = vpop.f32.mrb[0].mxu0
    %v7627 = vadd.f32 %v6758, %v7626
    %v7628 = vpop.f32.mrb[0].mxu0
    %v7629 = vadd.f32 %v6760, %v7628
    %7630 = vmatprep.mubr.bf16.mxu0 %v3475
    %7631 = vmatmul.mubr.bf16.gmra.mrb[0].mxu0 %v3474
    %v7632 = vpop.f32.mrb[0].mxu0
    %v7633 = vadd.f32 %v6764, %v7632
    %v7634 = vpop.f32.mrb[0].mxu0
    %v7635 = vadd.f32 %v6766, %v7634
    %v7636 = vpop.f32.mrb[0].mxu0
    %v7637 = vadd.f32 %v6768, %v7636
    %v7638 = vpop.f32.mrb[0].mxu0
    %v7639 = vadd.f32 %v6770, %v7638
    %7640 = vmatprep.mubr.bf16.mxu0 %v3479
    %7641 = vmatmul.mubr.bf16.gmra.mrb[0].mxu0 %v3478
    %v7642 = vpop.f32.mrb[0].mxu0
    %v7643 = vadd.f32 %v6774, %v7642
    %v7644 = vpop.f32.mrb[0].mxu0
    %v7645 = vadd.f32 %v6776, %v7644
    %v7646 = vpop.f32.mrb[0].mxu0
    %v7647 = vadd.f32 %v6778, %v7646
    %v7648 = vpop.f32.mrb[0].mxu0
    %v7649 = vadd.f32 %v6780, %v7648
    %7650 = vdwg.mxu0
    %7651 = vmatprep.subr.bf16.mxu0 %v7389
    %7652 = vmatpush1.bf16.msra.mxu0 %v7388
    %7653 = vmatprep.subr.bf16.mxu0 %v7393
    %7654 = vmatpush1.bf16.msra.mxu0 %v7392
    %7655 = vmatprep.subr.bf16.mxu0 %v7397
    %7656 = vmatpush1.bf16.msra.mxu0 %v7396
    %7657 = vmatprep.subr.bf16.mxu0 %v7401
    %7658 = vmatpush1.bf16.msra.mxu0 %v7400
    %7659 = vmatprep.subr.bf16.mxu0 %v7405
    %7660 = vmatpush1.bf16.msra.mxu0 %v7404
    %7661 = vmatprep.subr.bf16.mxu0 %v7409
    %7662 = vmatpush1.bf16.msra.mxu0 %v7408
    %7663 = vmatprep.subr.bf16.mxu0 %v7413
    %7664 = vmatpush1.bf16.msra.mxu0 %v7412
    %7665 = vmatprep.subr.bf16.mxu0 %v7417
    %7666 = vmatpush1.bf16.msra.mxu0 %v7416
    %7667 = vmatprep.subr.bf16.mxu0 %v7421
    %7668 = vmatpush1.bf16.msra.mxu0 %v7420
    %7669 = vmatprep.subr.bf16.mxu0 %v7425
    %7670 = vmatpush1.bf16.msra.mxu0 %v7424
    %7671 = vmatprep.subr.bf16.mxu0 %v7429
    %7672 = vmatpush1.bf16.msra.mxu0 %v7428
    %7673 = vmatprep.subr.bf16.mxu0 %v7433
    %7674 = vmatpush1.bf16.msra.mxu0 %v7432
    %7675 = vmatprep.subr.bf16.mxu0 0
    %7676 = vmatpush1.bf16.msra.mxu0 0
    %7677 = vmatprep.subr.bf16.mxu0 0
    %7678 = vmatpush1.bf16.msra.mxu0 0
    %7679 = vmatprep.subr.bf16.mxu0 0
    %7680 = vmatpush1.bf16.msra.mxu0 0
    %7681 = vmatprep.subr.bf16.mxu0 0
    %7682 = vmatpush1.bf16.msra.mxu0 0
    %7683 = vmatprep.mubr.bf16.mxu0 %v4064
    %7684 = vmatmul.mubr.bf16.gmra.mrb[0].mxu0 %v3456
    %v7685 = vpop.f32.mrb[0].mxu0
    %v7686 = vadd.f32 %v7583, %v7685
    %v7687 = vpop.f32.mrb[0].mxu0
    %v7688 = vadd.f32 %v7585, %v7687
    %v7689 = vpop.f32.mrb[0].mxu0
    %v7690 = vadd.f32 %v7587, %v7689
    %v7691 = vpop.f32.mrb[0].mxu0
    %v7692 = vadd.f32 %v7589, %v7691
    %7693 = vmatprep.mubr.bf16.mxu0 %v4067
    %7694 = vmatmul.mubr.bf16.gmra.mrb[0].mxu0 %v3460
    %v7695 = vpop.f32.mrb[0].mxu0
    %v7696 = vadd.f32 %v7593, %v7695
    %v7697 = vpop.f32.mrb[0].mxu0
    %v7698 = vadd.f32 %v7595, %v7697
    %v7699 = vpop.f32.mrb[0].mxu0
    %v7700 = vadd.f32 %v7597, %v7699
    %v7701 = vpop.f32.mrb[0].mxu0
    %v7702 = vadd.f32 %v7599, %v7701
    %7703 = vmatprep.mubr.bf16.mxu0 %v4070
    %7704 = vmatmul.mubr.bf16.gmra.mrb[0].mxu0 %v3464
    %v7705 = vpop.f32.mrb[0].mxu0
    %v7706 = vadd.f32 %v7603, %v7705
    %v7707 = vpop.f32.mrb[0].mxu0
    %v7708 = vadd.f32 %v7605, %v7707
    %v7709 = vpop.f32.mrb[0].mxu0
    %v7710 = vadd.f32 %v7607, %v7709
    %v7711 = vpop.f32.mrb[0].mxu0
    %v7712 = vadd.f32 %v7609, %v7711
    %7713 = vmatprep.mubr.bf16.mxu0 %v4073
    %7714 = vmatmul.mubr.bf16.gmra.mrb[0].mxu0 %v3468
    %v7715 = vpop.f32.mrb[0].mxu0
    %v7716 = vadd.f32 %v7613, %v7715
    %v7717 = vpop.f32.mrb[0].mxu0
    %v7718 = vadd.f32 %v7615, %v7717
    %v7719 = vpop.f32.mrb[0].mxu0
    %v7720 = vadd.f32 %v7617, %v7719
    %v7721 = vpop.f32.mrb[0].mxu0
    %v7722 = vadd.f32 %v7619, %v7721
    %7723 = vmatprep.mubr.bf16.mxu0 %v4076
    %7724 = vmatmul.mubr.bf16.gmra.mrb[0].mxu0 %v3472
    %v7725 = vpop.f32.mrb[0].mxu0
    %v7726 = vadd.f32 %v7623, %v7725
    %v7727 = vpop.f32.mrb[0].mxu0
    %v7728 = vadd.f32 %v7625, %v7727
    %v7729 = vpop.f32.mrb[0].mxu0
    %v7730 = vadd.f32 %v7627, %v7729
    %v7731 = vpop.f32.mrb[0].mxu0
    %v7732 = vadd.f32 %v7629, %v7731
    %7733 = vmatprep.mubr.bf16.mxu0 %v4079
    %7734 = vmatmul.mubr.bf16.gmra.mrb[0].mxu0 %v3476
    %v7735 = vpop.f32.mrb[0].mxu0
    %v7736 = vadd.f32 %v7633, %v7735
    %v7737 = vpop.f32.mrb[0].mxu0
    %v7738 = vadd.f32 %v7635, %v7737
    %v7739 = vpop.f32.mrb[0].mxu0
    %v7740 = vadd.f32 %v7637, %v7739
    %v7741 = vpop.f32.mrb[0].mxu0
    %v7742 = vadd.f32 %v7639, %v7741
    %7743 = vmatprep.mubr.bf16.mxu0 %v4082
    %7744 = vmatmul.mubr.bf16.gmra.mrb[0].mxu0 %v3480
    %v7745 = vpop.f32.mrb[0].mxu0
    %v7746 = vadd.f32 %v7643, %v7745
    %v7747 = vpop.f32.mrb[0].mxu0
    %v7748 = vadd.f32 %v7645, %v7747
    %v7749 = vpop.f32.mrb[0].mxu0
    %v7750 = vadd.f32 %v7647, %v7749
    %v7751 = vpop.f32.mrb[0].mxu0
    %v7752 = vadd.f32 %v7649, %v7751
    %7753 = vdwg.mxu0
    %7754 = vmatprep.subr.bf16.mxu0 %v7327
    %7755 = vmatpush1.bf16.msra.mxu0 %v7326
    %7756 = vmatprep.subr.bf16.mxu0 %v7331
    %7757 = vmatpush1.bf16.msra.mxu0 %v7330
    %7758 = vmatprep.subr.bf16.mxu0 %v7335
    %7759 = vmatpush1.bf16.msra.mxu0 %v7334
    %7760 = vmatprep.subr.bf16.mxu0 %v7339
    %7761 = vmatpush1.bf16.msra.mxu0 %v7338
    %7762 = vmatprep.subr.bf16.mxu0 %v7343
    %7763 = vmatpush1.bf16.msra.mxu0 %v7342
    %7764 = vmatprep.subr.bf16.mxu0 %v7347
    %7765 = vmatpush1.bf16.msra.mxu0 %v7346
    %7766 = vmatprep.subr.bf16.mxu0 %v7351
    %7767 = vmatpush1.bf16.msra.mxu0 %v7350
    %7768 = vmatprep.subr.bf16.mxu0 %v7355
    %7769 = vmatpush1.bf16.msra.mxu0 %v7354
    %7770 = vmatprep.subr.bf16.mxu0 %v7359
    %7771 = vmatpush1.bf16.msra.mxu0 %v7358
    %7772 = vmatprep.subr.bf16.mxu0 %v7363
    %7773 = vmatpush1.bf16.msra.mxu0 %v7362
    %7774 = vmatprep.subr.bf16.mxu0 %v7367
    %7775 = vmatpush1.bf16.msra.mxu0 %v7366
    %7776 = vmatprep.subr.bf16.mxu0 %v7371
    %7777 = vmatpush1.bf16.msra.mxu0 %v7370
    %7778 = vmatprep.subr.bf16.mxu0 %v7375
    %7779 = vmatpush1.bf16.msra.mxu0 %v7374
    %7780 = vmatprep.subr.bf16.mxu0 %v7379
    %7781 = vmatpush1.bf16.msra.mxu0 %v7378
    %7782 = vmatprep.subr.bf16.mxu0 %v7383
    %7783 = vmatpush1.bf16.msra.mxu0 %v7382
    %7784 = vmatprep.subr.bf16.mxu0 %v7387
    %7785 = vmatpush1.bf16.msra.mxu0 %v7386
    %7786 = vmatprep.mubr.bf16.mxu0 %v3455
    %7787 = vmatmul.mubr.bf16.gmra.mrb[0].mxu0 %v3454
    %v7788 = vpop.f32.mrb[0].mxu0
    %v7789 = vadd.f32 %v6920, %v7788
    %v7790 = vpop.f32.mrb[0].mxu0
    %v7791 = vadd.f32 %v6922, %v7790
    %v7792 = vpop.f32.mrb[0].mxu0
    %v7793 = vadd.f32 %v6924, %v7792
    %v7794 = vpop.f32.mrb[0].mxu0
    %v7795 = vadd.f32 %v6926, %v7794
    %7796 = vmatprep.mubr.bf16.mxu0 %v3459
    %7797 = vmatmul.mubr.bf16.gmra.mrb[0].mxu0 %v3458
    %v7798 = vpop.f32.mrb[0].mxu0
    %v7799 = vadd.f32 %v6930, %v7798
    %v7800 = vpop.f32.mrb[0].mxu0
    %v7801 = vadd.f32 %v6932, %v7800
    %v7802 = vpop.f32.mrb[0].mxu0
    %v7803 = vadd.f32 %v6934, %v7802
    %v7804 = vpop.f32.mrb[0].mxu0
    %v7805 = vadd.f32 %v6936, %v7804
    %7806 = vmatprep.mubr.bf16.mxu0 %v3463
    %7807 = vmatmul.mubr.bf16.gmra.mrb[0].mxu0 %v3462
    %v7808 = vpop.f32.mrb[0].mxu0
    %v7809 = vadd.f32 %v6940, %v7808
    %v7810 = vpop.f32.mrb[0].mxu0
    %v7811 = vadd.f32 %v6942, %v7810
    %v7812 = vpop.f32.mrb[0].mxu0
    %v7813 = vadd.f32 %v6944, %v7812
    %v7814 = vpop.f32.mrb[0].mxu0
    %v7815 = vadd.f32 %v6946, %v7814
    %7816 = vmatprep.mubr.bf16.mxu0 %v3467
    %7817 = vmatmul.mubr.bf16.gmra.mrb[0].mxu0 %v3466
    %v7818 = vpop.f32.mrb[0].mxu0
    %v7819 = vadd.f32 %v6950, %v7818
    %v7820 = vpop.f32.mrb[0].mxu0
    %v7821 = vadd.f32 %v6952, %v7820
    %v7822 = vpop.f32.mrb[0].mxu0
    %v7823 = vadd.f32 %v6954, %v7822
    %v7824 = vpop.f32.mrb[0].mxu0
    %v7825 = vadd.f32 %v6956, %v7824
    %7826 = vmatprep.mubr.bf16.mxu0 %v3471
    %7827 = vmatmul.mubr.bf16.gmra.mrb[0].mxu0 %v3470
    %v7828 = vpop.f32.mrb[0].mxu0
    %v7829 = vadd.f32 %v6960, %v7828
    %v7830 = vpop.f32.mrb[0].mxu0
    %v7831 = vadd.f32 %v6962, %v7830
    %v7832 = vpop.f32.mrb[0].mxu0
    %v7833 = vadd.f32 %v6964, %v7832
    %v7834 = vpop.f32.mrb[0].mxu0
    %v7835 = vadd.f32 %v6966, %v7834
    %7836 = vmatprep.mubr.bf16.mxu0 %v3475
    %7837 = vmatmul.mubr.bf16.gmra.mrb[0].mxu0 %v3474
    %v7838 = vpop.f32.mrb[0].mxu0
    %v7839 = vadd.f32 %v6970, %v7838
    %v7840 = vpop.f32.mrb[0].mxu0
    %v7841 = vadd.f32 %v6972, %v7840
    %v7842 = vpop.f32.mrb[0].mxu0
    %v7843 = vadd.f32 %v6974, %v7842
    %v7844 = vpop.f32.mrb[0].mxu0
    %v7845 = vadd.f32 %v6976, %v7844
    %7846 = vmatprep.mubr.bf16.mxu0 %v3479
    %7847 = vmatmul.mubr.bf16.gmra.mrb[0].mxu0 %v3478
    %v7848 = vpop.f32.mrb[0].mxu0
    %v7849 = vadd.f32 %v6980, %v7848
    %v7850 = vpop.f32.mrb[0].mxu0
    %v7851 = vadd.f32 %v6982, %v7850
    %v7852 = vpop.f32.mrb[0].mxu0
    %v7853 = vadd.f32 %v6984, %v7852
    %v7854 = vpop.f32.mrb[0].mxu0
    %v7855 = vadd.f32 %v6986, %v7854
    %7856 = vdwg.mxu0
    %7857 = vmatprep.subr.bf16.mxu0 %v7391
    %7858 = vmatpush1.bf16.msra.mxu0 %v7390
    %7859 = vmatprep.subr.bf16.mxu0 %v7395
    %7860 = vmatpush1.bf16.msra.mxu0 %v7394
    %7861 = vmatprep.subr.bf16.mxu0 %v7399
    %7862 = vmatpush1.bf16.msra.mxu0 %v7398
    %7863 = vmatprep.subr.bf16.mxu0 %v7403
    %7864 = vmatpush1.bf16.msra.mxu0 %v7402
    %7865 = vmatprep.subr.bf16.mxu0 %v7407
    %7866 = vmatpush1.bf16.msra.mxu0 %v7406
    %7867 = vmatprep.subr.bf16.mxu0 %v7411
    %7868 = vmatpush1.bf16.msra.mxu0 %v7410
    %7869 = vmatprep.subr.bf16.mxu0 %v7415
    %7870 = vmatpush1.bf16.msra.mxu0 %v7414
    %7871 = vmatprep.subr.bf16.mxu0 %v7419
    %7872 = vmatpush1.bf16.msra.mxu0 %v7418
    %7873 = vmatprep.subr.bf16.mxu0 %v7423
    %7874 = vmatpush1.bf16.msra.mxu0 %v7422
    %7875 = vmatprep.subr.bf16.mxu0 %v7427
    %7876 = vmatpush1.bf16.msra.mxu0 %v7426
    %7877 = vmatprep.subr.bf16.mxu0 %v7431
    %7878 = vmatpush1.bf16.msra.mxu0 %v7430
    %7879 = vmatprep.subr.bf16.mxu0 %v7435
    %7880 = vmatpush1.bf16.msra.mxu0 %v7434
    %7881 = vmatprep.subr.bf16.mxu0 0
    %7882 = vmatpush1.bf16.msra.mxu0 0
    %7883 = vmatprep.subr.bf16.mxu0 0
    %7884 = vmatpush1.bf16.msra.mxu0 0
    %7885 = vmatprep.subr.bf16.mxu0 0
    %7886 = vmatpush1.bf16.msra.mxu0 0
    %7887 = vmatprep.subr.bf16.mxu0 0
    %7888 = vmatpush1.bf16.msra.mxu0 0
    %7889 = vmatprep.mubr.bf16.mxu0 %v4064
    %7890 = vmatmul.mubr.bf16.gmra.mrb[0].mxu0 %v3456
    %v7891 = vpop.f32.mrb[0].mxu0
    %v7892 = vadd.f32 %v7789, %v7891
    %v7893 = vpop.f32.mrb[0].mxu0
    %v7894 = vadd.f32 %v7791, %v7893
    %v7895 = vpop.f32.mrb[0].mxu0
    %v7896 = vadd.f32 %v7793, %v7895
    %v7897 = vpop.f32.mrb[0].mxu0
    %v7898 = vadd.f32 %v7795, %v7897
    %7899 = vmatprep.mubr.bf16.mxu0 %v4067
    %7900 = vmatmul.mubr.bf16.gmra.mrb[0].mxu0 %v3460
    %v7901 = vpop.f32.mrb[0].mxu0
    %v7902 = vadd.f32 %v7799, %v7901
    %v7903 = vpop.f32.mrb[0].mxu0
    %v7904 = vadd.f32 %v7801, %v7903
    %v7905 = vpop.f32.mrb[0].mxu0
    %v7906 = vadd.f32 %v7803, %v7905
    %v7907 = vpop.f32.mrb[0].mxu0
    %v7908 = vadd.f32 %v7805, %v7907
    %7909 = vmatprep.mubr.bf16.mxu0 %v4070
    %7910 = vmatmul.mubr.bf16.gmra.mrb[0].mxu0 %v3464
    %v7911 = vpop.f32.mrb[0].mxu0
    %v7912 = vadd.f32 %v7809, %v7911
    %v7913 = vpop.f32.mrb[0].mxu0
    %v7914 = vadd.f32 %v7811, %v7913
    %v7915 = vpop.f32.mrb[0].mxu0
    %v7916 = vadd.f32 %v7813, %v7915
    %v7917 = vpop.f32.mrb[0].mxu0
    %v7918 = vadd.f32 %v7815, %v7917
    %7919 = vmatprep.mubr.bf16.mxu0 %v4073
    %7920 = vmatmul.mubr.bf16.gmra.mrb[0].mxu0 %v3468
    %v7921 = vpop.f32.mrb[0].mxu0
    %v7922 = vadd.f32 %v7819, %v7921
    %v7923 = vpop.f32.mrb[0].mxu0
    %v7924 = vadd.f32 %v7821, %v7923
    %v7925 = vpop.f32.mrb[0].mxu0
    %v7926 = vadd.f32 %v7823, %v7925
    %v7927 = vpop.f32.mrb[0].mxu0
    %v7928 = vadd.f32 %v7825, %v7927
    %7929 = vmatprep.mubr.bf16.mxu0 %v4076
    %7930 = vmatmul.mubr.bf16.gmra.mrb[0].mxu0 %v3472
    %v7931 = vpop.f32.mrb[0].mxu0
    %v7932 = vadd.f32 %v7829, %v7931
    %v7933 = vpop.f32.mrb[0].mxu0
    %v7934 = vadd.f32 %v7831, %v7933
    %v7935 = vpop.f32.mrb[0].mxu0
    %v7936 = vadd.f32 %v7833, %v7935
    %v7937 = vpop.f32.mrb[0].mxu0
    %v7938 = vadd.f32 %v7835, %v7937
    %7939 = vmatprep.mubr.bf16.mxu0 %v4079
    %7940 = vmatmul.mubr.bf16.gmra.mrb[0].mxu0 %v3476
    %v7941 = vpop.f32.mrb[0].mxu0
    %v7942 = vadd.f32 %v7839, %v7941
    %v7943 = vpop.f32.mrb[0].mxu0
    %v7944 = vadd.f32 %v7841, %v7943
    %v7945 = vpop.f32.mrb[0].mxu0
    %v7946 = vadd.f32 %v7843, %v7945
    %v7947 = vpop.f32.mrb[0].mxu0
    %v7948 = vadd.f32 %v7845, %v7947
    %7949 = vmatprep.mubr.bf16.mxu0 %v4082
    %7950 = vmatmul.mubr.bf16.gmra.mrb[0].mxu0 %v3480
    %v7951 = vpop.f32.mrb[0].mxu0
    %v7952 = vadd.f32 %v7849, %v7951
    %v7953 = vpop.f32.mrb[0].mxu0
    %v7954 = vadd.f32 %v7851, %v7953
    %v7955 = vpop.f32.mrb[0].mxu0
    %v7956 = vadd.f32 %v7853, %v7955
    %v7957 = vpop.f32.mrb[0].mxu0
    %v7958 = vadd.f32 %v7855, %v7957
    %7959 = vdwg.mxu0
    %s7960 = scalar_lea.vmem [#allocation10], 1792
    %v7961 = vld [vmem:[%s7960] sm:$0xff]
    %v7962 = vld [vmem:[%s7960 + $0x8] sm:$0xff]
    %v7963 = vld [vmem:[%s7960 + $0x10] sm:$0xff]
    %v7964 = vld [vmem:[%s7960 + $0x18] sm:$0xff]
    %v7965 = vld [vmem:[%s7960 + $0x20] sm:$0xff]
    %v7966 = vld [vmem:[%s7960 + $0x28] sm:$0xff]
    %v7967 = vld [vmem:[%s7960 + $0x30] sm:$0xff]
    %v7968 = vld [vmem:[%s7960 + $0x38] sm:$0xff]
    %v7969 = vld [vmem:[%s7960 + $0x40] sm:$0xff]
    %v7970 = vld [vmem:[%s7960 + $0x48] sm:$0xff]
    %v7971 = vld [vmem:[%s7960 + $0x50] sm:$0xff]
    %v7972 = vld [vmem:[%s7960 + $0x58] sm:$0xff]
    %v7973 = vld [vmem:[%s7960 + $0x60] sm:$0xff]
    %v7974 = vld [vmem:[%s7960 + $0x68] sm:$0xff]
    %v7975 = vld [vmem:[%s7960 + $0x70] sm:$0xff]
    %v7976 = vld [vmem:[%s7960 + $0x78] sm:$0xff]
    %v7977 = vld [vmem:[%s7960 + $0x80] sm:$0xff]
    %v7978 = vld [vmem:[%s7960 + $0x88] sm:$0xff]
    %v7979 = vld [vmem:[%s7960 + $0x90] sm:$0xff]
    %v7980 = vld [vmem:[%s7960 + $0x98] sm:$0xff]
    %v7981 = vld [vmem:[%s7960 + $0xa0] sm:$0xff]
    %v7982 = vld [vmem:[%s7960 + $0xa8] sm:$0xff]
    %v7983 = vld [vmem:[%s7960 + $0xb0] sm:$0xff]
    %v7984 = vld [vmem:[%s7960 + $0xb8] sm:$0xff]
    %v7985 = vld [vmem:[%s7960 + $0xc0] sm:$0xff]
    %v7986 = vld [vmem:[%s7960 + $0xc8] sm:$0xff]
    %v7987 = vld [vmem:[%s7960 + $0xd0] sm:$0xff]
    %v7988 = vld [vmem:[%s7960 + $0xd8] sm:$0xff]
    %v7989 = vld [vmem:[%s7960 + $0xe0] sm:$0xff]
    %v7990 = vld [vmem:[%s7960 + $0xe8] sm:$0xff]
    %v7991 = vld [vmem:[%s7960 + $0xf0] sm:$0xff]
    %v7992 = vld [vmem:[%s7960 + $0xf8] sm:$0xff]
    %v7993 = vld [vmem:[%s7960 + $0x100] sm:$0xff]
    %v7994 = vld [vmem:[%s7960 + $0x108] sm:$0xff]
    %v7995 = vld [vmem:[%s7960 + $0x110] sm:$0xff]
    %v7996 = vld [vmem:[%s7960 + $0x118] sm:$0xff]
    %v7997 = vld [vmem:[%s7960 + $0x120] sm:$0xff]
    %v7998 = vld [vmem:[%s7960 + $0x128] sm:$0xff]
    %v7999 = vld [vmem:[%s7960 + $0x130] sm:$0xff]
    %v8000 = vld [vmem:[%s7960 + $0x138] sm:$0xff]
    %v8001 = vld [vmem:[%s7960 + $0x140] sm:$0xff]
    %v8002 = vld [vmem:[%s7960 + $0x148] sm:$0xff]
    %v8003 = vld [vmem:[%s7960 + $0x150] sm:$0xff]
    %v8004 = vld [vmem:[%s7960 + $0x158] sm:$0xff]
    %v8005 = vld [vmem:[%s7960 + $0x160] sm:$0xff]
    %v8006 = vld [vmem:[%s7960 + $0x168] sm:$0xff]
    %v8007 = vld [vmem:[%s7960 + $0x170] sm:$0xff]
    %v8008 = vld [vmem:[%s7960 + $0x178] sm:$0xff]
    %v8009 = vld [vmem:[%s7960 + $0x180] sm:$0xff]
    %v8010 = vld [vmem:[%s7960 + $0x188] sm:$0xff]
    %v8011 = vld [vmem:[%s7960 + $0x190] sm:$0xff]
    %v8012 = vld [vmem:[%s7960 + $0x198] sm:$0xff]
    %v8013 = vld [vmem:[%s7960 + $0x1a0] sm:$0xff]
    %v8014 = vld [vmem:[%s7960 + $0x1a8] sm:$0xff]
    %v8015 = vld [vmem:[%s7960 + $0x1b0] sm:$0xff]
    %v8016 = vld [vmem:[%s7960 + $0x1b8] sm:$0xff]
    %v8017 = vld [vmem:[%s7960 + $0x1c0] sm:$0xff]
    %v8018 = vld [vmem:[%s7960 + $0x1c8] sm:$0xff]
    %v8019 = vld [vmem:[%s7960 + $0x1d0] sm:$0xff]
    %v8020 = vld [vmem:[%s7960 + $0x1d8] sm:$0xff]
    %v8021 = vld [vmem:[%s7960 + $0x1e0] sm:$0xff]
    %v8022 = vld [vmem:[%s7960 + $0x1e8] sm:$0xff]
    %v8023 = vld [vmem:[%s7960 + $0x1f0] sm:$0xff]
    %v8024 = vld [vmem:[%s7960 + $0x1f8] sm:$0xff]
    %v8025 = vld [vmem:[%s7960 + $0x200] sm:$0xff]
    %v8026 = vld [vmem:[%s7960 + $0x208] sm:$0xff]
    %v8027 = vld [vmem:[%s7960 + $0x210] sm:$0xff]
    %v8028 = vld [vmem:[%s7960 + $0x218] sm:$0xff]
    %v8029 = vld [vmem:[%s7960 + $0x220] sm:$0xff]
    %v8030 = vld [vmem:[%s7960 + $0x228] sm:$0xff]
    %v8031 = vld [vmem:[%s7960 + $0x230] sm:$0xff]
    %v8032 = vld [vmem:[%s7960 + $0x238] sm:$0xff]
    %v8033 = vld [vmem:[%s7960 + $0x240] sm:$0xff]
    %v8034 = vld [vmem:[%s7960 + $0x248] sm:$0xff]
    %v8035 = vld [vmem:[%s7960 + $0x250] sm:$0xff]
    %v8036 = vld [vmem:[%s7960 + $0x258] sm:$0xff]
    %v8037 = vld [vmem:[%s7960 + $0x260] sm:$0xff]
    %v8038 = vld [vmem:[%s7960 + $0x268] sm:$0xff]
    %v8039 = vld [vmem:[%s7960 + $0x270] sm:$0xff]
    %v8040 = vld [vmem:[%s7960 + $0x278] sm:$0xff]
    %v8041 = vld [vmem:[%s7960 + $0x280] sm:$0xff]
    %v8042 = vld [vmem:[%s7960 + $0x288] sm:$0xff]
    %v8043 = vld [vmem:[%s7960 + $0x290] sm:$0xff]
    %v8044 = vld [vmem:[%s7960 + $0x298] sm:$0xff]
    %v8045 = vld [vmem:[%s7960 + $0x2a0] sm:$0xff]
    %v8046 = vld [vmem:[%s7960 + $0x2a8] sm:$0xff]
    %v8047 = vld [vmem:[%s7960 + $0x2b0] sm:$0xff]
    %v8048 = vld [vmem:[%s7960 + $0x2b8] sm:$0xff]
    %v8049 = vld [vmem:[%s7960 + $0x2c0] sm:$0xff]
    %v8050 = vld [vmem:[%s7960 + $0x2c8] sm:$0xff]
    %v8051 = vld [vmem:[%s7960 + $0x2d0] sm:$0xff]
    %v8052 = vld [vmem:[%s7960 + $0x2d8] sm:$0xff]
    %v8053 = vld [vmem:[%s7960 + $0x2e0] sm:$0xff]
    %v8054 = vld [vmem:[%s7960 + $0x2e8] sm:$0xff]
    %v8055 = vld [vmem:[%s7960 + $0x2f0] sm:$0xff]
    %v8056 = vld [vmem:[%s7960 + $0x2f8] sm:$0xff]
    %v8057 = vld [vmem:[%s7960 + $0x300] sm:$0xff]
    %v8058 = vld [vmem:[%s7960 + $0x308] sm:$0xff]
    %v8059 = vld [vmem:[%s7960 + $0x310] sm:$0xff]
    %v8060 = vld [vmem:[%s7960 + $0x318] sm:$0xff]
    %v8061 = vld [vmem:[%s7960 + $0x320] sm:$0xff]
    %v8062 = vld [vmem:[%s7960 + $0x328] sm:$0xff]
    %v8063 = vld [vmem:[%s7960 + $0x330] sm:$0xff]
    %v8064 = vld [vmem:[%s7960 + $0x338] sm:$0xff]
    %v8065 = vld [vmem:[%s7960 + $0x340] sm:$0xff]
    %v8066 = vld [vmem:[%s7960 + $0x348] sm:$0xff]
    %v8067 = vld [vmem:[%s7960 + $0x350] sm:$0xff]
    %v8068 = vld [vmem:[%s7960 + $0x358] sm:$0xff]
    %v8069 = vld [vmem:[%s7960 + $0x360] sm:$0xff]
    %v8070 = vld [vmem:[%s7960 + $0x368] sm:$0xff]
    %v8071 = vld [vmem:[%s7960 + $0x370] sm:$0xff]
    %v8072 = vld [vmem:[%s7960 + $0x378] sm:$0xff]
    %v8185 = vunpack.c.l.b16 %v7961
    %v8186 = vunpack.c.h.b16 %v7961
    %v8187 = vunpack.c.l.b16 %v7962
    %v8188 = vunpack.c.h.b16 %v7962
    %v8189 = vunpack.c.l.b16 %v7963
    %v8190 = vunpack.c.h.b16 %v7963
    %v8191 = vunpack.c.l.b16 %v7964
    %v8192 = vunpack.c.h.b16 %v7964
    %v8193 = vunpack.c.l.b16 %v7965
    %v8194 = vunpack.c.h.b16 %v7965
    %v8195 = vunpack.c.l.b16 %v7966
    %v8196 = vunpack.c.h.b16 %v7966
    %v8197 = vunpack.c.l.b16 %v7967
    %v8198 = vunpack.c.h.b16 %v7967
    %v8199 = vunpack.c.l.b16 %v7968
    %v8200 = vunpack.c.h.b16 %v7968
    %v8201 = vunpack.c.l.b16 %v7969
    %v8202 = vunpack.c.h.b16 %v7969
    %v8203 = vunpack.c.l.b16 %v7970
    %v8204 = vunpack.c.h.b16 %v7970
    %v8205 = vunpack.c.l.b16 %v7971
    %v8206 = vunpack.c.h.b16 %v7971
    %v8207 = vunpack.c.l.b16 %v7972
    %v8208 = vunpack.c.h.b16 %v7972
    %v8209 = vunpack.c.l.b16 %v7973
    %v8210 = vunpack.c.h.b16 %v7973
    %v8211 = vunpack.c.l.b16 %v7974
    %v8212 = vunpack.c.h.b16 %v7974
    %v8213 = vunpack.c.l.b16 %v7975
    %v8214 = vunpack.c.h.b16 %v7975
    %v8215 = vunpack.c.l.b16 %v7976
    %v8216 = vunpack.c.h.b16 %v7976
    %v8217 = vunpack.c.l.b16 %v7977
    %v8218 = vunpack.c.h.b16 %v7977
    %v8219 = vunpack.c.l.b16 %v7978
    %v8220 = vunpack.c.h.b16 %v7978
    %v8221 = vunpack.c.l.b16 %v7979
    %v8222 = vunpack.c.h.b16 %v7979
    %v8223 = vunpack.c.l.b16 %v7980
    %v8224 = vunpack.c.h.b16 %v7980
    %v8225 = vunpack.c.l.b16 %v7981
    %v8226 = vunpack.c.h.b16 %v7981
    %v8227 = vunpack.c.l.b16 %v7982
    %v8228 = vunpack.c.h.b16 %v7982
    %v8229 = vunpack.c.l.b16 %v7983
    %v8230 = vunpack.c.h.b16 %v7983
    %v8231 = vunpack.c.l.b16 %v7984
    %v8232 = vunpack.c.h.b16 %v7984
    %v8233 = vunpack.c.l.b16 %v7985
    %v8234 = vunpack.c.h.b16 %v7985
    %v8235 = vunpack.c.l.b16 %v7986
    %v8236 = vunpack.c.h.b16 %v7986
    %v8237 = vunpack.c.l.b16 %v7987
    %v8238 = vunpack.c.h.b16 %v7987
    %v8239 = vunpack.c.l.b16 %v7988
    %v8240 = vunpack.c.h.b16 %v7988
    %v8241 = vunpack.c.l.b16 %v7989
    %v8242 = vunpack.c.h.b16 %v7989
    %v8243 = vunpack.c.l.b16 %v7990
    %v8244 = vunpack.c.h.b16 %v7990
    %v8245 = vunpack.c.l.b16 %v7991
    %v8246 = vunpack.c.h.b16 %v7991
    %v8247 = vunpack.c.l.b16 %v7992
    %v8248 = vunpack.c.h.b16 %v7992
    %v8249 = vunpack.c.l.b16 %v7993
    %v8250 = vunpack.c.h.b16 %v7993
    %v8251 = vunpack.c.l.b16 %v7994
    %v8252 = vunpack.c.h.b16 %v7994
    %v8253 = vunpack.c.l.b16 %v7995
    %v8254 = vunpack.c.h.b16 %v7995
    %v8255 = vunpack.c.l.b16 %v7996
    %v8256 = vunpack.c.h.b16 %v7996
    %v8257 = vunpack.c.l.b16 %v7997
    %v8258 = vunpack.c.h.b16 %v7997
    %v8259 = vunpack.c.l.b16 %v7998
    %v8260 = vunpack.c.h.b16 %v7998
    %v8261 = vunpack.c.l.b16 %v7999
    %v8262 = vunpack.c.h.b16 %v7999
    %v8263 = vunpack.c.l.b16 %v8000
    %v8264 = vunpack.c.h.b16 %v8000
    %v8265 = vunpack.c.l.b16 %v8001
    %v8266 = vunpack.c.h.b16 %v8001
    %v8267 = vunpack.c.l.b16 %v8002
    %v8268 = vunpack.c.h.b16 %v8002
    %v8269 = vunpack.c.l.b16 %v8003
    %v8270 = vunpack.c.h.b16 %v8003
    %v8271 = vunpack.c.l.b16 %v8004
    %v8272 = vunpack.c.h.b16 %v8004
    %v8273 = vunpack.c.l.b16 %v8005
    %v8274 = vunpack.c.h.b16 %v8005
    %v8275 = vunpack.c.l.b16 %v8006
    %v8276 = vunpack.c.h.b16 %v8006
    %v8277 = vunpack.c.l.b16 %v8007
    %v8278 = vunpack.c.h.b16 %v8007
    %v8279 = vunpack.c.l.b16 %v8008
    %v8280 = vunpack.c.h.b16 %v8008
    %v8281 = vunpack.c.l.b16 %v8009
    %v8282 = vunpack.c.h.b16 %v8009
    %v8283 = vunpack.c.l.b16 %v8010
    %v8284 = vunpack.c.h.b16 %v8010
    %v8285 = vunpack.c.l.b16 %v8011
    %v8286 = vunpack.c.h.b16 %v8011
    %v8287 = vunpack.c.l.b16 %v8012
    %v8288 = vunpack.c.h.b16 %v8012
    %v8289 = vunpack.c.l.b16 %v8013
    %v8290 = vunpack.c.h.b16 %v8013
    %v8291 = vunpack.c.l.b16 %v8014
    %v8292 = vunpack.c.h.b16 %v8014
    %v8293 = vunpack.c.l.b16 %v8015
    %v8294 = vunpack.c.h.b16 %v8015
    %v8295 = vunpack.c.l.b16 %v8016
    %v8296 = vunpack.c.h.b16 %v8016
    %v8297 = vunpack.c.l.b16 %v8017
    %v8298 = vunpack.c.h.b16 %v8017
    %v8299 = vunpack.c.l.b16 %v8018
    %v8300 = vunpack.c.h.b16 %v8018
    %v8301 = vunpack.c.l.b16 %v8019
    %v8302 = vunpack.c.h.b16 %v8019
    %v8303 = vunpack.c.l.b16 %v8020
    %v8304 = vunpack.c.h.b16 %v8020
    %v8305 = vunpack.c.l.b16 %v8021
    %v8306 = vunpack.c.h.b16 %v8021
    %v8307 = vunpack.c.l.b16 %v8022
    %v8308 = vunpack.c.h.b16 %v8022
    %v8309 = vunpack.c.l.b16 %v8023
    %v8310 = vunpack.c.h.b16 %v8023
    %v8311 = vunpack.c.l.b16 %v8024
    %v8312 = vunpack.c.h.b16 %v8024
    %v8313 = vunpack.c.l.b16 %v8025
    %v8314 = vunpack.c.h.b16 %v8025
    %v8315 = vunpack.c.l.b16 %v8026
    %v8316 = vunpack.c.h.b16 %v8026
    %v8317 = vunpack.c.l.b16 %v8027
    %v8318 = vunpack.c.h.b16 %v8027
    %v8319 = vunpack.c.l.b16 %v8028
    %v8320 = vunpack.c.h.b16 %v8028
    %v8321 = vunpack.c.l.b16 %v8029
    %v8322 = vunpack.c.h.b16 %v8029
    %v8323 = vunpack.c.l.b16 %v8030
    %v8324 = vunpack.c.h.b16 %v8030
    %v8325 = vunpack.c.l.b16 %v8031
    %v8326 = vunpack.c.h.b16 %v8031
    %v8327 = vunpack.c.l.b16 %v8032
    %v8328 = vunpack.c.h.b16 %v8032
    %v8329 = vunpack.c.l.b16 %v8033
    %v8330 = vunpack.c.h.b16 %v8033
    %v8331 = vunpack.c.l.b16 %v8034
    %v8332 = vunpack.c.h.b16 %v8034
    %v8333 = vunpack.c.l.b16 %v8035
    %v8334 = vunpack.c.h.b16 %v8035
    %v8335 = vunpack.c.l.b16 %v8036
    %v8336 = vunpack.c.h.b16 %v8036
    %v8337 = vunpack.c.l.b16 %v8037
    %v8338 = vunpack.c.h.b16 %v8037
    %v8339 = vunpack.c.l.b16 %v8038
    %v8340 = vunpack.c.h.b16 %v8038
    %v8341 = vunpack.c.l.b16 %v8039
    %v8342 = vunpack.c.h.b16 %v8039
    %v8343 = vunpack.c.l.b16 %v8040
    %v8344 = vunpack.c.h.b16 %v8040
    %v8345 = vunpack.c.l.b16 %v8041
    %v8346 = vunpack.c.h.b16 %v8041
    %v8347 = vunpack.c.l.b16 %v8042
    %v8348 = vunpack.c.h.b16 %v8042
    %v8349 = vunpack.c.l.b16 %v8043
    %v8350 = vunpack.c.h.b16 %v8043
    %v8351 = vunpack.c.l.b16 %v8044
    %v8352 = vunpack.c.h.b16 %v8044
    %v8353 = vunpack.c.l.b16 %v8045
    %v8354 = vunpack.c.h.b16 %v8045
    %v8355 = vunpack.c.l.b16 %v8046
    %v8356 = vunpack.c.h.b16 %v8046
    %v8357 = vunpack.c.l.b16 %v8047
    %v8358 = vunpack.c.h.b16 %v8047
    %v8359 = vunpack.c.l.b16 %v8048
    %v8360 = vunpack.c.h.b16 %v8048
    %v8361 = vunpack.c.l.b16 %v8049
    %v8362 = vunpack.c.h.b16 %v8049
    %v8363 = vunpack.c.l.b16 %v8050
    %v8364 = vunpack.c.h.b16 %v8050
    %v8365 = vunpack.c.l.b16 %v8051
    %v8366 = vunpack.c.h.b16 %v8051
    %v8367 = vunpack.c.l.b16 %v8052
    %v8368 = vunpack.c.h.b16 %v8052
    %v8369 = vunpack.c.l.b16 %v8053
    %v8370 = vunpack.c.h.b16 %v8053
    %v8371 = vunpack.c.l.b16 %v8054
    %v8372 = vunpack.c.h.b16 %v8054
    %v8373 = vunpack.c.l.b16 %v8055
    %v8374 = vunpack.c.h.b16 %v8055
    %v8375 = vunpack.c.l.b16 %v8056
    %v8376 = vunpack.c.h.b16 %v8056
    %v8377 = vunpack.c.l.b16 %v8057
    %v8378 = vunpack.c.h.b16 %v8057
    %v8379 = vunpack.c.l.b16 %v8058
    %v8380 = vunpack.c.h.b16 %v8058
    %v8381 = vunpack.c.l.b16 %v8059
    %v8382 = vunpack.c.h.b16 %v8059
    %v8383 = vunpack.c.l.b16 %v8060
    %v8384 = vunpack.c.h.b16 %v8060
    %v8385 = vunpack.c.l.b16 %v8061
    %v8386 = vunpack.c.h.b16 %v8061
    %v8387 = vunpack.c.l.b16 %v8062
    %v8388 = vunpack.c.h.b16 %v8062
    %v8389 = vunpack.c.l.b16 %v8063
    %v8390 = vunpack.c.h.b16 %v8063
    %v8391 = vunpack.c.l.b16 %v8064
    %v8392 = vunpack.c.h.b16 %v8064
    %v8393 = vunpack.c.l.b16 %v8065
    %v8394 = vunpack.c.h.b16 %v8065
    %v8395 = vunpack.c.l.b16 %v8066
    %v8396 = vunpack.c.h.b16 %v8066
    %v8397 = vunpack.c.l.b16 %v8067
    %v8398 = vunpack.c.h.b16 %v8067
    %v8399 = vunpack.c.l.b16 %v8068
    %v8400 = vunpack.c.h.b16 %v8068
    %v8401 = vunpack.c.l.b16 %v8069
    %v8402 = vunpack.c.h.b16 %v8069
    %v8403 = vunpack.c.l.b16 %v8070
    %v8404 = vunpack.c.h.b16 %v8070
    %v8405 = vunpack.c.l.b16 %v8071
    %v8406 = vunpack.c.h.b16 %v8071
    %v8407 = vunpack.c.l.b16 %v8072
    %v8408 = vunpack.c.h.b16 %v8072
    %v8409 = vpack.c.b16 %v8189, %v8185
    %v8410 = vpack.c.b16 %v8190, %v8186
    %v8411 = vpack.c.b16 %v8191, %v8187
    %v8412 = vpack.c.b16 %v8192, %v8188
    %v8413 = vpack.c.b16 %v8197, %v8193
    %v8414 = vpack.c.b16 %v8198, %v8194
    %v8415 = vpack.c.b16 %v8199, %v8195
    %v8416 = vpack.c.b16 %v8200, %v8196
    %v8417 = vpack.c.b16 %v8205, %v8201
    %v8418 = vpack.c.b16 %v8206, %v8202
    %v8419 = vpack.c.b16 %v8207, %v8203
    %v8420 = vpack.c.b16 %v8208, %v8204
    %v8421 = vpack.c.b16 %v8213, %v8209
    %v8422 = vpack.c.b16 %v8214, %v8210
    %v8423 = vpack.c.b16 %v8215, %v8211
    %v8424 = vpack.c.b16 %v8216, %v8212
    %v8425 = vpack.c.b16 %v8221, %v8217
    %v8426 = vpack.c.b16 %v8222, %v8218
    %v8427 = vpack.c.b16 %v8223, %v8219
    %v8428 = vpack.c.b16 %v8224, %v8220
    %v8429 = vpack.c.b16 %v8229, %v8225
    %v8430 = vpack.c.b16 %v8230, %v8226
    %v8431 = vpack.c.b16 %v8231, %v8227
    %v8432 = vpack.c.b16 %v8232, %v8228
    %v8433 = vpack.c.b16 %v8237, %v8233
    %v8434 = vpack.c.b16 %v8238, %v8234
    %v8435 = vpack.c.b16 %v8239, %v8235
    %v8436 = vpack.c.b16 %v8240, %v8236
    %v8437 = vpack.c.b16 %v8245, %v8241
    %v8438 = vpack.c.b16 %v8246, %v8242
    %v8439 = vpack.c.b16 %v8247, %v8243
    %v8440 = vpack.c.b16 %v8248, %v8244
    %v8441 = vpack.c.b16 %v8253, %v8249
    %v8442 = vpack.c.b16 %v8254, %v8250
    %v8443 = vpack.c.b16 %v8255, %v8251
    %v8444 = vpack.c.b16 %v8256, %v8252
    %v8445 = vpack.c.b16 %v8261, %v8257
    %v8446 = vpack.c.b16 %v8262, %v8258
    %v8447 = vpack.c.b16 %v8263, %v8259
    %v8448 = vpack.c.b16 %v8264, %v8260
    %v8449 = vpack.c.b16 %v8269, %v8265
    %v8450 = vpack.c.b16 %v8270, %v8266
    %v8451 = vpack.c.b16 %v8271, %v8267
    %v8452 = vpack.c.b16 %v8272, %v8268
    %v8453 = vpack.c.b16 %v8277, %v8273
    %v8454 = vpack.c.b16 %v8278, %v8274
    %v8455 = vpack.c.b16 %v8279, %v8275
    %v8456 = vpack.c.b16 %v8280, %v8276
    %v8457 = vpack.c.b16 %v8285, %v8281
    %v8458 = vpack.c.b16 %v8286, %v8282
    %v8459 = vpack.c.b16 %v8287, %v8283
    %v8460 = vpack.c.b16 %v8288, %v8284
    %v8461 = vpack.c.b16 %v8293, %v8289
    %v8462 = vpack.c.b16 %v8294, %v8290
    %v8463 = vpack.c.b16 %v8295, %v8291
    %v8464 = vpack.c.b16 %v8296, %v8292
    %v8465 = vpack.c.b16 %v8301, %v8297
    %v8466 = vpack.c.b16 %v8302, %v8298
    %v8467 = vpack.c.b16 %v8303, %v8299
    %v8468 = vpack.c.b16 %v8304, %v8300
    %v8469 = vpack.c.b16 %v8309, %v8305
    %v8470 = vpack.c.b16 %v8310, %v8306
    %v8471 = vpack.c.b16 %v8311, %v8307
    %v8472 = vpack.c.b16 %v8312, %v8308
    %v8473 = vpack.c.b16 %v8317, %v8313
    %v8474 = vpack.c.b16 %v8318, %v8314
    %v8475 = vpack.c.b16 %v8319, %v8315
    %v8476 = vpack.c.b16 %v8320, %v8316
    %v8477 = vpack.c.b16 %v8325, %v8321
    %v8478 = vpack.c.b16 %v8326, %v8322
    %v8479 = vpack.c.b16 %v8327, %v8323
    %v8480 = vpack.c.b16 %v8328, %v8324
    %v8481 = vpack.c.b16 %v8333, %v8329
    %v8482 = vpack.c.b16 %v8334, %v8330
    %v8483 = vpack.c.b16 %v8335, %v8331
    %v8484 = vpack.c.b16 %v8336, %v8332
    %v8485 = vpack.c.b16 %v8341, %v8337
    %v8486 = vpack.c.b16 %v8342, %v8338
    %v8487 = vpack.c.b16 %v8343, %v8339
    %v8488 = vpack.c.b16 %v8344, %v8340
    %v8489 = vpack.c.b16 %v8349, %v8345
    %v8490 = vpack.c.b16 %v8350, %v8346
    %v8491 = vpack.c.b16 %v8351, %v8347
    %v8492 = vpack.c.b16 %v8352, %v8348
    %v8493 = vpack.c.b16 %v8357, %v8353
    %v8494 = vpack.c.b16 %v8358, %v8354
    %v8495 = vpack.c.b16 %v8359, %v8355
    %v8496 = vpack.c.b16 %v8360, %v8356
    %v8497 = vpack.c.b16 %v8365, %v8361
    %v8498 = vpack.c.b16 %v8366, %v8362
    %v8499 = vpack.c.b16 %v8367, %v8363
    %v8500 = vpack.c.b16 %v8368, %v8364
    %v8501 = vpack.c.b16 %v8373, %v8369
    %v8502 = vpack.c.b16 %v8374, %v8370
    %v8503 = vpack.c.b16 %v8375, %v8371
    %v8504 = vpack.c.b16 %v8376, %v8372
    %v8505 = vpack.c.b16 %v8381, %v8377
    %v8506 = vpack.c.b16 %v8382, %v8378
    %v8507 = vpack.c.b16 %v8383, %v8379
    %v8508 = vpack.c.b16 %v8384, %v8380
    %v8509 = vpack.c.b16 %v8389, %v8385
    %v8510 = vpack.c.b16 %v8390, %v8386
    %v8511 = vpack.c.b16 %v8391, %v8387
    %v8512 = vpack.c.b16 %v8392, %v8388
    %v8513 = vpack.c.b16 %v8397, %v8393
    %v8514 = vpack.c.b16 %v8398, %v8394
    %v8515 = vpack.c.b16 %v8399, %v8395
    %v8516 = vpack.c.b16 %v8400, %v8396
    %v8517 = vpack.c.b16 %v8405, %v8401
    %v8518 = vpack.c.b16 %v8406, %v8402
    %v8519 = vpack.c.b16 %v8407, %v8403
    %v8520 = vpack.c.b16 %v8408, %v8404
    %8633 = vmatprep.subr.bf16.mxu0 %v8410
    %8634 = vmatpush1.bf16.msra.mxu0 %v8409
    %8635 = vmatprep.subr.bf16.mxu0 %v8414
    %8636 = vmatpush1.bf16.msra.mxu0 %v8413
    %8637 = vmatprep.subr.bf16.mxu0 %v8418
    %8638 = vmatpush1.bf16.msra.mxu0 %v8417
    %8639 = vmatprep.subr.bf16.mxu0 %v8422
    %8640 = vmatpush1.bf16.msra.mxu0 %v8421
    %8641 = vmatprep.subr.bf16.mxu0 %v8426
    %8642 = vmatpush1.bf16.msra.mxu0 %v8425
    %8643 = vmatprep.subr.bf16.mxu0 %v8430
    %8644 = vmatpush1.bf16.msra.mxu0 %v8429
    %8645 = vmatprep.subr.bf16.mxu0 %v8434
    %8646 = vmatpush1.bf16.msra.mxu0 %v8433
    %8647 = vmatprep.subr.bf16.mxu0 %v8438
    %8648 = vmatpush1.bf16.msra.mxu0 %v8437
    %8649 = vmatprep.subr.bf16.mxu0 %v8442
    %8650 = vmatpush1.bf16.msra.mxu0 %v8441
    %8651 = vmatprep.subr.bf16.mxu0 %v8446
    %8652 = vmatpush1.bf16.msra.mxu0 %v8445
    %8653 = vmatprep.subr.bf16.mxu0 %v8450
    %8654 = vmatpush1.bf16.msra.mxu0 %v8449
    %8655 = vmatprep.subr.bf16.mxu0 %v8454
    %8656 = vmatpush1.bf16.msra.mxu0 %v8453
    %8657 = vmatprep.subr.bf16.mxu0 %v8458
    %8658 = vmatpush1.bf16.msra.mxu0 %v8457
    %8659 = vmatprep.subr.bf16.mxu0 %v8462
    %8660 = vmatpush1.bf16.msra.mxu0 %v8461
    %8661 = vmatprep.subr.bf16.mxu0 %v8466
    %8662 = vmatpush1.bf16.msra.mxu0 %v8465
    %8663 = vmatprep.subr.bf16.mxu0 %v8470
    %8664 = vmatpush1.bf16.msra.mxu0 %v8469
    %8665 = vmatprep.mubr.bf16.mxu0 %v4694
    %8666 = vmatmul.mubr.bf16.gmra.mrb[0].mxu0 %v4693
    %v8667 = vpop.f32.mrb[0].mxu0
    %v8668 = vadd.f32 0.0, %v8667
    %v8669 = vpop.f32.mrb[0].mxu0
    %v8670 = vadd.f32 0.0, %v8669
    %v8671 = vpop.f32.mrb[0].mxu0
    %v8672 = vadd.f32 0.0, %v8671
    %v8673 = vpop.f32.mrb[0].mxu0
    %v8674 = vadd.f32 0.0, %v8673
    %8675 = vmatprep.mubr.bf16.mxu0 %v4698
    %8676 = vmatmul.mubr.bf16.gmra.mrb[0].mxu0 %v4697
    %v8677 = vpop.f32.mrb[0].mxu0
    %v8678 = vadd.f32 0.0, %v8677
    %v8679 = vpop.f32.mrb[0].mxu0
    %v8680 = vadd.f32 0.0, %v8679
    %v8681 = vpop.f32.mrb[0].mxu0
    %v8682 = vadd.f32 0.0, %v8681
    %v8683 = vpop.f32.mrb[0].mxu0
    %v8684 = vadd.f32 0.0, %v8683
    %8685 = vmatprep.mubr.bf16.mxu0 %v4702
    %8686 = vmatmul.mubr.bf16.gmra.mrb[0].mxu0 %v4701
    %v8687 = vpop.f32.mrb[0].mxu0
    %v8688 = vadd.f32 0.0, %v8687
    %v8689 = vpop.f32.mrb[0].mxu0
    %v8690 = vadd.f32 0.0, %v8689
    %v8691 = vpop.f32.mrb[0].mxu0
    %v8692 = vadd.f32 0.0, %v8691
    %v8693 = vpop.f32.mrb[0].mxu0
    %v8694 = vadd.f32 0.0, %v8693
    %8695 = vmatprep.mubr.bf16.mxu0 %v4706
    %8696 = vmatmul.mubr.bf16.gmra.mrb[0].mxu0 %v4705
    %v8697 = vpop.f32.mrb[0].mxu0
    %v8698 = vadd.f32 0.0, %v8697
    %v8699 = vpop.f32.mrb[0].mxu0
    %v8700 = vadd.f32 0.0, %v8699
    %v8701 = vpop.f32.mrb[0].mxu0
    %v8702 = vadd.f32 0.0, %v8701
    %v8703 = vpop.f32.mrb[0].mxu0
    %v8704 = vadd.f32 0.0, %v8703
    %8705 = vmatprep.mubr.bf16.mxu0 %v4710
    %8706 = vmatmul.mubr.bf16.gmra.mrb[0].mxu0 %v4709
    %v8707 = vpop.f32.mrb[0].mxu0
    %v8708 = vadd.f32 0.0, %v8707
    %v8709 = vpop.f32.mrb[0].mxu0
    %v8710 = vadd.f32 0.0, %v8709
    %v8711 = vpop.f32.mrb[0].mxu0
    %v8712 = vadd.f32 0.0, %v8711
    %v8713 = vpop.f32.mrb[0].mxu0
    %v8714 = vadd.f32 0.0, %v8713
    %8715 = vmatprep.mubr.bf16.mxu0 %v4714
    %8716 = vmatmul.mubr.bf16.gmra.mrb[0].mxu0 %v4713
    %v8717 = vpop.f32.mrb[0].mxu0
    %v8718 = vadd.f32 0.0, %v8717
    %v8719 = vpop.f32.mrb[0].mxu0
    %v8720 = vadd.f32 0.0, %v8719
    %v8721 = vpop.f32.mrb[0].mxu0
    %v8722 = vadd.f32 0.0, %v8721
    %v8723 = vpop.f32.mrb[0].mxu0
    %v8724 = vadd.f32 0.0, %v8723
    %8725 = vmatprep.mubr.bf16.mxu0 %v4718
    %8726 = vmatmul.mubr.bf16.gmra.mrb[0].mxu0 %v4717
    %v8727 = vpop.f32.mrb[0].mxu0
    %v8728 = vadd.f32 0.0, %v8727
    %v8729 = vpop.f32.mrb[0].mxu0
    %v8730 = vadd.f32 0.0, %v8729
    %v8731 = vpop.f32.mrb[0].mxu0
    %v8732 = vadd.f32 0.0, %v8731
    %v8733 = vpop.f32.mrb[0].mxu0
    %v8734 = vadd.f32 0.0, %v8733
    %8735 = vdwg.mxu0
    %8736 = vmatprep.subr.bf16.mxu0 %v8474
    %8737 = vmatpush1.bf16.msra.mxu0 %v8473
    %8738 = vmatprep.subr.bf16.mxu0 %v8478
    %8739 = vmatpush1.bf16.msra.mxu0 %v8477
    %8740 = vmatprep.subr.bf16.mxu0 %v8482
    %8741 = vmatpush1.bf16.msra.mxu0 %v8481
    %8742 = vmatprep.subr.bf16.mxu0 %v8486
    %8743 = vmatpush1.bf16.msra.mxu0 %v8485
    %8744 = vmatprep.subr.bf16.mxu0 %v8490
    %8745 = vmatpush1.bf16.msra.mxu0 %v8489
    %8746 = vmatprep.subr.bf16.mxu0 %v8494
    %8747 = vmatpush1.bf16.msra.mxu0 %v8493
    %8748 = vmatprep.subr.bf16.mxu0 %v8498
    %8749 = vmatpush1.bf16.msra.mxu0 %v8497
    %8750 = vmatprep.subr.bf16.mxu0 %v8502
    %8751 = vmatpush1.bf16.msra.mxu0 %v8501
    %8752 = vmatprep.subr.bf16.mxu0 %v8506
    %8753 = vmatpush1.bf16.msra.mxu0 %v8505
    %8754 = vmatprep.subr.bf16.mxu0 %v8510
    %8755 = vmatpush1.bf16.msra.mxu0 %v8509
    %8756 = vmatprep.subr.bf16.mxu0 %v8514
    %8757 = vmatpush1.bf16.msra.mxu0 %v8513
    %8758 = vmatprep.subr.bf16.mxu0 %v8518
    %8759 = vmatpush1.bf16.msra.mxu0 %v8517
    %8760 = vmatprep.subr.bf16.mxu0 0
    %8761 = vmatpush1.bf16.msra.mxu0 0
    %8762 = vmatprep.subr.bf16.mxu0 0
    %8763 = vmatpush1.bf16.msra.mxu0 0
    %8764 = vmatprep.subr.bf16.mxu0 0
    %8765 = vmatpush1.bf16.msra.mxu0 0
    %8766 = vmatprep.subr.bf16.mxu0 0
    %8767 = vmatpush1.bf16.msra.mxu0 0
    %8768 = vmatprep.mubr.bf16.mxu0 %v5303
    %8769 = vmatmul.mubr.bf16.gmra.mrb[0].mxu0 %v4695
    %v8770 = vpop.f32.mrb[0].mxu0
    %v8771 = vadd.f32 %v8668, %v8770
    %v8772 = vpop.f32.mrb[0].mxu0
    %v8773 = vadd.f32 %v8670, %v8772
    %v8774 = vpop.f32.mrb[0].mxu0
    %v8775 = vadd.f32 %v8672, %v8774
    %v8776 = vpop.f32.mrb[0].mxu0
    %v8777 = vadd.f32 %v8674, %v8776
    %8778 = vmatprep.mubr.bf16.mxu0 %v5306
    %8779 = vmatmul.mubr.bf16.gmra.mrb[0].mxu0 %v4699
    %v8780 = vpop.f32.mrb[0].mxu0
    %v8781 = vadd.f32 %v8678, %v8780
    %v8782 = vpop.f32.mrb[0].mxu0
    %v8783 = vadd.f32 %v8680, %v8782
    %v8784 = vpop.f32.mrb[0].mxu0
    %v8785 = vadd.f32 %v8682, %v8784
    %v8786 = vpop.f32.mrb[0].mxu0
    %v8787 = vadd.f32 %v8684, %v8786
    %8788 = vmatprep.mubr.bf16.mxu0 %v5309
    %8789 = vmatmul.mubr.bf16.gmra.mrb[0].mxu0 %v4703
    %v8790 = vpop.f32.mrb[0].mxu0
    %v8791 = vadd.f32 %v8688, %v8790
    %v8792 = vpop.f32.mrb[0].mxu0
    %v8793 = vadd.f32 %v8690, %v8792
    %v8794 = vpop.f32.mrb[0].mxu0
    %v8795 = vadd.f32 %v8692, %v8794
    %v8796 = vpop.f32.mrb[0].mxu0
    %v8797 = vadd.f32 %v8694, %v8796
    %8798 = vmatprep.mubr.bf16.mxu0 %v5312
    %8799 = vmatmul.mubr.bf16.gmra.mrb[0].mxu0 %v4707
    %v8800 = vpop.f32.mrb[0].mxu0
    %v8801 = vadd.f32 %v8698, %v8800
    %v8802 = vpop.f32.mrb[0].mxu0
    %v8803 = vadd.f32 %v8700, %v8802
    %v8804 = vpop.f32.mrb[0].mxu0
    %v8805 = vadd.f32 %v8702, %v8804
    %v8806 = vpop.f32.mrb[0].mxu0
    %v8807 = vadd.f32 %v8704, %v8806
    %8808 = vmatprep.mubr.bf16.mxu0 %v5315
    %8809 = vmatmul.mubr.bf16.gmra.mrb[0].mxu0 %v4711
    %v8810 = vpop.f32.mrb[0].mxu0
    %v8811 = vadd.f32 %v8708, %v8810
    %v8812 = vpop.f32.mrb[0].mxu0
    %v8813 = vadd.f32 %v8710, %v8812
    %v8814 = vpop.f32.mrb[0].mxu0
    %v8815 = vadd.f32 %v8712, %v8814
    %v8816 = vpop.f32.mrb[0].mxu0
    %v8817 = vadd.f32 %v8714, %v8816
    %8818 = vmatprep.mubr.bf16.mxu0 %v5318
    %8819 = vmatmul.mubr.bf16.gmra.mrb[0].mxu0 %v4715
    %v8820 = vpop.f32.mrb[0].mxu0
    %v8821 = vadd.f32 %v8718, %v8820
    %v8822 = vpop.f32.mrb[0].mxu0
    %v8823 = vadd.f32 %v8720, %v8822
    %v8824 = vpop.f32.mrb[0].mxu0
    %v8825 = vadd.f32 %v8722, %v8824
    %v8826 = vpop.f32.mrb[0].mxu0
    %v8827 = vadd.f32 %v8724, %v8826
    %8828 = vmatprep.mubr.bf16.mxu0 %v5321
    %8829 = vmatmul.mubr.bf16.gmra.mrb[0].mxu0 %v4719
    %v8830 = vpop.f32.mrb[0].mxu0
    %v8831 = vadd.f32 %v8728, %v8830
    %v8832 = vpop.f32.mrb[0].mxu0
    %v8833 = vadd.f32 %v8730, %v8832
    %v8834 = vpop.f32.mrb[0].mxu0
    %v8835 = vadd.f32 %v8732, %v8834
    %v8836 = vpop.f32.mrb[0].mxu0
    %v8837 = vadd.f32 %v8734, %v8836
    %8838 = vdwg.mxu0
    %8839 = vmatprep.subr.bf16.mxu0 %v8412
    %8840 = vmatpush1.bf16.msra.mxu0 %v8411
    %8841 = vmatprep.subr.bf16.mxu0 %v8416
    %8842 = vmatpush1.bf16.msra.mxu0 %v8415
    %8843 = vmatprep.subr.bf16.mxu0 %v8420
    %8844 = vmatpush1.bf16.msra.mxu0 %v8419
    %8845 = vmatprep.subr.bf16.mxu0 %v8424
    %8846 = vmatpush1.bf16.msra.mxu0 %v8423
    %8847 = vmatprep.subr.bf16.mxu0 %v8428
    %8848 = vmatpush1.bf16.msra.mxu0 %v8427
    %8849 = vmatprep.subr.bf16.mxu0 %v8432
    %8850 = vmatpush1.bf16.msra.mxu0 %v8431
    %8851 = vmatprep.subr.bf16.mxu0 %v8436
    %8852 = vmatpush1.bf16.msra.mxu0 %v8435
    %8853 = vmatprep.subr.bf16.mxu0 %v8440
    %8854 = vmatpush1.bf16.msra.mxu0 %v8439
    %8855 = vmatprep.subr.bf16.mxu0 %v8444
    %8856 = vmatpush1.bf16.msra.mxu0 %v8443
    %8857 = vmatprep.subr.bf16.mxu0 %v8448
    %8858 = vmatpush1.bf16.msra.mxu0 %v8447
    %8859 = vmatprep.subr.bf16.mxu0 %v8452
    %8860 = vmatpush1.bf16.msra.mxu0 %v8451
    %8861 = vmatprep.subr.bf16.mxu0 %v8456
    %8862 = vmatpush1.bf16.msra.mxu0 %v8455
    %8863 = vmatprep.subr.bf16.mxu0 %v8460
    %8864 = vmatpush1.bf16.msra.mxu0 %v8459
    %8865 = vmatprep.subr.bf16.mxu0 %v8464
    %8866 = vmatpush1.bf16.msra.mxu0 %v8463
    %8867 = vmatprep.subr.bf16.mxu0 %v8468
    %8868 = vmatpush1.bf16.msra.mxu0 %v8467
    %8869 = vmatprep.subr.bf16.mxu0 %v8472
    %8870 = vmatpush1.bf16.msra.mxu0 %v8471
    %8871 = vmatprep.mubr.bf16.mxu0 %v4694
    %8872 = vmatmul.mubr.bf16.gmra.mrb[0].mxu0 %v4693
    %v8873 = vpop.f32.mrb[0].mxu0
    %v8874 = vadd.f32 0.0, %v8873
    %v8875 = vpop.f32.mrb[0].mxu0
    %v8876 = vadd.f32 0.0, %v8875
    %v8877 = vpop.f32.mrb[0].mxu0
    %v8878 = vadd.f32 0.0, %v8877
    %v8879 = vpop.f32.mrb[0].mxu0
    %v8880 = vadd.f32 0.0, %v8879
    %8881 = vmatprep.mubr.bf16.mxu0 %v4698
    %8882 = vmatmul.mubr.bf16.gmra.mrb[0].mxu0 %v4697
    %v8883 = vpop.f32.mrb[0].mxu0
    %v8884 = vadd.f32 0.0, %v8883
    %v8885 = vpop.f32.mrb[0].mxu0
    %v8886 = vadd.f32 0.0, %v8885
    %v8887 = vpop.f32.mrb[0].mxu0
    %v8888 = vadd.f32 0.0, %v8887
    %v8889 = vpop.f32.mrb[0].mxu0
    %v8890 = vadd.f32 0.0, %v8889
    %8891 = vmatprep.mubr.bf16.mxu0 %v4702
    %8892 = vmatmul.mubr.bf16.gmra.mrb[0].mxu0 %v4701
    %v8893 = vpop.f32.mrb[0].mxu0
    %v8894 = vadd.f32 0.0, %v8893
    %v8895 = vpop.f32.mrb[0].mxu0
    %v8896 = vadd.f32 0.0, %v8895
    %v8897 = vpop.f32.mrb[0].mxu0
    %v8898 = vadd.f32 0.0, %v8897
    %v8899 = vpop.f32.mrb[0].mxu0
    %v8900 = vadd.f32 0.0, %v8899
    %8901 = vmatprep.mubr.bf16.mxu0 %v4706
    %8902 = vmatmul.mubr.bf16.gmra.mrb[0].mxu0 %v4705
    %v8903 = vpop.f32.mrb[0].mxu0
    %v8904 = vadd.f32 0.0, %v8903
    %v8905 = vpop.f32.mrb[0].mxu0
    %v8906 = vadd.f32 0.0, %v8905
    %v8907 = vpop.f32.mrb[0].mxu0
    %v8908 = vadd.f32 0.0, %v8907
    %v8909 = vpop.f32.mrb[0].mxu0
    %v8910 = vadd.f32 0.0, %v8909
    %8911 = vmatprep.mubr.bf16.mxu0 %v4710
    %8912 = vmatmul.mubr.bf16.gmra.mrb[0].mxu0 %v4709
    %v8913 = vpop.f32.mrb[0].mxu0
    %v8914 = vadd.f32 0.0, %v8913
    %v8915 = vpop.f32.mrb[0].mxu0
    %v8916 = vadd.f32 0.0, %v8915
    %v8917 = vpop.f32.mrb[0].mxu0
    %v8918 = vadd.f32 0.0, %v8917
    %v8919 = vpop.f32.mrb[0].mxu0
    %v8920 = vadd.f32 0.0, %v8919
    %8921 = vmatprep.mubr.bf16.mxu0 %v4714
    %8922 = vmatmul.mubr.bf16.gmra.mrb[0].mxu0 %v4713
    %v8923 = vpop.f32.mrb[0].mxu0
    %v8924 = vadd.f32 0.0, %v8923
    %v8925 = vpop.f32.mrb[0].mxu0
    %v8926 = vadd.f32 0.0, %v8925
    %v8927 = vpop.f32.mrb[0].mxu0
    %v8928 = vadd.f32 0.0, %v8927
    %v8929 = vpop.f32.mrb[0].mxu0
    %v8930 = vadd.f32 0.0, %v8929
    %8931 = vmatprep.mubr.bf16.mxu0 %v4718
    %8932 = vmatmul.mubr.bf16.gmra.mrb[0].mxu0 %v4717
    %v8933 = vpop.f32.mrb[0].mxu0
    %v8934 = vadd.f32 0.0, %v8933
    %v8935 = vpop.f32.mrb[0].mxu0
    %v8936 = vadd.f32 0.0, %v8935
    %v8937 = vpop.f32.mrb[0].mxu0
    %v8938 = vadd.f32 0.0, %v8937
    %v8939 = vpop.f32.mrb[0].mxu0
    %v8940 = vadd.f32 0.0, %v8939
    %8941 = vdwg.mxu0
    %8942 = vmatprep.subr.bf16.mxu0 %v8476
    %8943 = vmatpush1.bf16.msra.mxu0 %v8475
    %8944 = vmatprep.subr.bf16.mxu0 %v8480
    %8945 = vmatpush1.bf16.msra.mxu0 %v8479
    %8946 = vmatprep.subr.bf16.mxu0 %v8484
    %8947 = vmatpush1.bf16.msra.mxu0 %v8483
    %8948 = vmatprep.subr.bf16.mxu0 %v8488
    %8949 = vmatpush1.bf16.msra.mxu0 %v8487
    %8950 = vmatprep.subr.bf16.mxu0 %v8492
    %8951 = vmatpush1.bf16.msra.mxu0 %v8491
    %8952 = vmatprep.subr.bf16.mxu0 %v8496
    %8953 = vmatpush1.bf16.msra.mxu0 %v8495
    %8954 = vmatprep.subr.bf16.mxu0 %v8500
    %8955 = vmatpush1.bf16.msra.mxu0 %v8499
    %8956 = vmatprep.subr.bf16.mxu0 %v8504
    %8957 = vmatpush1.bf16.msra.mxu0 %v8503
    %8958 = vmatprep.subr.bf16.mxu0 %v8508
    %8959 = vmatpush1.bf16.msra.mxu0 %v8507
    %8960 = vmatprep.subr.bf16.mxu0 %v8512
    %8961 = vmatpush1.bf16.msra.mxu0 %v8511
    %8962 = vmatprep.subr.bf16.mxu0 %v8516
    %8963 = vmatpush1.bf16.msra.mxu0 %v8515
    %8964 = vmatprep.subr.bf16.mxu0 %v8520
    %8965 = vmatpush1.bf16.msra.mxu0 %v8519
    %8966 = vmatprep.subr.bf16.mxu0 0
    %8967 = vmatpush1.bf16.msra.mxu0 0
    %8968 = vmatprep.subr.bf16.mxu0 0
    %8969 = vmatpush1.bf16.msra.mxu0 0
    %8970 = vmatprep.subr.bf16.mxu0 0
    %8971 = vmatpush1.bf16.msra.mxu0 0
    %8972 = vmatprep.subr.bf16.mxu0 0
    %8973 = vmatpush1.bf16.msra.mxu0 0
    %8974 = vmatprep.mubr.bf16.mxu0 %v5303
    %8975 = vmatmul.mubr.bf16.gmra.mrb[0].mxu0 %v4695
    %v8976 = vpop.f32.mrb[0].mxu0
    %v8977 = vadd.f32 %v8874, %v8976
    %v8978 = vpop.f32.mrb[0].mxu0
    %v8979 = vadd.f32 %v8876, %v8978
    %v8980 = vpop.f32.mrb[0].mxu0
    %v8981 = vadd.f32 %v8878, %v8980
    %v8982 = vpop.f32.mrb[0].mxu0
    %v8983 = vadd.f32 %v8880, %v8982
    %8984 = vmatprep.mubr.bf16.mxu0 %v5306
    %8985 = vmatmul.mubr.bf16.gmra.mrb[0].mxu0 %v4699
    %v8986 = vpop.f32.mrb[0].mxu0
    %v8987 = vadd.f32 %v8884, %v8986
    %v8988 = vpop.f32.mrb[0].mxu0
    %v8989 = vadd.f32 %v8886, %v8988
    %v8990 = vpop.f32.mrb[0].mxu0
    %v8991 = vadd.f32 %v8888, %v8990
    %v8992 = vpop.f32.mrb[0].mxu0
    %v8993 = vadd.f32 %v8890, %v8992
    %8994 = vmatprep.mubr.bf16.mxu0 %v5309
    %8995 = vmatmul.mubr.bf16.gmra.mrb[0].mxu0 %v4703
    %v8996 = vpop.f32.mrb[0].mxu0
    %v8997 = vadd.f32 %v8894, %v8996
    %v8998 = vpop.f32.mrb[0].mxu0
    %v8999 = vadd.f32 %v8896, %v8998
    %v9000 = vpop.f32.mrb[0].mxu0
    %v9001 = vadd.f32 %v8898, %v9000
    %v9002 = vpop.f32.mrb[0].mxu0
    %v9003 = vadd.f32 %v8900, %v9002
    %9004 = vmatprep.mubr.bf16.mxu0 %v5312
    %9005 = vmatmul.mubr.bf16.gmra.mrb[0].mxu0 %v4707
    %v9006 = vpop.f32.mrb[0].mxu0
    %v9007 = vadd.f32 %v8904, %v9006
    %v9008 = vpop.f32.mrb[0].mxu0
    %v9009 = vadd.f32 %v8906, %v9008
    %v9010 = vpop.f32.mrb[0].mxu0
    %v9011 = vadd.f32 %v8908, %v9010
    %v9012 = vpop.f32.mrb[0].mxu0
    %v9013 = vadd.f32 %v8910, %v9012
    %9014 = vmatprep.mubr.bf16.mxu0 %v5315
    %9015 = vmatmul.mubr.bf16.gmra.mrb[0].mxu0 %v4711
    %v9016 = vpop.f32.mrb[0].mxu0
    %v9017 = vadd.f32 %v8914, %v9016
    %v9018 = vpop.f32.mrb[0].mxu0
    %v9019 = vadd.f32 %v8916, %v9018
    %v9020 = vpop.f32.mrb[0].mxu0
    %v9021 = vadd.f32 %v8918, %v9020
    %v9022 = vpop.f32.mrb[0].mxu0
    %v9023 = vadd.f32 %v8920, %v9022
    %9024 = vmatprep.mubr.bf16.mxu0 %v5318
    %9025 = vmatmul.mubr.bf16.gmra.mrb[0].mxu0 %v4715
    %v9026 = vpop.f32.mrb[0].mxu0
    %v9027 = vadd.f32 %v8924, %v9026
    %v9028 = vpop.f32.mrb[0].mxu0
    %v9029 = vadd.f32 %v8926, %v9028
    %v9030 = vpop.f32.mrb[0].mxu0
    %v9031 = vadd.f32 %v8928, %v9030
    %v9032 = vpop.f32.mrb[0].mxu0
    %v9033 = vadd.f32 %v8930, %v9032
    %9034 = vmatprep.mubr.bf16.mxu0 %v5321
    %9035 = vmatmul.mubr.bf16.gmra.mrb[0].mxu0 %v4719
    %v9036 = vpop.f32.mrb[0].mxu0
    %v9037 = vadd.f32 %v8934, %v9036
    %v9038 = vpop.f32.mrb[0].mxu0
    %v9039 = vadd.f32 %v8936, %v9038
    %v9040 = vpop.f32.mrb[0].mxu0
    %v9041 = vadd.f32 %v8938, %v9040
    %v9042 = vpop.f32.mrb[0].mxu0
    %v9043 = vadd.f32 %v8940, %v9042
    %9044 = vdwg.mxu0
    %v9045 = vadd.f32 %v7686, %v8771
    %v9046 = vadd.f32 %v7688, %v8773
    %v9047 = vadd.f32 %v7892, %v8977
    %v9048 = vadd.f32 %v7894, %v8979
    %v9049 = vadd.f32 %v7690, %v8775
    %v9050 = vadd.f32 %v7692, %v8777
    %v9051 = vadd.f32 %v7896, %v8981
    %v9052 = vadd.f32 %v7898, %v8983
    %v9053 = vadd.f32 %v7696, %v8781
    %v9054 = vadd.f32 %v7698, %v8783
    %v9055 = vadd.f32 %v7902, %v8987
    %v9056 = vadd.f32 %v7904, %v8989
    %v9057 = vadd.f32 %v7700, %v8785
    %v9058 = vadd.f32 %v7702, %v8787
    %v9059 = vadd.f32 %v7906, %v8991
    %v9060 = vadd.f32 %v7908, %v8993
    %v9061 = vadd.f32 %v7706, %v8791
    %v9062 = vadd.f32 %v7708, %v8793
    %v9063 = vadd.f32 %v7912, %v8997
    %v9064 = vadd.f32 %v7914, %v8999
    %v9065 = vadd.f32 %v7710, %v8795
    %v9066 = vadd.f32 %v7712, %v8797
    %v9067 = vadd.f32 %v7916, %v9001
    %v9068 = vadd.f32 %v7918, %v9003
    %v9069 = vadd.f32 %v7716, %v8801
    %v9070 = vadd.f32 %v7718, %v8803
    %v9071 = vadd.f32 %v7922, %v9007
    %v9072 = vadd.f32 %v7924, %v9009
    %v9073 = vadd.f32 %v7720, %v8805
    %v9074 = vadd.f32 %v7722, %v8807
    %v9075 = vadd.f32 %v7926, %v9011
    %v9076 = vadd.f32 %v7928, %v9013
    %v9077 = vadd.f32 %v7726, %v8811
    %v9078 = vadd.f32 %v7728, %v8813
    %v9079 = vadd.f32 %v7932, %v9017
    %v9080 = vadd.f32 %v7934, %v9019
    %v9081 = vadd.f32 %v7730, %v8815
    %v9082 = vadd.f32 %v7732, %v8817
    %v9083 = vadd.f32 %v7936, %v9021
    %v9084 = vadd.f32 %v7938, %v9023
    %v9085 = vadd.f32 %v7736, %v8821
    %v9086 = vadd.f32 %v7738, %v8823
    %v9087 = vadd.f32 %v7942, %v9027
    %v9088 = vadd.f32 %v7944, %v9029
    %v9089 = vadd.f32 %v7740, %v8825
    %v9090 = vadd.f32 %v7742, %v8827
    %v9091 = vadd.f32 %v7946, %v9031
    %v9092 = vadd.f32 %v7948, %v9033
    %v9093 = vadd.f32 %v7746, %v8831
    %v9094 = vadd.f32 %v7748, %v8833
    %v9095 = vadd.f32 %v7952, %v9037
    %v9096 = vadd.f32 %v7954, %v9039
    %v9097 = vadd.f32 %v7750, %v8835
    %v9098 = vadd.f32 %v7752, %v8837
    %v9099 = vadd.f32 %v7956, %v9041
    %v9100 = vadd.f32 %v7958, %v9043
    %v9101 = vmax.f32 %v5735, %v9045
    %v9102 = vmax.f32 %v5736, %v9046
    %v9103 = vmax.f32 %v5737, %v9047
    %v9104 = vmax.f32 %v5738, %v9048
    %v9105 = vmax.f32 %v5739, %v9049
    %v9106 = vmax.f32 %v5740, %v9050
    %v9107 = vmax.f32 %v5741, %v9051
    %v9108 = vmax.f32 %v5742, %v9052
    %v9109 = vmax.f32 %v5743, %v9053
    %v9110 = vmax.f32 %v5744, %v9054
    %v9111 = vmax.f32 %v5745, %v9055
    %v9112 = vmax.f32 %v5746, %v9056
    %v9113 = vmax.f32 %v5747, %v9057
    %v9114 = vmax.f32 %v5748, %v9058
    %v9115 = vmax.f32 %v5749, %v9059
    %v9116 = vmax.f32 %v5750, %v9060
    %v9117 = vmax.f32 %v5751, %v9061
    %v9118 = vmax.f32 %v5752, %v9062
    %v9119 = vmax.f32 %v5753, %v9063
    %v9120 = vmax.f32 %v5754, %v9064
    %v9121 = vmax.f32 %v5755, %v9065
    %v9122 = vmax.f32 %v5756, %v9066
    %v9123 = vmax.f32 %v5757, %v9067
    %v9124 = vmax.f32 %v5758, %v9068
    %v9125 = vmax.f32 %v5759, %v9069
    %v9126 = vmax.f32 %v5760, %v9070
    %v9127 = vmax.f32 %v5761, %v9071
    %v9128 = vmax.f32 %v5762, %v9072
    %v9129 = vmax.f32 %v5763, %v9073
    %v9130 = vmax.f32 %v5764, %v9074
    %v9131 = vmax.f32 %v5765, %v9075
    %v9132 = vmax.f32 %v5766, %v9076
    %v9133 = vmax.f32 %v5767, %v9077
    %v9134 = vmax.f32 %v5768, %v9078
    %v9135 = vmax.f32 %v5769, %v9079
    %v9136 = vmax.f32 %v5770, %v9080
    %v9137 = vmax.f32 %v5771, %v9081
    %v9138 = vmax.f32 %v5772, %v9082
    %v9139 = vmax.f32 %v5773, %v9083
    %v9140 = vmax.f32 %v5774, %v9084
    %v9141 = vmax.f32 %v5775, %v9085
    %v9142 = vmax.f32 %v5776, %v9086
    %v9143 = vmax.f32 %v5777, %v9087
    %v9144 = vmax.f32 %v5778, %v9088
    %v9145 = vmax.f32 %v5779, %v9089
    %v9146 = vmax.f32 %v5780, %v9090
    %v9147 = vmax.f32 %v5781, %v9091
    %v9148 = vmax.f32 %v5782, %v9092
    %v9149 = vmax.f32 %v5783, %v9093
    %v9150 = vmax.f32 %v5784, %v9094
    %v9151 = vmax.f32 %v5785, %v9095
    %v9152 = vmax.f32 %v5786, %v9096
    %v9153 = vmax.f32 %v5787, %v9097
    %v9154 = vmax.f32 %v5788, %v9098
    %v9155 = vmax.f32 %v5789, %v9099
    %v9156 = vmax.f32 %v5790, %v9100
    %v9157 = vld [vmem:[#allocation11] sm:$0xf]
    %v9159 = vlaneseq
    %v9160 = vshrl.u32 %v9159, 7
    %v9161 = vsub.s32 0, %v9160
    %v9162 = vrot.slane %v9157, %v9161
    %v9163 = vlaneseq
    %v9164 = vshrl.u32 %v9163, 7
    %v9165 = vsub.s32 1, %v9164
    %v9166 = vrot.slane %v9157, %v9165
    %v9167 = vlaneseq
    %v9168 = vshrl.u32 %v9167, 7
    %v9169 = vsub.s32 2, %v9168
    %v9170 = vrot.slane %v9157, %v9169
    %v9171 = vlaneseq
    %v9172 = vshrl.u32 %v9171, 7
    %v9173 = vsub.s32 3, %v9172
    %v9174 = vrot.slane %v9157, %v9173
    %v9179 = vadd.f32 %v9101, %v9162
    %v9180 = vadd.f32 %v9102, %v9166
    %v9181 = vadd.f32 %v9103, %v9170
    %v9182 = vadd.f32 %v9104, %v9174
    %v9183 = vadd.f32 %v9105, %v9162
    %v9184 = vadd.f32 %v9106, %v9166
    %v9185 = vadd.f32 %v9107, %v9170
    %v9186 = vadd.f32 %v9108, %v9174
    %v9187 = vadd.f32 %v9109, %v9162
    %v9188 = vadd.f32 %v9110, %v9166
    %v9189 = vadd.f32 %v9111, %v9170
    %v9190 = vadd.f32 %v9112, %v9174
    %v9191 = vadd.f32 %v9113, %v9162
    %v9192 = vadd.f32 %v9114, %v9166
    %v9193 = vadd.f32 %v9115, %v9170
    %v9194 = vadd.f32 %v9116, %v9174
    %v9195 = vadd.f32 %v9117, %v9162
    %v9196 = vadd.f32 %v9118, %v9166
    %v9197 = vadd.f32 %v9119, %v9170
    %v9198 = vadd.f32 %v9120, %v9174
    %v9199 = vadd.f32 %v9121, %v9162
    %v9200 = vadd.f32 %v9122, %v9166
    %v9201 = vadd.f32 %v9123, %v9170
    %v9202 = vadd.f32 %v9124, %v9174
    %v9203 = vadd.f32 %v9125, %v9162
    %v9204 = vadd.f32 %v9126, %v9166
    %v9205 = vadd.f32 %v9127, %v9170
    %v9206 = vadd.f32 %v9128, %v9174
    %v9207 = vadd.f32 %v9129, %v9162
    %v9208 = vadd.f32 %v9130, %v9166
    %v9209 = vadd.f32 %v9131, %v9170
    %v9210 = vadd.f32 %v9132, %v9174
    %v9211 = vadd.f32 %v9133, %v9162
    %v9212 = vadd.f32 %v9134, %v9166
    %v9213 = vadd.f32 %v9135, %v9170
    %v9214 = vadd.f32 %v9136, %v9174
    %v9215 = vadd.f32 %v9137, %v9162
    %v9216 = vadd.f32 %v9138, %v9166
    %v9217 = vadd.f32 %v9139, %v9170
    %v9218 = vadd.f32 %v9140, %v9174
    %v9219 = vadd.f32 %v9141, %v9162
    %v9220 = vadd.f32 %v9142, %v9166
    %v9221 = vadd.f32 %v9143, %v9170
    %v9222 = vadd.f32 %v9144, %v9174
    %v9223 = vadd.f32 %v9145, %v9162
    %v9224 = vadd.f32 %v9146, %v9166
    %v9225 = vadd.f32 %v9147, %v9170
    %v9226 = vadd.f32 %v9148, %v9174
    %v9227 = vadd.f32 %v9149, %v9162
    %v9228 = vadd.f32 %v9150, %v9166
    %v9229 = vadd.f32 %v9151, %v9170
    %v9230 = vadd.f32 %v9152, %v9174
    %v9231 = vadd.f32 %v9153, %v9162
    %v9232 = vadd.f32 %v9154, %v9166
    %v9233 = vadd.f32 %v9155, %v9170
    %v9234 = vadd.f32 %v9156, %v9174
    %v9235 = vmax.f32 %v9179, 0.0
    %v9236 = vmax.f32 %v9180, 0.0
    %v9237 = vmax.f32 %v9181, 0.0
    %v9238 = vmax.f32 %v9182, 0.0
    %v9239 = vmax.f32 %v9183, 0.0
    %v9240 = vmax.f32 %v9184, 0.0
    %v9241 = vmax.f32 %v9185, 0.0
    %v9242 = vmax.f32 %v9186, 0.0
    %v9243 = vmax.f32 %v9187, 0.0
    %v9244 = vmax.f32 %v9188, 0.0
    %v9245 = vmax.f32 %v9189, 0.0
    %v9246 = vmax.f32 %v9190, 0.0
    %v9247 = vmax.f32 %v9191, 0.0
    %v9248 = vmax.f32 %v9192, 0.0
    %v9249 = vmax.f32 %v9193, 0.0
    %v9250 = vmax.f32 %v9194, 0.0
    %v9251 = vmax.f32 %v9195, 0.0
    %v9252 = vmax.f32 %v9196, 0.0
    %v9253 = vmax.f32 %v9197, 0.0
    %v9254 = vmax.f32 %v9198, 0.0
    %v9255 = vmax.f32 %v9199, 0.0
    %v9256 = vmax.f32 %v9200, 0.0
    %v9257 = vmax.f32 %v9201, 0.0
    %v9258 = vmax.f32 %v9202, 0.0
    %v9259 = vmax.f32 %v9203, 0.0
    %v9260 = vmax.f32 %v9204, 0.0
    %v9261 = vmax.f32 %v9205, 0.0
    %v9262 = vmax.f32 %v9206, 0.0
    %v9263 = vmax.f32 %v9207, 0.0
    %v9264 = vmax.f32 %v9208, 0.0
    %v9265 = vmax.f32 %v9209, 0.0
    %v9266 = vmax.f32 %v9210, 0.0
    %v9267 = vmax.f32 %v9211, 0.0
    %v9268 = vmax.f32 %v9212, 0.0
    %v9269 = vmax.f32 %v9213, 0.0
    %v9270 = vmax.f32 %v9214, 0.0
    %v9271 = vmax.f32 %v9215, 0.0
    %v9272 = vmax.f32 %v9216, 0.0
    %v9273 = vmax.f32 %v9217, 0.0
    %v9274 = vmax.f32 %v9218, 0.0
    %v9275 = vmax.f32 %v9219, 0.0
    %v9276 = vmax.f32 %v9220, 0.0
    %v9277 = vmax.f32 %v9221, 0.0
    %v9278 = vmax.f32 %v9222, 0.0
    %v9279 = vmax.f32 %v9223, 0.0
    %v9280 = vmax.f32 %v9224, 0.0
    %v9281 = vmax.f32 %v9225, 0.0
    %v9282 = vmax.f32 %v9226, 0.0
    %v9283 = vmax.f32 %v9227, 0.0
    %v9284 = vmax.f32 %v9228, 0.0
    %v9285 = vmax.f32 %v9229, 0.0
    %v9286 = vmax.f32 %v9230, 0.0
    %v9287 = vmax.f32 %v9231, 0.0
    %v9288 = vmax.f32 %v9232, 0.0
    %v9289 = vmax.f32 %v9233, 0.0
    %v9290 = vmax.f32 %v9234, 0.0
    %v9291 = vmax.f32 %v9235, %v9239
    %v9292 = vmax.f32 %v9236, %v9240
    %v9293 = vmax.f32 %v9237, %v9241
    %v9294 = vmax.f32 %v9238, %v9242
    %v9295 = vmax.f32 %v9243, %v9247
    %v9296 = vmax.f32 %v9244, %v9248
    %v9297 = vmax.f32 %v9245, %v9249
    %v9298 = vmax.f32 %v9246, %v9250
    %v9299 = vmax.f32 %v9251, %v9255
    %v9300 = vmax.f32 %v9252, %v9256
    %v9301 = vmax.f32 %v9253, %v9257
    %v9302 = vmax.f32 %v9254, %v9258
    %v9303 = vmax.f32 %v9259, %v9263
    %v9304 = vmax.f32 %v9260, %v9264
    %v9305 = vmax.f32 %v9261, %v9265
    %v9306 = vmax.f32 %v9262, %v9266
    %v9307 = vmax.f32 %v9267, %v9271
    %v9308 = vmax.f32 %v9268, %v9272
    %v9309 = vmax.f32 %v9269, %v9273
    %v9310 = vmax.f32 %v9270, %v9274
    %v9311 = vmax.f32 %v9275, %v9279
    %v9312 = vmax.f32 %v9276, %v9280
    %v9313 = vmax.f32 %v9277, %v9281
    %v9314 = vmax.f32 %v9278, %v9282
    %v9315 = vmax.f32 %v9283, %v9287
    %v9316 = vmax.f32 %v9284, %v9288
    %v9317 = vmax.f32 %v9285, %v9289
    %v9318 = vmax.f32 %v9286, %v9290
    %v9319 = vpack.c.bf16 %v9295, %v9291
    %v9320 = vpack.c.bf16 %v9296, %v9292
    %v9321 = vpack.c.bf16 %v9297, %v9293
    %v9322 = vpack.c.bf16 %v9298, %v9294
    %v9323 = vpack.c.bf16 %v9303, %v9299
    %v9324 = vpack.c.bf16 %v9304, %v9300
    %v9325 = vpack.c.bf16 %v9305, %v9301
    %v9326 = vpack.c.bf16 %v9306, %v9302
    %v9327 = vpack.c.bf16 %v9311, %v9307
    %v9328 = vpack.c.bf16 %v9312, %v9308
    %v9329 = vpack.c.bf16 %v9313, %v9309
    %v9330 = vpack.c.bf16 %v9314, %v9310
    %v9331 = vpack.c.bf16 %v9315, %v9315
    %v9332 = vpack.c.bf16 %v9316, %v9316
    %v9333 = vpack.c.bf16 %v9317, %v9317
    %v9334 = vpack.c.bf16 %v9318, %v9318
    %v9335 = vld [vmem:[#allocation13] sm:$0xf]
    %v9336 = vld [vmem:[#allocation13 + $0x4] sm:$0xf]
    %v9337 = vld [vmem:[#allocation13 + $0x8] sm:$0xf]
    %v9338 = vld [vmem:[#allocation13 + $0xc] sm:$0xf]
    %v9339 = vld [vmem:[#allocation13 + $0x10] sm:$0xf]
    %v9340 = vld [vmem:[#allocation13 + $0x14] sm:$0xf]
    %v9341 = vld [vmem:[#allocation13 + $0x18] sm:$0xf]
    %v9342 = vld [vmem:[#allocation13 + $0x1c] sm:$0xf]
    %v9343 = vld [vmem:[#allocation13 + $0x20] sm:$0xf]
    %v9344 = vld [vmem:[#allocation13 + $0x24] sm:$0xf]
    %v9345 = vld [vmem:[#allocation13 + $0x28] sm:$0xf]
    %v9346 = vld [vmem:[#allocation13 + $0x2c] sm:$0xf]
    %v9347 = vld [vmem:[#allocation13 + $0x30] sm:$0xf]
    %v9348 = vld [vmem:[#allocation13 + $0x34] sm:$0xf]
    %v9349 = vld [vmem:[#allocation13 + $0x38] sm:$0xf]
    %v9350 = vld [vmem:[#allocation13 + $0x3c] sm:$0xf]
    %v9351 = vld [vmem:[#allocation13 + $0x40] sm:$0xf]
    %v9352 = vld [vmem:[#allocation13 + $0x44] sm:$0xf]
    %v9353 = vld [vmem:[#allocation13 + $0x48] sm:$0xf]
    %v9354 = vld [vmem:[#allocation13 + $0x4c] sm:$0xf]
    %v9355 = vld [vmem:[#allocation13 + $0x50] sm:$0xf]
    %v9356 = vld [vmem:[#allocation13 + $0x54] sm:$0xf]
    %v9357 = vld [vmem:[#allocation13 + $0x58] sm:$0xf]
    %v9358 = vld [vmem:[#allocation13 + $0x5c] sm:$0xf]
    %v9359 = vld [vmem:[#allocation13 + $0x60] sm:$0xf]
    %v9360 = vld [vmem:[#allocation13 + $0x64] sm:$0xf]
    %v9361 = vld [vmem:[#allocation13 + $0x68] sm:$0xf]
    %v9362 = vld [vmem:[#allocation13 + $0x6c] sm:$0xf]
    %v9363 = vld [vmem:[#allocation13 + $0x70] sm:$0xf]
    %v9364 = vld [vmem:[#allocation13 + $0x74] sm:$0xf]
    %v9365 = vld [vmem:[#allocation13 + $0x78] sm:$0xf]
    %v9366 = vld [vmem:[#allocation13 + $0x7c] sm:$0xf]
    %v9367 = vld [vmem:[#allocation13 + $0x80] sm:$0xf]
    %v9368 = vld [vmem:[#allocation13 + $0x84] sm:$0xf]
    %v9369 = vld [vmem:[#allocation13 + $0x88] sm:$0xf]
    %v9370 = vld [vmem:[#allocation13 + $0x8c] sm:$0xf]
    %v9371 = vld [vmem:[#allocation13 + $0x90] sm:$0xf]
    %v9372 = vld [vmem:[#allocation13 + $0x94] sm:$0xf]
    %v9373 = vld [vmem:[#allocation13 + $0x98] sm:$0xf]
    %v9374 = vld [vmem:[#allocation13 + $0x9c] sm:$0xf]
    %v9375 = vld [vmem:[#allocation13 + $0xa0] sm:$0xf]
    %v9376 = vld [vmem:[#allocation13 + $0xa4] sm:$0xf]
    %v9377 = vld [vmem:[#allocation13 + $0xa8] sm:$0xf]
    %v9378 = vld [vmem:[#allocation13 + $0xac] sm:$0xf]
    %v9379 = vld [vmem:[#allocation13 + $0xb0] sm:$0xf]
    %v9380 = vld [vmem:[#allocation13 + $0xb4] sm:$0xf]
    %v9381 = vld [vmem:[#allocation13 + $0xb8] sm:$0xf]
    %v9382 = vld [vmem:[#allocation13 + $0xbc] sm:$0xf]
    %v9383 = vld [vmem:[#allocation13 + $0xc0] sm:$0xf]
    %v9384 = vld [vmem:[#allocation13 + $0xc4] sm:$0xf]
    %v9385 = vld [vmem:[#allocation13 + $0xc8] sm:$0xf]
    %v9386 = vld [vmem:[#allocation13 + $0xcc] sm:$0xf]
    %v9387 = vld [vmem:[#allocation13 + $0xd0] sm:$0xf]
    %v9388 = vld [vmem:[#allocation13 + $0xd4] sm:$0xf]
    %v9389 = vld [vmem:[#allocation13 + $0xd8] sm:$0xf]
    %v9390 = vld [vmem:[#allocation13 + $0xdc] sm:$0xf]
    %v9447 = vunpack.c.l.b16 %v9335
    %v9448 = vunpack.c.l.b16 %v9336
    %v9449 = vunpack.c.l.b16 %v9337
    %v9450 = vunpack.c.l.b16 %v9338
    %v9451 = vunpack.c.l.b16 %v9339
    %v9452 = vunpack.c.l.b16 %v9340
    %v9453 = vunpack.c.l.b16 %v9341
    %v9454 = vunpack.c.l.b16 %v9342
    %v9455 = vunpack.c.l.b16 %v9343
    %v9456 = vunpack.c.l.b16 %v9344
    %v9457 = vunpack.c.l.b16 %v9345
    %v9458 = vunpack.c.l.b16 %v9346
    %v9459 = vunpack.c.l.b16 %v9347
    %v9460 = vunpack.c.l.b16 %v9348
    %v9461 = vunpack.c.l.b16 %v9349
    %v9462 = vunpack.c.l.b16 %v9350
    %v9463 = vunpack.c.l.b16 %v9351
    %v9464 = vunpack.c.l.b16 %v9352
    %v9465 = vunpack.c.l.b16 %v9353
    %v9466 = vunpack.c.l.b16 %v9354
    %v9467 = vunpack.c.l.b16 %v9355
    %v9468 = vunpack.c.l.b16 %v9356
    %v9469 = vunpack.c.l.b16 %v9357
    %v9470 = vunpack.c.l.b16 %v9358
    %v9471 = vunpack.c.l.b16 %v9359
    %v9472 = vunpack.c.l.b16 %v9360
    %v9473 = vunpack.c.l.b16 %v9361
    %v9474 = vunpack.c.l.b16 %v9362
    %v9475 = vunpack.c.l.b16 %v9363
    %v9476 = vunpack.c.l.b16 %v9364
    %v9477 = vunpack.c.l.b16 %v9365
    %v9478 = vunpack.c.l.b16 %v9366
    %v9479 = vunpack.c.l.b16 %v9367
    %v9480 = vunpack.c.l.b16 %v9368
    %v9481 = vunpack.c.l.b16 %v9369
    %v9482 = vunpack.c.l.b16 %v9370
    %v9483 = vunpack.c.l.b16 %v9371
    %v9484 = vunpack.c.l.b16 %v9372
    %v9485 = vunpack.c.l.b16 %v9373
    %v9486 = vunpack.c.l.b16 %v9374
    %v9487 = vunpack.c.l.b16 %v9375
    %v9488 = vunpack.c.l.b16 %v9376
    %v9489 = vunpack.c.l.b16 %v9377
    %v9490 = vunpack.c.l.b16 %v9378
    %v9491 = vunpack.c.l.b16 %v9379
    %v9492 = vunpack.c.l.b16 %v9380
    %v9493 = vunpack.c.l.b16 %v9381
    %v9494 = vunpack.c.l.b16 %v9382
    %v9495 = vunpack.c.l.b16 %v9383
    %v9496 = vunpack.c.l.b16 %v9384
    %v9497 = vunpack.c.l.b16 %v9385
    %v9498 = vunpack.c.l.b16 %v9386
    %v9499 = vunpack.c.l.b16 %v9387
    %v9500 = vunpack.c.l.b16 %v9388
    %v9501 = vunpack.c.l.b16 %v9389
    %v9502 = vunpack.c.l.b16 %v9390
    %v9503 = vpack.c.b16 %v9448, %v9447
    %v9504 = vpack.c.b16 %v9450, %v9449
    %v9505 = vpack.c.b16 %v9452, %v9451
    %v9506 = vpack.c.b16 %v9454, %v9453
    %v9507 = vpack.c.b16 %v9456, %v9455
    %v9508 = vpack.c.b16 %v9458, %v9457
    %v9509 = vpack.c.b16 %v9460, %v9459
    %v9510 = vpack.c.b16 %v9462, %v9461
    %v9511 = vpack.c.b16 %v9464, %v9463
    %v9512 = vpack.c.b16 %v9466, %v9465
    %v9513 = vpack.c.b16 %v9468, %v9467
    %v9514 = vpack.c.b16 %v9470, %v9469
    %v9515 = vpack.c.b16 %v9472, %v9471
    %v9516 = vpack.c.b16 %v9474, %v9473
    %v9517 = vpack.c.b16 %v9476, %v9475
    %v9518 = vpack.c.b16 %v9478, %v9477
    %v9519 = vpack.c.b16 %v9480, %v9479
    %v9520 = vpack.c.b16 %v9482, %v9481
    %v9521 = vpack.c.b16 %v9484, %v9483
    %v9522 = vpack.c.b16 %v9486, %v9485
    %v9523 = vpack.c.b16 %v9488, %v9487
    %v9524 = vpack.c.b16 %v9490, %v9489
    %v9525 = vpack.c.b16 %v9492, %v9491
    %v9526 = vpack.c.b16 %v9494, %v9493
    %v9527 = vpack.c.b16 %v9496, %v9495
    %v9528 = vpack.c.b16 %v9498, %v9497
    %v9529 = vpack.c.b16 %v9500, %v9499
    %v9530 = vpack.c.b16 %v9502, %v9501
    %v9560 = vsel %vm2936, %v9322, 0
    %v9563 = vsel %vm2936, %v9326, 0
    %v9566 = vsel %vm2936, %v9330, 0
    %v9569 = vsel %vm2936, %v9334, 0
    %9571 = vmatprep.subr.bf16.mxu0 0
    %9572 = vmatpush1.bf16.msra.mxu0 %v9503
    %9573 = vmatprep.subr.bf16.mxu0 0
    %9574 = vmatpush1.bf16.msra.mxu0 %v9504
    %9575 = vmatprep.subr.bf16.mxu0 0
    %9576 = vmatpush1.bf16.msra.mxu0 %v9505
    %9577 = vmatprep.subr.bf16.mxu0 0
    %9578 = vmatpush1.bf16.msra.mxu0 %v9506
    %9579 = vmatprep.subr.bf16.mxu0 0
    %9580 = vmatpush1.bf16.msra.mxu0 %v9507
    %9581 = vmatprep.subr.bf16.mxu0 0
    %9582 = vmatpush1.bf16.msra.mxu0 %v9508
    %9583 = vmatprep.subr.bf16.mxu0 0
    %9584 = vmatpush1.bf16.msra.mxu0 %v9509
    %9585 = vmatprep.subr.bf16.mxu0 0
    %9586 = vmatpush1.bf16.msra.mxu0 %v9510
    %9587 = vmatprep.subr.bf16.mxu0 0
    %9588 = vmatpush1.bf16.msra.mxu0 %v9511
    %9589 = vmatprep.subr.bf16.mxu0 0
    %9590 = vmatpush1.bf16.msra.mxu0 %v9512
    %9591 = vmatprep.subr.bf16.mxu0 0
    %9592 = vmatpush1.bf16.msra.mxu0 %v9513
    %9593 = vmatprep.subr.bf16.mxu0 0
    %9594 = vmatpush1.bf16.msra.mxu0 %v9514
    %9595 = vmatprep.subr.bf16.mxu0 0
    %9596 = vmatpush1.bf16.msra.mxu0 %v9515
    %9597 = vmatprep.subr.bf16.mxu0 0
    %9598 = vmatpush1.bf16.msra.mxu0 %v9516
    %9599 = vmatprep.subr.bf16.mxu0 0
    %9600 = vmatpush1.bf16.msra.mxu0 %v9517
    %9601 = vmatprep.subr.bf16.mxu0 0
    %9602 = vmatpush1.bf16.msra.mxu0 %v9518
    %9603 = vmatprep.mubr.bf16.mxu0 %v9320
    %9604 = vmatmul.mubr.bf16.gmra.mrb[0].mxu0 %v9319
    %v9605 = vpop.f32.mrb[0].mxu0
    %v9606 = vadd.f32 0.0, %v9605
    %v9607 = vpop.f32.mrb[0].mxu0
    %v9608 = vpop.f32.mrb[0].mxu0
    %v9609 = vadd.f32 0.0, %v9608
    %v9610 = vpop.f32.mrb[0].mxu0
    %9611 = vmatprep.mubr.bf16.mxu0 %v9324
    %9612 = vmatmul.mubr.bf16.gmra.mrb[0].mxu0 %v9323
    %v9613 = vpop.f32.mrb[0].mxu0
    %v9614 = vadd.f32 0.0, %v9613
    %v9615 = vpop.f32.mrb[0].mxu0
    %v9616 = vpop.f32.mrb[0].mxu0
    %v9617 = vadd.f32 0.0, %v9616
    %v9618 = vpop.f32.mrb[0].mxu0
    %9619 = vmatprep.mubr.bf16.mxu0 %v9328
    %9620 = vmatmul.mubr.bf16.gmra.mrb[0].mxu0 %v9327
    %v9621 = vpop.f32.mrb[0].mxu0
    %v9622 = vadd.f32 0.0, %v9621
    %v9623 = vpop.f32.mrb[0].mxu0
    %v9624 = vpop.f32.mrb[0].mxu0
    %v9625 = vadd.f32 0.0, %v9624
    %v9626 = vpop.f32.mrb[0].mxu0
    %9627 = vmatprep.mubr.bf16.mxu0 %v9332
    %9628 = vmatmul.mubr.bf16.gmra.mrb[0].mxu0 %v9331
    %v9629 = vpop.f32.mrb[0].mxu0
    %v9630 = vadd.f32 0.0, %v9629
    %v9631 = vpop.f32.mrb[0].mxu0
    %v9632 = vpop.f32.mrb[0].mxu0
    %v9633 = vpop.f32.mrb[0].mxu0
    %9634 = vdwg.mxu0
    %9635 = vmatprep.subr.bf16.mxu0 0
    %9636 = vmatpush1.bf16.msra.mxu0 %v9519
    %9637 = vmatprep.subr.bf16.mxu0 0
    %9638 = vmatpush1.bf16.msra.mxu0 %v9520
    %9639 = vmatprep.subr.bf16.mxu0 0
    %9640 = vmatpush1.bf16.msra.mxu0 %v9521
    %9641 = vmatprep.subr.bf16.mxu0 0
    %9642 = vmatpush1.bf16.msra.mxu0 %v9522
    %9643 = vmatprep.subr.bf16.mxu0 0
    %9644 = vmatpush1.bf16.msra.mxu0 %v9523
    %9645 = vmatprep.subr.bf16.mxu0 0
    %9646 = vmatpush1.bf16.msra.mxu0 %v9524
    %9647 = vmatprep.subr.bf16.mxu0 0
    %9648 = vmatpush1.bf16.msra.mxu0 %v9525
    %9649 = vmatprep.subr.bf16.mxu0 0
    %9650 = vmatpush1.bf16.msra.mxu0 %v9526
    %9651 = vmatprep.subr.bf16.mxu0 0
    %9652 = vmatpush1.bf16.msra.mxu0 %v9527
    %9653 = vmatprep.subr.bf16.mxu0 0
    %9654 = vmatpush1.bf16.msra.mxu0 %v9528
    %9655 = vmatprep.subr.bf16.mxu0 0
    %9656 = vmatpush1.bf16.msra.mxu0 %v9529
    %9657 = vmatprep.subr.bf16.mxu0 0
    %9658 = vmatpush1.bf16.msra.mxu0 %v9530
    %9659 = vmatprep.subr.bf16.mxu0 0
    %9660 = vmatpush1.bf16.msra.mxu0 0
    %9661 = vmatprep.subr.bf16.mxu0 0
    %9662 = vmatpush1.bf16.msra.mxu0 0
    %9663 = vmatprep.subr.bf16.mxu0 0
    %9664 = vmatpush1.bf16.msra.mxu0 0
    %9665 = vmatprep.subr.bf16.mxu0 0
    %9666 = vmatpush1.bf16.msra.mxu0 0
    %9667 = vmatprep.mubr.bf16.mxu0 %v9560
    %9668 = vmatmul.mubr.bf16.gmra.mrb[0].mxu0 %v9321
    %v9669 = vpop.f32.mrb[0].mxu0
    %v9670 = vadd.f32 %v9606, %v9669
    %v9671 = vpop.f32.mrb[0].mxu0
    %v9672 = vpop.f32.mrb[0].mxu0
    %v9673 = vadd.f32 %v9609, %v9672
    %v9674 = vpop.f32.mrb[0].mxu0
    %9675 = vmatprep.mubr.bf16.mxu0 %v9563
    %9676 = vmatmul.mubr.bf16.gmra.mrb[0].mxu0 %v9325
    %v9677 = vpop.f32.mrb[0].mxu0
    %v9678 = vadd.f32 %v9614, %v9677
    %v9679 = vpop.f32.mrb[0].mxu0
    %v9680 = vpop.f32.mrb[0].mxu0
    %v9681 = vadd.f32 %v9617, %v9680
    %v9682 = vpop.f32.mrb[0].mxu0
    %9683 = vmatprep.mubr.bf16.mxu0 %v9566
    %9684 = vmatmul.mubr.bf16.gmra.mrb[0].mxu0 %v9329
    %v9685 = vpop.f32.mrb[0].mxu0
    %v9686 = vadd.f32 %v9622, %v9685
    %v9687 = vpop.f32.mrb[0].mxu0
    %v9688 = vpop.f32.mrb[0].mxu0
    %v9689 = vadd.f32 %v9625, %v9688
    %v9690 = vpop.f32.mrb[0].mxu0
    %9691 = vmatprep.mubr.bf16.mxu0 %v9569
    %9692 = vmatmul.mubr.bf16.gmra.mrb[0].mxu0 %v9333
    %v9693 = vpop.f32.mrb[0].mxu0
    %v9694 = vadd.f32 %v9630, %v9693
    %v9695 = vpop.f32.mrb[0].mxu0
    %v9696 = vpop.f32.mrb[0].mxu0
    %v9697 = vpop.f32.mrb[0].mxu0
    %9698 = vdwg.mxu0
    %v9699 = vld [vmem:[#allocation14] sm:$0x1]
    %v9701 = vlaneseq
    %v9702 = vshrl.u32 %v9701, 7
    %v9703 = vsub.s32 0, %v9702
    %v9704 = vrot.slane %v9699, %v9703
    %v9706 = vadd.f32 %v9670, %v9704
    %9708 = vrot.lane.b32.xlu0 %v9673, 112
    %v9709 = vpop.permute.xlu0 %9708
    %v9711 = vadd.f32 %v9706, %v9709
    %9713 = vrot.lane.b32.xlu0 %v9678, 96
    %v9714 = vpop.permute.xlu0 %9713
    %v9716 = vadd.f32 %v9711, %v9714
    %9718 = vrot.lane.b32.xlu0 %v9681, 80
    %v9719 = vpop.permute.xlu0 %9718
    %v9721 = vadd.f32 %v9716, %v9719
    %9723 = vrot.lane.b32.xlu0 %v9686, 64
    %v9724 = vpop.permute.xlu0 %9723
    %v9726 = vadd.f32 %v9721, %v9724
    %9728 = vrot.lane.b32.xlu0 %v9689, 48
    %v9729 = vpop.permute.xlu0 %9728
    %v9731 = vadd.f32 %v9726, %v9729
    %9733 = vrot.lane.b32.xlu0 %v9694, 32
    %v9734 = vpop.permute.xlu0 %9733
    %v9736 = vadd.f32 %v9731, %v9734
    %vm9737 = vcmask 80896
    %9738 = vst.msk [vmem:[%s9] sm:$0xff] %vm9737, %v9736
    // Predicated region
    $region70: #{cnn_forward_pallas.1} parent=1 // pred_check
      _
    $region71: #{cnn_forward_pallas.1} parent=1 // pred_check_branch
      %9740 = sbr.rel (0) target = $region73
    $region72: #{cnn_forward_pallas.1} parent=1 // pred_region
      _
    $region73: #{cnn_forward_pallas.1} parent=1 // pred_fallthru
      _
    // Predicated region
    $region74: #{cnn_forward_pallas.1} parent=1 // pred_check
      _
    $region75: #{cnn_forward_pallas.1} parent=1 // pred_check_branch
      %9742 = sbr.rel (0) target = $region77
    $region76: #{cnn_forward_pallas.1} parent=1 // pred_region
      _
    $region77: #{cnn_forward_pallas.1} parent=1 // pred_fallthru
      _
    %9743 = vsyncpa [#allocation4], 1
    %9744 = vsyncpa [#allocation6], 1
    %9745 = vsyncpa [#allocation9], 1
    %9746 = vsyncpa [#allocation12], 1
    %9747 = vsyncpa [#allocation15], 1

</llo_original>
